<compile_context>
chip_gen: v7x
topology: tpu7x:2x2x1
jax: 0.10.0
libtpu: 0.0.40
codegen_flags: <defaults>
</compile_context>

<pallas_src>
import jax
import jax.numpy as jnp
from jax.experimental import pallas as pl
from jax.experimental.pallas import tpu as pltpu


# ---------------------------------------------------------------------------
# Kernel 1: GPool projection scores, lane-dense (1, N) output, row-tiled.
# ---------------------------------------------------------------------------
def _score_kernel(h_ref, w_ref, b_ref, o_ref):
    # h_ref: (TM, F) tile of H; w_ref: (8, F) pre-broadcast f32 weight row;
    # b_ref: (1, 1) SMEM scalar; o_ref: (1, TM) lane-dense slice of scores.
    z = jax.lax.dot_general(
        w_ref[...], h_ref[...].astype(jnp.float32),
        dimension_numbers=(((1,), (1,)), ((), ())),   # contract on F (NT)
        precision=jax.lax.Precision.HIGHEST,
        preferred_element_type=jnp.float32)           # (8, TM), rows identical
    o_ref[...] = jax.nn.sigmoid(z[0:1, :] + b_ref[0, 0])


def _score_row_tile(n, f, vmem_budget_bytes=8 * 1024 * 1024):
    # Biggest row tile that divides N, keeps >= 2 grid steps when possible
    # (pipelining + v7x megacore split) and keeps the double-buffered H tile
    # inside a conservative VMEM budget.
    candidates = (2048, 1024, 512, 256, 128)
    for tm in candidates:
        if n % tm == 0 and n // tm >= 2 and 2 * tm * f * 4 <= vmem_budget_bytes:
            return tm
    for tm in candidates:
        if n % tm == 0 and 2 * tm * f * 4 <= vmem_budget_bytes:
            return tm
    return n


def gpool_scores(H, wp, bp):
    """sigmoid(H @ wp + bp) -> (N,) float32 scores."""
    N, F = H.shape
    # Hoist the weight replication out of the kernel: (F, 1) -> (8, F) f32.
    w8 = jnp.broadcast_to(wp.reshape(1, F).astype(jnp.float32), (8, F))
    b11 = jnp.reshape(bp, (1, 1)).astype(jnp.float32)
    tm = _score_row_tile(N, F)
    out = pl.pallas_call(
        _score_kernel,
        out_shape=jax.ShapeDtypeStruct((1, N), jnp.float32),
        grid=(N // tm,),
        in_specs=[
            pl.BlockSpec((tm, F), lambda i: (i, 0)),
            pl.BlockSpec((8, F), lambda i: (0, 0)),
            pl.BlockSpec((1, 1), lambda i: (0, 0),
                         memory_space=pltpu.MemorySpace.SMEM),
        ],
        out_specs=pl.BlockSpec((1, tm), lambda i: (0, i)),
        compiler_params=pltpu.CompilerParams(
            dimension_semantics=("parallel",)),
    )(H, w8, b11)
    return out[0]


# ---------------------------------------------------------------------------
# Kernel 2: fused top-k gather (one-hot MXU selection) + score scale + GCN.
#   inputs : idx_col (k, 1) int32, vals_row (1, k) f32, H (N, F), A (N, N),
#            Wg (F, Fout)
#   outputs: Hout = relu(Ap @ (H[idx] * vals[:,None]) @ Wg)   (k, Fout)
#            Ap   = A[idx][:, idx]                            (k, k)
# ---------------------------------------------------------------------------
def _pooled_gcn_kernel(idxc_ref, vals_ref, h_ref, a_ref, w_ref,
                       hout_ref, ap_ref,
                       sel_ref, hg_ref, ar_ref, t_ref):
    k, n = sel_ref.shape

    # One-hot selection matrix S[i, j] = 1.0 iff j == idx[i]  (VPU iota+cmp).
    lane_ids = jax.lax.broadcasted_iota(jnp.int32, (k, n), 1)
    sel_ref[...] = (lane_ids == idxc_ref[...]).astype(jnp.float32)

    exact = jax.lax.Precision.HIGHEST   # one-hot x f32 stays bit-exact

    # Row gathers on the MXU: Hg = H[idx, :], Ar = A[idx, :].
    hg_ref[...] = jnp.dot(sel_ref[...], h_ref[...].astype(jnp.float32),
                          precision=exact,
                          preferred_element_type=jnp.float32)        # (k, F)
    ar_ref[...] = jnp.dot(sel_ref[...], a_ref[...].astype(jnp.float32),
                          precision=exact,
                          preferred_element_type=jnp.float32)        # (k, N)

    # Column gather as an NT matmul: Ap = Ar[:, idx] = Ar @ S^T.
    ap = jax.lax.dot_general(
        ar_ref[...], sel_ref[...],
        dimension_numbers=(((1,), (1,)), ((), ())),
        precision=exact,
        preferred_element_type=jnp.float32)                          # (k, k)
    ap_ref[...] = ap.astype(ap_ref.dtype)

    # GCN layer on the pooled graph:
    #   relu(Ap @ (Hg * vals[:,None]) @ Wg) == relu((Ap * vals[None,:]) @ Hg @ Wg)
    # (diagonal scaling folded into the lane axis of Ap: k*k lane-dense VPU work,
    #  no sublane-major (k,1) broadcast).
    t_ref[...] = jnp.dot(ap * vals_ref[...], hg_ref[...],
                         preferred_element_type=jnp.float32)         # (k, F)
    out = jnp.dot(t_ref[...], w_ref[...].astype(jnp.float32),
                  preferred_element_type=jnp.float32)                # (k, Fout)
    hout_ref[...] = jnp.maximum(out, 0.0).astype(hout_ref.dtype)


def pooled_gcn(idx, vals, H, A, Wg):
    N, F = H.shape
    Fout = Wg.shape[1]
    k = idx.shape[0]
    idx_col = idx.reshape(k, 1).astype(jnp.int32)     # sublane-major, for iota cmp
    vals_row = vals.reshape(1, k).astype(jnp.float32)  # lane-dense, for Ap scaling
    return pl.pallas_call(
        _pooled_gcn_kernel,
        out_shape=(jax.ShapeDtypeStruct((k, Fout), H.dtype),
                   jax.ShapeDtypeStruct((k, k), A.dtype)),
        grid=(1,),
        in_specs=[
            pl.BlockSpec((k, 1), lambda i: (0, 0)),       # idx column
            pl.BlockSpec((1, k), lambda i: (0, 0)),       # vals row
            pl.BlockSpec((N, F), lambda i: (0, 0)),       # H
            pl.BlockSpec((N, N), lambda i: (0, 0)),       # A
            pl.BlockSpec((F, Fout), lambda i: (0, 0)),    # Wg
        ],
        out_specs=(
            pl.BlockSpec((k, Fout), lambda i: (0, 0)),
            pl.BlockSpec((k, k), lambda i: (0, 0)),
        ),
        scratch_shapes=[
            pltpu.VMEM((k, N), jnp.float32),   # S   one-hot selection
            pltpu.VMEM((k, F), jnp.float32),   # Hg  = H[idx, :]
            pltpu.VMEM((k, N), jnp.float32),   # Ar  = A[idx, :]
            pltpu.VMEM((k, F), jnp.float32),   # t   = (Ap*vals) @ Hg
        ],
        compiler_params=pltpu.CompilerParams(
            dimension_semantics=("arbitrary",)),
    )(idx_col, vals_row, H, A, Wg)


# ---------------------------------------------------------------------------
# Full GPoolBlock forward.
# ---------------------------------------------------------------------------
def gpool_block_forward(H, A, params, pooling_size):
    scores = gpool_scores(H, params["proj_w"], params["proj_b"])   # (N,)
    # TODO(synk): top-k selection has no clean Pallas equivalent; it stays in
    # XLA (lax.top_k).  Everything downstream is fused into one pallas_call.
    vals, idx = jax.lax.top_k(scores, pooling_size)
    Hout, Ap = pooled_gcn(idx, vals, H, A, params["gcn_w"])
    return Hout, Ap, idx


# ---------------------------------------------------------------------------
# Reference (plain JAX) for the sanity check.
# ---------------------------------------------------------------------------
def reference_forward(H, A, params, pooling_size):
    scores = jax.nn.sigmoid(H @ params["proj_w"] + params["proj_b"])[:, 0]
    vals, idx = jax.lax.top_k(scores, pooling_size)
    Hs = H[idx, :] * vals[:, None]
    Ap = A[idx, :][:, idx]
    return jnp.maximum(Ap @ Hs @ params["gcn_w"], 0.0), Ap, idx, scores


if __name__ == "__main__":
    # in_features == out_features is required by the PyTorch module's forward
    # order (GPool before GCN).  Shapes kept small but (8,128)/MXU aligned.
    N = 256        # graph nodes
    F_IN = 128     # in_features == out_features
    F_OUT = 128
    K = 128        # pooling_size

    key = jax.random.PRNGKey(0)
    k_h, k_a, k_gw, k_pw, k_pb = jax.random.split(key, 5)

    H = jax.random.normal(k_h, (N, F_IN), dtype=jnp.float32)
    A = jax.random.uniform(k_a, (N, N), dtype=jnp.float32)

    gcn_bound = (6.0 / (F_IN + F_OUT)) ** 0.5       # xavier-uniform-like
    proj_bound = (1.0 / F_OUT) ** 0.5
    params = {
        "gcn_w": jax.random.uniform(k_gw, (F_IN, F_OUT), jnp.float32,
                                    -gcn_bound, gcn_bound),
        "proj_w": jax.random.uniform(k_pw, (F_OUT, 1), jnp.float32,
                                     -proj_bound, proj_bound),
        "proj_b": jax.random.uniform(k_pb, (), jnp.float32,
                                     -proj_bound, proj_bound),
    }

    fwd = jax.jit(gpool_block_forward, static_argnums=3)
    Hout, Ap, idx = fwd(H, A, params, K)
    jax.block_until_ready((Hout, Ap, idx))

    Href, Apref, idxref, scores_ref = reference_forward(H, A, params, K)

    assert Hout.shape == (K, F_OUT) and Ap.shape == (K, K) and idx.shape == (K,)
    scores = gpool_scores(H, params["proj_w"], params["proj_b"])
    assert jnp.allclose(scores, scores_ref, atol=5e-3)
    assert jnp.array_equal(idx, idxref)
    # One-hot selection matmuls at precision=HIGHEST reproduce the gather
    # exactly, so Ap matches the reference gather (essentially) to the bit.
    assert jnp.allclose(Ap, Apref, atol=1e-6, rtol=0.0)
    # TPU f32 matmuls may execute with bf16 passes by default (both in XLA and
    # in the kernel); tolerance is sized for that, not for an algorithmic gap.
    assert jnp.allclose(Hout, Href, atol=1e-2, rtol=1e-2)

    print("KERNEL_OK")
</pallas_src>

<mosaic_0001>
module attributes {stable_mosaic.version = 11 : i64} {
  func.func @_score_kernel(%arg0: i32, %arg1: memref<128x128xf32, #tpu.memory_space<vmem>>, %arg2: memref<8x128xf32, #tpu.memory_space<vmem>>, %arg3: memref<1x1xf32, #tpu.memory_space<smem>>, %arg4: memref<1x128xf32, #tpu.memory_space<vmem>>) attributes {dimension_semantics = [#tpu.dimension_semantics<parallel>], iteration_bounds = array<i64: 2>, scalar_prefetch = 0 : i64, scratch_operands = 0 : i64, tpu.core_type = #tpu.core_type<tc>, window_params = [{transform_indices = @transform_0, window_bounds = array<i64: 128, 128>}, {pipeline_mode = #tpu.pipeline_mode<synchronous>, transform_indices = @transform_1, window_bounds = array<i64: 8, 128>}, {transform_indices = @transform_2, window_bounds = array<i64: 1, 1>}, {transform_indices = @transform_3, window_bounds = array<i64: 1, 128>}]} {
    %c0 = arith.constant 0 : index
    %c0_0 = arith.constant 0 : index
    %0 = vector.load %arg2[%c0, %c0_0] : memref<8x128xf32, #tpu.memory_space<vmem>>, vector<8x128xf32>
    %c0_1 = arith.constant 0 : index
    %c0_2 = arith.constant 0 : index
    %1 = vector.load %arg1[%c0_1, %c0_2] : memref<128x128xf32, #tpu.memory_space<vmem>>, vector<128x128xf32>
    %cst = arith.constant dense<0.000000e+00> : vector<8x128xf32>
    %2 = tpu.matmul %0, %1, %cst {dimension_numbers = #tpu.dot_dimension_numbers<[1], [1], [0], [0], [0, 0, 1, 0], [], []>, precision = #tpu.contract_precision<fp32>} : vector<8x128xf32>, vector<128x128xf32>, vector<8x128xf32> -> vector<8x128xf32>
    %3 = vector.extract_strided_slice %2 {offsets = [0, 0], sizes = [1, 128], strides = [1, 1]} : vector<8x128xf32> to vector<1x128xf32>
    %c0_3 = arith.constant 0 : index
    %c0_4 = arith.constant 0 : index
    %4 = memref.load %arg3[%c0_3, %c0_4] : memref<1x1xf32, #tpu.memory_space<smem>>
    %5 = vector.broadcast %4 : f32 to vector<1x128xf32>
    %6 = arith.addf %3, %5 : vector<1x128xf32>
    %7 = arith.negf %6 : vector<1x128xf32>
    %8 = math.exp %7 : vector<1x128xf32>
    %cst_5 = arith.constant 1.000000e+00 : f32
    %9 = vector.broadcast %cst_5 : f32 to vector<1x128xf32>
    %10 = arith.addf %9, %8 : vector<1x128xf32>
    %11 = arith.divf %9, %10 : vector<1x128xf32>
    %c0_6 = arith.constant 0 : index
    %c0_7 = arith.constant 0 : index
    %12 = vector.load %arg4[%c0_6, %c0_7] : memref<1x128xf32, #tpu.memory_space<vmem>>, vector<1x128xf32>
    tpu.vector_store %arg4[%c0_6, %c0_7], %11 {strides = array<i32>} : memref<1x128xf32, #tpu.memory_space<vmem>>, vector<1x128xf32>,
    return
  }
  func.func @transform_0(%arg0: i32) -> (i32, i32) {
    %c0_i32 = arith.constant 0 : i32
    %c0_i32_0 = arith.constant 0 : i32
    return %arg0, %c0_i32 : i32, i32
  }
  func.func @transform_1(%arg0: i32) -> (i32, i32) {
    %c0_i32 = arith.constant 0 : i32
    %c0_i32_0 = arith.constant 0 : i32
    %c0_i32_1 = arith.constant 0 : i32
    return %c0_i32, %c0_i32_0 : i32, i32
  }
  func.func @transform_2(%arg0: i32) -> (i32, i32) {
    %c0_i32 = arith.constant 0 : i32
    %c0_i32_0 = arith.constant 0 : i32
    %c0_i32_1 = arith.constant 0 : i32
    return %c0_i32, %c0_i32_0 : i32, i32
  }
  func.func @transform_3(%arg0: i32) -> (i32, i32) {
    %c0_i32 = arith.constant 0 : i32
    %c0_i32_0 = arith.constant 0 : i32
    return %c0_i32, %arg0 : i32, i32
  }
}

module attributes {stable_mosaic.version = 11 : i64} {
  func.func @_pooled_gcn_kernel(%arg0: i32, %arg1: memref<128x1xi32, #tpu.memory_space<vmem>>, %arg2: memref<1x128xf32, #tpu.memory_space<vmem>>, %arg3: memref<256x128xf32, #tpu.memory_space<vmem>>, %arg4: memref<256x256xf32, #tpu.memory_space<vmem>>, %arg5: memref<128x128xf32, #tpu.memory_space<vmem>>, %arg6: memref<128x128xf32, #tpu.memory_space<vmem>>, %arg7: memref<128x128xf32, #tpu.memory_space<vmem>>, %arg8: memref<128x256xf32, #tpu.memory_space<vmem>>, %arg9: memref<128x128xf32, #tpu.memory_space<vmem>>, %arg10: memref<128x256xf32, #tpu.memory_space<vmem>>, %arg11: memref<128x128xf32, #tpu.memory_space<vmem>>) attributes {dimension_semantics = [#tpu.dimension_semantics<arbitrary>], iteration_bounds = array<i64: 1>, scalar_prefetch = 0 : i64, scratch_operands = 4 : i64, tpu.core_type = #tpu.core_type<tc>, window_params = [{pipeline_mode = #tpu.pipeline_mode<synchronous>, transform_indices = @transform_0, window_bounds = array<i64: 128, 1>}, {pipeline_mode = #tpu.pipeline_mode<synchronous>, transform_indices = @transform_1, window_bounds = array<i64: 1, 128>}, {pipeline_mode = #tpu.pipeline_mode<synchronous>, transform_indices = @transform_2, window_bounds = array<i64: 256, 128>}, {pipeline_mode = #tpu.pipeline_mode<synchronous>, transform_indices = @transform_3, window_bounds = array<i64: 256, 256>}, {pipeline_mode = #tpu.pipeline_mode<synchronous>, transform_indices = @transform_4, window_bounds = array<i64: 128, 128>}, {pipeline_mode = #tpu.pipeline_mode<synchronous>, transform_indices = @transform_5, window_bounds = array<i64: 128, 128>}, {pipeline_mode = #tpu.pipeline_mode<synchronous>, transform_indices = @transform_6, window_bounds = array<i64: 128, 128>}]} {
    %0 = tpu.iota {dimensions = array<i32: 1>} : vector<128x256xi32>
    %c0 = arith.constant 0 : index
    %c0_0 = arith.constant 0 : index
    %1 = vector.load %arg1[%c0, %c0_0] : memref<128x1xi32, #tpu.memory_space<vmem>>, vector<128x1xi32>
    %2 = vector.broadcast %1 : vector<128x1xi32> to vector<128x256xi32>
    %3 = arith.cmpi eq, %0, %2 : vector<128x256xi32>
    %4 = arith.extui %3 : vector<128x256xi1> to vector<128x256xi32>
    %5 = arith.sitofp %4 : vector<128x256xi32> to vector<128x256xf32>
    %c0_1 = arith.constant 0 : index
    %c0_2 = arith.constant 0 : index
    %6 = vector.load %arg8[%c0_1, %c0_2] : memref<128x256xf32, #tpu.memory_space<vmem>>, vector<128x256xf32>
    tpu.vector_store %arg8[%c0_1, %c0_2], %5 {strides = array<i32>} : memref<128x256xf32, #tpu.memory_space<vmem>>, vector<128x256xf32>,
    %c0_3 = arith.constant 0 : index
    %c0_4 = arith.constant 0 : index
    %7 = vector.load %arg8[%c0_3, %c0_4] : memref<128x256xf32, #tpu.memory_space<vmem>>, vector<128x256xf32>
    %c0_5 = arith.constant 0 : index
    %c0_6 = arith.constant 0 : index
    %8 = vector.load %arg3[%c0_5, %c0_6] : memref<256x128xf32, #tpu.memory_space<vmem>>, vector<256x128xf32>
    %cst = arith.constant dense<0.000000e+00> : vector<128x128xf32>
    %9 = tpu.matmul %7, %8, %cst {dimension_numbers = #tpu.dot_dimension_numbers<[1], [0], [0], [1], [0, 0, 1, 1], [], []>, precision = #tpu.contract_precision<fp32>} : vector<128x256xf32>, vector<256x128xf32>, vector<128x128xf32> -> vector<128x128xf32>
    %c0_7 = arith.constant 0 : index
    %c0_8 = arith.constant 0 : index
    %10 = vector.load %arg9[%c0_7, %c0_8] : memref<128x128xf32, #tpu.memory_space<vmem>>, vector<128x128xf32>
    tpu.vector_store %arg9[%c0_7, %c0_8], %9 {strides = array<i32>} : memref<128x128xf32, #tpu.memory_space<vmem>>, vector<128x128xf32>,
    %c0_9 = arith.constant 0 : index
    %c0_10 = arith.constant 0 : index
    %11 = vector.load %arg8[%c0_9, %c0_10] : memref<128x256xf32, #tpu.memory_space<vmem>>, vector<128x256xf32>
    %c0_11 = arith.constant 0 : index
    %c0_12 = arith.constant 0 : index
    %12 = vector.load %arg4[%c0_11, %c0_12] : memref<256x256xf32, #tpu.memory_space<vmem>>, vector<256x256xf32>
    %cst_13 = arith.constant dense<0.000000e+00> : vector<128x256xf32>
    %13 = tpu.matmul %11, %12, %cst_13 {dimension_numbers = #tpu.dot_dimension_numbers<[1], [0], [0], [1], [0, 0, 1, 1], [], []>, precision = #tpu.contract_precision<fp32>} : vector<128x256xf32>, vector<256x256xf32>, vector<128x256xf32> -> vector<128x256xf32>
    %c0_14 = arith.constant 0 : index
    %c0_15 = arith.constant 0 : index
    %14 = vector.load %arg10[%c0_14, %c0_15] : memref<128x256xf32, #tpu.memory_space<vmem>>, vector<128x256xf32>
    tpu.vector_store %arg10[%c0_14, %c0_15], %13 {strides = array<i32>} : memref<128x256xf32, #tpu.memory_space<vmem>>, vector<128x256xf32>,
    %c0_16 = arith.constant 0 : index
    %c0_17 = arith.constant 0 : index
    %15 = vector.load %arg10[%c0_16, %c0_17] : memref<128x256xf32, #tpu.memory_space<vmem>>, vector<128x256xf32>
    %c0_18 = arith.constant 0 : index
    %c0_19 = arith.constant 0 : index
    %16 = vector.load %arg8[%c0_18, %c0_19] : memref<128x256xf32, #tpu.memory_space<vmem>>, vector<128x256xf32>
    %cst_20 = arith.constant dense<0.000000e+00> : vector<128x128xf32>
    %17 = tpu.matmul %15, %16, %cst_20 {dimension_numbers = #tpu.dot_dimension_numbers<[1], [1], [0], [0], [0, 0, 1, 0], [], []>, precision = #tpu.contract_precision<fp32>} : vector<128x256xf32>, vector<128x256xf32>, vector<128x128xf32> -> vector<128x128xf32>
    %c0_21 = arith.constant 0 : index
    %c0_22 = arith.constant 0 : index
    %18 = vector.load %arg7[%c0_21, %c0_22] : memref<128x128xf32, #tpu.memory_space<vmem>>, vector<128x128xf32>
    tpu.vector_store %arg7[%c0_21, %c0_22], %17 {strides = array<i32>} : memref<128x128xf32, #tpu.memory_space<vmem>>, vector<128x128xf32>,
    %c0_23 = arith.constant 0 : index
    %c0_24 = arith.constant 0 : index
    %19 = vector.load %arg2[%c0_23, %c0_24] : memref<1x128xf32, #tpu.memory_space<vmem>>, vector<1x128xf32>
    %20 = vector.broadcast %19 : vector<1x128xf32> to vector<128x128xf32>
    %21 = arith.mulf %17, %20 : vector<128x128xf32>
    %c0_25 = arith.constant 0 : index
    %c0_26 = arith.constant 0 : index
    %22 = vector.load %arg9[%c0_25, %c0_26] : memref<128x128xf32, #tpu.memory_space<vmem>>, vector<128x128xf32>
    %cst_27 = arith.constant dense<0.000000e+00> : vector<128x128xf32>
    %23 = tpu.matmul %21, %22, %cst_27 {dimension_numbers = #tpu.dot_dimension_numbers<[1], [0], [0], [1], [0, 0, 1, 1], [], []>} : vector<128x128xf32>, vector<128x128xf32>, vector<128x128xf32> -> vector<128x128xf32>
    %c0_28 = arith.constant 0 : index
    %c0_29 = arith.constant 0 : index
    %24 = vector.load %arg11[%c0_28, %c0_29] : memref<128x128xf32, #tpu.memory_space<vmem>>, vector<128x128xf32>
    tpu.vector_store %arg11[%c0_28, %c0_29], %23 {strides = array<i32>} : memref<128x128xf32, #tpu.memory_space<vmem>>, vector<128x128xf32>,
    %c0_30 = arith.constant 0 : index
    %c0_31 = arith.constant 0 : index
    %25 = vector.load %arg11[%c0_30, %c0_31] : memref<128x128xf32, #tpu.memory_space<vmem>>, vector<128x128xf32>
    %c0_32 = arith.constant 0 : index
    %c0_33 = arith.constant 0 : index
    %26 = vector.load %arg5[%c0_32, %c0_33] : memref<128x128xf32, #tpu.memory_space<vmem>>, vector<128x128xf32>
    %cst_34 = arith.constant dense<0.000000e+00> : vector<128x128xf32>
    %27 = tpu.matmul %25, %26, %cst_34 {dimension_numbers = #tpu.dot_dimension_numbers<[1], [0], [0], [1], [0, 0, 1, 1], [], []>} : vector<128x128xf32>, vector<128x128xf32>, vector<128x128xf32> -> vector<128x128xf32>
    %cst_35 = arith.constant 0.000000e+00 : f32
    %28 = vector.broadcast %cst_35 : f32 to vector<128x128xf32>
    %29 = arith.maximumf %27, %28 : vector<128x128xf32>
    %c0_36 = arith.constant 0 : index
    %c0_37 = arith.constant 0 : index
    %30 = vector.load %arg6[%c0_36, %c0_37] : memref<128x128xf32, #tpu.memory_space<vmem>>, vector<128x128xf32>
    tpu.vector_store %arg6[%c0_36, %c0_37], %29 {strides = array<i32>} : memref<128x128xf32, #tpu.memory_space<vmem>>, vector<128x128xf32>,
    return
  }
  func.func @transform_0(%arg0: i32) -> (i32, i32) {
    %c0_i32 = arith.constant 0 : i32
    %c0_i32_0 = arith.constant 0 : i32
    %c0_i32_1 = arith.constant 0 : i32
    return %c0_i32, %c0_i32_0 : i32, i32
  }
  func.func @transform_1(%arg0: i32) -> (i32, i32) {
    %c0_i32 = arith.constant 0 : i32
    %c0_i32_0 = arith.constant 0 : i32
    %c0_i32_1 = arith.constant 0 : i32
    return %c0_i32, %c0_i32_0 : i32, i32
  }
  func.func @transform_2(%arg0: i32) -> (i32, i32) {
    %c0_i32 = arith.constant 0 : i32
    %c0_i32_0 = arith.constant 0 : i32
    %c0_i32_1 = arith.constant 0 : i32
    return %c0_i32, %c0_i32_0 : i32, i32
  }
  func.func @transform_3(%arg0: i32) -> (i32, i32) {
    %c0_i32 = arith.constant 0 : i32
    %c0_i32_0 = arith.constant 0 : i32
    %c0_i32_1 = arith.constant 0 : i32
    return %c0_i32, %c0_i32_0 : i32, i32
  }
  func.func @transform_4(%arg0: i32) -> (i32, i32) {
    %c0_i32 = arith.constant 0 : i32
    %c0_i32_0 = arith.constant 0 : i32
    %c0_i32_1 = arith.constant 0 : i32
    return %c0_i32, %c0_i32_0 : i32, i32
  }
  func.func @transform_5(%arg0: i32) -> (i32, i32) {
    %c0_i32 = arith.constant 0 : i32
    %c0_i32_0 = arith.constant 0 : i32
    %c0_i32_1 = arith.constant 0 : i32
    return %c0_i32, %c0_i32_0 : i32, i32
  }
  func.func @transform_6(%arg0: i32) -> (i32, i32) {
    %c0_i32 = arith.constant 0 : i32
    %c0_i32_0 = arith.constant 0 : i32
    %c0_i32_1 = arith.constant 0 : i32
    return %c0_i32, %c0_i32_0 : i32, i32
  }
}

</mosaic_0001>

<llo_original>
// kernel: gpool_block_forward.2
$region0: #{gpool_block_forward.2}
  #allocation0 [shape = 'u32[]', space=smem, size = 0x4, offset = 0x4, fixed_abs, tag = 'smem constant byte address 0x4 - core index']
  #allocation1 [shape = 'u32[144,128]{1,0:T(1,128)}', space=vmem, size = 0x12000, scoped, tag = 'internal scratch']
  #allocation2 [shape = 'f32[1,1]{1,0:T(1,128)S(6)}', space=smem, size = 0x200, scoped, tag = 'scoped memory for gpool_block_forward.2']
  %s0 = inlined_call_operand.hbm [shape: f32[256,128], index: 0, kind: input, shape index: {}]
  %s1 = inlined_call_operand.vmem [shape: f32[8,128], index: 1, kind: input, shape index: {}]
  %s2 = inlined_call_operand.<no memory space> [shape: f32[1,1], index: 2, kind: input, shape index: {}]
  %s3 = inlined_call_operand.vmem [shape: f32[1,256], index: 3, kind: output, shape index: {}]
  %s4 = sld [smem:[#allocation0]]
  $region49: #{gpool_block_forward.2} parent=0
    _
  %s6 = ssub.s32 1, %s4
  %s7 = scalar_select 0, %s6, %s4
  %8 = sst [smem:[#allocation2]] %s2
  $region1: #{gpool_block_forward.2} parent=0
    #allocation3 [shape = 'u8[131072]{0}', space=vmem, size = 0x20000, scoped, tag = 'input window, operand 0']
    #allocation4 [shape = 's32[2]{0}', space=sflag, size = 0x8, scoped, tag = 'scoped memory for gpool_block_forward.2']
    %9 = vsyncpa [#allocation4], 0
    %s10 = scalar_lea.sflag [#allocation4], 1
    %11 = vsyncpa %s10, 0
    loop: start=0, step=1, limit=4
    $region2: #{gpool_block_forward.2} parent=1 // loop_pre_header
      _
    $region3: #{gpool_block_forward.2} parent=1 // loop_header
      %s13 = sphi 0, %s17
      %p14 = scmp.ge.s32.totalorder %s13, 4
      %s23 = sphi 0, %s25
      %s26 = sphi 0, %s23
      %s27 = sphi 0, %s26
      %s43 = sphi 0, %s27
      %s47 = sphi 0, %s47
      %s49 = sphi 0, %s47
      %s50 = sphi 0, %s49
      %s64 = sphi 0, %s50
      %s68 = sphi 0, %s68
      %s70 = sphi 0, %s68
      %s71 = sphi 0, %s70
      %s85 = sphi 0, %s71
      %s91 = sphi 0, %s93
      %s94 = sphi 0, %s91
      %s95 = sphi 0, %s94
      %s111 = sphi 0, %s95
    $region4: #{gpool_block_forward.2} parent=1 // loop_header_branch
      %16 = sbr.rel (%p14) target = $region8
    $region5: #{gpool_block_forward.2} parent=1 // loop_body
      %s18 = ssub.s32 %s13, 1
      %s19 = ssub.s32 %s13, 2
      %s20 = sadd.s32 %s13, 1
      %s21 = ssub.s32 %s13, %s20
      %p22 = scmp.eq.s32.totalorder %s21, 0
      %s24 = sadd.s32 %s23, 1
      %s25 = scalar_select %p22, %s23, %s24
      %p28 = pneg %p22
      %p29 = scmp.eq.s32.totalorder %s13, 1
      %p30 = por %p28, %p29
      %p31 = scmp.ne.s32.totalorder %s23, %s26
      %p32 = scmp.eq.s32.totalorder %s13, 0
      %p33 = por %p31, %p32
      %p34 = scmp.ne.s32.totalorder %s23, %s26
      %p35 = scmp.eq.s32.totalorder %s18, 1
      %p36 = por %p34, %p35
      %p37 = scmp.ne.s32.totalorder %s26, %s27
      %p38 = scmp.eq.s32.totalorder %s18, 0
      %p39 = por %p37, %p38
      %p40 = scmp.ne.s32.totalorder %s26, %s27
      %p41 = scmp.eq.s32.totalorder %s19, 1
      %p42 = por %p40, %p41
      %p44 = scmp.ne.s32.totalorder %s27, %s43
      %p45 = scmp.eq.s32.totalorder %s19, 0
      %p46 = por %p44, %p45
      %s48 = sadd.s32 %s47, 1
      %p51 = scmp.eq.s32.totalorder %s13, 1
      %p52 = scmp.ne.s32.totalorder %s47, %s49
      %p53 = scmp.eq.s32.totalorder %s13, 0
      %p54 = por %p52, %p53
      %p55 = scmp.ne.s32.totalorder %s47, %s49
      %p56 = scmp.eq.s32.totalorder %s18, 1
      %p57 = por %p55, %p56
      %p58 = scmp.ne.s32.totalorder %s49, %s50
      %p59 = scmp.eq.s32.totalorder %s18, 0
      %p60 = por %p58, %p59
      %p61 = scmp.ne.s32.totalorder %s49, %s50
      %p62 = scmp.eq.s32.totalorder %s19, 1
      %p63 = por %p61, %p62
      %p65 = scmp.ne.s32.totalorder %s50, %s64
      %p66 = scmp.eq.s32.totalorder %s19, 0
      %p67 = por %p65, %p66
      %s69 = sadd.s32 %s68, 1
      %p72 = scmp.eq.s32.totalorder %s13, 1
      %p73 = scmp.ne.s32.totalorder %s68, %s70
      %p74 = scmp.eq.s32.totalorder %s13, 0
      %p75 = por %p73, %p74
      %p76 = scmp.ne.s32.totalorder %s68, %s70
      %p77 = scmp.eq.s32.totalorder %s18, 1
      %p78 = por %p76, %p77
      %p79 = scmp.ne.s32.totalorder %s70, %s71
      %p80 = scmp.eq.s32.totalorder %s18, 0
      %p81 = por %p79, %p80
      %p82 = scmp.ne.s32.totalorder %s70, %s71
      %p83 = scmp.eq.s32.totalorder %s19, 1
      %p84 = por %p82, %p83
      %p86 = scmp.ne.s32.totalorder %s71, %s85
      %p87 = scmp.eq.s32.totalorder %s19, 0
      %p88 = por %p86, %p87
      %s89 = ssub.s32 %s13, %s20
      %p90 = scmp.eq.s32.totalorder %s89, 0
      %s92 = sadd.s32 %s91, 1
      %s93 = scalar_select %p90, %s91, %s92
      %p96 = pneg %p90
      %p97 = scmp.eq.s32.totalorder %s13, 1
      %p98 = por %p96, %p97
      %p99 = scmp.ne.s32.totalorder %s91, %s94
      %p100 = scmp.eq.s32.totalorder %s13, 0
      %p101 = por %p99, %p100
      %p102 = scmp.ne.s32.totalorder %s91, %s94
      %p103 = scmp.eq.s32.totalorder %s18, 1
      %p104 = por %p102, %p103
      %p105 = scmp.ne.s32.totalorder %s94, %s95
      %p106 = scmp.eq.s32.totalorder %s18, 0
      %p107 = por %p105, %p106
      %p108 = scmp.ne.s32.totalorder %s94, %s95
      %p109 = scmp.eq.s32.totalorder %s19, 1
      %p110 = por %p108, %p109
      %p112 = scmp.ne.s32.totalorder %s95, %s111
      %p113 = scmp.eq.s32.totalorder %s19, 0
      %p114 = por %p112, %p113
      %p115 = scmp.le.s32.totalorder 1, %s13
      %p116 = scmp.lt.s32.totalorder %s13, 3
      %p117 = pnand %p115, %p116
      %p118 = pneg %p117
      // Predicated region
      $region9: #{gpool_block_forward.2} parent=5 // pred_check
        _
      $region10: #{gpool_block_forward.2} parent=5 // pred_check_branch
        %120 = sbr.rel (%p117) target = $region12
      $region11: #{gpool_block_forward.2} parent=5 // pred_region
        %s121 = ssub.s32 %s13, 1
        // Predicated region
        $region13: #{gpool_block_forward.2} parent=11 // pred_check
          %p122 = pneg %p60
        $region14: #{gpool_block_forward.2} parent=11 // pred_check_branch
          %124 = sbr.rel (%p122) target = $region16
        $region15: #{gpool_block_forward.2} parent=11 // pred_region
          _
        $region16: #{gpool_block_forward.2} parent=11 // pred_fallthru
          _
        // Predicated region
        $region17: #{gpool_block_forward.2} parent=11 // pred_check
          %p125 = pneg %p81
        $region18: #{gpool_block_forward.2} parent=11 // pred_check_branch
          %127 = sbr.rel (%p125) target = $region20
        $region19: #{gpool_block_forward.2} parent=11 // pred_region
          _
        $region20: #{gpool_block_forward.2} parent=11 // pred_fallthru
          _
      $region12: #{gpool_block_forward.2} parent=5 // pred_fallthru
        _
      %p128 = scmp.lt.s32.totalorder %s13, 2
      // Predicated region
      $region21: #{gpool_block_forward.2} parent=5 // pred_check
        %p129 = pneg %p128
      $region22: #{gpool_block_forward.2} parent=5 // pred_check_branch
        %131 = sbr.rel (%p129) target = $region24
      $region23: #{gpool_block_forward.2} parent=5 // pred_region
        // Predicated region
        $region25: #{gpool_block_forward.2} parent=23 // pred_check
          %p132 = pneg %p33
        $region26: #{gpool_block_forward.2} parent=23 // pred_check_branch
          %134 = sbr.rel (%p132) target = $region28
        $region27: #{gpool_block_forward.2} parent=23 // pred_region
          %s135 = sand.u32 %s23, 1
          %s136 = scalar_lea.sflag [#allocation4], %s135
          %s137 = sand.u32 %s23, 1
          %s138 = smul.addr %s137, 128
          %s139 = scalar_lea.vmem [#allocation3], %s138
          %s140 = smul.u32 16, %s13
          %s142 = ssub.s32 2048, 2048
          %143 = vsyncadd %s136, %s142
          %s144 = smul.addr %s140, 128
          %s145 = scalar_lea.hbm %s0, %s144
          %s146 = sshll.u32 %s139, 4
          %s147 = int_to_ptr.vmem [resolvable:$true] %s146
          %152 = dma.hbm_to_vmem [thread:$0]  %s145, 2048, %s147, %s136, 128, 128, 8
        $region28: #{gpool_block_forward.2} parent=23 // pred_fallthru
          _
      $region24: #{gpool_block_forward.2} parent=5 // pred_fallthru
        _
      %p153 = scmp.le.s32.totalorder 1, %s13
      %p154 = scmp.lt.s32.totalorder %s13, 3
      %p155 = pnand %p153, %p154
      %p156 = pneg %p155
      // Predicated region
      $region29: #{gpool_block_forward.2} parent=5 // pred_check
        _
      $region30: #{gpool_block_forward.2} parent=5 // pred_check_branch
        %158 = sbr.rel (%p155) target = $region32
      $region31: #{gpool_block_forward.2} parent=5 // pred_region
        %s159 = ssub.s32 %s13, 1
        %s160 = sand.u32 %s26, 1
        %s161 = scalar_lea.sflag [#allocation4], %s160
        %s162 = sand.u32 %s26, 1
        %s163 = smul.addr %s162, 128
        %s164 = scalar_lea.vmem [#allocation3], %s163
        // Predicated region
        $region33: #{gpool_block_forward.2} parent=31 // pred_check
          %p165 = pneg %p39
        $region34: #{gpool_block_forward.2} parent=31 // pred_check_branch
          %167 = sbr.rel (%p165) target = $region36
        $region35: #{gpool_block_forward.2} parent=31 // pred_region
          %168 = dma.done %s161, 2048
        $region36: #{gpool_block_forward.2} parent=31 // pred_fallthru
          _
        %s169 = sand.u32 %s26, 1
        %s170 = scalar_lea.sflag [#allocation4], %s169
        %s171 = sand.u32 %s26, 1
        %s172 = smul.addr %s171, 128
        %s173 = scalar_lea.vmem [#allocation3], %s172
        %p174 = pneg %p39
        %p175 = pneg %p36
        %p176 = pneg %p60
        %p177 = pneg %p57
        %p178 = pneg %p81
        %p179 = pneg %p78
        %p180 = pneg %p107
        %p181 = pneg %p104
        %p182 = scmp.lt.s32.totalorder %s18, 1
        %s183 = scalar_select %p182, %s18, 1
        %s184 = scalar_lea.vmem %s3, %s183
        %s185 = smul.u32 16, %s18
        %p186 = scmp.lt.s32.totalorder %s18, 1
        %s187 = scalar_select %p186, %s18, 1
        %s188 = scalar_lea.vmem %s3, %s187
        %v189 = vld [vmem:[%s1] sm:$0xff]
        %v190 = vld [vmem:[%s164] sm:$0xff]
        %v191 = vld [vmem:[%s164 + $0x8] sm:$0xff]
        %v192 = vld [vmem:[%s164 + $0x10] sm:$0xff]
        %v193 = vld [vmem:[%s164 + $0x18] sm:$0xff]
        %v194 = vld [vmem:[%s164 + $0x20] sm:$0xff]
        %v195 = vld [vmem:[%s164 + $0x28] sm:$0xff]
        %v196 = vld [vmem:[%s164 + $0x30] sm:$0xff]
        %v197 = vld [vmem:[%s164 + $0x38] sm:$0xff]
        %v198 = vld [vmem:[%s164 + $0x40] sm:$0xff]
        %v199 = vld [vmem:[%s164 + $0x48] sm:$0xff]
        %v200 = vld [vmem:[%s164 + $0x50] sm:$0xff]
        %v201 = vld [vmem:[%s164 + $0x58] sm:$0xff]
        %v202 = vld [vmem:[%s164 + $0x60] sm:$0xff]
        %v203 = vld [vmem:[%s164 + $0x68] sm:$0xff]
        %v204 = vld [vmem:[%s164 + $0x70] sm:$0xff]
        %v205 = vld [vmem:[%s164 + $0x78] sm:$0xff]
        %206 = vmatprep.subr.mxu0 0.0
        %v207 = vand.u32 %v190, 4294901760
        %208 = vmatpush1.xpose.msra.mxu0 %v207
        %209 = vmatprep.subr.mxu0 0.0
        %v210 = vand.u32 %v191, 4294901760
        %211 = vmatpush1.xpose.msra.mxu0 %v210
        %212 = vmatprep.subr.mxu0 0.0
        %v213 = vand.u32 %v192, 4294901760
        %214 = vmatpush1.xpose.msra.mxu0 %v213
        %215 = vmatprep.subr.mxu0 0.0
        %v216 = vand.u32 %v193, 4294901760
        %217 = vmatpush1.xpose.msra.mxu0 %v216
        %218 = vmatprep.subr.mxu0 0.0
        %v219 = vand.u32 %v194, 4294901760
        %220 = vmatpush1.xpose.msra.mxu0 %v219
        %221 = vmatprep.subr.mxu0 0.0
        %v222 = vand.u32 %v195, 4294901760
        %223 = vmatpush1.xpose.msra.mxu0 %v222
        %224 = vmatprep.subr.mxu0 0.0
        %v225 = vand.u32 %v196, 4294901760
        %226 = vmatpush1.xpose.msra.mxu0 %v225
        %227 = vmatprep.subr.mxu0 0.0
        %v228 = vand.u32 %v197, 4294901760
        %229 = vmatpush1.xpose.msra.mxu0 %v228
        %230 = vmatprep.subr.mxu0 0.0
        %v231 = vand.u32 %v198, 4294901760
        %232 = vmatpush1.xpose.msra.mxu0 %v231
        %233 = vmatprep.subr.mxu0 0.0
        %v234 = vand.u32 %v199, 4294901760
        %235 = vmatpush1.xpose.msra.mxu0 %v234
        %236 = vmatprep.subr.mxu0 0.0
        %v237 = vand.u32 %v200, 4294901760
        %238 = vmatpush1.xpose.msra.mxu0 %v237
        %239 = vmatprep.subr.mxu0 0.0
        %v240 = vand.u32 %v201, 4294901760
        %241 = vmatpush1.xpose.msra.mxu0 %v240
        %242 = vmatprep.subr.mxu0 0.0
        %v243 = vand.u32 %v202, 4294901760
        %244 = vmatpush1.xpose.msra.mxu0 %v243
        %245 = vmatprep.subr.mxu0 0.0
        %v246 = vand.u32 %v203, 4294901760
        %247 = vmatpush1.xpose.msra.mxu0 %v246
        %248 = vmatprep.subr.mxu0 0.0
        %v249 = vand.u32 %v204, 4294901760
        %250 = vmatpush1.xpose.msra.mxu0 %v249
        %251 = vmatprep.subr.mxu0 0.0
        %v252 = vand.u32 %v205, 4294901760
        %253 = vmatpush1.xpose.msra.mxu0 %v252
        %254 = vmatprep.subr.mxu0 0.0
        %255 = vmatpush1.xpose.msra.mxu0 0.0
        %256 = vmatprep.subr.mxu0 0.0
        %257 = vmatpush1.xpose.msra.mxu0 0.0
        %258 = vmatprep.subr.mxu0 0.0
        %259 = vmatpush1.xpose.msra.mxu0 0.0
        %260 = vmatprep.subr.mxu0 0.0
        %261 = vmatpush1.xpose.msra.mxu0 0.0
        %262 = vmatprep.subr.mxu0 0.0
        %263 = vmatpush1.xpose.msra.mxu0 0.0
        %264 = vmatprep.subr.mxu0 0.0
        %265 = vmatpush1.xpose.msra.mxu0 0.0
        %266 = vmatprep.subr.mxu0 0.0
        %267 = vmatpush1.xpose.msra.mxu0 0.0
        %268 = vmatprep.subr.mxu0 0.0
        %269 = vmatpush1.xpose.msra.mxu0 0.0
        %270 = vmatprep.subr.mxu0 0.0
        %271 = vmatpush1.xpose.msra.mxu0 0.0
        %272 = vmatprep.subr.mxu0 0.0
        %273 = vmatpush1.xpose.msra.mxu0 0.0
        %274 = vmatprep.subr.mxu0 0.0
        %275 = vmatpush1.xpose.msra.mxu0 0.0
        %276 = vmatprep.subr.mxu0 0.0
        %277 = vmatpush1.xpose.msra.mxu0 0.0
        %278 = vmatprep.subr.mxu0 0.0
        %279 = vmatpush1.xpose.msra.mxu0 0.0
        %280 = vmatprep.subr.mxu0 0.0
        %281 = vmatpush1.xpose.msra.mxu0 0.0
        %282 = vmatprep.subr.mxu0 0.0
        %283 = vmatpush1.xpose.msra.mxu0 0.0
        %284 = vmatprep.subr.mxu0 0.0
        %285 = vmatpush1.xpose.msra.mxu0 0.0
        %286 = vmatprep.mubr.f32.mxu0 0.0
        %v287 = vand.u32 %v189, 4294901760
        %v288 = vsub.f32 %v189, %v287
        %v289 = vand.u32 %v288, 4294901760
        %v290 = vsub.f32 %v288, %v289
        %v291 = vand.u32 %v290, 4294901760
        %292 = vmatmul.mubr.f32.gmra.mrb[0].mxu0 %v291
        %v293 = vpop.f32.mrb[0].mxu0
        %v294 = vadd.f32 0.0, %v293
        %v295 = vpop.f32.mrb[0].mxu0
        %296 = vdwg.mxu0
        %297 = vmatprep.subr.mxu0 0.0
        %v298 = vand.u32 %v190, 4294901760
        %v299 = vsub.f32 %v190, %v298
        %v300 = vand.u32 %v299, 4294901760
        %v301 = vsub.f32 %v299, %v300
        %v302 = vand.u32 %v301, 4294901760
        %303 = vmatpush1.xpose.msra.mxu0 %v302
        %304 = vmatprep.subr.mxu0 0.0
        %v305 = vand.u32 %v191, 4294901760
        %v306 = vsub.f32 %v191, %v305
        %v307 = vand.u32 %v306, 4294901760
        %v308 = vsub.f32 %v306, %v307
        %v309 = vand.u32 %v308, 4294901760
        %310 = vmatpush1.xpose.msra.mxu0 %v309
        %311 = vmatprep.subr.mxu0 0.0
        %v312 = vand.u32 %v192, 4294901760
        %v313 = vsub.f32 %v192, %v312
        %v314 = vand.u32 %v313, 4294901760
        %v315 = vsub.f32 %v313, %v314
        %v316 = vand.u32 %v315, 4294901760
        %317 = vmatpush1.xpose.msra.mxu0 %v316
        %318 = vmatprep.subr.mxu0 0.0
        %v319 = vand.u32 %v193, 4294901760
        %v320 = vsub.f32 %v193, %v319
        %v321 = vand.u32 %v320, 4294901760
        %v322 = vsub.f32 %v320, %v321
        %v323 = vand.u32 %v322, 4294901760
        %324 = vmatpush1.xpose.msra.mxu0 %v323
        %325 = vmatprep.subr.mxu0 0.0
        %v326 = vand.u32 %v194, 4294901760
        %v327 = vsub.f32 %v194, %v326
        %v328 = vand.u32 %v327, 4294901760
        %v329 = vsub.f32 %v327, %v328
        %v330 = vand.u32 %v329, 4294901760
        %331 = vmatpush1.xpose.msra.mxu0 %v330
        %332 = vmatprep.subr.mxu0 0.0
        %v333 = vand.u32 %v195, 4294901760
        %v334 = vsub.f32 %v195, %v333
        %v335 = vand.u32 %v334, 4294901760
        %v336 = vsub.f32 %v334, %v335
        %v337 = vand.u32 %v336, 4294901760
        %338 = vmatpush1.xpose.msra.mxu0 %v337
        %339 = vmatprep.subr.mxu0 0.0
        %v340 = vand.u32 %v196, 4294901760
        %v341 = vsub.f32 %v196, %v340
        %v342 = vand.u32 %v341, 4294901760
        %v343 = vsub.f32 %v341, %v342
        %v344 = vand.u32 %v343, 4294901760
        %345 = vmatpush1.xpose.msra.mxu0 %v344
        %346 = vmatprep.subr.mxu0 0.0
        %v347 = vand.u32 %v197, 4294901760
        %v348 = vsub.f32 %v197, %v347
        %v349 = vand.u32 %v348, 4294901760
        %v350 = vsub.f32 %v348, %v349
        %v351 = vand.u32 %v350, 4294901760
        %352 = vmatpush1.xpose.msra.mxu0 %v351
        %353 = vmatprep.subr.mxu0 0.0
        %v354 = vand.u32 %v198, 4294901760
        %v355 = vsub.f32 %v198, %v354
        %v356 = vand.u32 %v355, 4294901760
        %v357 = vsub.f32 %v355, %v356
        %v358 = vand.u32 %v357, 4294901760
        %359 = vmatpush1.xpose.msra.mxu0 %v358
        %360 = vmatprep.subr.mxu0 0.0
        %v361 = vand.u32 %v199, 4294901760
        %v362 = vsub.f32 %v199, %v361
        %v363 = vand.u32 %v362, 4294901760
        %v364 = vsub.f32 %v362, %v363
        %v365 = vand.u32 %v364, 4294901760
        %366 = vmatpush1.xpose.msra.mxu0 %v365
        %367 = vmatprep.subr.mxu0 0.0
        %v368 = vand.u32 %v200, 4294901760
        %v369 = vsub.f32 %v200, %v368
        %v370 = vand.u32 %v369, 4294901760
        %v371 = vsub.f32 %v369, %v370
        %v372 = vand.u32 %v371, 4294901760
        %373 = vmatpush1.xpose.msra.mxu0 %v372
        %374 = vmatprep.subr.mxu0 0.0
        %v375 = vand.u32 %v201, 4294901760
        %v376 = vsub.f32 %v201, %v375
        %v377 = vand.u32 %v376, 4294901760
        %v378 = vsub.f32 %v376, %v377
        %v379 = vand.u32 %v378, 4294901760
        %380 = vmatpush1.xpose.msra.mxu0 %v379
        %381 = vmatprep.subr.mxu0 0.0
        %v382 = vand.u32 %v202, 4294901760
        %v383 = vsub.f32 %v202, %v382
        %v384 = vand.u32 %v383, 4294901760
        %v385 = vsub.f32 %v383, %v384
        %v386 = vand.u32 %v385, 4294901760
        %387 = vmatpush1.xpose.msra.mxu0 %v386
        %388 = vmatprep.subr.mxu0 0.0
        %v389 = vand.u32 %v203, 4294901760
        %v390 = vsub.f32 %v203, %v389
        %v391 = vand.u32 %v390, 4294901760
        %v392 = vsub.f32 %v390, %v391
        %v393 = vand.u32 %v392, 4294901760
        %394 = vmatpush1.xpose.msra.mxu0 %v393
        %395 = vmatprep.subr.mxu0 0.0
        %v396 = vand.u32 %v204, 4294901760
        %v397 = vsub.f32 %v204, %v396
        %v398 = vand.u32 %v397, 4294901760
        %v399 = vsub.f32 %v397, %v398
        %v400 = vand.u32 %v399, 4294901760
        %401 = vmatpush1.xpose.msra.mxu0 %v400
        %402 = vmatprep.subr.mxu0 0.0
        %v403 = vand.u32 %v205, 4294901760
        %v404 = vsub.f32 %v205, %v403
        %v405 = vand.u32 %v404, 4294901760
        %v406 = vsub.f32 %v404, %v405
        %v407 = vand.u32 %v406, 4294901760
        %408 = vmatpush1.xpose.msra.mxu0 %v407
        %409 = vmatprep.subr.mxu0 0.0
        %410 = vmatpush1.xpose.msra.mxu0 0.0
        %411 = vmatprep.subr.mxu0 0.0
        %412 = vmatpush1.xpose.msra.mxu0 0.0
        %413 = vmatprep.subr.mxu0 0.0
        %414 = vmatpush1.xpose.msra.mxu0 0.0
        %415 = vmatprep.subr.mxu0 0.0
        %416 = vmatpush1.xpose.msra.mxu0 0.0
        %417 = vmatprep.subr.mxu0 0.0
        %418 = vmatpush1.xpose.msra.mxu0 0.0
        %419 = vmatprep.subr.mxu0 0.0
        %420 = vmatpush1.xpose.msra.mxu0 0.0
        %421 = vmatprep.subr.mxu0 0.0
        %422 = vmatpush1.xpose.msra.mxu0 0.0
        %423 = vmatprep.subr.mxu0 0.0
        %424 = vmatpush1.xpose.msra.mxu0 0.0
        %425 = vmatprep.subr.mxu0 0.0
        %426 = vmatpush1.xpose.msra.mxu0 0.0
        %427 = vmatprep.subr.mxu0 0.0
        %428 = vmatpush1.xpose.msra.mxu0 0.0
        %429 = vmatprep.subr.mxu0 0.0
        %430 = vmatpush1.xpose.msra.mxu0 0.0
        %431 = vmatprep.subr.mxu0 0.0
        %432 = vmatpush1.xpose.msra.mxu0 0.0
        %433 = vmatprep.subr.mxu0 0.0
        %434 = vmatpush1.xpose.msra.mxu0 0.0
        %435 = vmatprep.subr.mxu0 0.0
        %436 = vmatpush1.xpose.msra.mxu0 0.0
        %437 = vmatprep.subr.mxu0 0.0
        %438 = vmatpush1.xpose.msra.mxu0 0.0
        %439 = vmatprep.subr.mxu0 0.0
        %440 = vmatpush1.xpose.msra.mxu0 0.0
        %441 = vmatprep.mubr.f32.mxu0 0.0
        %v442 = vand.u32 %v189, 4294901760
        %443 = vmatmul.mubr.f32.gmra.mrb[0].mxu0 %v442
        %v444 = vpop.f32.mrb[0].mxu0
        %v445 = vadd.f32 %v294, %v444
        %v446 = vpop.f32.mrb[0].mxu0
        %447 = vdwg.mxu0
        %448 = vmatprep.subr.mxu0 0.0
        %v449 = vand.u32 %v190, 4294901760
        %v450 = vsub.f32 %v190, %v449
        %451 = vmatpush1.xpose.msra.mxu0 %v450
        %452 = vmatprep.subr.mxu0 0.0
        %v453 = vand.u32 %v191, 4294901760
        %v454 = vsub.f32 %v191, %v453
        %455 = vmatpush1.xpose.msra.mxu0 %v454
        %456 = vmatprep.subr.mxu0 0.0
        %v457 = vand.u32 %v192, 4294901760
        %v458 = vsub.f32 %v192, %v457
        %459 = vmatpush1.xpose.msra.mxu0 %v458
        %460 = vmatprep.subr.mxu0 0.0
        %v461 = vand.u32 %v193, 4294901760
        %v462 = vsub.f32 %v193, %v461
        %463 = vmatpush1.xpose.msra.mxu0 %v462
        %464 = vmatprep.subr.mxu0 0.0
        %v465 = vand.u32 %v194, 4294901760
        %v466 = vsub.f32 %v194, %v465
        %467 = vmatpush1.xpose.msra.mxu0 %v466
        %468 = vmatprep.subr.mxu0 0.0
        %v469 = vand.u32 %v195, 4294901760
        %v470 = vsub.f32 %v195, %v469
        %471 = vmatpush1.xpose.msra.mxu0 %v470
        %472 = vmatprep.subr.mxu0 0.0
        %v473 = vand.u32 %v196, 4294901760
        %v474 = vsub.f32 %v196, %v473
        %475 = vmatpush1.xpose.msra.mxu0 %v474
        %476 = vmatprep.subr.mxu0 0.0
        %v477 = vand.u32 %v197, 4294901760
        %v478 = vsub.f32 %v197, %v477
        %479 = vmatpush1.xpose.msra.mxu0 %v478
        %480 = vmatprep.subr.mxu0 0.0
        %v481 = vand.u32 %v198, 4294901760
        %v482 = vsub.f32 %v198, %v481
        %483 = vmatpush1.xpose.msra.mxu0 %v482
        %484 = vmatprep.subr.mxu0 0.0
        %v485 = vand.u32 %v199, 4294901760
        %v486 = vsub.f32 %v199, %v485
        %487 = vmatpush1.xpose.msra.mxu0 %v486
        %488 = vmatprep.subr.mxu0 0.0
        %v489 = vand.u32 %v200, 4294901760
        %v490 = vsub.f32 %v200, %v489
        %491 = vmatpush1.xpose.msra.mxu0 %v490
        %492 = vmatprep.subr.mxu0 0.0
        %v493 = vand.u32 %v201, 4294901760
        %v494 = vsub.f32 %v201, %v493
        %495 = vmatpush1.xpose.msra.mxu0 %v494
        %496 = vmatprep.subr.mxu0 0.0
        %v497 = vand.u32 %v202, 4294901760
        %v498 = vsub.f32 %v202, %v497
        %499 = vmatpush1.xpose.msra.mxu0 %v498
        %500 = vmatprep.subr.mxu0 0.0
        %v501 = vand.u32 %v203, 4294901760
        %v502 = vsub.f32 %v203, %v501
        %503 = vmatpush1.xpose.msra.mxu0 %v502
        %504 = vmatprep.subr.mxu0 0.0
        %v505 = vand.u32 %v204, 4294901760
        %v506 = vsub.f32 %v204, %v505
        %507 = vmatpush1.xpose.msra.mxu0 %v506
        %508 = vmatprep.subr.mxu0 0.0
        %v509 = vand.u32 %v205, 4294901760
        %v510 = vsub.f32 %v205, %v509
        %511 = vmatpush1.xpose.msra.mxu0 %v510
        %512 = vmatprep.subr.mxu0 0.0
        %513 = vmatpush1.xpose.msra.mxu0 0.0
        %514 = vmatprep.subr.mxu0 0.0
        %515 = vmatpush1.xpose.msra.mxu0 0.0
        %516 = vmatprep.subr.mxu0 0.0
        %517 = vmatpush1.xpose.msra.mxu0 0.0
        %518 = vmatprep.subr.mxu0 0.0
        %519 = vmatpush1.xpose.msra.mxu0 0.0
        %520 = vmatprep.subr.mxu0 0.0
        %521 = vmatpush1.xpose.msra.mxu0 0.0
        %522 = vmatprep.subr.mxu0 0.0
        %523 = vmatpush1.xpose.msra.mxu0 0.0
        %524 = vmatprep.subr.mxu0 0.0
        %525 = vmatpush1.xpose.msra.mxu0 0.0
        %526 = vmatprep.subr.mxu0 0.0
        %527 = vmatpush1.xpose.msra.mxu0 0.0
        %528 = vmatprep.subr.mxu0 0.0
        %529 = vmatpush1.xpose.msra.mxu0 0.0
        %530 = vmatprep.subr.mxu0 0.0
        %531 = vmatpush1.xpose.msra.mxu0 0.0
        %532 = vmatprep.subr.mxu0 0.0
        %533 = vmatpush1.xpose.msra.mxu0 0.0
        %534 = vmatprep.subr.mxu0 0.0
        %535 = vmatpush1.xpose.msra.mxu0 0.0
        %536 = vmatprep.subr.mxu0 0.0
        %537 = vmatpush1.xpose.msra.mxu0 0.0
        %538 = vmatprep.subr.mxu0 0.0
        %539 = vmatpush1.xpose.msra.mxu0 0.0
        %540 = vmatprep.subr.mxu0 0.0
        %541 = vmatpush1.xpose.msra.mxu0 0.0
        %542 = vmatprep.subr.mxu0 0.0
        %543 = vmatpush1.xpose.msra.mxu0 0.0
        %544 = vmatprep.mubr.f32.mxu0 0.0
        %v545 = vand.u32 %v189, 4294901760
        %v546 = vsub.f32 %v189, %v545
        %547 = vmatmul.mubr.f32.gmra.mrb[0].mxu0 %v546
        %v548 = vpop.f32.mrb[0].mxu0
        %v549 = vadd.f32 %v445, %v548
        %v550 = vpop.f32.mrb[0].mxu0
        %551 = vdwg.mxu0
        %552 = vmatprep.subr.mxu0 0.0
        %v553 = vand.u32 %v190, 4294901760
        %554 = vmatpush1.xpose.msra.mxu0 %v553
        %555 = vmatprep.subr.mxu0 0.0
        %v556 = vand.u32 %v191, 4294901760
        %557 = vmatpush1.xpose.msra.mxu0 %v556
        %558 = vmatprep.subr.mxu0 0.0
        %v559 = vand.u32 %v192, 4294901760
        %560 = vmatpush1.xpose.msra.mxu0 %v559
        %561 = vmatprep.subr.mxu0 0.0
        %v562 = vand.u32 %v193, 4294901760
        %563 = vmatpush1.xpose.msra.mxu0 %v562
        %564 = vmatprep.subr.mxu0 0.0
        %v565 = vand.u32 %v194, 4294901760
        %566 = vmatpush1.xpose.msra.mxu0 %v565
        %567 = vmatprep.subr.mxu0 0.0
        %v568 = vand.u32 %v195, 4294901760
        %569 = vmatpush1.xpose.msra.mxu0 %v568
        %570 = vmatprep.subr.mxu0 0.0
        %v571 = vand.u32 %v196, 4294901760
        %572 = vmatpush1.xpose.msra.mxu0 %v571
        %573 = vmatprep.subr.mxu0 0.0
        %v574 = vand.u32 %v197, 4294901760
        %575 = vmatpush1.xpose.msra.mxu0 %v574
        %576 = vmatprep.subr.mxu0 0.0
        %v577 = vand.u32 %v198, 4294901760
        %578 = vmatpush1.xpose.msra.mxu0 %v577
        %579 = vmatprep.subr.mxu0 0.0
        %v580 = vand.u32 %v199, 4294901760
        %581 = vmatpush1.xpose.msra.mxu0 %v580
        %582 = vmatprep.subr.mxu0 0.0
        %v583 = vand.u32 %v200, 4294901760
        %584 = vmatpush1.xpose.msra.mxu0 %v583
        %585 = vmatprep.subr.mxu0 0.0
        %v586 = vand.u32 %v201, 4294901760
        %587 = vmatpush1.xpose.msra.mxu0 %v586
        %588 = vmatprep.subr.mxu0 0.0
        %v589 = vand.u32 %v202, 4294901760
        %590 = vmatpush1.xpose.msra.mxu0 %v589
        %591 = vmatprep.subr.mxu0 0.0
        %v592 = vand.u32 %v203, 4294901760
        %593 = vmatpush1.xpose.msra.mxu0 %v592
        %594 = vmatprep.subr.mxu0 0.0
        %v595 = vand.u32 %v204, 4294901760
        %596 = vmatpush1.xpose.msra.mxu0 %v595
        %597 = vmatprep.subr.mxu0 0.0
        %v598 = vand.u32 %v205, 4294901760
        %599 = vmatpush1.xpose.msra.mxu0 %v598
        %600 = vmatprep.subr.mxu0 0.0
        %601 = vmatpush1.xpose.msra.mxu0 0.0
        %602 = vmatprep.subr.mxu0 0.0
        %603 = vmatpush1.xpose.msra.mxu0 0.0
        %604 = vmatprep.subr.mxu0 0.0
        %605 = vmatpush1.xpose.msra.mxu0 0.0
        %606 = vmatprep.subr.mxu0 0.0
        %607 = vmatpush1.xpose.msra.mxu0 0.0
        %608 = vmatprep.subr.mxu0 0.0
        %609 = vmatpush1.xpose.msra.mxu0 0.0
        %610 = vmatprep.subr.mxu0 0.0
        %611 = vmatpush1.xpose.msra.mxu0 0.0
        %612 = vmatprep.subr.mxu0 0.0
        %613 = vmatpush1.xpose.msra.mxu0 0.0
        %614 = vmatprep.subr.mxu0 0.0
        %615 = vmatpush1.xpose.msra.mxu0 0.0
        %616 = vmatprep.subr.mxu0 0.0
        %617 = vmatpush1.xpose.msra.mxu0 0.0
        %618 = vmatprep.subr.mxu0 0.0
        %619 = vmatpush1.xpose.msra.mxu0 0.0
        %620 = vmatprep.subr.mxu0 0.0
        %621 = vmatpush1.xpose.msra.mxu0 0.0
        %622 = vmatprep.subr.mxu0 0.0
        %623 = vmatpush1.xpose.msra.mxu0 0.0
        %624 = vmatprep.subr.mxu0 0.0
        %625 = vmatpush1.xpose.msra.mxu0 0.0
        %626 = vmatprep.subr.mxu0 0.0
        %627 = vmatpush1.xpose.msra.mxu0 0.0
        %628 = vmatprep.subr.mxu0 0.0
        %629 = vmatpush1.xpose.msra.mxu0 0.0
        %630 = vmatprep.subr.mxu0 0.0
        %631 = vmatpush1.xpose.msra.mxu0 0.0
        %632 = vmatprep.mubr.f32.mxu0 0.0
        %v633 = vand.u32 %v189, 4294901760
        %v634 = vsub.f32 %v189, %v633
        %v635 = vand.u32 %v634, 4294901760
        %636 = vmatmul.mubr.f32.gmra.mrb[0].mxu0 %v635
        %v637 = vpop.f32.mrb[0].mxu0
        %v638 = vadd.f32 %v549, %v637
        %v639 = vpop.f32.mrb[0].mxu0
        %640 = vdwg.mxu0
        %641 = vmatprep.subr.mxu0 0.0
        %v642 = vand.u32 %v190, 4294901760
        %v643 = vsub.f32 %v190, %v642
        %v644 = vand.u32 %v643, 4294901760
        %645 = vmatpush1.xpose.msra.mxu0 %v644
        %646 = vmatprep.subr.mxu0 0.0
        %v647 = vand.u32 %v191, 4294901760
        %v648 = vsub.f32 %v191, %v647
        %v649 = vand.u32 %v648, 4294901760
        %650 = vmatpush1.xpose.msra.mxu0 %v649
        %651 = vmatprep.subr.mxu0 0.0
        %v652 = vand.u32 %v192, 4294901760
        %v653 = vsub.f32 %v192, %v652
        %v654 = vand.u32 %v653, 4294901760
        %655 = vmatpush1.xpose.msra.mxu0 %v654
        %656 = vmatprep.subr.mxu0 0.0
        %v657 = vand.u32 %v193, 4294901760
        %v658 = vsub.f32 %v193, %v657
        %v659 = vand.u32 %v658, 4294901760
        %660 = vmatpush1.xpose.msra.mxu0 %v659
        %661 = vmatprep.subr.mxu0 0.0
        %v662 = vand.u32 %v194, 4294901760
        %v663 = vsub.f32 %v194, %v662
        %v664 = vand.u32 %v663, 4294901760
        %665 = vmatpush1.xpose.msra.mxu0 %v664
        %666 = vmatprep.subr.mxu0 0.0
        %v667 = vand.u32 %v195, 4294901760
        %v668 = vsub.f32 %v195, %v667
        %v669 = vand.u32 %v668, 4294901760
        %670 = vmatpush1.xpose.msra.mxu0 %v669
        %671 = vmatprep.subr.mxu0 0.0
        %v672 = vand.u32 %v196, 4294901760
        %v673 = vsub.f32 %v196, %v672
        %v674 = vand.u32 %v673, 4294901760
        %675 = vmatpush1.xpose.msra.mxu0 %v674
        %676 = vmatprep.subr.mxu0 0.0
        %v677 = vand.u32 %v197, 4294901760
        %v678 = vsub.f32 %v197, %v677
        %v679 = vand.u32 %v678, 4294901760
        %680 = vmatpush1.xpose.msra.mxu0 %v679
        %681 = vmatprep.subr.mxu0 0.0
        %v682 = vand.u32 %v198, 4294901760
        %v683 = vsub.f32 %v198, %v682
        %v684 = vand.u32 %v683, 4294901760
        %685 = vmatpush1.xpose.msra.mxu0 %v684
        %686 = vmatprep.subr.mxu0 0.0
        %v687 = vand.u32 %v199, 4294901760
        %v688 = vsub.f32 %v199, %v687
        %v689 = vand.u32 %v688, 4294901760
        %690 = vmatpush1.xpose.msra.mxu0 %v689
        %691 = vmatprep.subr.mxu0 0.0
        %v692 = vand.u32 %v200, 4294901760
        %v693 = vsub.f32 %v200, %v692
        %v694 = vand.u32 %v693, 4294901760
        %695 = vmatpush1.xpose.msra.mxu0 %v694
        %696 = vmatprep.subr.mxu0 0.0
        %v697 = vand.u32 %v201, 4294901760
        %v698 = vsub.f32 %v201, %v697
        %v699 = vand.u32 %v698, 4294901760
        %700 = vmatpush1.xpose.msra.mxu0 %v699
        %701 = vmatprep.subr.mxu0 0.0
        %v702 = vand.u32 %v202, 4294901760
        %v703 = vsub.f32 %v202, %v702
        %v704 = vand.u32 %v703, 4294901760
        %705 = vmatpush1.xpose.msra.mxu0 %v704
        %706 = vmatprep.subr.mxu0 0.0
        %v707 = vand.u32 %v203, 4294901760
        %v708 = vsub.f32 %v203, %v707
        %v709 = vand.u32 %v708, 4294901760
        %710 = vmatpush1.xpose.msra.mxu0 %v709
        %711 = vmatprep.subr.mxu0 0.0
        %v712 = vand.u32 %v204, 4294901760
        %v713 = vsub.f32 %v204, %v712
        %v714 = vand.u32 %v713, 4294901760
        %715 = vmatpush1.xpose.msra.mxu0 %v714
        %716 = vmatprep.subr.mxu0 0.0
        %v717 = vand.u32 %v205, 4294901760
        %v718 = vsub.f32 %v205, %v717
        %v719 = vand.u32 %v718, 4294901760
        %720 = vmatpush1.xpose.msra.mxu0 %v719
        %721 = vmatprep.subr.mxu0 0.0
        %722 = vmatpush1.xpose.msra.mxu0 0.0
        %723 = vmatprep.subr.mxu0 0.0
        %724 = vmatpush1.xpose.msra.mxu0 0.0
        %725 = vmatprep.subr.mxu0 0.0
        %726 = vmatpush1.xpose.msra.mxu0 0.0
        %727 = vmatprep.subr.mxu0 0.0
        %728 = vmatpush1.xpose.msra.mxu0 0.0
        %729 = vmatprep.subr.mxu0 0.0
        %730 = vmatpush1.xpose.msra.mxu0 0.0
        %731 = vmatprep.subr.mxu0 0.0
        %732 = vmatpush1.xpose.msra.mxu0 0.0
        %733 = vmatprep.subr.mxu0 0.0
        %734 = vmatpush1.xpose.msra.mxu0 0.0
        %735 = vmatprep.subr.mxu0 0.0
        %736 = vmatpush1.xpose.msra.mxu0 0.0
        %737 = vmatprep.subr.mxu0 0.0
        %738 = vmatpush1.xpose.msra.mxu0 0.0
        %739 = vmatprep.subr.mxu0 0.0
        %740 = vmatpush1.xpose.msra.mxu0 0.0
        %741 = vmatprep.subr.mxu0 0.0
        %742 = vmatpush1.xpose.msra.mxu0 0.0
        %743 = vmatprep.subr.mxu0 0.0
        %744 = vmatpush1.xpose.msra.mxu0 0.0
        %745 = vmatprep.subr.mxu0 0.0
        %746 = vmatpush1.xpose.msra.mxu0 0.0
        %747 = vmatprep.subr.mxu0 0.0
        %748 = vmatpush1.xpose.msra.mxu0 0.0
        %749 = vmatprep.subr.mxu0 0.0
        %750 = vmatpush1.xpose.msra.mxu0 0.0
        %751 = vmatprep.subr.mxu0 0.0
        %752 = vmatpush1.xpose.msra.mxu0 0.0
        %753 = vmatprep.mubr.f32.mxu0 0.0
        %v754 = vand.u32 %v189, 4294901760
        %755 = vmatmul.mubr.f32.gmra.mrb[0].mxu0 %v754
        %v756 = vpop.f32.mrb[0].mxu0
        %v757 = vadd.f32 %v638, %v756
        %v758 = vpop.f32.mrb[0].mxu0
        %759 = vdwg.mxu0
        %760 = vmatprep.subr.mxu0 0.0
        %v761 = vand.u32 %v190, 4294901760
        %762 = vmatpush1.xpose.msra.mxu0 %v761
        %763 = vmatprep.subr.mxu0 0.0
        %v764 = vand.u32 %v191, 4294901760
        %765 = vmatpush1.xpose.msra.mxu0 %v764
        %766 = vmatprep.subr.mxu0 0.0
        %v767 = vand.u32 %v192, 4294901760
        %768 = vmatpush1.xpose.msra.mxu0 %v767
        %769 = vmatprep.subr.mxu0 0.0
        %v770 = vand.u32 %v193, 4294901760
        %771 = vmatpush1.xpose.msra.mxu0 %v770
        %772 = vmatprep.subr.mxu0 0.0
        %v773 = vand.u32 %v194, 4294901760
        %774 = vmatpush1.xpose.msra.mxu0 %v773
        %775 = vmatprep.subr.mxu0 0.0
        %v776 = vand.u32 %v195, 4294901760
        %777 = vmatpush1.xpose.msra.mxu0 %v776
        %778 = vmatprep.subr.mxu0 0.0
        %v779 = vand.u32 %v196, 4294901760
        %780 = vmatpush1.xpose.msra.mxu0 %v779
        %781 = vmatprep.subr.mxu0 0.0
        %v782 = vand.u32 %v197, 4294901760
        %783 = vmatpush1.xpose.msra.mxu0 %v782
        %784 = vmatprep.subr.mxu0 0.0
        %v785 = vand.u32 %v198, 4294901760
        %786 = vmatpush1.xpose.msra.mxu0 %v785
        %787 = vmatprep.subr.mxu0 0.0
        %v788 = vand.u32 %v199, 4294901760
        %789 = vmatpush1.xpose.msra.mxu0 %v788
        %790 = vmatprep.subr.mxu0 0.0
        %v791 = vand.u32 %v200, 4294901760
        %792 = vmatpush1.xpose.msra.mxu0 %v791
        %793 = vmatprep.subr.mxu0 0.0
        %v794 = vand.u32 %v201, 4294901760
        %795 = vmatpush1.xpose.msra.mxu0 %v794
        %796 = vmatprep.subr.mxu0 0.0
        %v797 = vand.u32 %v202, 4294901760
        %798 = vmatpush1.xpose.msra.mxu0 %v797
        %799 = vmatprep.subr.mxu0 0.0
        %v800 = vand.u32 %v203, 4294901760
        %801 = vmatpush1.xpose.msra.mxu0 %v800
        %802 = vmatprep.subr.mxu0 0.0
        %v803 = vand.u32 %v204, 4294901760
        %804 = vmatpush1.xpose.msra.mxu0 %v803
        %805 = vmatprep.subr.mxu0 0.0
        %v806 = vand.u32 %v205, 4294901760
        %807 = vmatpush1.xpose.msra.mxu0 %v806
        %808 = vmatprep.subr.mxu0 0.0
        %809 = vmatpush1.xpose.msra.mxu0 0.0
        %810 = vmatprep.subr.mxu0 0.0
        %811 = vmatpush1.xpose.msra.mxu0 0.0
        %812 = vmatprep.subr.mxu0 0.0
        %813 = vmatpush1.xpose.msra.mxu0 0.0
        %814 = vmatprep.subr.mxu0 0.0
        %815 = vmatpush1.xpose.msra.mxu0 0.0
        %816 = vmatprep.subr.mxu0 0.0
        %817 = vmatpush1.xpose.msra.mxu0 0.0
        %818 = vmatprep.subr.mxu0 0.0
        %819 = vmatpush1.xpose.msra.mxu0 0.0
        %820 = vmatprep.subr.mxu0 0.0
        %821 = vmatpush1.xpose.msra.mxu0 0.0
        %822 = vmatprep.subr.mxu0 0.0
        %823 = vmatpush1.xpose.msra.mxu0 0.0
        %824 = vmatprep.subr.mxu0 0.0
        %825 = vmatpush1.xpose.msra.mxu0 0.0
        %826 = vmatprep.subr.mxu0 0.0
        %827 = vmatpush1.xpose.msra.mxu0 0.0
        %828 = vmatprep.subr.mxu0 0.0
        %829 = vmatpush1.xpose.msra.mxu0 0.0
        %830 = vmatprep.subr.mxu0 0.0
        %831 = vmatpush1.xpose.msra.mxu0 0.0
        %832 = vmatprep.subr.mxu0 0.0
        %833 = vmatpush1.xpose.msra.mxu0 0.0
        %834 = vmatprep.subr.mxu0 0.0
        %835 = vmatpush1.xpose.msra.mxu0 0.0
        %836 = vmatprep.subr.mxu0 0.0
        %837 = vmatpush1.xpose.msra.mxu0 0.0
        %838 = vmatprep.subr.mxu0 0.0
        %839 = vmatpush1.xpose.msra.mxu0 0.0
        %840 = vmatprep.mubr.f32.mxu0 0.0
        %v841 = vand.u32 %v189, 4294901760
        %842 = vmatmul.mubr.f32.gmra.mrb[0].mxu0 %v841
        %v843 = vpop.f32.mrb[0].mxu0
        %v844 = vadd.f32 %v757, %v843
        %v845 = vpop.f32.mrb[0].mxu0
        %846 = vdwg.mxu0
        %s847 = sld [smem:[#allocation2]]
        %v848 = vstv %s847
        %v849 = vadd.f32 %v844, %v848
        %v850 = vxor.u32 %v849, 2147483648
        %v851 = vmul.f32 %v850, 1.442695
        %v852 = vpow.pop %v851
        %v853 = vadd.f32 %v852, 1.0
        %v854 = vrcp.pop %v853
        %v855 = vmul.f32 1.0, %v854
        %856 = vst [vmem:[%s188] sm:$0x1] %v855
        %p857 = scmp.lt.s32.totalorder %s18, 1
        %s858 = scalar_select %p857, %s18, 1
        %s859 = scalar_lea.vmem %s3, %s858
        // Predicated region
        $region37: #{gpool_block_forward.2} parent=31 // pred_check
          %p860 = pneg %p104
        $region38: #{gpool_block_forward.2} parent=31 // pred_check_branch
          %862 = sbr.rel (%p860) target = $region40
        $region39: #{gpool_block_forward.2} parent=31 // pred_region
          _
        $region40: #{gpool_block_forward.2} parent=31 // pred_fallthru
          _
      $region32: #{gpool_block_forward.2} parent=5 // pred_fallthru
        _
      %p863 = scmp.le.s32.totalorder 2, %s13
      // Predicated region
      $region41: #{gpool_block_forward.2} parent=5 // pred_check
        %p864 = pneg %p863
      $region42: #{gpool_block_forward.2} parent=5 // pred_check_branch
        %866 = sbr.rel (%p864) target = $region44
      $region43: #{gpool_block_forward.2} parent=5 // pred_region
        %s867 = ssub.s32 %s13, 2
        // Predicated region
        $region45: #{gpool_block_forward.2} parent=43 // pred_check
          %p868 = pneg %p110
        $region46: #{gpool_block_forward.2} parent=43 // pred_check_branch
          %870 = sbr.rel (%p868) target = $region48
        $region47: #{gpool_block_forward.2} parent=43 // pred_region
          %p871 = scmp.lt.s32.totalorder %s19, 1
          %s872 = scalar_select %p871, %s19, 1
          %s873 = scalar_lea.vmem %s3, %s872
        $region48: #{gpool_block_forward.2} parent=43 // pred_fallthru
          _
      $region44: #{gpool_block_forward.2} parent=5 // pred_fallthru
        _
    $region6: #{gpool_block_forward.2} parent=1 // loop_footer
      %s17 = sadd.s32 1, %s13
    $region7: #{gpool_block_forward.2} parent=1 // loop_footer_branch
      %12 = sbr.rel target = $region3
    $region8: #{gpool_block_forward.2} parent=1 // loop_exit
      _
    %874 = vsyncpa [#allocation4], 1
    %s875 = scalar_lea.sflag [#allocation4], 1
    %876 = vsyncpa %s875, 1

// kernel: gpool_block_forward.3
$region0: #{gpool_block_forward.3}
  #allocation0 [shape = 'u32[]', space=smem, size = 0x4, offset = 0x4, fixed_abs, tag = 'smem constant byte address 0x4 - core index']
  #allocation1 [shape = 'u32[144,128]{1,0:T(1,128)}', space=vmem, size = 0x12000, scoped, tag = 'internal scratch']
  #allocation2 [shape = 'f32[128,256]{1,0:T(8,128)}', space=vmem, size = 0x20000, scoped, tag = 'scratch operand']
  #allocation3 [shape = 'f32[128,128]{1,0:T(8,128)}', space=vmem, size = 0x10000, scoped, tag = 'scratch operand']
  #allocation4 [shape = 'f32[128,256]{1,0:T(8,128)}', space=vmem, size = 0x20000, scoped, tag = 'scratch operand']
  #allocation5 [shape = 'f32[128,128]{1,0:T(8,128)}', space=vmem, size = 0x10000, scoped, tag = 'scratch operand']
  %s0 = inlined_call_operand.vmem [shape: s32[128,1], index: 0, kind: input, shape index: {}]
  %s1 = inlined_call_operand.vmem [shape: f32[1,128], index: 1, kind: input, shape index: {}]
  %s2 = inlined_call_operand.vmem [shape: f32[256,128], index: 2, kind: input, shape index: {}]
  %s3 = inlined_call_operand.hbm [shape: f32[256,256], index: 3, kind: input, shape index: {}]
  %s4 = inlined_call_operand.vmem [shape: f32[128,128], index: 4, kind: input, shape index: {}]
  %s5 = inlined_call_operand.hbm [shape: f32[128,128], index: 5, kind: output, shape index: {0}]
  %s6 = inlined_call_operand.hbm [shape: f32[128,128], index: 6, kind: output, shape index: {1}]
  %7 = xla_tuple %s5, %s6
  %s8 = sld [smem:[#allocation0]]
  $region42: #{gpool_block_forward.3} parent=0
    _
  %s10 = ssub.s32 1, %s8
  %s11 = scalar_select 0, %s10, %s8
  $region1: #{gpool_block_forward.3} parent=0
    #allocation6 [shape = 'u8[262144]{0}', space=vmem, size = 0x40000, scoped, tag = 'input window, operand 3, single buffered']
    #allocation7 [shape = 's32[1]{0}', space=sflag, size = 0x4, scoped, tag = 'scoped memory for gpool_block_forward.3']
    #allocation8 [shape = 's32[1]{0}', space=sflag, size = 0x4, scoped, tag = 'scoped memory for gpool_block_forward.3']
    #allocation9 [shape = 'u8[65536]{0}', space=vmem, size = 0x10000, scoped, tag = 'output window, operand 0, single buffered']
    #allocation10 [shape = 'u8[65536]{0}', space=vmem, size = 0x10000, scoped, tag = 'output window, operand 1, single buffered']
    #allocation11 [shape = 's32[1]{0}', space=sflag, size = 0x4, scoped, tag = 'scoped memory for gpool_block_forward.3']
    %12 = vsyncpa [#allocation7], 0
    %13 = vsyncpa [#allocation8], 0
    %14 = vsyncpa [#allocation11], 0
    // Predicated region
    $region2: #{gpool_block_forward.3} parent=1 // pred_check
      _
    $region3: #{gpool_block_forward.3} parent=1 // pred_check_branch
      %16 = sbr.rel (0) target = $region5
    $region4: #{gpool_block_forward.3} parent=1 // pred_region
      _
    $region5: #{gpool_block_forward.3} parent=1 // pred_fallthru
      _
    // Predicated region
    $region6: #{gpool_block_forward.3} parent=1 // pred_check
      _
    $region7: #{gpool_block_forward.3} parent=1 // pred_check_branch
      %18 = sbr.rel (0) target = $region9
    $region8: #{gpool_block_forward.3} parent=1 // pred_region
      _
    $region9: #{gpool_block_forward.3} parent=1 // pred_fallthru
      _
    // Predicated region
    $region10: #{gpool_block_forward.3} parent=1 // pred_check
      _
    $region11: #{gpool_block_forward.3} parent=1 // pred_check_branch
      %20 = sbr.rel (0) target = $region13
    $region12: #{gpool_block_forward.3} parent=1 // pred_region
      _
    $region13: #{gpool_block_forward.3} parent=1 // pred_fallthru
      _
    // Predicated region
    $region14: #{gpool_block_forward.3} parent=1 // pred_check
      _
    $region15: #{gpool_block_forward.3} parent=1 // pred_check_branch
      %22 = sbr.rel (0) target = $region17
    $region16: #{gpool_block_forward.3} parent=1 // pred_region
      %s24 = ssub.s32 8192, 8192
      %25 = vsyncadd [#allocation7], %s24
      %s26 = sshll.u32 [#allocation6], 4
      %s27 = int_to_ptr.vmem [resolvable:$true] %s26
      %32 = dma.hbm_to_vmem [thread:$0]  %s3, 8192, %s27, [#allocation7], 256, 256, 16
    $region17: #{gpool_block_forward.3} parent=1 // pred_fallthru
      _
    // Predicated region
    $region18: #{gpool_block_forward.3} parent=1 // pred_check
      _
    $region19: #{gpool_block_forward.3} parent=1 // pred_check_branch
      %34 = sbr.rel (0) target = $region21
    $region20: #{gpool_block_forward.3} parent=1 // pred_region
      _
    $region21: #{gpool_block_forward.3} parent=1 // pred_fallthru
      _
    // Predicated region
    $region22: #{gpool_block_forward.3} parent=1 // pred_check
      _
    $region23: #{gpool_block_forward.3} parent=1 // pred_check_branch
      %36 = sbr.rel (0) target = $region25
    $region24: #{gpool_block_forward.3} parent=1 // pred_region
      %37 = dma.done [#allocation7], 8192
    $region25: #{gpool_block_forward.3} parent=1 // pred_fallthru
      _
    %v38 = vlaneseq
    %v39 = vand.u32 %v38, 127
    %v40 = vadd.s32 %v39, 128
    %v41 = vld [vmem:[%s0] sm:$0xff]
    %v42 = vld [vmem:[%s0 + $0x8] sm:$0xff]
    %v43 = vld [vmem:[%s0 + $0x10] sm:$0xff]
    %v44 = vld [vmem:[%s0 + $0x18] sm:$0xff]
    %v45 = vld [vmem:[%s0 + $0x20] sm:$0xff]
    %v46 = vld [vmem:[%s0 + $0x28] sm:$0xff]
    %v47 = vld [vmem:[%s0 + $0x30] sm:$0xff]
    %v48 = vld [vmem:[%s0 + $0x38] sm:$0xff]
    %v49 = vld [vmem:[%s0 + $0x40] sm:$0xff]
    %v50 = vld [vmem:[%s0 + $0x48] sm:$0xff]
    %v51 = vld [vmem:[%s0 + $0x50] sm:$0xff]
    %v52 = vld [vmem:[%s0 + $0x58] sm:$0xff]
    %v53 = vld [vmem:[%s0 + $0x60] sm:$0xff]
    %v54 = vld [vmem:[%s0 + $0x68] sm:$0xff]
    %v55 = vld [vmem:[%s0 + $0x70] sm:$0xff]
    %v56 = vld [vmem:[%s0 + $0x78] sm:$0xff]
    %57 = vset.pattern.permute.xlu0 0
    %58 = vperm.xlu0 %57, %v41
    %v59 = vpop.permute.xlu0 %58
    %60 = vset.pattern.permute.xlu0 0
    %61 = vperm.xlu0 %60, %v42
    %v62 = vpop.permute.xlu0 %61
    %63 = vset.pattern.permute.xlu0 0
    %64 = vperm.xlu0 %63, %v43
    %v65 = vpop.permute.xlu0 %64
    %66 = vset.pattern.permute.xlu0 0
    %67 = vperm.xlu0 %66, %v44
    %v68 = vpop.permute.xlu0 %67
    %69 = vset.pattern.permute.xlu0 0
    %70 = vperm.xlu0 %69, %v45
    %v71 = vpop.permute.xlu0 %70
    %72 = vset.pattern.permute.xlu0 0
    %73 = vperm.xlu0 %72, %v46
    %v74 = vpop.permute.xlu0 %73
    %75 = vset.pattern.permute.xlu0 0
    %76 = vperm.xlu0 %75, %v47
    %v77 = vpop.permute.xlu0 %76
    %78 = vset.pattern.permute.xlu0 0
    %79 = vperm.xlu0 %78, %v48
    %v80 = vpop.permute.xlu0 %79
    %81 = vset.pattern.permute.xlu0 0
    %82 = vperm.xlu0 %81, %v49
    %v83 = vpop.permute.xlu0 %82
    %84 = vset.pattern.permute.xlu0 0
    %85 = vperm.xlu0 %84, %v50
    %v86 = vpop.permute.xlu0 %85
    %87 = vset.pattern.permute.xlu0 0
    %88 = vperm.xlu0 %87, %v51
    %v89 = vpop.permute.xlu0 %88
    %90 = vset.pattern.permute.xlu0 0
    %91 = vperm.xlu0 %90, %v52
    %v92 = vpop.permute.xlu0 %91
    %93 = vset.pattern.permute.xlu0 0
    %94 = vperm.xlu0 %93, %v53
    %v95 = vpop.permute.xlu0 %94
    %96 = vset.pattern.permute.xlu0 0
    %97 = vperm.xlu0 %96, %v54
    %v98 = vpop.permute.xlu0 %97
    %99 = vset.pattern.permute.xlu0 0
    %100 = vperm.xlu0 %99, %v55
    %v101 = vpop.permute.xlu0 %100
    %102 = vset.pattern.permute.xlu0 0
    %103 = vperm.xlu0 %102, %v56
    %v104 = vpop.permute.xlu0 %103
    %vm105 = vcmp.eq.s32.totalorder %v39, %v59
    %vm106 = vcmp.eq.s32.totalorder %v40, %v59
    %vm107 = vcmp.eq.s32.totalorder %v39, %v62
    %vm108 = vcmp.eq.s32.totalorder %v40, %v62
    %vm109 = vcmp.eq.s32.totalorder %v39, %v65
    %vm110 = vcmp.eq.s32.totalorder %v40, %v65
    %vm111 = vcmp.eq.s32.totalorder %v39, %v68
    %vm112 = vcmp.eq.s32.totalorder %v40, %v68
    %vm113 = vcmp.eq.s32.totalorder %v39, %v71
    %vm114 = vcmp.eq.s32.totalorder %v40, %v71
    %vm115 = vcmp.eq.s32.totalorder %v39, %v74
    %vm116 = vcmp.eq.s32.totalorder %v40, %v74
    %vm117 = vcmp.eq.s32.totalorder %v39, %v77
    %vm118 = vcmp.eq.s32.totalorder %v40, %v77
    %vm119 = vcmp.eq.s32.totalorder %v39, %v80
    %vm120 = vcmp.eq.s32.totalorder %v40, %v80
    %vm121 = vcmp.eq.s32.totalorder %v39, %v83
    %vm122 = vcmp.eq.s32.totalorder %v40, %v83
    %vm123 = vcmp.eq.s32.totalorder %v39, %v86
    %vm124 = vcmp.eq.s32.totalorder %v40, %v86
    %vm125 = vcmp.eq.s32.totalorder %v39, %v89
    %vm126 = vcmp.eq.s32.totalorder %v40, %v89
    %vm127 = vcmp.eq.s32.totalorder %v39, %v92
    %vm128 = vcmp.eq.s32.totalorder %v40, %v92
    %vm129 = vcmp.eq.s32.totalorder %v39, %v95
    %vm130 = vcmp.eq.s32.totalorder %v40, %v95
    %vm131 = vcmp.eq.s32.totalorder %v39, %v98
    %vm132 = vcmp.eq.s32.totalorder %v40, %v98
    %vm133 = vcmp.eq.s32.totalorder %v39, %v101
    %vm134 = vcmp.eq.s32.totalorder %v40, %v101
    %vm135 = vcmp.eq.s32.totalorder %v39, %v104
    %vm136 = vcmp.eq.s32.totalorder %v40, %v104
    %v137 = vsel %vm105, 1, 0
    %v138 = vsel %vm106, 1, 0
    %v139 = vsel %vm107, 1, 0
    %v140 = vsel %vm108, 1, 0
    %v141 = vsel %vm109, 1, 0
    %v142 = vsel %vm110, 1, 0
    %v143 = vsel %vm111, 1, 0
    %v144 = vsel %vm112, 1, 0
    %v145 = vsel %vm113, 1, 0
    %v146 = vsel %vm114, 1, 0
    %v147 = vsel %vm115, 1, 0
    %v148 = vsel %vm116, 1, 0
    %v149 = vsel %vm117, 1, 0
    %v150 = vsel %vm118, 1, 0
    %v151 = vsel %vm119, 1, 0
    %v152 = vsel %vm120, 1, 0
    %v153 = vsel %vm121, 1, 0
    %v154 = vsel %vm122, 1, 0
    %v155 = vsel %vm123, 1, 0
    %v156 = vsel %vm124, 1, 0
    %v157 = vsel %vm125, 1, 0
    %v158 = vsel %vm126, 1, 0
    %v159 = vsel %vm127, 1, 0
    %v160 = vsel %vm128, 1, 0
    %v161 = vsel %vm129, 1, 0
    %v162 = vsel %vm130, 1, 0
    %v163 = vsel %vm131, 1, 0
    %v164 = vsel %vm132, 1, 0
    %v165 = vsel %vm133, 1, 0
    %v166 = vsel %vm134, 1, 0
    %v167 = vsel %vm135, 1, 0
    %v168 = vsel %vm136, 1, 0
    %v169 = vcvt.s32.f32 %v137
    %v170 = vcvt.s32.f32 %v138
    %v171 = vcvt.s32.f32 %v139
    %v172 = vcvt.s32.f32 %v140
    %v173 = vcvt.s32.f32 %v141
    %v174 = vcvt.s32.f32 %v142
    %v175 = vcvt.s32.f32 %v143
    %v176 = vcvt.s32.f32 %v144
    %v177 = vcvt.s32.f32 %v145
    %v178 = vcvt.s32.f32 %v146
    %v179 = vcvt.s32.f32 %v147
    %v180 = vcvt.s32.f32 %v148
    %v181 = vcvt.s32.f32 %v149
    %v182 = vcvt.s32.f32 %v150
    %v183 = vcvt.s32.f32 %v151
    %v184 = vcvt.s32.f32 %v152
    %v185 = vcvt.s32.f32 %v153
    %v186 = vcvt.s32.f32 %v154
    %v187 = vcvt.s32.f32 %v155
    %v188 = vcvt.s32.f32 %v156
    %v189 = vcvt.s32.f32 %v157
    %v190 = vcvt.s32.f32 %v158
    %v191 = vcvt.s32.f32 %v159
    %v192 = vcvt.s32.f32 %v160
    %v193 = vcvt.s32.f32 %v161
    %v194 = vcvt.s32.f32 %v162
    %v195 = vcvt.s32.f32 %v163
    %v196 = vcvt.s32.f32 %v164
    %v197 = vcvt.s32.f32 %v165
    %v198 = vcvt.s32.f32 %v166
    %v199 = vcvt.s32.f32 %v167
    %v200 = vcvt.s32.f32 %v168
    %201 = vst [vmem:[#allocation2] sm:$0xff] %v169
    %202 = vst [vmem:[#allocation2 + $0x8] sm:$0xff] %v170
    %203 = vst [vmem:[#allocation2 + $0x10] sm:$0xff] %v171
    %204 = vst [vmem:[#allocation2 + $0x18] sm:$0xff] %v172
    %205 = vst [vmem:[#allocation2 + $0x20] sm:$0xff] %v173
    %206 = vst [vmem:[#allocation2 + $0x28] sm:$0xff] %v174
    %207 = vst [vmem:[#allocation2 + $0x30] sm:$0xff] %v175
    %208 = vst [vmem:[#allocation2 + $0x38] sm:$0xff] %v176
    %209 = vst [vmem:[#allocation2 + $0x40] sm:$0xff] %v177
    %210 = vst [vmem:[#allocation2 + $0x48] sm:$0xff] %v178
    %211 = vst [vmem:[#allocation2 + $0x50] sm:$0xff] %v179
    %212 = vst [vmem:[#allocation2 + $0x58] sm:$0xff] %v180
    %213 = vst [vmem:[#allocation2 + $0x60] sm:$0xff] %v181
    %214 = vst [vmem:[#allocation2 + $0x68] sm:$0xff] %v182
    %215 = vst [vmem:[#allocation2 + $0x70] sm:$0xff] %v183
    %216 = vst [vmem:[#allocation2 + $0x78] sm:$0xff] %v184
    %217 = vst [vmem:[#allocation2 + $0x80] sm:$0xff] %v185
    %218 = vst [vmem:[#allocation2 + $0x88] sm:$0xff] %v186
    %219 = vst [vmem:[#allocation2 + $0x90] sm:$0xff] %v187
    %220 = vst [vmem:[#allocation2 + $0x98] sm:$0xff] %v188
    %221 = vst [vmem:[#allocation2 + $0xa0] sm:$0xff] %v189
    %222 = vst [vmem:[#allocation2 + $0xa8] sm:$0xff] %v190
    %223 = vst [vmem:[#allocation2 + $0xb0] sm:$0xff] %v191
    %224 = vst [vmem:[#allocation2 + $0xb8] sm:$0xff] %v192
    %225 = vst [vmem:[#allocation2 + $0xc0] sm:$0xff] %v193
    %226 = vst [vmem:[#allocation2 + $0xc8] sm:$0xff] %v194
    %227 = vst [vmem:[#allocation2 + $0xd0] sm:$0xff] %v195
    %228 = vst [vmem:[#allocation2 + $0xd8] sm:$0xff] %v196
    %229 = vst [vmem:[#allocation2 + $0xe0] sm:$0xff] %v197
    %230 = vst [vmem:[#allocation2 + $0xe8] sm:$0xff] %v198
    %231 = vst [vmem:[#allocation2 + $0xf0] sm:$0xff] %v199
    %232 = vst [vmem:[#allocation2 + $0xf8] sm:$0xff] %v200
    %v233 = vld [vmem:[#allocation2] sm:$0xff]
    %v234 = vld [vmem:[#allocation2 + $0x8] sm:$0xff]
    %v235 = vld [vmem:[#allocation2 + $0x10] sm:$0xff]
    %v236 = vld [vmem:[#allocation2 + $0x18] sm:$0xff]
    %v237 = vld [vmem:[#allocation2 + $0x20] sm:$0xff]
    %v238 = vld [vmem:[#allocation2 + $0x28] sm:$0xff]
    %v239 = vld [vmem:[#allocation2 + $0x30] sm:$0xff]
    %v240 = vld [vmem:[#allocation2 + $0x38] sm:$0xff]
    %v241 = vld [vmem:[#allocation2 + $0x40] sm:$0xff]
    %v242 = vld [vmem:[#allocation2 + $0x48] sm:$0xff]
    %v243 = vld [vmem:[#allocation2 + $0x50] sm:$0xff]
    %v244 = vld [vmem:[#allocation2 + $0x58] sm:$0xff]
    %v245 = vld [vmem:[#allocation2 + $0x60] sm:$0xff]
    %v246 = vld [vmem:[#allocation2 + $0x68] sm:$0xff]
    %v247 = vld [vmem:[#allocation2 + $0x70] sm:$0xff]
    %v248 = vld [vmem:[#allocation2 + $0x78] sm:$0xff]
    %v249 = vld [vmem:[#allocation2 + $0x80] sm:$0xff]
    %v250 = vld [vmem:[#allocation2 + $0x88] sm:$0xff]
    %v251 = vld [vmem:[#allocation2 + $0x90] sm:$0xff]
    %v252 = vld [vmem:[#allocation2 + $0x98] sm:$0xff]
    %v253 = vld [vmem:[#allocation2 + $0xa0] sm:$0xff]
    %v254 = vld [vmem:[#allocation2 + $0xa8] sm:$0xff]
    %v255 = vld [vmem:[#allocation2 + $0xb0] sm:$0xff]
    %v256 = vld [vmem:[#allocation2 + $0xb8] sm:$0xff]
    %v257 = vld [vmem:[#allocation2 + $0xc0] sm:$0xff]
    %v258 = vld [vmem:[#allocation2 + $0xc8] sm:$0xff]
    %v259 = vld [vmem:[#allocation2 + $0xd0] sm:$0xff]
    %v260 = vld [vmem:[#allocation2 + $0xd8] sm:$0xff]
    %v261 = vld [vmem:[#allocation2 + $0xe0] sm:$0xff]
    %v262 = vld [vmem:[#allocation2 + $0xe8] sm:$0xff]
    %v263 = vld [vmem:[#allocation2 + $0xf0] sm:$0xff]
    %v264 = vld [vmem:[#allocation2 + $0xf8] sm:$0xff]
    %v265 = vld [vmem:[%s2] sm:$0xff]
    %v266 = vld [vmem:[%s2 + $0x8] sm:$0xff]
    %v267 = vld [vmem:[%s2 + $0x10] sm:$0xff]
    %v268 = vld [vmem:[%s2 + $0x18] sm:$0xff]
    %v269 = vld [vmem:[%s2 + $0x20] sm:$0xff]
    %v270 = vld [vmem:[%s2 + $0x28] sm:$0xff]
    %v271 = vld [vmem:[%s2 + $0x30] sm:$0xff]
    %v272 = vld [vmem:[%s2 + $0x38] sm:$0xff]
    %v273 = vld [vmem:[%s2 + $0x40] sm:$0xff]
    %v274 = vld [vmem:[%s2 + $0x48] sm:$0xff]
    %v275 = vld [vmem:[%s2 + $0x50] sm:$0xff]
    %v276 = vld [vmem:[%s2 + $0x58] sm:$0xff]
    %v277 = vld [vmem:[%s2 + $0x60] sm:$0xff]
    %v278 = vld [vmem:[%s2 + $0x68] sm:$0xff]
    %v279 = vld [vmem:[%s2 + $0x70] sm:$0xff]
    %v280 = vld [vmem:[%s2 + $0x78] sm:$0xff]
    %v281 = vld [vmem:[%s2 + $0x80] sm:$0xff]
    %v282 = vld [vmem:[%s2 + $0x88] sm:$0xff]
    %v283 = vld [vmem:[%s2 + $0x90] sm:$0xff]
    %v284 = vld [vmem:[%s2 + $0x98] sm:$0xff]
    %v285 = vld [vmem:[%s2 + $0xa0] sm:$0xff]
    %v286 = vld [vmem:[%s2 + $0xa8] sm:$0xff]
    %v287 = vld [vmem:[%s2 + $0xb0] sm:$0xff]
    %v288 = vld [vmem:[%s2 + $0xb8] sm:$0xff]
    %v289 = vld [vmem:[%s2 + $0xc0] sm:$0xff]
    %v290 = vld [vmem:[%s2 + $0xc8] sm:$0xff]
    %v291 = vld [vmem:[%s2 + $0xd0] sm:$0xff]
    %v292 = vld [vmem:[%s2 + $0xd8] sm:$0xff]
    %v293 = vld [vmem:[%s2 + $0xe0] sm:$0xff]
    %v294 = vld [vmem:[%s2 + $0xe8] sm:$0xff]
    %v295 = vld [vmem:[%s2 + $0xf0] sm:$0xff]
    %v296 = vld [vmem:[%s2 + $0xf8] sm:$0xff]
    %297 = vmatprep.subr.mxu0 0.0
    %v298 = vand.u32 %v265, 4294901760
    %299 = vmatpush1.msra.mxu0 %v298
    %300 = vmatprep.subr.mxu0 0.0
    %v301 = vand.u32 %v266, 4294901760
    %302 = vmatpush1.msra.mxu0 %v301
    %303 = vmatprep.subr.mxu0 0.0
    %v304 = vand.u32 %v267, 4294901760
    %305 = vmatpush1.msra.mxu0 %v304
    %306 = vmatprep.subr.mxu0 0.0
    %v307 = vand.u32 %v268, 4294901760
    %308 = vmatpush1.msra.mxu0 %v307
    %309 = vmatprep.subr.mxu0 0.0
    %v310 = vand.u32 %v269, 4294901760
    %311 = vmatpush1.msra.mxu0 %v310
    %312 = vmatprep.subr.mxu0 0.0
    %v313 = vand.u32 %v270, 4294901760
    %314 = vmatpush1.msra.mxu0 %v313
    %315 = vmatprep.subr.mxu0 0.0
    %v316 = vand.u32 %v271, 4294901760
    %317 = vmatpush1.msra.mxu0 %v316
    %318 = vmatprep.subr.mxu0 0.0
    %v319 = vand.u32 %v272, 4294901760
    %320 = vmatpush1.msra.mxu0 %v319
    %321 = vmatprep.subr.mxu0 0.0
    %v322 = vand.u32 %v273, 4294901760
    %323 = vmatpush1.msra.mxu0 %v322
    %324 = vmatprep.subr.mxu0 0.0
    %v325 = vand.u32 %v274, 4294901760
    %326 = vmatpush1.msra.mxu0 %v325
    %327 = vmatprep.subr.mxu0 0.0
    %v328 = vand.u32 %v275, 4294901760
    %329 = vmatpush1.msra.mxu0 %v328
    %330 = vmatprep.subr.mxu0 0.0
    %v331 = vand.u32 %v276, 4294901760
    %332 = vmatpush1.msra.mxu0 %v331
    %333 = vmatprep.subr.mxu0 0.0
    %v334 = vand.u32 %v277, 4294901760
    %335 = vmatpush1.msra.mxu0 %v334
    %336 = vmatprep.subr.mxu0 0.0
    %v337 = vand.u32 %v278, 4294901760
    %338 = vmatpush1.msra.mxu0 %v337
    %339 = vmatprep.subr.mxu0 0.0
    %v340 = vand.u32 %v279, 4294901760
    %341 = vmatpush1.msra.mxu0 %v340
    %342 = vmatprep.subr.mxu0 0.0
    %v343 = vand.u32 %v280, 4294901760
    %344 = vmatpush1.msra.mxu0 %v343
    %345 = vmatprep.subr.mxu0 0.0
    %v346 = vand.u32 %v281, 4294901760
    %347 = vmatpush1.msra.mxu0 %v346
    %348 = vmatprep.subr.mxu0 0.0
    %v349 = vand.u32 %v282, 4294901760
    %350 = vmatpush1.msra.mxu0 %v349
    %351 = vmatprep.subr.mxu0 0.0
    %v352 = vand.u32 %v283, 4294901760
    %353 = vmatpush1.msra.mxu0 %v352
    %354 = vmatprep.subr.mxu0 0.0
    %v355 = vand.u32 %v284, 4294901760
    %356 = vmatpush1.msra.mxu0 %v355
    %357 = vmatprep.subr.mxu0 0.0
    %v358 = vand.u32 %v285, 4294901760
    %359 = vmatpush1.msra.mxu0 %v358
    %360 = vmatprep.subr.mxu0 0.0
    %v361 = vand.u32 %v286, 4294901760
    %362 = vmatpush1.msra.mxu0 %v361
    %363 = vmatprep.subr.mxu0 0.0
    %v364 = vand.u32 %v287, 4294901760
    %365 = vmatpush1.msra.mxu0 %v364
    %366 = vmatprep.subr.mxu0 0.0
    %v367 = vand.u32 %v288, 4294901760
    %368 = vmatpush1.msra.mxu0 %v367
    %369 = vmatprep.subr.mxu0 0.0
    %v370 = vand.u32 %v289, 4294901760
    %371 = vmatpush1.msra.mxu0 %v370
    %372 = vmatprep.subr.mxu0 0.0
    %v373 = vand.u32 %v290, 4294901760
    %374 = vmatpush1.msra.mxu0 %v373
    %375 = vmatprep.subr.mxu0 0.0
    %v376 = vand.u32 %v291, 4294901760
    %377 = vmatpush1.msra.mxu0 %v376
    %378 = vmatprep.subr.mxu0 0.0
    %v379 = vand.u32 %v292, 4294901760
    %380 = vmatpush1.msra.mxu0 %v379
    %381 = vmatprep.subr.mxu0 0.0
    %v382 = vand.u32 %v293, 4294901760
    %383 = vmatpush1.msra.mxu0 %v382
    %384 = vmatprep.subr.mxu0 0.0
    %v385 = vand.u32 %v294, 4294901760
    %386 = vmatpush1.msra.mxu0 %v385
    %387 = vmatprep.subr.mxu0 0.0
    %v388 = vand.u32 %v295, 4294901760
    %389 = vmatpush1.msra.mxu0 %v388
    %390 = vmatprep.subr.mxu0 0.0
    %v391 = vand.u32 %v296, 4294901760
    %392 = vmatpush1.msra.mxu0 %v391
    %v393 = vand.u32 %v234, 4294901760
    %v394 = vsub.f32 %v234, %v393
    %v395 = vand.u32 %v394, 4294901760
    %v396 = vsub.f32 %v394, %v395
    %v397 = vand.u32 %v396, 4294901760
    %398 = vmatprep.mubr.f32.mxu0 %v397
    %v399 = vand.u32 %v233, 4294901760
    %v400 = vsub.f32 %v233, %v399
    %v401 = vand.u32 %v400, 4294901760
    %v402 = vsub.f32 %v400, %v401
    %v403 = vand.u32 %v402, 4294901760
    %404 = vmatmul.mubr.f32.gmra.mrb[0].mxu0 %v403
    %v405 = vpop.f32.mrb[0].mxu0
    %v406 = vadd.f32 0.0, %v405
    %v407 = vpop.f32.mrb[0].mxu0
    %v408 = vand.u32 %v236, 4294901760
    %v409 = vsub.f32 %v236, %v408
    %v410 = vand.u32 %v409, 4294901760
    %v411 = vsub.f32 %v409, %v410
    %v412 = vand.u32 %v411, 4294901760
    %413 = vmatprep.mubr.f32.mxu0 %v412
    %v414 = vand.u32 %v235, 4294901760
    %v415 = vsub.f32 %v235, %v414
    %v416 = vand.u32 %v415, 4294901760
    %v417 = vsub.f32 %v415, %v416
    %v418 = vand.u32 %v417, 4294901760
    %419 = vmatmul.mubr.f32.gmra.mrb[0].mxu0 %v418
    %v420 = vpop.f32.mrb[0].mxu0
    %v421 = vadd.f32 0.0, %v420
    %v422 = vpop.f32.mrb[0].mxu0
    %v423 = vand.u32 %v238, 4294901760
    %v424 = vsub.f32 %v238, %v423
    %v425 = vand.u32 %v424, 4294901760
    %v426 = vsub.f32 %v424, %v425
    %v427 = vand.u32 %v426, 4294901760
    %428 = vmatprep.mubr.f32.mxu0 %v427
    %v429 = vand.u32 %v237, 4294901760
    %v430 = vsub.f32 %v237, %v429
    %v431 = vand.u32 %v430, 4294901760
    %v432 = vsub.f32 %v430, %v431
    %v433 = vand.u32 %v432, 4294901760
    %434 = vmatmul.mubr.f32.gmra.mrb[0].mxu0 %v433
    %v435 = vpop.f32.mrb[0].mxu0
    %v436 = vadd.f32 0.0, %v435
    %v437 = vpop.f32.mrb[0].mxu0
    %v438 = vand.u32 %v240, 4294901760
    %v439 = vsub.f32 %v240, %v438
    %v440 = vand.u32 %v439, 4294901760
    %v441 = vsub.f32 %v439, %v440
    %v442 = vand.u32 %v441, 4294901760
    %443 = vmatprep.mubr.f32.mxu0 %v442
    %v444 = vand.u32 %v239, 4294901760
    %v445 = vsub.f32 %v239, %v444
    %v446 = vand.u32 %v445, 4294901760
    %v447 = vsub.f32 %v445, %v446
    %v448 = vand.u32 %v447, 4294901760
    %449 = vmatmul.mubr.f32.gmra.mrb[0].mxu0 %v448
    %v450 = vpop.f32.mrb[0].mxu0
    %v451 = vadd.f32 0.0, %v450
    %v452 = vpop.f32.mrb[0].mxu0
    %v453 = vand.u32 %v242, 4294901760
    %v454 = vsub.f32 %v242, %v453
    %v455 = vand.u32 %v454, 4294901760
    %v456 = vsub.f32 %v454, %v455
    %v457 = vand.u32 %v456, 4294901760
    %458 = vmatprep.mubr.f32.mxu0 %v457
    %v459 = vand.u32 %v241, 4294901760
    %v460 = vsub.f32 %v241, %v459
    %v461 = vand.u32 %v460, 4294901760
    %v462 = vsub.f32 %v460, %v461
    %v463 = vand.u32 %v462, 4294901760
    %464 = vmatmul.mubr.f32.gmra.mrb[0].mxu0 %v463
    %v465 = vpop.f32.mrb[0].mxu0
    %v466 = vadd.f32 0.0, %v465
    %v467 = vpop.f32.mrb[0].mxu0
    %v468 = vand.u32 %v244, 4294901760
    %v469 = vsub.f32 %v244, %v468
    %v470 = vand.u32 %v469, 4294901760
    %v471 = vsub.f32 %v469, %v470
    %v472 = vand.u32 %v471, 4294901760
    %473 = vmatprep.mubr.f32.mxu0 %v472
    %v474 = vand.u32 %v243, 4294901760
    %v475 = vsub.f32 %v243, %v474
    %v476 = vand.u32 %v475, 4294901760
    %v477 = vsub.f32 %v475, %v476
    %v478 = vand.u32 %v477, 4294901760
    %479 = vmatmul.mubr.f32.gmra.mrb[0].mxu0 %v478
    %v480 = vpop.f32.mrb[0].mxu0
    %v481 = vadd.f32 0.0, %v480
    %v482 = vpop.f32.mrb[0].mxu0
    %v483 = vand.u32 %v246, 4294901760
    %v484 = vsub.f32 %v246, %v483
    %v485 = vand.u32 %v484, 4294901760
    %v486 = vsub.f32 %v484, %v485
    %v487 = vand.u32 %v486, 4294901760
    %488 = vmatprep.mubr.f32.mxu0 %v487
    %v489 = vand.u32 %v245, 4294901760
    %v490 = vsub.f32 %v245, %v489
    %v491 = vand.u32 %v490, 4294901760
    %v492 = vsub.f32 %v490, %v491
    %v493 = vand.u32 %v492, 4294901760
    %494 = vmatmul.mubr.f32.gmra.mrb[0].mxu0 %v493
    %v495 = vpop.f32.mrb[0].mxu0
    %v496 = vadd.f32 0.0, %v495
    %v497 = vpop.f32.mrb[0].mxu0
    %v498 = vand.u32 %v248, 4294901760
    %v499 = vsub.f32 %v248, %v498
    %v500 = vand.u32 %v499, 4294901760
    %v501 = vsub.f32 %v499, %v500
    %v502 = vand.u32 %v501, 4294901760
    %503 = vmatprep.mubr.f32.mxu0 %v502
    %v504 = vand.u32 %v247, 4294901760
    %v505 = vsub.f32 %v247, %v504
    %v506 = vand.u32 %v505, 4294901760
    %v507 = vsub.f32 %v505, %v506
    %v508 = vand.u32 %v507, 4294901760
    %509 = vmatmul.mubr.f32.gmra.mrb[0].mxu0 %v508
    %v510 = vpop.f32.mrb[0].mxu0
    %v511 = vadd.f32 0.0, %v510
    %v512 = vpop.f32.mrb[0].mxu0
    %v513 = vand.u32 %v250, 4294901760
    %v514 = vsub.f32 %v250, %v513
    %v515 = vand.u32 %v514, 4294901760
    %v516 = vsub.f32 %v514, %v515
    %v517 = vand.u32 %v516, 4294901760
    %518 = vmatprep.mubr.f32.mxu0 %v517
    %v519 = vand.u32 %v249, 4294901760
    %v520 = vsub.f32 %v249, %v519
    %v521 = vand.u32 %v520, 4294901760
    %v522 = vsub.f32 %v520, %v521
    %v523 = vand.u32 %v522, 4294901760
    %524 = vmatmul.mubr.f32.gmra.mrb[0].mxu0 %v523
    %v525 = vpop.f32.mrb[0].mxu0
    %v526 = vadd.f32 0.0, %v525
    %v527 = vpop.f32.mrb[0].mxu0
    %v528 = vand.u32 %v252, 4294901760
    %v529 = vsub.f32 %v252, %v528
    %v530 = vand.u32 %v529, 4294901760
    %v531 = vsub.f32 %v529, %v530
    %v532 = vand.u32 %v531, 4294901760
    %533 = vmatprep.mubr.f32.mxu0 %v532
    %v534 = vand.u32 %v251, 4294901760
    %v535 = vsub.f32 %v251, %v534
    %v536 = vand.u32 %v535, 4294901760
    %v537 = vsub.f32 %v535, %v536
    %v538 = vand.u32 %v537, 4294901760
    %539 = vmatmul.mubr.f32.gmra.mrb[0].mxu0 %v538
    %v540 = vpop.f32.mrb[0].mxu0
    %v541 = vadd.f32 0.0, %v540
    %v542 = vpop.f32.mrb[0].mxu0
    %v543 = vand.u32 %v254, 4294901760
    %v544 = vsub.f32 %v254, %v543
    %v545 = vand.u32 %v544, 4294901760
    %v546 = vsub.f32 %v544, %v545
    %v547 = vand.u32 %v546, 4294901760
    %548 = vmatprep.mubr.f32.mxu0 %v547
    %v549 = vand.u32 %v253, 4294901760
    %v550 = vsub.f32 %v253, %v549
    %v551 = vand.u32 %v550, 4294901760
    %v552 = vsub.f32 %v550, %v551
    %v553 = vand.u32 %v552, 4294901760
    %554 = vmatmul.mubr.f32.gmra.mrb[0].mxu0 %v553
    %v555 = vpop.f32.mrb[0].mxu0
    %v556 = vadd.f32 0.0, %v555
    %v557 = vpop.f32.mrb[0].mxu0
    %v558 = vand.u32 %v256, 4294901760
    %v559 = vsub.f32 %v256, %v558
    %v560 = vand.u32 %v559, 4294901760
    %v561 = vsub.f32 %v559, %v560
    %v562 = vand.u32 %v561, 4294901760
    %563 = vmatprep.mubr.f32.mxu0 %v562
    %v564 = vand.u32 %v255, 4294901760
    %v565 = vsub.f32 %v255, %v564
    %v566 = vand.u32 %v565, 4294901760
    %v567 = vsub.f32 %v565, %v566
    %v568 = vand.u32 %v567, 4294901760
    %569 = vmatmul.mubr.f32.gmra.mrb[0].mxu0 %v568
    %v570 = vpop.f32.mrb[0].mxu0
    %v571 = vadd.f32 0.0, %v570
    %v572 = vpop.f32.mrb[0].mxu0
    %v573 = vand.u32 %v258, 4294901760
    %v574 = vsub.f32 %v258, %v573
    %v575 = vand.u32 %v574, 4294901760
    %v576 = vsub.f32 %v574, %v575
    %v577 = vand.u32 %v576, 4294901760
    %578 = vmatprep.mubr.f32.mxu0 %v577
    %v579 = vand.u32 %v257, 4294901760
    %v580 = vsub.f32 %v257, %v579
    %v581 = vand.u32 %v580, 4294901760
    %v582 = vsub.f32 %v580, %v581
    %v583 = vand.u32 %v582, 4294901760
    %584 = vmatmul.mubr.f32.gmra.mrb[0].mxu0 %v583
    %v585 = vpop.f32.mrb[0].mxu0
    %v586 = vadd.f32 0.0, %v585
    %v587 = vpop.f32.mrb[0].mxu0
    %v588 = vand.u32 %v260, 4294901760
    %v589 = vsub.f32 %v260, %v588
    %v590 = vand.u32 %v589, 4294901760
    %v591 = vsub.f32 %v589, %v590
    %v592 = vand.u32 %v591, 4294901760
    %593 = vmatprep.mubr.f32.mxu0 %v592
    %v594 = vand.u32 %v259, 4294901760
    %v595 = vsub.f32 %v259, %v594
    %v596 = vand.u32 %v595, 4294901760
    %v597 = vsub.f32 %v595, %v596
    %v598 = vand.u32 %v597, 4294901760
    %599 = vmatmul.mubr.f32.gmra.mrb[0].mxu0 %v598
    %v600 = vpop.f32.mrb[0].mxu0
    %v601 = vadd.f32 0.0, %v600
    %v602 = vpop.f32.mrb[0].mxu0
    %v603 = vand.u32 %v262, 4294901760
    %v604 = vsub.f32 %v262, %v603
    %v605 = vand.u32 %v604, 4294901760
    %v606 = vsub.f32 %v604, %v605
    %v607 = vand.u32 %v606, 4294901760
    %608 = vmatprep.mubr.f32.mxu0 %v607
    %v609 = vand.u32 %v261, 4294901760
    %v610 = vsub.f32 %v261, %v609
    %v611 = vand.u32 %v610, 4294901760
    %v612 = vsub.f32 %v610, %v611
    %v613 = vand.u32 %v612, 4294901760
    %614 = vmatmul.mubr.f32.gmra.mrb[0].mxu0 %v613
    %v615 = vpop.f32.mrb[0].mxu0
    %v616 = vadd.f32 0.0, %v615
    %v617 = vpop.f32.mrb[0].mxu0
    %v618 = vand.u32 %v264, 4294901760
    %v619 = vsub.f32 %v264, %v618
    %v620 = vand.u32 %v619, 4294901760
    %v621 = vsub.f32 %v619, %v620
    %v622 = vand.u32 %v621, 4294901760
    %623 = vmatprep.mubr.f32.mxu0 %v622
    %v624 = vand.u32 %v263, 4294901760
    %v625 = vsub.f32 %v263, %v624
    %v626 = vand.u32 %v625, 4294901760
    %v627 = vsub.f32 %v625, %v626
    %v628 = vand.u32 %v627, 4294901760
    %629 = vmatmul.mubr.f32.gmra.mrb[0].mxu0 %v628
    %v630 = vpop.f32.mrb[0].mxu0
    %v631 = vadd.f32 0.0, %v630
    %v632 = vpop.f32.mrb[0].mxu0
    %633 = vdwg.mxu0
    %634 = vmatprep.subr.mxu0 0.0
    %v635 = vand.u32 %v265, 4294901760
    %v636 = vsub.f32 %v265, %v635
    %v637 = vand.u32 %v636, 4294901760
    %v638 = vsub.f32 %v636, %v637
    %v639 = vand.u32 %v638, 4294901760
    %640 = vmatpush1.msra.mxu0 %v639
    %641 = vmatprep.subr.mxu0 0.0
    %v642 = vand.u32 %v266, 4294901760
    %v643 = vsub.f32 %v266, %v642
    %v644 = vand.u32 %v643, 4294901760
    %v645 = vsub.f32 %v643, %v644
    %v646 = vand.u32 %v645, 4294901760
    %647 = vmatpush1.msra.mxu0 %v646
    %648 = vmatprep.subr.mxu0 0.0
    %v649 = vand.u32 %v267, 4294901760
    %v650 = vsub.f32 %v267, %v649
    %v651 = vand.u32 %v650, 4294901760
    %v652 = vsub.f32 %v650, %v651
    %v653 = vand.u32 %v652, 4294901760
    %654 = vmatpush1.msra.mxu0 %v653
    %655 = vmatprep.subr.mxu0 0.0
    %v656 = vand.u32 %v268, 4294901760
    %v657 = vsub.f32 %v268, %v656
    %v658 = vand.u32 %v657, 4294901760
    %v659 = vsub.f32 %v657, %v658
    %v660 = vand.u32 %v659, 4294901760
    %661 = vmatpush1.msra.mxu0 %v660
    %662 = vmatprep.subr.mxu0 0.0
    %v663 = vand.u32 %v269, 4294901760
    %v664 = vsub.f32 %v269, %v663
    %v665 = vand.u32 %v664, 4294901760
    %v666 = vsub.f32 %v664, %v665
    %v667 = vand.u32 %v666, 4294901760
    %668 = vmatpush1.msra.mxu0 %v667
    %669 = vmatprep.subr.mxu0 0.0
    %v670 = vand.u32 %v270, 4294901760
    %v671 = vsub.f32 %v270, %v670
    %v672 = vand.u32 %v671, 4294901760
    %v673 = vsub.f32 %v671, %v672
    %v674 = vand.u32 %v673, 4294901760
    %675 = vmatpush1.msra.mxu0 %v674
    %676 = vmatprep.subr.mxu0 0.0
    %v677 = vand.u32 %v271, 4294901760
    %v678 = vsub.f32 %v271, %v677
    %v679 = vand.u32 %v678, 4294901760
    %v680 = vsub.f32 %v678, %v679
    %v681 = vand.u32 %v680, 4294901760
    %682 = vmatpush1.msra.mxu0 %v681
    %683 = vmatprep.subr.mxu0 0.0
    %v684 = vand.u32 %v272, 4294901760
    %v685 = vsub.f32 %v272, %v684
    %v686 = vand.u32 %v685, 4294901760
    %v687 = vsub.f32 %v685, %v686
    %v688 = vand.u32 %v687, 4294901760
    %689 = vmatpush1.msra.mxu0 %v688
    %690 = vmatprep.subr.mxu0 0.0
    %v691 = vand.u32 %v273, 4294901760
    %v692 = vsub.f32 %v273, %v691
    %v693 = vand.u32 %v692, 4294901760
    %v694 = vsub.f32 %v692, %v693
    %v695 = vand.u32 %v694, 4294901760
    %696 = vmatpush1.msra.mxu0 %v695
    %697 = vmatprep.subr.mxu0 0.0
    %v698 = vand.u32 %v274, 4294901760
    %v699 = vsub.f32 %v274, %v698
    %v700 = vand.u32 %v699, 4294901760
    %v701 = vsub.f32 %v699, %v700
    %v702 = vand.u32 %v701, 4294901760
    %703 = vmatpush1.msra.mxu0 %v702
    %704 = vmatprep.subr.mxu0 0.0
    %v705 = vand.u32 %v275, 4294901760
    %v706 = vsub.f32 %v275, %v705
    %v707 = vand.u32 %v706, 4294901760
    %v708 = vsub.f32 %v706, %v707
    %v709 = vand.u32 %v708, 4294901760
    %710 = vmatpush1.msra.mxu0 %v709
    %711 = vmatprep.subr.mxu0 0.0
    %v712 = vand.u32 %v276, 4294901760
    %v713 = vsub.f32 %v276, %v712
    %v714 = vand.u32 %v713, 4294901760
    %v715 = vsub.f32 %v713, %v714
    %v716 = vand.u32 %v715, 4294901760
    %717 = vmatpush1.msra.mxu0 %v716
    %718 = vmatprep.subr.mxu0 0.0
    %v719 = vand.u32 %v277, 4294901760
    %v720 = vsub.f32 %v277, %v719
    %v721 = vand.u32 %v720, 4294901760
    %v722 = vsub.f32 %v720, %v721
    %v723 = vand.u32 %v722, 4294901760
    %724 = vmatpush1.msra.mxu0 %v723
    %725 = vmatprep.subr.mxu0 0.0
    %v726 = vand.u32 %v278, 4294901760
    %v727 = vsub.f32 %v278, %v726
    %v728 = vand.u32 %v727, 4294901760
    %v729 = vsub.f32 %v727, %v728
    %v730 = vand.u32 %v729, 4294901760
    %731 = vmatpush1.msra.mxu0 %v730
    %732 = vmatprep.subr.mxu0 0.0
    %v733 = vand.u32 %v279, 4294901760
    %v734 = vsub.f32 %v279, %v733
    %v735 = vand.u32 %v734, 4294901760
    %v736 = vsub.f32 %v734, %v735
    %v737 = vand.u32 %v736, 4294901760
    %738 = vmatpush1.msra.mxu0 %v737
    %739 = vmatprep.subr.mxu0 0.0
    %v740 = vand.u32 %v280, 4294901760
    %v741 = vsub.f32 %v280, %v740
    %v742 = vand.u32 %v741, 4294901760
    %v743 = vsub.f32 %v741, %v742
    %v744 = vand.u32 %v743, 4294901760
    %745 = vmatpush1.msra.mxu0 %v744
    %746 = vmatprep.subr.mxu0 0.0
    %v747 = vand.u32 %v281, 4294901760
    %v748 = vsub.f32 %v281, %v747
    %v749 = vand.u32 %v748, 4294901760
    %v750 = vsub.f32 %v748, %v749
    %v751 = vand.u32 %v750, 4294901760
    %752 = vmatpush1.msra.mxu0 %v751
    %753 = vmatprep.subr.mxu0 0.0
    %v754 = vand.u32 %v282, 4294901760
    %v755 = vsub.f32 %v282, %v754
    %v756 = vand.u32 %v755, 4294901760
    %v757 = vsub.f32 %v755, %v756
    %v758 = vand.u32 %v757, 4294901760
    %759 = vmatpush1.msra.mxu0 %v758
    %760 = vmatprep.subr.mxu0 0.0
    %v761 = vand.u32 %v283, 4294901760
    %v762 = vsub.f32 %v283, %v761
    %v763 = vand.u32 %v762, 4294901760
    %v764 = vsub.f32 %v762, %v763
    %v765 = vand.u32 %v764, 4294901760
    %766 = vmatpush1.msra.mxu0 %v765
    %767 = vmatprep.subr.mxu0 0.0
    %v768 = vand.u32 %v284, 4294901760
    %v769 = vsub.f32 %v284, %v768
    %v770 = vand.u32 %v769, 4294901760
    %v771 = vsub.f32 %v769, %v770
    %v772 = vand.u32 %v771, 4294901760
    %773 = vmatpush1.msra.mxu0 %v772
    %774 = vmatprep.subr.mxu0 0.0
    %v775 = vand.u32 %v285, 4294901760
    %v776 = vsub.f32 %v285, %v775
    %v777 = vand.u32 %v776, 4294901760
    %v778 = vsub.f32 %v776, %v777
    %v779 = vand.u32 %v778, 4294901760
    %780 = vmatpush1.msra.mxu0 %v779
    %781 = vmatprep.subr.mxu0 0.0
    %v782 = vand.u32 %v286, 4294901760
    %v783 = vsub.f32 %v286, %v782
    %v784 = vand.u32 %v783, 4294901760
    %v785 = vsub.f32 %v783, %v784
    %v786 = vand.u32 %v785, 4294901760
    %787 = vmatpush1.msra.mxu0 %v786
    %788 = vmatprep.subr.mxu0 0.0
    %v789 = vand.u32 %v287, 4294901760
    %v790 = vsub.f32 %v287, %v789
    %v791 = vand.u32 %v790, 4294901760
    %v792 = vsub.f32 %v790, %v791
    %v793 = vand.u32 %v792, 4294901760
    %794 = vmatpush1.msra.mxu0 %v793
    %795 = vmatprep.subr.mxu0 0.0
    %v796 = vand.u32 %v288, 4294901760
    %v797 = vsub.f32 %v288, %v796
    %v798 = vand.u32 %v797, 4294901760
    %v799 = vsub.f32 %v797, %v798
    %v800 = vand.u32 %v799, 4294901760
    %801 = vmatpush1.msra.mxu0 %v800
    %802 = vmatprep.subr.mxu0 0.0
    %v803 = vand.u32 %v289, 4294901760
    %v804 = vsub.f32 %v289, %v803
    %v805 = vand.u32 %v804, 4294901760
    %v806 = vsub.f32 %v804, %v805
    %v807 = vand.u32 %v806, 4294901760
    %808 = vmatpush1.msra.mxu0 %v807
    %809 = vmatprep.subr.mxu0 0.0
    %v810 = vand.u32 %v290, 4294901760
    %v811 = vsub.f32 %v290, %v810
    %v812 = vand.u32 %v811, 4294901760
    %v813 = vsub.f32 %v811, %v812
    %v814 = vand.u32 %v813, 4294901760
    %815 = vmatpush1.msra.mxu0 %v814
    %816 = vmatprep.subr.mxu0 0.0
    %v817 = vand.u32 %v291, 4294901760
    %v818 = vsub.f32 %v291, %v817
    %v819 = vand.u32 %v818, 4294901760
    %v820 = vsub.f32 %v818, %v819
    %v821 = vand.u32 %v820, 4294901760
    %822 = vmatpush1.msra.mxu0 %v821
    %823 = vmatprep.subr.mxu0 0.0
    %v824 = vand.u32 %v292, 4294901760
    %v825 = vsub.f32 %v292, %v824
    %v826 = vand.u32 %v825, 4294901760
    %v827 = vsub.f32 %v825, %v826
    %v828 = vand.u32 %v827, 4294901760
    %829 = vmatpush1.msra.mxu0 %v828
    %830 = vmatprep.subr.mxu0 0.0
    %v831 = vand.u32 %v293, 4294901760
    %v832 = vsub.f32 %v293, %v831
    %v833 = vand.u32 %v832, 4294901760
    %v834 = vsub.f32 %v832, %v833
    %v835 = vand.u32 %v834, 4294901760
    %836 = vmatpush1.msra.mxu0 %v835
    %837 = vmatprep.subr.mxu0 0.0
    %v838 = vand.u32 %v294, 4294901760
    %v839 = vsub.f32 %v294, %v838
    %v840 = vand.u32 %v839, 4294901760
    %v841 = vsub.f32 %v839, %v840
    %v842 = vand.u32 %v841, 4294901760
    %843 = vmatpush1.msra.mxu0 %v842
    %844 = vmatprep.subr.mxu0 0.0
    %v845 = vand.u32 %v295, 4294901760
    %v846 = vsub.f32 %v295, %v845
    %v847 = vand.u32 %v846, 4294901760
    %v848 = vsub.f32 %v846, %v847
    %v849 = vand.u32 %v848, 4294901760
    %850 = vmatpush1.msra.mxu0 %v849
    %851 = vmatprep.subr.mxu0 0.0
    %v852 = vand.u32 %v296, 4294901760
    %v853 = vsub.f32 %v296, %v852
    %v854 = vand.u32 %v853, 4294901760
    %v855 = vsub.f32 %v853, %v854
    %v856 = vand.u32 %v855, 4294901760
    %857 = vmatpush1.msra.mxu0 %v856
    %v858 = vand.u32 %v234, 4294901760
    %859 = vmatprep.mubr.f32.mxu0 %v858
    %v860 = vand.u32 %v233, 4294901760
    %861 = vmatmul.mubr.f32.gmra.mrb[0].mxu0 %v860
    %v862 = vpop.f32.mrb[0].mxu0
    %v863 = vadd.f32 %v406, %v862
    %v864 = vpop.f32.mrb[0].mxu0
    %v865 = vand.u32 %v236, 4294901760
    %866 = vmatprep.mubr.f32.mxu0 %v865
    %v867 = vand.u32 %v235, 4294901760
    %868 = vmatmul.mubr.f32.gmra.mrb[0].mxu0 %v867
    %v869 = vpop.f32.mrb[0].mxu0
    %v870 = vadd.f32 %v421, %v869
    %v871 = vpop.f32.mrb[0].mxu0
    %v872 = vand.u32 %v238, 4294901760
    %873 = vmatprep.mubr.f32.mxu0 %v872
    %v874 = vand.u32 %v237, 4294901760
    %875 = vmatmul.mubr.f32.gmra.mrb[0].mxu0 %v874
    %v876 = vpop.f32.mrb[0].mxu0
    %v877 = vadd.f32 %v436, %v876
    %v878 = vpop.f32.mrb[0].mxu0
    %v879 = vand.u32 %v240, 4294901760
    %880 = vmatprep.mubr.f32.mxu0 %v879
    %v881 = vand.u32 %v239, 4294901760
    %882 = vmatmul.mubr.f32.gmra.mrb[0].mxu0 %v881
    %v883 = vpop.f32.mrb[0].mxu0
    %v884 = vadd.f32 %v451, %v883
    %v885 = vpop.f32.mrb[0].mxu0
    %v886 = vand.u32 %v242, 4294901760
    %887 = vmatprep.mubr.f32.mxu0 %v886
    %v888 = vand.u32 %v241, 4294901760
    %889 = vmatmul.mubr.f32.gmra.mrb[0].mxu0 %v888
    %v890 = vpop.f32.mrb[0].mxu0
    %v891 = vadd.f32 %v466, %v890
    %v892 = vpop.f32.mrb[0].mxu0
    %v893 = vand.u32 %v244, 4294901760
    %894 = vmatprep.mubr.f32.mxu0 %v893
    %v895 = vand.u32 %v243, 4294901760
    %896 = vmatmul.mubr.f32.gmra.mrb[0].mxu0 %v895
    %v897 = vpop.f32.mrb[0].mxu0
    %v898 = vadd.f32 %v481, %v897
    %v899 = vpop.f32.mrb[0].mxu0
    %v900 = vand.u32 %v246, 4294901760
    %901 = vmatprep.mubr.f32.mxu0 %v900
    %v902 = vand.u32 %v245, 4294901760
    %903 = vmatmul.mubr.f32.gmra.mrb[0].mxu0 %v902
    %v904 = vpop.f32.mrb[0].mxu0
    %v905 = vadd.f32 %v496, %v904
    %v906 = vpop.f32.mrb[0].mxu0
    %v907 = vand.u32 %v248, 4294901760
    %908 = vmatprep.mubr.f32.mxu0 %v907
    %v909 = vand.u32 %v247, 4294901760
    %910 = vmatmul.mubr.f32.gmra.mrb[0].mxu0 %v909
    %v911 = vpop.f32.mrb[0].mxu0
    %v912 = vadd.f32 %v511, %v911
    %v913 = vpop.f32.mrb[0].mxu0
    %v914 = vand.u32 %v250, 4294901760
    %915 = vmatprep.mubr.f32.mxu0 %v914
    %v916 = vand.u32 %v249, 4294901760
    %917 = vmatmul.mubr.f32.gmra.mrb[0].mxu0 %v916
    %v918 = vpop.f32.mrb[0].mxu0
    %v919 = vadd.f32 %v526, %v918
    %v920 = vpop.f32.mrb[0].mxu0
    %v921 = vand.u32 %v252, 4294901760
    %922 = vmatprep.mubr.f32.mxu0 %v921
    %v923 = vand.u32 %v251, 4294901760
    %924 = vmatmul.mubr.f32.gmra.mrb[0].mxu0 %v923
    %v925 = vpop.f32.mrb[0].mxu0
    %v926 = vadd.f32 %v541, %v925
    %v927 = vpop.f32.mrb[0].mxu0
    %v928 = vand.u32 %v254, 4294901760
    %929 = vmatprep.mubr.f32.mxu0 %v928
    %v930 = vand.u32 %v253, 4294901760
    %931 = vmatmul.mubr.f32.gmra.mrb[0].mxu0 %v930
    %v932 = vpop.f32.mrb[0].mxu0
    %v933 = vadd.f32 %v556, %v932
    %v934 = vpop.f32.mrb[0].mxu0
    %v935 = vand.u32 %v256, 4294901760
    %936 = vmatprep.mubr.f32.mxu0 %v935
    %v937 = vand.u32 %v255, 4294901760
    %938 = vmatmul.mubr.f32.gmra.mrb[0].mxu0 %v937
    %v939 = vpop.f32.mrb[0].mxu0
    %v940 = vadd.f32 %v571, %v939
    %v941 = vpop.f32.mrb[0].mxu0
    %v942 = vand.u32 %v258, 4294901760
    %943 = vmatprep.mubr.f32.mxu0 %v942
    %v944 = vand.u32 %v257, 4294901760
    %945 = vmatmul.mubr.f32.gmra.mrb[0].mxu0 %v944
    %v946 = vpop.f32.mrb[0].mxu0
    %v947 = vadd.f32 %v586, %v946
    %v948 = vpop.f32.mrb[0].mxu0
    %v949 = vand.u32 %v260, 4294901760
    %950 = vmatprep.mubr.f32.mxu0 %v949
    %v951 = vand.u32 %v259, 4294901760
    %952 = vmatmul.mubr.f32.gmra.mrb[0].mxu0 %v951
    %v953 = vpop.f32.mrb[0].mxu0
    %v954 = vadd.f32 %v601, %v953
    %v955 = vpop.f32.mrb[0].mxu0
    %v956 = vand.u32 %v262, 4294901760
    %957 = vmatprep.mubr.f32.mxu0 %v956
    %v958 = vand.u32 %v261, 4294901760
    %959 = vmatmul.mubr.f32.gmra.mrb[0].mxu0 %v958
    %v960 = vpop.f32.mrb[0].mxu0
    %v961 = vadd.f32 %v616, %v960
    %v962 = vpop.f32.mrb[0].mxu0
    %v963 = vand.u32 %v264, 4294901760
    %964 = vmatprep.mubr.f32.mxu0 %v963
    %v965 = vand.u32 %v263, 4294901760
    %966 = vmatmul.mubr.f32.gmra.mrb[0].mxu0 %v965
    %v967 = vpop.f32.mrb[0].mxu0
    %v968 = vadd.f32 %v631, %v967
    %v969 = vpop.f32.mrb[0].mxu0
    %970 = vdwg.mxu0
    %971 = vmatprep.subr.mxu0 0.0
    %v972 = vand.u32 %v265, 4294901760
    %v973 = vsub.f32 %v265, %v972
    %974 = vmatpush1.msra.mxu0 %v973
    %975 = vmatprep.subr.mxu0 0.0
    %v976 = vand.u32 %v266, 4294901760
    %v977 = vsub.f32 %v266, %v976
    %978 = vmatpush1.msra.mxu0 %v977
    %979 = vmatprep.subr.mxu0 0.0
    %v980 = vand.u32 %v267, 4294901760
    %v981 = vsub.f32 %v267, %v980
    %982 = vmatpush1.msra.mxu0 %v981
    %983 = vmatprep.subr.mxu0 0.0
    %v984 = vand.u32 %v268, 4294901760
    %v985 = vsub.f32 %v268, %v984
    %986 = vmatpush1.msra.mxu0 %v985
    %987 = vmatprep.subr.mxu0 0.0
    %v988 = vand.u32 %v269, 4294901760
    %v989 = vsub.f32 %v269, %v988
    %990 = vmatpush1.msra.mxu0 %v989
    %991 = vmatprep.subr.mxu0 0.0
    %v992 = vand.u32 %v270, 4294901760
    %v993 = vsub.f32 %v270, %v992
    %994 = vmatpush1.msra.mxu0 %v993
    %995 = vmatprep.subr.mxu0 0.0
    %v996 = vand.u32 %v271, 4294901760
    %v997 = vsub.f32 %v271, %v996
    %998 = vmatpush1.msra.mxu0 %v997
    %999 = vmatprep.subr.mxu0 0.0
    %v1000 = vand.u32 %v272, 4294901760
    %v1001 = vsub.f32 %v272, %v1000
    %1002 = vmatpush1.msra.mxu0 %v1001
    %1003 = vmatprep.subr.mxu0 0.0
    %v1004 = vand.u32 %v273, 4294901760
    %v1005 = vsub.f32 %v273, %v1004
    %1006 = vmatpush1.msra.mxu0 %v1005
    %1007 = vmatprep.subr.mxu0 0.0
    %v1008 = vand.u32 %v274, 4294901760
    %v1009 = vsub.f32 %v274, %v1008
    %1010 = vmatpush1.msra.mxu0 %v1009
    %1011 = vmatprep.subr.mxu0 0.0
    %v1012 = vand.u32 %v275, 4294901760
    %v1013 = vsub.f32 %v275, %v1012
    %1014 = vmatpush1.msra.mxu0 %v1013
    %1015 = vmatprep.subr.mxu0 0.0
    %v1016 = vand.u32 %v276, 4294901760
    %v1017 = vsub.f32 %v276, %v1016
    %1018 = vmatpush1.msra.mxu0 %v1017
    %1019 = vmatprep.subr.mxu0 0.0
    %v1020 = vand.u32 %v277, 4294901760
    %v1021 = vsub.f32 %v277, %v1020
    %1022 = vmatpush1.msra.mxu0 %v1021
    %1023 = vmatprep.subr.mxu0 0.0
    %v1024 = vand.u32 %v278, 4294901760
    %v1025 = vsub.f32 %v278, %v1024
    %1026 = vmatpush1.msra.mxu0 %v1025
    %1027 = vmatprep.subr.mxu0 0.0
    %v1028 = vand.u32 %v279, 4294901760
    %v1029 = vsub.f32 %v279, %v1028
    %1030 = vmatpush1.msra.mxu0 %v1029
    %1031 = vmatprep.subr.mxu0 0.0
    %v1032 = vand.u32 %v280, 4294901760
    %v1033 = vsub.f32 %v280, %v1032
    %1034 = vmatpush1.msra.mxu0 %v1033
    %1035 = vmatprep.subr.mxu0 0.0
    %v1036 = vand.u32 %v281, 4294901760
    %v1037 = vsub.f32 %v281, %v1036
    %1038 = vmatpush1.msra.mxu0 %v1037
    %1039 = vmatprep.subr.mxu0 0.0
    %v1040 = vand.u32 %v282, 4294901760
    %v1041 = vsub.f32 %v282, %v1040
    %1042 = vmatpush1.msra.mxu0 %v1041
    %1043 = vmatprep.subr.mxu0 0.0
    %v1044 = vand.u32 %v283, 4294901760
    %v1045 = vsub.f32 %v283, %v1044
    %1046 = vmatpush1.msra.mxu0 %v1045
    %1047 = vmatprep.subr.mxu0 0.0
    %v1048 = vand.u32 %v284, 4294901760
    %v1049 = vsub.f32 %v284, %v1048
    %1050 = vmatpush1.msra.mxu0 %v1049
    %1051 = vmatprep.subr.mxu0 0.0
    %v1052 = vand.u32 %v285, 4294901760
    %v1053 = vsub.f32 %v285, %v1052
    %1054 = vmatpush1.msra.mxu0 %v1053
    %1055 = vmatprep.subr.mxu0 0.0
    %v1056 = vand.u32 %v286, 4294901760
    %v1057 = vsub.f32 %v286, %v1056
    %1058 = vmatpush1.msra.mxu0 %v1057
    %1059 = vmatprep.subr.mxu0 0.0
    %v1060 = vand.u32 %v287, 4294901760
    %v1061 = vsub.f32 %v287, %v1060
    %1062 = vmatpush1.msra.mxu0 %v1061
    %1063 = vmatprep.subr.mxu0 0.0
    %v1064 = vand.u32 %v288, 4294901760
    %v1065 = vsub.f32 %v288, %v1064
    %1066 = vmatpush1.msra.mxu0 %v1065
    %1067 = vmatprep.subr.mxu0 0.0
    %v1068 = vand.u32 %v289, 4294901760
    %v1069 = vsub.f32 %v289, %v1068
    %1070 = vmatpush1.msra.mxu0 %v1069
    %1071 = vmatprep.subr.mxu0 0.0
    %v1072 = vand.u32 %v290, 4294901760
    %v1073 = vsub.f32 %v290, %v1072
    %1074 = vmatpush1.msra.mxu0 %v1073
    %1075 = vmatprep.subr.mxu0 0.0
    %v1076 = vand.u32 %v291, 4294901760
    %v1077 = vsub.f32 %v291, %v1076
    %1078 = vmatpush1.msra.mxu0 %v1077
    %1079 = vmatprep.subr.mxu0 0.0
    %v1080 = vand.u32 %v292, 4294901760
    %v1081 = vsub.f32 %v292, %v1080
    %1082 = vmatpush1.msra.mxu0 %v1081
    %1083 = vmatprep.subr.mxu0 0.0
    %v1084 = vand.u32 %v293, 4294901760
    %v1085 = vsub.f32 %v293, %v1084
    %1086 = vmatpush1.msra.mxu0 %v1085
    %1087 = vmatprep.subr.mxu0 0.0
    %v1088 = vand.u32 %v294, 4294901760
    %v1089 = vsub.f32 %v294, %v1088
    %1090 = vmatpush1.msra.mxu0 %v1089
    %1091 = vmatprep.subr.mxu0 0.0
    %v1092 = vand.u32 %v295, 4294901760
    %v1093 = vsub.f32 %v295, %v1092
    %1094 = vmatpush1.msra.mxu0 %v1093
    %1095 = vmatprep.subr.mxu0 0.0
    %v1096 = vand.u32 %v296, 4294901760
    %v1097 = vsub.f32 %v296, %v1096
    %1098 = vmatpush1.msra.mxu0 %v1097
    %v1099 = vand.u32 %v234, 4294901760
    %v1100 = vsub.f32 %v234, %v1099
    %1101 = vmatprep.mubr.f32.mxu0 %v1100
    %v1102 = vand.u32 %v233, 4294901760
    %v1103 = vsub.f32 %v233, %v1102
    %1104 = vmatmul.mubr.f32.gmra.mrb[0].mxu0 %v1103
    %v1105 = vpop.f32.mrb[0].mxu0
    %v1106 = vadd.f32 %v863, %v1105
    %v1107 = vpop.f32.mrb[0].mxu0
    %v1108 = vand.u32 %v236, 4294901760
    %v1109 = vsub.f32 %v236, %v1108
    %1110 = vmatprep.mubr.f32.mxu0 %v1109
    %v1111 = vand.u32 %v235, 4294901760
    %v1112 = vsub.f32 %v235, %v1111
    %1113 = vmatmul.mubr.f32.gmra.mrb[0].mxu0 %v1112
    %v1114 = vpop.f32.mrb[0].mxu0
    %v1115 = vadd.f32 %v870, %v1114
    %v1116 = vpop.f32.mrb[0].mxu0
    %v1117 = vand.u32 %v238, 4294901760
    %v1118 = vsub.f32 %v238, %v1117
    %1119 = vmatprep.mubr.f32.mxu0 %v1118
    %v1120 = vand.u32 %v237, 4294901760
    %v1121 = vsub.f32 %v237, %v1120
    %1122 = vmatmul.mubr.f32.gmra.mrb[0].mxu0 %v1121
    %v1123 = vpop.f32.mrb[0].mxu0
    %v1124 = vadd.f32 %v877, %v1123
    %v1125 = vpop.f32.mrb[0].mxu0
    %v1126 = vand.u32 %v240, 4294901760
    %v1127 = vsub.f32 %v240, %v1126
    %1128 = vmatprep.mubr.f32.mxu0 %v1127
    %v1129 = vand.u32 %v239, 4294901760
    %v1130 = vsub.f32 %v239, %v1129
    %1131 = vmatmul.mubr.f32.gmra.mrb[0].mxu0 %v1130
    %v1132 = vpop.f32.mrb[0].mxu0
    %v1133 = vadd.f32 %v884, %v1132
    %v1134 = vpop.f32.mrb[0].mxu0
    %v1135 = vand.u32 %v242, 4294901760
    %v1136 = vsub.f32 %v242, %v1135
    %1137 = vmatprep.mubr.f32.mxu0 %v1136
    %v1138 = vand.u32 %v241, 4294901760
    %v1139 = vsub.f32 %v241, %v1138
    %1140 = vmatmul.mubr.f32.gmra.mrb[0].mxu0 %v1139
    %v1141 = vpop.f32.mrb[0].mxu0
    %v1142 = vadd.f32 %v891, %v1141
    %v1143 = vpop.f32.mrb[0].mxu0
    %v1144 = vand.u32 %v244, 4294901760
    %v1145 = vsub.f32 %v244, %v1144
    %1146 = vmatprep.mubr.f32.mxu0 %v1145
    %v1147 = vand.u32 %v243, 4294901760
    %v1148 = vsub.f32 %v243, %v1147
    %1149 = vmatmul.mubr.f32.gmra.mrb[0].mxu0 %v1148
    %v1150 = vpop.f32.mrb[0].mxu0
    %v1151 = vadd.f32 %v898, %v1150
    %v1152 = vpop.f32.mrb[0].mxu0
    %v1153 = vand.u32 %v246, 4294901760
    %v1154 = vsub.f32 %v246, %v1153
    %1155 = vmatprep.mubr.f32.mxu0 %v1154
    %v1156 = vand.u32 %v245, 4294901760
    %v1157 = vsub.f32 %v245, %v1156
    %1158 = vmatmul.mubr.f32.gmra.mrb[0].mxu0 %v1157
    %v1159 = vpop.f32.mrb[0].mxu0
    %v1160 = vadd.f32 %v905, %v1159
    %v1161 = vpop.f32.mrb[0].mxu0
    %v1162 = vand.u32 %v248, 4294901760
    %v1163 = vsub.f32 %v248, %v1162
    %1164 = vmatprep.mubr.f32.mxu0 %v1163
    %v1165 = vand.u32 %v247, 4294901760
    %v1166 = vsub.f32 %v247, %v1165
    %1167 = vmatmul.mubr.f32.gmra.mrb[0].mxu0 %v1166
    %v1168 = vpop.f32.mrb[0].mxu0
    %v1169 = vadd.f32 %v912, %v1168
    %v1170 = vpop.f32.mrb[0].mxu0
    %v1171 = vand.u32 %v250, 4294901760
    %v1172 = vsub.f32 %v250, %v1171
    %1173 = vmatprep.mubr.f32.mxu0 %v1172
    %v1174 = vand.u32 %v249, 4294901760
    %v1175 = vsub.f32 %v249, %v1174
    %1176 = vmatmul.mubr.f32.gmra.mrb[0].mxu0 %v1175
    %v1177 = vpop.f32.mrb[0].mxu0
    %v1178 = vadd.f32 %v919, %v1177
    %v1179 = vpop.f32.mrb[0].mxu0
    %v1180 = vand.u32 %v252, 4294901760
    %v1181 = vsub.f32 %v252, %v1180
    %1182 = vmatprep.mubr.f32.mxu0 %v1181
    %v1183 = vand.u32 %v251, 4294901760
    %v1184 = vsub.f32 %v251, %v1183
    %1185 = vmatmul.mubr.f32.gmra.mrb[0].mxu0 %v1184
    %v1186 = vpop.f32.mrb[0].mxu0
    %v1187 = vadd.f32 %v926, %v1186
    %v1188 = vpop.f32.mrb[0].mxu0
    %v1189 = vand.u32 %v254, 4294901760
    %v1190 = vsub.f32 %v254, %v1189
    %1191 = vmatprep.mubr.f32.mxu0 %v1190
    %v1192 = vand.u32 %v253, 4294901760
    %v1193 = vsub.f32 %v253, %v1192
    %1194 = vmatmul.mubr.f32.gmra.mrb[0].mxu0 %v1193
    %v1195 = vpop.f32.mrb[0].mxu0
    %v1196 = vadd.f32 %v933, %v1195
    %v1197 = vpop.f32.mrb[0].mxu0
    %v1198 = vand.u32 %v256, 4294901760
    %v1199 = vsub.f32 %v256, %v1198
    %1200 = vmatprep.mubr.f32.mxu0 %v1199
    %v1201 = vand.u32 %v255, 4294901760
    %v1202 = vsub.f32 %v255, %v1201
    %1203 = vmatmul.mubr.f32.gmra.mrb[0].mxu0 %v1202
    %v1204 = vpop.f32.mrb[0].mxu0
    %v1205 = vadd.f32 %v940, %v1204
    %v1206 = vpop.f32.mrb[0].mxu0
    %v1207 = vand.u32 %v258, 4294901760
    %v1208 = vsub.f32 %v258, %v1207
    %1209 = vmatprep.mubr.f32.mxu0 %v1208
    %v1210 = vand.u32 %v257, 4294901760
    %v1211 = vsub.f32 %v257, %v1210
    %1212 = vmatmul.mubr.f32.gmra.mrb[0].mxu0 %v1211
    %v1213 = vpop.f32.mrb[0].mxu0
    %v1214 = vadd.f32 %v947, %v1213
    %v1215 = vpop.f32.mrb[0].mxu0
    %v1216 = vand.u32 %v260, 4294901760
    %v1217 = vsub.f32 %v260, %v1216
    %1218 = vmatprep.mubr.f32.mxu0 %v1217
    %v1219 = vand.u32 %v259, 4294901760
    %v1220 = vsub.f32 %v259, %v1219
    %1221 = vmatmul.mubr.f32.gmra.mrb[0].mxu0 %v1220
    %v1222 = vpop.f32.mrb[0].mxu0
    %v1223 = vadd.f32 %v954, %v1222
    %v1224 = vpop.f32.mrb[0].mxu0
    %v1225 = vand.u32 %v262, 4294901760
    %v1226 = vsub.f32 %v262, %v1225
    %1227 = vmatprep.mubr.f32.mxu0 %v1226
    %v1228 = vand.u32 %v261, 4294901760
    %v1229 = vsub.f32 %v261, %v1228
    %1230 = vmatmul.mubr.f32.gmra.mrb[0].mxu0 %v1229
    %v1231 = vpop.f32.mrb[0].mxu0
    %v1232 = vadd.f32 %v961, %v1231
    %v1233 = vpop.f32.mrb[0].mxu0
    %v1234 = vand.u32 %v264, 4294901760
    %v1235 = vsub.f32 %v264, %v1234
    %1236 = vmatprep.mubr.f32.mxu0 %v1235
    %v1237 = vand.u32 %v263, 4294901760
    %v1238 = vsub.f32 %v263, %v1237
    %1239 = vmatmul.mubr.f32.gmra.mrb[0].mxu0 %v1238
    %v1240 = vpop.f32.mrb[0].mxu0
    %v1241 = vadd.f32 %v968, %v1240
    %v1242 = vpop.f32.mrb[0].mxu0
    %1243 = vdwg.mxu0
    %1244 = vmatprep.subr.mxu0 0.0
    %v1245 = vand.u32 %v265, 4294901760
    %1246 = vmatpush1.msra.mxu0 %v1245
    %1247 = vmatprep.subr.mxu0 0.0
    %v1248 = vand.u32 %v266, 4294901760
    %1249 = vmatpush1.msra.mxu0 %v1248
    %1250 = vmatprep.subr.mxu0 0.0
    %v1251 = vand.u32 %v267, 4294901760
    %1252 = vmatpush1.msra.mxu0 %v1251
    %1253 = vmatprep.subr.mxu0 0.0
    %v1254 = vand.u32 %v268, 4294901760
    %1255 = vmatpush1.msra.mxu0 %v1254
    %1256 = vmatprep.subr.mxu0 0.0
    %v1257 = vand.u32 %v269, 4294901760
    %1258 = vmatpush1.msra.mxu0 %v1257
    %1259 = vmatprep.subr.mxu0 0.0
    %v1260 = vand.u32 %v270, 4294901760
    %1261 = vmatpush1.msra.mxu0 %v1260
    %1262 = vmatprep.subr.mxu0 0.0
    %v1263 = vand.u32 %v271, 4294901760
    %1264 = vmatpush1.msra.mxu0 %v1263
    %1265 = vmatprep.subr.mxu0 0.0
    %v1266 = vand.u32 %v272, 4294901760
    %1267 = vmatpush1.msra.mxu0 %v1266
    %1268 = vmatprep.subr.mxu0 0.0
    %v1269 = vand.u32 %v273, 4294901760
    %1270 = vmatpush1.msra.mxu0 %v1269
    %1271 = vmatprep.subr.mxu0 0.0
    %v1272 = vand.u32 %v274, 4294901760
    %1273 = vmatpush1.msra.mxu0 %v1272
    %1274 = vmatprep.subr.mxu0 0.0
    %v1275 = vand.u32 %v275, 4294901760
    %1276 = vmatpush1.msra.mxu0 %v1275
    %1277 = vmatprep.subr.mxu0 0.0
    %v1278 = vand.u32 %v276, 4294901760
    %1279 = vmatpush1.msra.mxu0 %v1278
    %1280 = vmatprep.subr.mxu0 0.0
    %v1281 = vand.u32 %v277, 4294901760
    %1282 = vmatpush1.msra.mxu0 %v1281
    %1283 = vmatprep.subr.mxu0 0.0
    %v1284 = vand.u32 %v278, 4294901760
    %1285 = vmatpush1.msra.mxu0 %v1284
    %1286 = vmatprep.subr.mxu0 0.0
    %v1287 = vand.u32 %v279, 4294901760
    %1288 = vmatpush1.msra.mxu0 %v1287
    %1289 = vmatprep.subr.mxu0 0.0
    %v1290 = vand.u32 %v280, 4294901760
    %1291 = vmatpush1.msra.mxu0 %v1290
    %1292 = vmatprep.subr.mxu0 0.0
    %v1293 = vand.u32 %v281, 4294901760
    %1294 = vmatpush1.msra.mxu0 %v1293
    %1295 = vmatprep.subr.mxu0 0.0
    %v1296 = vand.u32 %v282, 4294901760
    %1297 = vmatpush1.msra.mxu0 %v1296
    %1298 = vmatprep.subr.mxu0 0.0
    %v1299 = vand.u32 %v283, 4294901760
    %1300 = vmatpush1.msra.mxu0 %v1299
    %1301 = vmatprep.subr.mxu0 0.0
    %v1302 = vand.u32 %v284, 4294901760
    %1303 = vmatpush1.msra.mxu0 %v1302
    %1304 = vmatprep.subr.mxu0 0.0
    %v1305 = vand.u32 %v285, 4294901760
    %1306 = vmatpush1.msra.mxu0 %v1305
    %1307 = vmatprep.subr.mxu0 0.0
    %v1308 = vand.u32 %v286, 4294901760
    %1309 = vmatpush1.msra.mxu0 %v1308
    %1310 = vmatprep.subr.mxu0 0.0
    %v1311 = vand.u32 %v287, 4294901760
    %1312 = vmatpush1.msra.mxu0 %v1311
    %1313 = vmatprep.subr.mxu0 0.0
    %v1314 = vand.u32 %v288, 4294901760
    %1315 = vmatpush1.msra.mxu0 %v1314
    %1316 = vmatprep.subr.mxu0 0.0
    %v1317 = vand.u32 %v289, 4294901760
    %1318 = vmatpush1.msra.mxu0 %v1317
    %1319 = vmatprep.subr.mxu0 0.0
    %v1320 = vand.u32 %v290, 4294901760
    %1321 = vmatpush1.msra.mxu0 %v1320
    %1322 = vmatprep.subr.mxu0 0.0
    %v1323 = vand.u32 %v291, 4294901760
    %1324 = vmatpush1.msra.mxu0 %v1323
    %1325 = vmatprep.subr.mxu0 0.0
    %v1326 = vand.u32 %v292, 4294901760
    %1327 = vmatpush1.msra.mxu0 %v1326
    %1328 = vmatprep.subr.mxu0 0.0
    %v1329 = vand.u32 %v293, 4294901760
    %1330 = vmatpush1.msra.mxu0 %v1329
    %1331 = vmatprep.subr.mxu0 0.0
    %v1332 = vand.u32 %v294, 4294901760
    %1333 = vmatpush1.msra.mxu0 %v1332
    %1334 = vmatprep.subr.mxu0 0.0
    %v1335 = vand.u32 %v295, 4294901760
    %1336 = vmatpush1.msra.mxu0 %v1335
    %1337 = vmatprep.subr.mxu0 0.0
    %v1338 = vand.u32 %v296, 4294901760
    %1339 = vmatpush1.msra.mxu0 %v1338
    %v1340 = vand.u32 %v234, 4294901760
    %v1341 = vsub.f32 %v234, %v1340
    %v1342 = vand.u32 %v1341, 4294901760
    %1343 = vmatprep.mubr.f32.mxu0 %v1342
    %v1344 = vand.u32 %v233, 4294901760
    %v1345 = vsub.f32 %v233, %v1344
    %v1346 = vand.u32 %v1345, 4294901760
    %1347 = vmatmul.mubr.f32.gmra.mrb[0].mxu0 %v1346
    %v1348 = vpop.f32.mrb[0].mxu0
    %v1349 = vadd.f32 %v1106, %v1348
    %v1350 = vpop.f32.mrb[0].mxu0
    %v1351 = vand.u32 %v236, 4294901760
    %v1352 = vsub.f32 %v236, %v1351
    %v1353 = vand.u32 %v1352, 4294901760
    %1354 = vmatprep.mubr.f32.mxu0 %v1353
    %v1355 = vand.u32 %v235, 4294901760
    %v1356 = vsub.f32 %v235, %v1355
    %v1357 = vand.u32 %v1356, 4294901760
    %1358 = vmatmul.mubr.f32.gmra.mrb[0].mxu0 %v1357
    %v1359 = vpop.f32.mrb[0].mxu0
    %v1360 = vadd.f32 %v1115, %v1359
    %v1361 = vpop.f32.mrb[0].mxu0
    %v1362 = vand.u32 %v238, 4294901760
    %v1363 = vsub.f32 %v238, %v1362
    %v1364 = vand.u32 %v1363, 4294901760
    %1365 = vmatprep.mubr.f32.mxu0 %v1364
    %v1366 = vand.u32 %v237, 4294901760
    %v1367 = vsub.f32 %v237, %v1366
    %v1368 = vand.u32 %v1367, 4294901760
    %1369 = vmatmul.mubr.f32.gmra.mrb[0].mxu0 %v1368
    %v1370 = vpop.f32.mrb[0].mxu0
    %v1371 = vadd.f32 %v1124, %v1370
    %v1372 = vpop.f32.mrb[0].mxu0
    %v1373 = vand.u32 %v240, 4294901760
    %v1374 = vsub.f32 %v240, %v1373
    %v1375 = vand.u32 %v1374, 4294901760
    %1376 = vmatprep.mubr.f32.mxu0 %v1375
    %v1377 = vand.u32 %v239, 4294901760
    %v1378 = vsub.f32 %v239, %v1377
    %v1379 = vand.u32 %v1378, 4294901760
    %1380 = vmatmul.mubr.f32.gmra.mrb[0].mxu0 %v1379
    %v1381 = vpop.f32.mrb[0].mxu0
    %v1382 = vadd.f32 %v1133, %v1381
    %v1383 = vpop.f32.mrb[0].mxu0
    %v1384 = vand.u32 %v242, 4294901760
    %v1385 = vsub.f32 %v242, %v1384
    %v1386 = vand.u32 %v1385, 4294901760
    %1387 = vmatprep.mubr.f32.mxu0 %v1386
    %v1388 = vand.u32 %v241, 4294901760
    %v1389 = vsub.f32 %v241, %v1388
    %v1390 = vand.u32 %v1389, 4294901760
    %1391 = vmatmul.mubr.f32.gmra.mrb[0].mxu0 %v1390
    %v1392 = vpop.f32.mrb[0].mxu0
    %v1393 = vadd.f32 %v1142, %v1392
    %v1394 = vpop.f32.mrb[0].mxu0
    %v1395 = vand.u32 %v244, 4294901760
    %v1396 = vsub.f32 %v244, %v1395
    %v1397 = vand.u32 %v1396, 4294901760
    %1398 = vmatprep.mubr.f32.mxu0 %v1397
    %v1399 = vand.u32 %v243, 4294901760
    %v1400 = vsub.f32 %v243, %v1399
    %v1401 = vand.u32 %v1400, 4294901760
    %1402 = vmatmul.mubr.f32.gmra.mrb[0].mxu0 %v1401
    %v1403 = vpop.f32.mrb[0].mxu0
    %v1404 = vadd.f32 %v1151, %v1403
    %v1405 = vpop.f32.mrb[0].mxu0
    %v1406 = vand.u32 %v246, 4294901760
    %v1407 = vsub.f32 %v246, %v1406
    %v1408 = vand.u32 %v1407, 4294901760
    %1409 = vmatprep.mubr.f32.mxu0 %v1408
    %v1410 = vand.u32 %v245, 4294901760
    %v1411 = vsub.f32 %v245, %v1410
    %v1412 = vand.u32 %v1411, 4294901760
    %1413 = vmatmul.mubr.f32.gmra.mrb[0].mxu0 %v1412
    %v1414 = vpop.f32.mrb[0].mxu0
    %v1415 = vadd.f32 %v1160, %v1414
    %v1416 = vpop.f32.mrb[0].mxu0
    %v1417 = vand.u32 %v248, 4294901760
    %v1418 = vsub.f32 %v248, %v1417
    %v1419 = vand.u32 %v1418, 4294901760
    %1420 = vmatprep.mubr.f32.mxu0 %v1419
    %v1421 = vand.u32 %v247, 4294901760
    %v1422 = vsub.f32 %v247, %v1421
    %v1423 = vand.u32 %v1422, 4294901760
    %1424 = vmatmul.mubr.f32.gmra.mrb[0].mxu0 %v1423
    %v1425 = vpop.f32.mrb[0].mxu0
    %v1426 = vadd.f32 %v1169, %v1425
    %v1427 = vpop.f32.mrb[0].mxu0
    %v1428 = vand.u32 %v250, 4294901760
    %v1429 = vsub.f32 %v250, %v1428
    %v1430 = vand.u32 %v1429, 4294901760
    %1431 = vmatprep.mubr.f32.mxu0 %v1430
    %v1432 = vand.u32 %v249, 4294901760
    %v1433 = vsub.f32 %v249, %v1432
    %v1434 = vand.u32 %v1433, 4294901760
    %1435 = vmatmul.mubr.f32.gmra.mrb[0].mxu0 %v1434
    %v1436 = vpop.f32.mrb[0].mxu0
    %v1437 = vadd.f32 %v1178, %v1436
    %v1438 = vpop.f32.mrb[0].mxu0
    %v1439 = vand.u32 %v252, 4294901760
    %v1440 = vsub.f32 %v252, %v1439
    %v1441 = vand.u32 %v1440, 4294901760
    %1442 = vmatprep.mubr.f32.mxu0 %v1441
    %v1443 = vand.u32 %v251, 4294901760
    %v1444 = vsub.f32 %v251, %v1443
    %v1445 = vand.u32 %v1444, 4294901760
    %1446 = vmatmul.mubr.f32.gmra.mrb[0].mxu0 %v1445
    %v1447 = vpop.f32.mrb[0].mxu0
    %v1448 = vadd.f32 %v1187, %v1447
    %v1449 = vpop.f32.mrb[0].mxu0
    %v1450 = vand.u32 %v254, 4294901760
    %v1451 = vsub.f32 %v254, %v1450
    %v1452 = vand.u32 %v1451, 4294901760
    %1453 = vmatprep.mubr.f32.mxu0 %v1452
    %v1454 = vand.u32 %v253, 4294901760
    %v1455 = vsub.f32 %v253, %v1454
    %v1456 = vand.u32 %v1455, 4294901760
    %1457 = vmatmul.mubr.f32.gmra.mrb[0].mxu0 %v1456
    %v1458 = vpop.f32.mrb[0].mxu0
    %v1459 = vadd.f32 %v1196, %v1458
    %v1460 = vpop.f32.mrb[0].mxu0
    %v1461 = vand.u32 %v256, 4294901760
    %v1462 = vsub.f32 %v256, %v1461
    %v1463 = vand.u32 %v1462, 4294901760
    %1464 = vmatprep.mubr.f32.mxu0 %v1463
    %v1465 = vand.u32 %v255, 4294901760
    %v1466 = vsub.f32 %v255, %v1465
    %v1467 = vand.u32 %v1466, 4294901760
    %1468 = vmatmul.mubr.f32.gmra.mrb[0].mxu0 %v1467
    %v1469 = vpop.f32.mrb[0].mxu0
    %v1470 = vadd.f32 %v1205, %v1469
    %v1471 = vpop.f32.mrb[0].mxu0
    %v1472 = vand.u32 %v258, 4294901760
    %v1473 = vsub.f32 %v258, %v1472
    %v1474 = vand.u32 %v1473, 4294901760
    %1475 = vmatprep.mubr.f32.mxu0 %v1474
    %v1476 = vand.u32 %v257, 4294901760
    %v1477 = vsub.f32 %v257, %v1476
    %v1478 = vand.u32 %v1477, 4294901760
    %1479 = vmatmul.mubr.f32.gmra.mrb[0].mxu0 %v1478
    %v1480 = vpop.f32.mrb[0].mxu0
    %v1481 = vadd.f32 %v1214, %v1480
    %v1482 = vpop.f32.mrb[0].mxu0
    %v1483 = vand.u32 %v260, 4294901760
    %v1484 = vsub.f32 %v260, %v1483
    %v1485 = vand.u32 %v1484, 4294901760
    %1486 = vmatprep.mubr.f32.mxu0 %v1485
    %v1487 = vand.u32 %v259, 4294901760
    %v1488 = vsub.f32 %v259, %v1487
    %v1489 = vand.u32 %v1488, 4294901760
    %1490 = vmatmul.mubr.f32.gmra.mrb[0].mxu0 %v1489
    %v1491 = vpop.f32.mrb[0].mxu0
    %v1492 = vadd.f32 %v1223, %v1491
    %v1493 = vpop.f32.mrb[0].mxu0
    %v1494 = vand.u32 %v262, 4294901760
    %v1495 = vsub.f32 %v262, %v1494
    %v1496 = vand.u32 %v1495, 4294901760
    %1497 = vmatprep.mubr.f32.mxu0 %v1496
    %v1498 = vand.u32 %v261, 4294901760
    %v1499 = vsub.f32 %v261, %v1498
    %v1500 = vand.u32 %v1499, 4294901760
    %1501 = vmatmul.mubr.f32.gmra.mrb[0].mxu0 %v1500
    %v1502 = vpop.f32.mrb[0].mxu0
    %v1503 = vadd.f32 %v1232, %v1502
    %v1504 = vpop.f32.mrb[0].mxu0
    %v1505 = vand.u32 %v264, 4294901760
    %v1506 = vsub.f32 %v264, %v1505
    %v1507 = vand.u32 %v1506, 4294901760
    %1508 = vmatprep.mubr.f32.mxu0 %v1507
    %v1509 = vand.u32 %v263, 4294901760
    %v1510 = vsub.f32 %v263, %v1509
    %v1511 = vand.u32 %v1510, 4294901760
    %1512 = vmatmul.mubr.f32.gmra.mrb[0].mxu0 %v1511
    %v1513 = vpop.f32.mrb[0].mxu0
    %v1514 = vadd.f32 %v1241, %v1513
    %v1515 = vpop.f32.mrb[0].mxu0
    %1516 = vdwg.mxu0
    %1517 = vmatprep.subr.mxu0 0.0
    %v1518 = vand.u32 %v265, 4294901760
    %v1519 = vsub.f32 %v265, %v1518
    %v1520 = vand.u32 %v1519, 4294901760
    %1521 = vmatpush1.msra.mxu0 %v1520
    %1522 = vmatprep.subr.mxu0 0.0
    %v1523 = vand.u32 %v266, 4294901760
    %v1524 = vsub.f32 %v266, %v1523
    %v1525 = vand.u32 %v1524, 4294901760
    %1526 = vmatpush1.msra.mxu0 %v1525
    %1527 = vmatprep.subr.mxu0 0.0
    %v1528 = vand.u32 %v267, 4294901760
    %v1529 = vsub.f32 %v267, %v1528
    %v1530 = vand.u32 %v1529, 4294901760
    %1531 = vmatpush1.msra.mxu0 %v1530
    %1532 = vmatprep.subr.mxu0 0.0
    %v1533 = vand.u32 %v268, 4294901760
    %v1534 = vsub.f32 %v268, %v1533
    %v1535 = vand.u32 %v1534, 4294901760
    %1536 = vmatpush1.msra.mxu0 %v1535
    %1537 = vmatprep.subr.mxu0 0.0
    %v1538 = vand.u32 %v269, 4294901760
    %v1539 = vsub.f32 %v269, %v1538
    %v1540 = vand.u32 %v1539, 4294901760
    %1541 = vmatpush1.msra.mxu0 %v1540
    %1542 = vmatprep.subr.mxu0 0.0
    %v1543 = vand.u32 %v270, 4294901760
    %v1544 = vsub.f32 %v270, %v1543
    %v1545 = vand.u32 %v1544, 4294901760
    %1546 = vmatpush1.msra.mxu0 %v1545
    %1547 = vmatprep.subr.mxu0 0.0
    %v1548 = vand.u32 %v271, 4294901760
    %v1549 = vsub.f32 %v271, %v1548
    %v1550 = vand.u32 %v1549, 4294901760
    %1551 = vmatpush1.msra.mxu0 %v1550
    %1552 = vmatprep.subr.mxu0 0.0
    %v1553 = vand.u32 %v272, 4294901760
    %v1554 = vsub.f32 %v272, %v1553
    %v1555 = vand.u32 %v1554, 4294901760
    %1556 = vmatpush1.msra.mxu0 %v1555
    %1557 = vmatprep.subr.mxu0 0.0
    %v1558 = vand.u32 %v273, 4294901760
    %v1559 = vsub.f32 %v273, %v1558
    %v1560 = vand.u32 %v1559, 4294901760
    %1561 = vmatpush1.msra.mxu0 %v1560
    %1562 = vmatprep.subr.mxu0 0.0
    %v1563 = vand.u32 %v274, 4294901760
    %v1564 = vsub.f32 %v274, %v1563
    %v1565 = vand.u32 %v1564, 4294901760
    %1566 = vmatpush1.msra.mxu0 %v1565
    %1567 = vmatprep.subr.mxu0 0.0
    %v1568 = vand.u32 %v275, 4294901760
    %v1569 = vsub.f32 %v275, %v1568
    %v1570 = vand.u32 %v1569, 4294901760
    %1571 = vmatpush1.msra.mxu0 %v1570
    %1572 = vmatprep.subr.mxu0 0.0
    %v1573 = vand.u32 %v276, 4294901760
    %v1574 = vsub.f32 %v276, %v1573
    %v1575 = vand.u32 %v1574, 4294901760
    %1576 = vmatpush1.msra.mxu0 %v1575
    %1577 = vmatprep.subr.mxu0 0.0
    %v1578 = vand.u32 %v277, 4294901760
    %v1579 = vsub.f32 %v277, %v1578
    %v1580 = vand.u32 %v1579, 4294901760
    %1581 = vmatpush1.msra.mxu0 %v1580
    %1582 = vmatprep.subr.mxu0 0.0
    %v1583 = vand.u32 %v278, 4294901760
    %v1584 = vsub.f32 %v278, %v1583
    %v1585 = vand.u32 %v1584, 4294901760
    %1586 = vmatpush1.msra.mxu0 %v1585
    %1587 = vmatprep.subr.mxu0 0.0
    %v1588 = vand.u32 %v279, 4294901760
    %v1589 = vsub.f32 %v279, %v1588
    %v1590 = vand.u32 %v1589, 4294901760
    %1591 = vmatpush1.msra.mxu0 %v1590
    %1592 = vmatprep.subr.mxu0 0.0
    %v1593 = vand.u32 %v280, 4294901760
    %v1594 = vsub.f32 %v280, %v1593
    %v1595 = vand.u32 %v1594, 4294901760
    %1596 = vmatpush1.msra.mxu0 %v1595
    %1597 = vmatprep.subr.mxu0 0.0
    %v1598 = vand.u32 %v281, 4294901760
    %v1599 = vsub.f32 %v281, %v1598
    %v1600 = vand.u32 %v1599, 4294901760
    %1601 = vmatpush1.msra.mxu0 %v1600
    %1602 = vmatprep.subr.mxu0 0.0
    %v1603 = vand.u32 %v282, 4294901760
    %v1604 = vsub.f32 %v282, %v1603
    %v1605 = vand.u32 %v1604, 4294901760
    %1606 = vmatpush1.msra.mxu0 %v1605
    %1607 = vmatprep.subr.mxu0 0.0
    %v1608 = vand.u32 %v283, 4294901760
    %v1609 = vsub.f32 %v283, %v1608
    %v1610 = vand.u32 %v1609, 4294901760
    %1611 = vmatpush1.msra.mxu0 %v1610
    %1612 = vmatprep.subr.mxu0 0.0
    %v1613 = vand.u32 %v284, 4294901760
    %v1614 = vsub.f32 %v284, %v1613
    %v1615 = vand.u32 %v1614, 4294901760
    %1616 = vmatpush1.msra.mxu0 %v1615
    %1617 = vmatprep.subr.mxu0 0.0
    %v1618 = vand.u32 %v285, 4294901760
    %v1619 = vsub.f32 %v285, %v1618
    %v1620 = vand.u32 %v1619, 4294901760
    %1621 = vmatpush1.msra.mxu0 %v1620
    %1622 = vmatprep.subr.mxu0 0.0
    %v1623 = vand.u32 %v286, 4294901760
    %v1624 = vsub.f32 %v286, %v1623
    %v1625 = vand.u32 %v1624, 4294901760
    %1626 = vmatpush1.msra.mxu0 %v1625
    %1627 = vmatprep.subr.mxu0 0.0
    %v1628 = vand.u32 %v287, 4294901760
    %v1629 = vsub.f32 %v287, %v1628
    %v1630 = vand.u32 %v1629, 4294901760
    %1631 = vmatpush1.msra.mxu0 %v1630
    %1632 = vmatprep.subr.mxu0 0.0
    %v1633 = vand.u32 %v288, 4294901760
    %v1634 = vsub.f32 %v288, %v1633
    %v1635 = vand.u32 %v1634, 4294901760
    %1636 = vmatpush1.msra.mxu0 %v1635
    %1637 = vmatprep.subr.mxu0 0.0
    %v1638 = vand.u32 %v289, 4294901760
    %v1639 = vsub.f32 %v289, %v1638
    %v1640 = vand.u32 %v1639, 4294901760
    %1641 = vmatpush1.msra.mxu0 %v1640
    %1642 = vmatprep.subr.mxu0 0.0
    %v1643 = vand.u32 %v290, 4294901760
    %v1644 = vsub.f32 %v290, %v1643
    %v1645 = vand.u32 %v1644, 4294901760
    %1646 = vmatpush1.msra.mxu0 %v1645
    %1647 = vmatprep.subr.mxu0 0.0
    %v1648 = vand.u32 %v291, 4294901760
    %v1649 = vsub.f32 %v291, %v1648
    %v1650 = vand.u32 %v1649, 4294901760
    %1651 = vmatpush1.msra.mxu0 %v1650
    %1652 = vmatprep.subr.mxu0 0.0
    %v1653 = vand.u32 %v292, 4294901760
    %v1654 = vsub.f32 %v292, %v1653
    %v1655 = vand.u32 %v1654, 4294901760
    %1656 = vmatpush1.msra.mxu0 %v1655
    %1657 = vmatprep.subr.mxu0 0.0
    %v1658 = vand.u32 %v293, 4294901760
    %v1659 = vsub.f32 %v293, %v1658
    %v1660 = vand.u32 %v1659, 4294901760
    %1661 = vmatpush1.msra.mxu0 %v1660
    %1662 = vmatprep.subr.mxu0 0.0
    %v1663 = vand.u32 %v294, 4294901760
    %v1664 = vsub.f32 %v294, %v1663
    %v1665 = vand.u32 %v1664, 4294901760
    %1666 = vmatpush1.msra.mxu0 %v1665
    %1667 = vmatprep.subr.mxu0 0.0
    %v1668 = vand.u32 %v295, 4294901760
    %v1669 = vsub.f32 %v295, %v1668
    %v1670 = vand.u32 %v1669, 4294901760
    %1671 = vmatpush1.msra.mxu0 %v1670
    %1672 = vmatprep.subr.mxu0 0.0
    %v1673 = vand.u32 %v296, 4294901760
    %v1674 = vsub.f32 %v296, %v1673
    %v1675 = vand.u32 %v1674, 4294901760
    %1676 = vmatpush1.msra.mxu0 %v1675
    %v1677 = vand.u32 %v234, 4294901760
    %1678 = vmatprep.mubr.f32.mxu0 %v1677
    %v1679 = vand.u32 %v233, 4294901760
    %1680 = vmatmul.mubr.f32.gmra.mrb[0].mxu0 %v1679
    %v1681 = vpop.f32.mrb[0].mxu0
    %v1682 = vadd.f32 %v1349, %v1681
    %v1683 = vpop.f32.mrb[0].mxu0
    %v1684 = vand.u32 %v236, 4294901760
    %1685 = vmatprep.mubr.f32.mxu0 %v1684
    %v1686 = vand.u32 %v235, 4294901760
    %1687 = vmatmul.mubr.f32.gmra.mrb[0].mxu0 %v1686
    %v1688 = vpop.f32.mrb[0].mxu0
    %v1689 = vadd.f32 %v1360, %v1688
    %v1690 = vpop.f32.mrb[0].mxu0
    %v1691 = vand.u32 %v238, 4294901760
    %1692 = vmatprep.mubr.f32.mxu0 %v1691
    %v1693 = vand.u32 %v237, 4294901760
    %1694 = vmatmul.mubr.f32.gmra.mrb[0].mxu0 %v1693
    %v1695 = vpop.f32.mrb[0].mxu0
    %v1696 = vadd.f32 %v1371, %v1695
    %v1697 = vpop.f32.mrb[0].mxu0
    %v1698 = vand.u32 %v240, 4294901760
    %1699 = vmatprep.mubr.f32.mxu0 %v1698
    %v1700 = vand.u32 %v239, 4294901760
    %1701 = vmatmul.mubr.f32.gmra.mrb[0].mxu0 %v1700
    %v1702 = vpop.f32.mrb[0].mxu0
    %v1703 = vadd.f32 %v1382, %v1702
    %v1704 = vpop.f32.mrb[0].mxu0
    %v1705 = vand.u32 %v242, 4294901760
    %1706 = vmatprep.mubr.f32.mxu0 %v1705
    %v1707 = vand.u32 %v241, 4294901760
    %1708 = vmatmul.mubr.f32.gmra.mrb[0].mxu0 %v1707
    %v1709 = vpop.f32.mrb[0].mxu0
    %v1710 = vadd.f32 %v1393, %v1709
    %v1711 = vpop.f32.mrb[0].mxu0
    %v1712 = vand.u32 %v244, 4294901760
    %1713 = vmatprep.mubr.f32.mxu0 %v1712
    %v1714 = vand.u32 %v243, 4294901760
    %1715 = vmatmul.mubr.f32.gmra.mrb[0].mxu0 %v1714
    %v1716 = vpop.f32.mrb[0].mxu0
    %v1717 = vadd.f32 %v1404, %v1716
    %v1718 = vpop.f32.mrb[0].mxu0
    %v1719 = vand.u32 %v246, 4294901760
    %1720 = vmatprep.mubr.f32.mxu0 %v1719
    %v1721 = vand.u32 %v245, 4294901760
    %1722 = vmatmul.mubr.f32.gmra.mrb[0].mxu0 %v1721
    %v1723 = vpop.f32.mrb[0].mxu0
    %v1724 = vadd.f32 %v1415, %v1723
    %v1725 = vpop.f32.mrb[0].mxu0
    %v1726 = vand.u32 %v248, 4294901760
    %1727 = vmatprep.mubr.f32.mxu0 %v1726
    %v1728 = vand.u32 %v247, 4294901760
    %1729 = vmatmul.mubr.f32.gmra.mrb[0].mxu0 %v1728
    %v1730 = vpop.f32.mrb[0].mxu0
    %v1731 = vadd.f32 %v1426, %v1730
    %v1732 = vpop.f32.mrb[0].mxu0
    %v1733 = vand.u32 %v250, 4294901760
    %1734 = vmatprep.mubr.f32.mxu0 %v1733
    %v1735 = vand.u32 %v249, 4294901760
    %1736 = vmatmul.mubr.f32.gmra.mrb[0].mxu0 %v1735
    %v1737 = vpop.f32.mrb[0].mxu0
    %v1738 = vadd.f32 %v1437, %v1737
    %v1739 = vpop.f32.mrb[0].mxu0
    %v1740 = vand.u32 %v252, 4294901760
    %1741 = vmatprep.mubr.f32.mxu0 %v1740
    %v1742 = vand.u32 %v251, 4294901760
    %1743 = vmatmul.mubr.f32.gmra.mrb[0].mxu0 %v1742
    %v1744 = vpop.f32.mrb[0].mxu0
    %v1745 = vadd.f32 %v1448, %v1744
    %v1746 = vpop.f32.mrb[0].mxu0
    %v1747 = vand.u32 %v254, 4294901760
    %1748 = vmatprep.mubr.f32.mxu0 %v1747
    %v1749 = vand.u32 %v253, 4294901760
    %1750 = vmatmul.mubr.f32.gmra.mrb[0].mxu0 %v1749
    %v1751 = vpop.f32.mrb[0].mxu0
    %v1752 = vadd.f32 %v1459, %v1751
    %v1753 = vpop.f32.mrb[0].mxu0
    %v1754 = vand.u32 %v256, 4294901760
    %1755 = vmatprep.mubr.f32.mxu0 %v1754
    %v1756 = vand.u32 %v255, 4294901760
    %1757 = vmatmul.mubr.f32.gmra.mrb[0].mxu0 %v1756
    %v1758 = vpop.f32.mrb[0].mxu0
    %v1759 = vadd.f32 %v1470, %v1758
    %v1760 = vpop.f32.mrb[0].mxu0
    %v1761 = vand.u32 %v258, 4294901760
    %1762 = vmatprep.mubr.f32.mxu0 %v1761
    %v1763 = vand.u32 %v257, 4294901760
    %1764 = vmatmul.mubr.f32.gmra.mrb[0].mxu0 %v1763
    %v1765 = vpop.f32.mrb[0].mxu0
    %v1766 = vadd.f32 %v1481, %v1765
    %v1767 = vpop.f32.mrb[0].mxu0
    %v1768 = vand.u32 %v260, 4294901760
    %1769 = vmatprep.mubr.f32.mxu0 %v1768
    %v1770 = vand.u32 %v259, 4294901760
    %1771 = vmatmul.mubr.f32.gmra.mrb[0].mxu0 %v1770
    %v1772 = vpop.f32.mrb[0].mxu0
    %v1773 = vadd.f32 %v1492, %v1772
    %v1774 = vpop.f32.mrb[0].mxu0
    %v1775 = vand.u32 %v262, 4294901760
    %1776 = vmatprep.mubr.f32.mxu0 %v1775
    %v1777 = vand.u32 %v261, 4294901760
    %1778 = vmatmul.mubr.f32.gmra.mrb[0].mxu0 %v1777
    %v1779 = vpop.f32.mrb[0].mxu0
    %v1780 = vadd.f32 %v1503, %v1779
    %v1781 = vpop.f32.mrb[0].mxu0
    %v1782 = vand.u32 %v264, 4294901760
    %1783 = vmatprep.mubr.f32.mxu0 %v1782
    %v1784 = vand.u32 %v263, 4294901760
    %1785 = vmatmul.mubr.f32.gmra.mrb[0].mxu0 %v1784
    %v1786 = vpop.f32.mrb[0].mxu0
    %v1787 = vadd.f32 %v1514, %v1786
    %v1788 = vpop.f32.mrb[0].mxu0
    %1789 = vdwg.mxu0
    %1790 = vmatprep.subr.mxu0 0.0
    %v1791 = vand.u32 %v265, 4294901760
    %1792 = vmatpush1.msra.mxu0 %v1791
    %1793 = vmatprep.subr.mxu0 0.0
    %v1794 = vand.u32 %v266, 4294901760
    %1795 = vmatpush1.msra.mxu0 %v1794
    %1796 = vmatprep.subr.mxu0 0.0
    %v1797 = vand.u32 %v267, 4294901760
    %1798 = vmatpush1.msra.mxu0 %v1797
    %1799 = vmatprep.subr.mxu0 0.0
    %v1800 = vand.u32 %v268, 4294901760
    %1801 = vmatpush1.msra.mxu0 %v1800
    %1802 = vmatprep.subr.mxu0 0.0
    %v1803 = vand.u32 %v269, 4294901760
    %1804 = vmatpush1.msra.mxu0 %v1803
    %1805 = vmatprep.subr.mxu0 0.0
    %v1806 = vand.u32 %v270, 4294901760
    %1807 = vmatpush1.msra.mxu0 %v1806
    %1808 = vmatprep.subr.mxu0 0.0
    %v1809 = vand.u32 %v271, 4294901760
    %1810 = vmatpush1.msra.mxu0 %v1809
    %1811 = vmatprep.subr.mxu0 0.0
    %v1812 = vand.u32 %v272, 4294901760
    %1813 = vmatpush1.msra.mxu0 %v1812
    %1814 = vmatprep.subr.mxu0 0.0
    %v1815 = vand.u32 %v273, 4294901760
    %1816 = vmatpush1.msra.mxu0 %v1815
    %1817 = vmatprep.subr.mxu0 0.0
    %v1818 = vand.u32 %v274, 4294901760
    %1819 = vmatpush1.msra.mxu0 %v1818
    %1820 = vmatprep.subr.mxu0 0.0
    %v1821 = vand.u32 %v275, 4294901760
    %1822 = vmatpush1.msra.mxu0 %v1821
    %1823 = vmatprep.subr.mxu0 0.0
    %v1824 = vand.u32 %v276, 4294901760
    %1825 = vmatpush1.msra.mxu0 %v1824
    %1826 = vmatprep.subr.mxu0 0.0
    %v1827 = vand.u32 %v277, 4294901760
    %1828 = vmatpush1.msra.mxu0 %v1827
    %1829 = vmatprep.subr.mxu0 0.0
    %v1830 = vand.u32 %v278, 4294901760
    %1831 = vmatpush1.msra.mxu0 %v1830
    %1832 = vmatprep.subr.mxu0 0.0
    %v1833 = vand.u32 %v279, 4294901760
    %1834 = vmatpush1.msra.mxu0 %v1833
    %1835 = vmatprep.subr.mxu0 0.0
    %v1836 = vand.u32 %v280, 4294901760
    %1837 = vmatpush1.msra.mxu0 %v1836
    %1838 = vmatprep.subr.mxu0 0.0
    %v1839 = vand.u32 %v281, 4294901760
    %1840 = vmatpush1.msra.mxu0 %v1839
    %1841 = vmatprep.subr.mxu0 0.0
    %v1842 = vand.u32 %v282, 4294901760
    %1843 = vmatpush1.msra.mxu0 %v1842
    %1844 = vmatprep.subr.mxu0 0.0
    %v1845 = vand.u32 %v283, 4294901760
    %1846 = vmatpush1.msra.mxu0 %v1845
    %1847 = vmatprep.subr.mxu0 0.0
    %v1848 = vand.u32 %v284, 4294901760
    %1849 = vmatpush1.msra.mxu0 %v1848
    %1850 = vmatprep.subr.mxu0 0.0
    %v1851 = vand.u32 %v285, 4294901760
    %1852 = vmatpush1.msra.mxu0 %v1851
    %1853 = vmatprep.subr.mxu0 0.0
    %v1854 = vand.u32 %v286, 4294901760
    %1855 = vmatpush1.msra.mxu0 %v1854
    %1856 = vmatprep.subr.mxu0 0.0
    %v1857 = vand.u32 %v287, 4294901760
    %1858 = vmatpush1.msra.mxu0 %v1857
    %1859 = vmatprep.subr.mxu0 0.0
    %v1860 = vand.u32 %v288, 4294901760
    %1861 = vmatpush1.msra.mxu0 %v1860
    %1862 = vmatprep.subr.mxu0 0.0
    %v1863 = vand.u32 %v289, 4294901760
    %1864 = vmatpush1.msra.mxu0 %v1863
    %1865 = vmatprep.subr.mxu0 0.0
    %v1866 = vand.u32 %v290, 4294901760
    %1867 = vmatpush1.msra.mxu0 %v1866
    %1868 = vmatprep.subr.mxu0 0.0
    %v1869 = vand.u32 %v291, 4294901760
    %1870 = vmatpush1.msra.mxu0 %v1869
    %1871 = vmatprep.subr.mxu0 0.0
    %v1872 = vand.u32 %v292, 4294901760
    %1873 = vmatpush1.msra.mxu0 %v1872
    %1874 = vmatprep.subr.mxu0 0.0
    %v1875 = vand.u32 %v293, 4294901760
    %1876 = vmatpush1.msra.mxu0 %v1875
    %1877 = vmatprep.subr.mxu0 0.0
    %v1878 = vand.u32 %v294, 4294901760
    %1879 = vmatpush1.msra.mxu0 %v1878
    %1880 = vmatprep.subr.mxu0 0.0
    %v1881 = vand.u32 %v295, 4294901760
    %1882 = vmatpush1.msra.mxu0 %v1881
    %1883 = vmatprep.subr.mxu0 0.0
    %v1884 = vand.u32 %v296, 4294901760
    %1885 = vmatpush1.msra.mxu0 %v1884
    %v1886 = vand.u32 %v234, 4294901760
    %1887 = vmatprep.mubr.f32.mxu0 %v1886
    %v1888 = vand.u32 %v233, 4294901760
    %1889 = vmatmul.mubr.f32.gmra.mrb[0].mxu0 %v1888
    %v1890 = vpop.f32.mrb[0].mxu0
    %v1891 = vadd.f32 %v1682, %v1890
    %v1892 = vpop.f32.mrb[0].mxu0
    %v1893 = vand.u32 %v236, 4294901760
    %1894 = vmatprep.mubr.f32.mxu0 %v1893
    %v1895 = vand.u32 %v235, 4294901760
    %1896 = vmatmul.mubr.f32.gmra.mrb[0].mxu0 %v1895
    %v1897 = vpop.f32.mrb[0].mxu0
    %v1898 = vadd.f32 %v1689, %v1897
    %v1899 = vpop.f32.mrb[0].mxu0
    %v1900 = vand.u32 %v238, 4294901760
    %1901 = vmatprep.mubr.f32.mxu0 %v1900
    %v1902 = vand.u32 %v237, 4294901760
    %1903 = vmatmul.mubr.f32.gmra.mrb[0].mxu0 %v1902
    %v1904 = vpop.f32.mrb[0].mxu0
    %v1905 = vadd.f32 %v1696, %v1904
    %v1906 = vpop.f32.mrb[0].mxu0
    %v1907 = vand.u32 %v240, 4294901760
    %1908 = vmatprep.mubr.f32.mxu0 %v1907
    %v1909 = vand.u32 %v239, 4294901760
    %1910 = vmatmul.mubr.f32.gmra.mrb[0].mxu0 %v1909
    %v1911 = vpop.f32.mrb[0].mxu0
    %v1912 = vadd.f32 %v1703, %v1911
    %v1913 = vpop.f32.mrb[0].mxu0
    %v1914 = vand.u32 %v242, 4294901760
    %1915 = vmatprep.mubr.f32.mxu0 %v1914
    %v1916 = vand.u32 %v241, 4294901760
    %1917 = vmatmul.mubr.f32.gmra.mrb[0].mxu0 %v1916
    %v1918 = vpop.f32.mrb[0].mxu0
    %v1919 = vadd.f32 %v1710, %v1918
    %v1920 = vpop.f32.mrb[0].mxu0
    %v1921 = vand.u32 %v244, 4294901760
    %1922 = vmatprep.mubr.f32.mxu0 %v1921
    %v1923 = vand.u32 %v243, 4294901760
    %1924 = vmatmul.mubr.f32.gmra.mrb[0].mxu0 %v1923
    %v1925 = vpop.f32.mrb[0].mxu0
    %v1926 = vadd.f32 %v1717, %v1925
    %v1927 = vpop.f32.mrb[0].mxu0
    %v1928 = vand.u32 %v246, 4294901760
    %1929 = vmatprep.mubr.f32.mxu0 %v1928
    %v1930 = vand.u32 %v245, 4294901760
    %1931 = vmatmul.mubr.f32.gmra.mrb[0].mxu0 %v1930
    %v1932 = vpop.f32.mrb[0].mxu0
    %v1933 = vadd.f32 %v1724, %v1932
    %v1934 = vpop.f32.mrb[0].mxu0
    %v1935 = vand.u32 %v248, 4294901760
    %1936 = vmatprep.mubr.f32.mxu0 %v1935
    %v1937 = vand.u32 %v247, 4294901760
    %1938 = vmatmul.mubr.f32.gmra.mrb[0].mxu0 %v1937
    %v1939 = vpop.f32.mrb[0].mxu0
    %v1940 = vadd.f32 %v1731, %v1939
    %v1941 = vpop.f32.mrb[0].mxu0
    %v1942 = vand.u32 %v250, 4294901760
    %1943 = vmatprep.mubr.f32.mxu0 %v1942
    %v1944 = vand.u32 %v249, 4294901760
    %1945 = vmatmul.mubr.f32.gmra.mrb[0].mxu0 %v1944
    %v1946 = vpop.f32.mrb[0].mxu0
    %v1947 = vadd.f32 %v1738, %v1946
    %v1948 = vpop.f32.mrb[0].mxu0
    %v1949 = vand.u32 %v252, 4294901760
    %1950 = vmatprep.mubr.f32.mxu0 %v1949
    %v1951 = vand.u32 %v251, 4294901760
    %1952 = vmatmul.mubr.f32.gmra.mrb[0].mxu0 %v1951
    %v1953 = vpop.f32.mrb[0].mxu0
    %v1954 = vadd.f32 %v1745, %v1953
    %v1955 = vpop.f32.mrb[0].mxu0
    %v1956 = vand.u32 %v254, 4294901760
    %1957 = vmatprep.mubr.f32.mxu0 %v1956
    %v1958 = vand.u32 %v253, 4294901760
    %1959 = vmatmul.mubr.f32.gmra.mrb[0].mxu0 %v1958
    %v1960 = vpop.f32.mrb[0].mxu0
    %v1961 = vadd.f32 %v1752, %v1960
    %v1962 = vpop.f32.mrb[0].mxu0
    %v1963 = vand.u32 %v256, 4294901760
    %1964 = vmatprep.mubr.f32.mxu0 %v1963
    %v1965 = vand.u32 %v255, 4294901760
    %1966 = vmatmul.mubr.f32.gmra.mrb[0].mxu0 %v1965
    %v1967 = vpop.f32.mrb[0].mxu0
    %v1968 = vadd.f32 %v1759, %v1967
    %v1969 = vpop.f32.mrb[0].mxu0
    %v1970 = vand.u32 %v258, 4294901760
    %1971 = vmatprep.mubr.f32.mxu0 %v1970
    %v1972 = vand.u32 %v257, 4294901760
    %1973 = vmatmul.mubr.f32.gmra.mrb[0].mxu0 %v1972
    %v1974 = vpop.f32.mrb[0].mxu0
    %v1975 = vadd.f32 %v1766, %v1974
    %v1976 = vpop.f32.mrb[0].mxu0
    %v1977 = vand.u32 %v260, 4294901760
    %1978 = vmatprep.mubr.f32.mxu0 %v1977
    %v1979 = vand.u32 %v259, 4294901760
    %1980 = vmatmul.mubr.f32.gmra.mrb[0].mxu0 %v1979
    %v1981 = vpop.f32.mrb[0].mxu0
    %v1982 = vadd.f32 %v1773, %v1981
    %v1983 = vpop.f32.mrb[0].mxu0
    %v1984 = vand.u32 %v262, 4294901760
    %1985 = vmatprep.mubr.f32.mxu0 %v1984
    %v1986 = vand.u32 %v261, 4294901760
    %1987 = vmatmul.mubr.f32.gmra.mrb[0].mxu0 %v1986
    %v1988 = vpop.f32.mrb[0].mxu0
    %v1989 = vadd.f32 %v1780, %v1988
    %v1990 = vpop.f32.mrb[0].mxu0
    %v1991 = vand.u32 %v264, 4294901760
    %1992 = vmatprep.mubr.f32.mxu0 %v1991
    %v1993 = vand.u32 %v263, 4294901760
    %1994 = vmatmul.mubr.f32.gmra.mrb[0].mxu0 %v1993
    %v1995 = vpop.f32.mrb[0].mxu0
    %v1996 = vadd.f32 %v1787, %v1995
    %v1997 = vpop.f32.mrb[0].mxu0
    %1998 = vdwg.mxu0
    %1999 = vst [vmem:[#allocation3] sm:$0xff] %v1891
    %2000 = vst [vmem:[#allocation3 + $0x8] sm:$0xff] %v1898
    %2001 = vst [vmem:[#allocation3 + $0x10] sm:$0xff] %v1905
    %2002 = vst [vmem:[#allocation3 + $0x18] sm:$0xff] %v1912
    %2003 = vst [vmem:[#allocation3 + $0x20] sm:$0xff] %v1919
    %2004 = vst [vmem:[#allocation3 + $0x28] sm:$0xff] %v1926
    %2005 = vst [vmem:[#allocation3 + $0x30] sm:$0xff] %v1933
    %2006 = vst [vmem:[#allocation3 + $0x38] sm:$0xff] %v1940
    %2007 = vst [vmem:[#allocation3 + $0x40] sm:$0xff] %v1947
    %2008 = vst [vmem:[#allocation3 + $0x48] sm:$0xff] %v1954
    %2009 = vst [vmem:[#allocation3 + $0x50] sm:$0xff] %v1961
    %2010 = vst [vmem:[#allocation3 + $0x58] sm:$0xff] %v1968
    %2011 = vst [vmem:[#allocation3 + $0x60] sm:$0xff] %v1975
    %2012 = vst [vmem:[#allocation3 + $0x68] sm:$0xff] %v1982
    %2013 = vst [vmem:[#allocation3 + $0x70] sm:$0xff] %v1989
    %2014 = vst [vmem:[#allocation3 + $0x78] sm:$0xff] %v1996
    %v2015 = vld [vmem:[#allocation2] sm:$0xff]
    %v2016 = vld [vmem:[#allocation2 + $0x8] sm:$0xff]
    %v2017 = vld [vmem:[#allocation2 + $0x10] sm:$0xff]
    %v2018 = vld [vmem:[#allocation2 + $0x18] sm:$0xff]
    %v2019 = vld [vmem:[#allocation2 + $0x20] sm:$0xff]
    %v2020 = vld [vmem:[#allocation2 + $0x28] sm:$0xff]
    %v2021 = vld [vmem:[#allocation2 + $0x30] sm:$0xff]
    %v2022 = vld [vmem:[#allocation2 + $0x38] sm:$0xff]
    %v2023 = vld [vmem:[#allocation2 + $0x40] sm:$0xff]
    %v2024 = vld [vmem:[#allocation2 + $0x48] sm:$0xff]
    %v2025 = vld [vmem:[#allocation2 + $0x50] sm:$0xff]
    %v2026 = vld [vmem:[#allocation2 + $0x58] sm:$0xff]
    %v2027 = vld [vmem:[#allocation2 + $0x60] sm:$0xff]
    %v2028 = vld [vmem:[#allocation2 + $0x68] sm:$0xff]
    %v2029 = vld [vmem:[#allocation2 + $0x70] sm:$0xff]
    %v2030 = vld [vmem:[#allocation2 + $0x78] sm:$0xff]
    %v2031 = vld [vmem:[#allocation2 + $0x80] sm:$0xff]
    %v2032 = vld [vmem:[#allocation2 + $0x88] sm:$0xff]
    %v2033 = vld [vmem:[#allocation2 + $0x90] sm:$0xff]
    %v2034 = vld [vmem:[#allocation2 + $0x98] sm:$0xff]
    %v2035 = vld [vmem:[#allocation2 + $0xa0] sm:$0xff]
    %v2036 = vld [vmem:[#allocation2 + $0xa8] sm:$0xff]
    %v2037 = vld [vmem:[#allocation2 + $0xb0] sm:$0xff]
    %v2038 = vld [vmem:[#allocation2 + $0xb8] sm:$0xff]
    %v2039 = vld [vmem:[#allocation2 + $0xc0] sm:$0xff]
    %v2040 = vld [vmem:[#allocation2 + $0xc8] sm:$0xff]
    %v2041 = vld [vmem:[#allocation2 + $0xd0] sm:$0xff]
    %v2042 = vld [vmem:[#allocation2 + $0xd8] sm:$0xff]
    %v2043 = vld [vmem:[#allocation2 + $0xe0] sm:$0xff]
    %v2044 = vld [vmem:[#allocation2 + $0xe8] sm:$0xff]
    %v2045 = vld [vmem:[#allocation2 + $0xf0] sm:$0xff]
    %v2046 = vld [vmem:[#allocation2 + $0xf8] sm:$0xff]
    %v2047 = vld [vmem:[#allocation6] sm:$0xff]
    %v2048 = vld [vmem:[#allocation6 + $0x8] sm:$0xff]
    %v2049 = vld [vmem:[#allocation6 + $0x10] sm:$0xff]
    %v2050 = vld [vmem:[#allocation6 + $0x18] sm:$0xff]
    %v2051 = vld [vmem:[#allocation6 + $0x20] sm:$0xff]
    %v2052 = vld [vmem:[#allocation6 + $0x28] sm:$0xff]
    %v2053 = vld [vmem:[#allocation6 + $0x30] sm:$0xff]
    %v2054 = vld [vmem:[#allocation6 + $0x38] sm:$0xff]
    %v2055 = vld [vmem:[#allocation6 + $0x40] sm:$0xff]
    %v2056 = vld [vmem:[#allocation6 + $0x48] sm:$0xff]
    %v2057 = vld [vmem:[#allocation6 + $0x50] sm:$0xff]
    %v2058 = vld [vmem:[#allocation6 + $0x58] sm:$0xff]
    %v2059 = vld [vmem:[#allocation6 + $0x60] sm:$0xff]
    %v2060 = vld [vmem:[#allocation6 + $0x68] sm:$0xff]
    %v2061 = vld [vmem:[#allocation6 + $0x70] sm:$0xff]
    %v2062 = vld [vmem:[#allocation6 + $0x78] sm:$0xff]
    %v2063 = vld [vmem:[#allocation6 + $0x80] sm:$0xff]
    %v2064 = vld [vmem:[#allocation6 + $0x88] sm:$0xff]
    %v2065 = vld [vmem:[#allocation6 + $0x90] sm:$0xff]
    %v2066 = vld [vmem:[#allocation6 + $0x98] sm:$0xff]
    %v2067 = vld [vmem:[#allocation6 + $0xa0] sm:$0xff]
    %v2068 = vld [vmem:[#allocation6 + $0xa8] sm:$0xff]
    %v2069 = vld [vmem:[#allocation6 + $0xb0] sm:$0xff]
    %v2070 = vld [vmem:[#allocation6 + $0xb8] sm:$0xff]
    %v2071 = vld [vmem:[#allocation6 + $0xc0] sm:$0xff]
    %v2072 = vld [vmem:[#allocation6 + $0xc8] sm:$0xff]
    %v2073 = vld [vmem:[#allocation6 + $0xd0] sm:$0xff]
    %v2074 = vld [vmem:[#allocation6 + $0xd8] sm:$0xff]
    %v2075 = vld [vmem:[#allocation6 + $0xe0] sm:$0xff]
    %v2076 = vld [vmem:[#allocation6 + $0xe8] sm:$0xff]
    %v2077 = vld [vmem:[#allocation6 + $0xf0] sm:$0xff]
    %v2078 = vld [vmem:[#allocation6 + $0xf8] sm:$0xff]
    %v2079 = vld [vmem:[#allocation6 + $0x100] sm:$0xff]
    %v2080 = vld [vmem:[#allocation6 + $0x108] sm:$0xff]
    %v2081 = vld [vmem:[#allocation6 + $0x110] sm:$0xff]
    %v2082 = vld [vmem:[#allocation6 + $0x118] sm:$0xff]
    %v2083 = vld [vmem:[#allocation6 + $0x120] sm:$0xff]
    %v2084 = vld [vmem:[#allocation6 + $0x128] sm:$0xff]
    %v2085 = vld [vmem:[#allocation6 + $0x130] sm:$0xff]
    %v2086 = vld [vmem:[#allocation6 + $0x138] sm:$0xff]
    %v2087 = vld [vmem:[#allocation6 + $0x140] sm:$0xff]
    %v2088 = vld [vmem:[#allocation6 + $0x148] sm:$0xff]
    %v2089 = vld [vmem:[#allocation6 + $0x150] sm:$0xff]
    %v2090 = vld [vmem:[#allocation6 + $0x158] sm:$0xff]
    %v2091 = vld [vmem:[#allocation6 + $0x160] sm:$0xff]
    %v2092 = vld [vmem:[#allocation6 + $0x168] sm:$0xff]
    %v2093 = vld [vmem:[#allocation6 + $0x170] sm:$0xff]
    %v2094 = vld [vmem:[#allocation6 + $0x178] sm:$0xff]
    %v2095 = vld [vmem:[#allocation6 + $0x180] sm:$0xff]
    %v2096 = vld [vmem:[#allocation6 + $0x188] sm:$0xff]
    %v2097 = vld [vmem:[#allocation6 + $0x190] sm:$0xff]
    %v2098 = vld [vmem:[#allocation6 + $0x198] sm:$0xff]
    %v2099 = vld [vmem:[#allocation6 + $0x1a0] sm:$0xff]
    %v2100 = vld [vmem:[#allocation6 + $0x1a8] sm:$0xff]
    %v2101 = vld [vmem:[#allocation6 + $0x1b0] sm:$0xff]
    %v2102 = vld [vmem:[#allocation6 + $0x1b8] sm:$0xff]
    %v2103 = vld [vmem:[#allocation6 + $0x1c0] sm:$0xff]
    %v2104 = vld [vmem:[#allocation6 + $0x1c8] sm:$0xff]
    %v2105 = vld [vmem:[#allocation6 + $0x1d0] sm:$0xff]
    %v2106 = vld [vmem:[#allocation6 + $0x1d8] sm:$0xff]
    %v2107 = vld [vmem:[#allocation6 + $0x1e0] sm:$0xff]
    %v2108 = vld [vmem:[#allocation6 + $0x1e8] sm:$0xff]
    %v2109 = vld [vmem:[#allocation6 + $0x1f0] sm:$0xff]
    %v2110 = vld [vmem:[#allocation6 + $0x1f8] sm:$0xff]
    %v2111 = vand.u32 %v2048, 4294901760
    %2112 = vmatprep.subr.mxu0 %v2111
    %v2113 = vand.u32 %v2047, 4294901760
    %2114 = vmatpush1.msra.mxu0 %v2113
    %v2115 = vand.u32 %v2050, 4294901760
    %2116 = vmatprep.subr.mxu0 %v2115
    %v2117 = vand.u32 %v2049, 4294901760
    %2118 = vmatpush1.msra.mxu0 %v2117
    %v2119 = vand.u32 %v2052, 4294901760
    %2120 = vmatprep.subr.mxu0 %v2119
    %v2121 = vand.u32 %v2051, 4294901760
    %2122 = vmatpush1.msra.mxu0 %v2121
    %v2123 = vand.u32 %v2054, 4294901760
    %2124 = vmatprep.subr.mxu0 %v2123
    %v2125 = vand.u32 %v2053, 4294901760
    %2126 = vmatpush1.msra.mxu0 %v2125
    %v2127 = vand.u32 %v2056, 4294901760
    %2128 = vmatprep.subr.mxu0 %v2127
    %v2129 = vand.u32 %v2055, 4294901760
    %2130 = vmatpush1.msra.mxu0 %v2129
    %v2131 = vand.u32 %v2058, 4294901760
    %2132 = vmatprep.subr.mxu0 %v2131
    %v2133 = vand.u32 %v2057, 4294901760
    %2134 = vmatpush1.msra.mxu0 %v2133
    %v2135 = vand.u32 %v2060, 4294901760
    %2136 = vmatprep.subr.mxu0 %v2135
    %v2137 = vand.u32 %v2059, 4294901760
    %2138 = vmatpush1.msra.mxu0 %v2137
    %v2139 = vand.u32 %v2062, 4294901760
    %2140 = vmatprep.subr.mxu0 %v2139
    %v2141 = vand.u32 %v2061, 4294901760
    %2142 = vmatpush1.msra.mxu0 %v2141
    %v2143 = vand.u32 %v2064, 4294901760
    %2144 = vmatprep.subr.mxu0 %v2143
    %v2145 = vand.u32 %v2063, 4294901760
    %2146 = vmatpush1.msra.mxu0 %v2145
    %v2147 = vand.u32 %v2066, 4294901760
    %2148 = vmatprep.subr.mxu0 %v2147
    %v2149 = vand.u32 %v2065, 4294901760
    %2150 = vmatpush1.msra.mxu0 %v2149
    %v2151 = vand.u32 %v2068, 4294901760
    %2152 = vmatprep.subr.mxu0 %v2151
    %v2153 = vand.u32 %v2067, 4294901760
    %2154 = vmatpush1.msra.mxu0 %v2153
    %v2155 = vand.u32 %v2070, 4294901760
    %2156 = vmatprep.subr.mxu0 %v2155
    %v2157 = vand.u32 %v2069, 4294901760
    %2158 = vmatpush1.msra.mxu0 %v2157
    %v2159 = vand.u32 %v2072, 4294901760
    %2160 = vmatprep.subr.mxu0 %v2159
    %v2161 = vand.u32 %v2071, 4294901760
    %2162 = vmatpush1.msra.mxu0 %v2161
    %v2163 = vand.u32 %v2074, 4294901760
    %2164 = vmatprep.subr.mxu0 %v2163
    %v2165 = vand.u32 %v2073, 4294901760
    %2166 = vmatpush1.msra.mxu0 %v2165
    %v2167 = vand.u32 %v2076, 4294901760
    %2168 = vmatprep.subr.mxu0 %v2167
    %v2169 = vand.u32 %v2075, 4294901760
    %2170 = vmatpush1.msra.mxu0 %v2169
    %v2171 = vand.u32 %v2078, 4294901760
    %2172 = vmatprep.subr.mxu0 %v2171
    %v2173 = vand.u32 %v2077, 4294901760
    %2174 = vmatpush1.msra.mxu0 %v2173
    %v2175 = vand.u32 %v2080, 4294901760
    %2176 = vmatprep.subr.mxu0 %v2175
    %v2177 = vand.u32 %v2079, 4294901760
    %2178 = vmatpush1.msra.mxu0 %v2177
    %v2179 = vand.u32 %v2082, 4294901760
    %2180 = vmatprep.subr.mxu0 %v2179
    %v2181 = vand.u32 %v2081, 4294901760
    %2182 = vmatpush1.msra.mxu0 %v2181
    %v2183 = vand.u32 %v2084, 4294901760
    %2184 = vmatprep.subr.mxu0 %v2183
    %v2185 = vand.u32 %v2083, 4294901760
    %2186 = vmatpush1.msra.mxu0 %v2185
    %v2187 = vand.u32 %v2086, 4294901760
    %2188 = vmatprep.subr.mxu0 %v2187
    %v2189 = vand.u32 %v2085, 4294901760
    %2190 = vmatpush1.msra.mxu0 %v2189
    %v2191 = vand.u32 %v2088, 4294901760
    %2192 = vmatprep.subr.mxu0 %v2191
    %v2193 = vand.u32 %v2087, 4294901760
    %2194 = vmatpush1.msra.mxu0 %v2193
    %v2195 = vand.u32 %v2090, 4294901760
    %2196 = vmatprep.subr.mxu0 %v2195
    %v2197 = vand.u32 %v2089, 4294901760
    %2198 = vmatpush1.msra.mxu0 %v2197
    %v2199 = vand.u32 %v2092, 4294901760
    %2200 = vmatprep.subr.mxu0 %v2199
    %v2201 = vand.u32 %v2091, 4294901760
    %2202 = vmatpush1.msra.mxu0 %v2201
    %v2203 = vand.u32 %v2094, 4294901760
    %2204 = vmatprep.subr.mxu0 %v2203
    %v2205 = vand.u32 %v2093, 4294901760
    %2206 = vmatpush1.msra.mxu0 %v2205
    %v2207 = vand.u32 %v2096, 4294901760
    %2208 = vmatprep.subr.mxu0 %v2207
    %v2209 = vand.u32 %v2095, 4294901760
    %2210 = vmatpush1.msra.mxu0 %v2209
    %v2211 = vand.u32 %v2098, 4294901760
    %2212 = vmatprep.subr.mxu0 %v2211
    %v2213 = vand.u32 %v2097, 4294901760
    %2214 = vmatpush1.msra.mxu0 %v2213
    %v2215 = vand.u32 %v2100, 4294901760
    %2216 = vmatprep.subr.mxu0 %v2215
    %v2217 = vand.u32 %v2099, 4294901760
    %2218 = vmatpush1.msra.mxu0 %v2217
    %v2219 = vand.u32 %v2102, 4294901760
    %2220 = vmatprep.subr.mxu0 %v2219
    %v2221 = vand.u32 %v2101, 4294901760
    %2222 = vmatpush1.msra.mxu0 %v2221
    %v2223 = vand.u32 %v2104, 4294901760
    %2224 = vmatprep.subr.mxu0 %v2223
    %v2225 = vand.u32 %v2103, 4294901760
    %2226 = vmatpush1.msra.mxu0 %v2225
    %v2227 = vand.u32 %v2106, 4294901760
    %2228 = vmatprep.subr.mxu0 %v2227
    %v2229 = vand.u32 %v2105, 4294901760
    %2230 = vmatpush1.msra.mxu0 %v2229
    %v2231 = vand.u32 %v2108, 4294901760
    %2232 = vmatprep.subr.mxu0 %v2231
    %v2233 = vand.u32 %v2107, 4294901760
    %2234 = vmatpush1.msra.mxu0 %v2233
    %v2235 = vand.u32 %v2110, 4294901760
    %2236 = vmatprep.subr.mxu0 %v2235
    %v2237 = vand.u32 %v2109, 4294901760
    %2238 = vmatpush1.msra.mxu0 %v2237
    %v2239 = vand.u32 %v2016, 4294901760
    %v2240 = vsub.f32 %v2016, %v2239
    %v2241 = vand.u32 %v2240, 4294901760
    %v2242 = vsub.f32 %v2240, %v2241
    %v2243 = vand.u32 %v2242, 4294901760
    %2244 = vmatprep.mubr.f32.mxu0 %v2243
    %v2245 = vand.u32 %v2015, 4294901760
    %v2246 = vsub.f32 %v2015, %v2245
    %v2247 = vand.u32 %v2246, 4294901760
    %v2248 = vsub.f32 %v2246, %v2247
    %v2249 = vand.u32 %v2248, 4294901760
    %2250 = vmatmul.mubr.f32.gmra.mrb[0].mxu0 %v2249
    %v2251 = vpop.f32.mrb[0].mxu0
    %v2252 = vadd.f32 0.0, %v2251
    %v2253 = vpop.f32.mrb[0].mxu0
    %v2254 = vadd.f32 0.0, %v2253
    %v2255 = vand.u32 %v2018, 4294901760
    %v2256 = vsub.f32 %v2018, %v2255
    %v2257 = vand.u32 %v2256, 4294901760
    %v2258 = vsub.f32 %v2256, %v2257
    %v2259 = vand.u32 %v2258, 4294901760
    %2260 = vmatprep.mubr.f32.mxu0 %v2259
    %v2261 = vand.u32 %v2017, 4294901760
    %v2262 = vsub.f32 %v2017, %v2261
    %v2263 = vand.u32 %v2262, 4294901760
    %v2264 = vsub.f32 %v2262, %v2263
    %v2265 = vand.u32 %v2264, 4294901760
    %2266 = vmatmul.mubr.f32.gmra.mrb[0].mxu0 %v2265
    %v2267 = vpop.f32.mrb[0].mxu0
    %v2268 = vadd.f32 0.0, %v2267
    %v2269 = vpop.f32.mrb[0].mxu0
    %v2270 = vadd.f32 0.0, %v2269
    %v2271 = vand.u32 %v2020, 4294901760
    %v2272 = vsub.f32 %v2020, %v2271
    %v2273 = vand.u32 %v2272, 4294901760
    %v2274 = vsub.f32 %v2272, %v2273
    %v2275 = vand.u32 %v2274, 4294901760
    %2276 = vmatprep.mubr.f32.mxu0 %v2275
    %v2277 = vand.u32 %v2019, 4294901760
    %v2278 = vsub.f32 %v2019, %v2277
    %v2279 = vand.u32 %v2278, 4294901760
    %v2280 = vsub.f32 %v2278, %v2279
    %v2281 = vand.u32 %v2280, 4294901760
    %2282 = vmatmul.mubr.f32.gmra.mrb[0].mxu0 %v2281
    %v2283 = vpop.f32.mrb[0].mxu0
    %v2284 = vadd.f32 0.0, %v2283
    %v2285 = vpop.f32.mrb[0].mxu0
    %v2286 = vadd.f32 0.0, %v2285
    %v2287 = vand.u32 %v2022, 4294901760
    %v2288 = vsub.f32 %v2022, %v2287
    %v2289 = vand.u32 %v2288, 4294901760
    %v2290 = vsub.f32 %v2288, %v2289
    %v2291 = vand.u32 %v2290, 4294901760
    %2292 = vmatprep.mubr.f32.mxu0 %v2291
    %v2293 = vand.u32 %v2021, 4294901760
    %v2294 = vsub.f32 %v2021, %v2293
    %v2295 = vand.u32 %v2294, 4294901760
    %v2296 = vsub.f32 %v2294, %v2295
    %v2297 = vand.u32 %v2296, 4294901760
    %2298 = vmatmul.mubr.f32.gmra.mrb[0].mxu0 %v2297
    %v2299 = vpop.f32.mrb[0].mxu0
    %v2300 = vadd.f32 0.0, %v2299
    %v2301 = vpop.f32.mrb[0].mxu0
    %v2302 = vadd.f32 0.0, %v2301
    %v2303 = vand.u32 %v2024, 4294901760
    %v2304 = vsub.f32 %v2024, %v2303
    %v2305 = vand.u32 %v2304, 4294901760
    %v2306 = vsub.f32 %v2304, %v2305
    %v2307 = vand.u32 %v2306, 4294901760
    %2308 = vmatprep.mubr.f32.mxu0 %v2307
    %v2309 = vand.u32 %v2023, 4294901760
    %v2310 = vsub.f32 %v2023, %v2309
    %v2311 = vand.u32 %v2310, 4294901760
    %v2312 = vsub.f32 %v2310, %v2311
    %v2313 = vand.u32 %v2312, 4294901760
    %2314 = vmatmul.mubr.f32.gmra.mrb[0].mxu0 %v2313
    %v2315 = vpop.f32.mrb[0].mxu0
    %v2316 = vadd.f32 0.0, %v2315
    %v2317 = vpop.f32.mrb[0].mxu0
    %v2318 = vadd.f32 0.0, %v2317
    %v2319 = vand.u32 %v2026, 4294901760
    %v2320 = vsub.f32 %v2026, %v2319
    %v2321 = vand.u32 %v2320, 4294901760
    %v2322 = vsub.f32 %v2320, %v2321
    %v2323 = vand.u32 %v2322, 4294901760
    %2324 = vmatprep.mubr.f32.mxu0 %v2323
    %v2325 = vand.u32 %v2025, 4294901760
    %v2326 = vsub.f32 %v2025, %v2325
    %v2327 = vand.u32 %v2326, 4294901760
    %v2328 = vsub.f32 %v2326, %v2327
    %v2329 = vand.u32 %v2328, 4294901760
    %2330 = vmatmul.mubr.f32.gmra.mrb[0].mxu0 %v2329
    %v2331 = vpop.f32.mrb[0].mxu0
    %v2332 = vadd.f32 0.0, %v2331
    %v2333 = vpop.f32.mrb[0].mxu0
    %v2334 = vadd.f32 0.0, %v2333
    %v2335 = vand.u32 %v2028, 4294901760
    %v2336 = vsub.f32 %v2028, %v2335
    %v2337 = vand.u32 %v2336, 4294901760
    %v2338 = vsub.f32 %v2336, %v2337
    %v2339 = vand.u32 %v2338, 4294901760
    %2340 = vmatprep.mubr.f32.mxu0 %v2339
    %v2341 = vand.u32 %v2027, 4294901760
    %v2342 = vsub.f32 %v2027, %v2341
    %v2343 = vand.u32 %v2342, 4294901760
    %v2344 = vsub.f32 %v2342, %v2343
    %v2345 = vand.u32 %v2344, 4294901760
    %2346 = vmatmul.mubr.f32.gmra.mrb[0].mxu0 %v2345
    %v2347 = vpop.f32.mrb[0].mxu0
    %v2348 = vadd.f32 0.0, %v2347
    %v2349 = vpop.f32.mrb[0].mxu0
    %v2350 = vadd.f32 0.0, %v2349
    %v2351 = vand.u32 %v2030, 4294901760
    %v2352 = vsub.f32 %v2030, %v2351
    %v2353 = vand.u32 %v2352, 4294901760
    %v2354 = vsub.f32 %v2352, %v2353
    %v2355 = vand.u32 %v2354, 4294901760
    %2356 = vmatprep.mubr.f32.mxu0 %v2355
    %v2357 = vand.u32 %v2029, 4294901760
    %v2358 = vsub.f32 %v2029, %v2357
    %v2359 = vand.u32 %v2358, 4294901760
    %v2360 = vsub.f32 %v2358, %v2359
    %v2361 = vand.u32 %v2360, 4294901760
    %2362 = vmatmul.mubr.f32.gmra.mrb[0].mxu0 %v2361
    %v2363 = vpop.f32.mrb[0].mxu0
    %v2364 = vadd.f32 0.0, %v2363
    %v2365 = vpop.f32.mrb[0].mxu0
    %v2366 = vadd.f32 0.0, %v2365
    %v2367 = vand.u32 %v2032, 4294901760
    %v2368 = vsub.f32 %v2032, %v2367
    %v2369 = vand.u32 %v2368, 4294901760
    %v2370 = vsub.f32 %v2368, %v2369
    %v2371 = vand.u32 %v2370, 4294901760
    %2372 = vmatprep.mubr.f32.mxu0 %v2371
    %v2373 = vand.u32 %v2031, 4294901760
    %v2374 = vsub.f32 %v2031, %v2373
    %v2375 = vand.u32 %v2374, 4294901760
    %v2376 = vsub.f32 %v2374, %v2375
    %v2377 = vand.u32 %v2376, 4294901760
    %2378 = vmatmul.mubr.f32.gmra.mrb[0].mxu0 %v2377
    %v2379 = vpop.f32.mrb[0].mxu0
    %v2380 = vadd.f32 0.0, %v2379
    %v2381 = vpop.f32.mrb[0].mxu0
    %v2382 = vadd.f32 0.0, %v2381
    %v2383 = vand.u32 %v2034, 4294901760
    %v2384 = vsub.f32 %v2034, %v2383
    %v2385 = vand.u32 %v2384, 4294901760
    %v2386 = vsub.f32 %v2384, %v2385
    %v2387 = vand.u32 %v2386, 4294901760
    %2388 = vmatprep.mubr.f32.mxu0 %v2387
    %v2389 = vand.u32 %v2033, 4294901760
    %v2390 = vsub.f32 %v2033, %v2389
    %v2391 = vand.u32 %v2390, 4294901760
    %v2392 = vsub.f32 %v2390, %v2391
    %v2393 = vand.u32 %v2392, 4294901760
    %2394 = vmatmul.mubr.f32.gmra.mrb[0].mxu0 %v2393
    %v2395 = vpop.f32.mrb[0].mxu0
    %v2396 = vadd.f32 0.0, %v2395
    %v2397 = vpop.f32.mrb[0].mxu0
    %v2398 = vadd.f32 0.0, %v2397
    %v2399 = vand.u32 %v2036, 4294901760
    %v2400 = vsub.f32 %v2036, %v2399
    %v2401 = vand.u32 %v2400, 4294901760
    %v2402 = vsub.f32 %v2400, %v2401
    %v2403 = vand.u32 %v2402, 4294901760
    %2404 = vmatprep.mubr.f32.mxu0 %v2403
    %v2405 = vand.u32 %v2035, 4294901760
    %v2406 = vsub.f32 %v2035, %v2405
    %v2407 = vand.u32 %v2406, 4294901760
    %v2408 = vsub.f32 %v2406, %v2407
    %v2409 = vand.u32 %v2408, 4294901760
    %2410 = vmatmul.mubr.f32.gmra.mrb[0].mxu0 %v2409
    %v2411 = vpop.f32.mrb[0].mxu0
    %v2412 = vadd.f32 0.0, %v2411
    %v2413 = vpop.f32.mrb[0].mxu0
    %v2414 = vadd.f32 0.0, %v2413
    %v2415 = vand.u32 %v2038, 4294901760
    %v2416 = vsub.f32 %v2038, %v2415
    %v2417 = vand.u32 %v2416, 4294901760
    %v2418 = vsub.f32 %v2416, %v2417
    %v2419 = vand.u32 %v2418, 4294901760
    %2420 = vmatprep.mubr.f32.mxu0 %v2419
    %v2421 = vand.u32 %v2037, 4294901760
    %v2422 = vsub.f32 %v2037, %v2421
    %v2423 = vand.u32 %v2422, 4294901760
    %v2424 = vsub.f32 %v2422, %v2423
    %v2425 = vand.u32 %v2424, 4294901760
    %2426 = vmatmul.mubr.f32.gmra.mrb[0].mxu0 %v2425
    %v2427 = vpop.f32.mrb[0].mxu0
    %v2428 = vadd.f32 0.0, %v2427
    %v2429 = vpop.f32.mrb[0].mxu0
    %v2430 = vadd.f32 0.0, %v2429
    %v2431 = vand.u32 %v2040, 4294901760
    %v2432 = vsub.f32 %v2040, %v2431
    %v2433 = vand.u32 %v2432, 4294901760
    %v2434 = vsub.f32 %v2432, %v2433
    %v2435 = vand.u32 %v2434, 4294901760
    %2436 = vmatprep.mubr.f32.mxu0 %v2435
    %v2437 = vand.u32 %v2039, 4294901760
    %v2438 = vsub.f32 %v2039, %v2437
    %v2439 = vand.u32 %v2438, 4294901760
    %v2440 = vsub.f32 %v2438, %v2439
    %v2441 = vand.u32 %v2440, 4294901760
    %2442 = vmatmul.mubr.f32.gmra.mrb[0].mxu0 %v2441
    %v2443 = vpop.f32.mrb[0].mxu0
    %v2444 = vadd.f32 0.0, %v2443
    %v2445 = vpop.f32.mrb[0].mxu0
    %v2446 = vadd.f32 0.0, %v2445
    %v2447 = vand.u32 %v2042, 4294901760
    %v2448 = vsub.f32 %v2042, %v2447
    %v2449 = vand.u32 %v2448, 4294901760
    %v2450 = vsub.f32 %v2448, %v2449
    %v2451 = vand.u32 %v2450, 4294901760
    %2452 = vmatprep.mubr.f32.mxu0 %v2451
    %v2453 = vand.u32 %v2041, 4294901760
    %v2454 = vsub.f32 %v2041, %v2453
    %v2455 = vand.u32 %v2454, 4294901760
    %v2456 = vsub.f32 %v2454, %v2455
    %v2457 = vand.u32 %v2456, 4294901760
    %2458 = vmatmul.mubr.f32.gmra.mrb[0].mxu0 %v2457
    %v2459 = vpop.f32.mrb[0].mxu0
    %v2460 = vadd.f32 0.0, %v2459
    %v2461 = vpop.f32.mrb[0].mxu0
    %v2462 = vadd.f32 0.0, %v2461
    %v2463 = vand.u32 %v2044, 4294901760
    %v2464 = vsub.f32 %v2044, %v2463
    %v2465 = vand.u32 %v2464, 4294901760
    %v2466 = vsub.f32 %v2464, %v2465
    %v2467 = vand.u32 %v2466, 4294901760
    %2468 = vmatprep.mubr.f32.mxu0 %v2467
    %v2469 = vand.u32 %v2043, 4294901760
    %v2470 = vsub.f32 %v2043, %v2469
    %v2471 = vand.u32 %v2470, 4294901760
    %v2472 = vsub.f32 %v2470, %v2471
    %v2473 = vand.u32 %v2472, 4294901760
    %2474 = vmatmul.mubr.f32.gmra.mrb[0].mxu0 %v2473
    %v2475 = vpop.f32.mrb[0].mxu0
    %v2476 = vadd.f32 0.0, %v2475
    %v2477 = vpop.f32.mrb[0].mxu0
    %v2478 = vadd.f32 0.0, %v2477
    %v2479 = vand.u32 %v2046, 4294901760
    %v2480 = vsub.f32 %v2046, %v2479
    %v2481 = vand.u32 %v2480, 4294901760
    %v2482 = vsub.f32 %v2480, %v2481
    %v2483 = vand.u32 %v2482, 4294901760
    %2484 = vmatprep.mubr.f32.mxu0 %v2483
    %v2485 = vand.u32 %v2045, 4294901760
    %v2486 = vsub.f32 %v2045, %v2485
    %v2487 = vand.u32 %v2486, 4294901760
    %v2488 = vsub.f32 %v2486, %v2487
    %v2489 = vand.u32 %v2488, 4294901760
    %2490 = vmatmul.mubr.f32.gmra.mrb[0].mxu0 %v2489
    %v2491 = vpop.f32.mrb[0].mxu0
    %v2492 = vadd.f32 0.0, %v2491
    %v2493 = vpop.f32.mrb[0].mxu0
    %v2494 = vadd.f32 0.0, %v2493
    %2495 = vdwg.mxu0
    %v2496 = vand.u32 %v2048, 4294901760
    %v2497 = vsub.f32 %v2048, %v2496
    %v2498 = vand.u32 %v2497, 4294901760
    %v2499 = vsub.f32 %v2497, %v2498
    %v2500 = vand.u32 %v2499, 4294901760
    %2501 = vmatprep.subr.mxu0 %v2500
    %v2502 = vand.u32 %v2047, 4294901760
    %v2503 = vsub.f32 %v2047, %v2502
    %v2504 = vand.u32 %v2503, 4294901760
    %v2505 = vsub.f32 %v2503, %v2504
    %v2506 = vand.u32 %v2505, 4294901760
    %2507 = vmatpush1.msra.mxu0 %v2506
    %v2508 = vand.u32 %v2050, 4294901760
    %v2509 = vsub.f32 %v2050, %v2508
    %v2510 = vand.u32 %v2509, 4294901760
    %v2511 = vsub.f32 %v2509, %v2510
    %v2512 = vand.u32 %v2511, 4294901760
    %2513 = vmatprep.subr.mxu0 %v2512
    %v2514 = vand.u32 %v2049, 4294901760
    %v2515 = vsub.f32 %v2049, %v2514
    %v2516 = vand.u32 %v2515, 4294901760
    %v2517 = vsub.f32 %v2515, %v2516
    %v2518 = vand.u32 %v2517, 4294901760
    %2519 = vmatpush1.msra.mxu0 %v2518
    %v2520 = vand.u32 %v2052, 4294901760
    %v2521 = vsub.f32 %v2052, %v2520
    %v2522 = vand.u32 %v2521, 4294901760
    %v2523 = vsub.f32 %v2521, %v2522
    %v2524 = vand.u32 %v2523, 4294901760
    %2525 = vmatprep.subr.mxu0 %v2524
    %v2526 = vand.u32 %v2051, 4294901760
    %v2527 = vsub.f32 %v2051, %v2526
    %v2528 = vand.u32 %v2527, 4294901760
    %v2529 = vsub.f32 %v2527, %v2528
    %v2530 = vand.u32 %v2529, 4294901760
    %2531 = vmatpush1.msra.mxu0 %v2530
    %v2532 = vand.u32 %v2054, 4294901760
    %v2533 = vsub.f32 %v2054, %v2532
    %v2534 = vand.u32 %v2533, 4294901760
    %v2535 = vsub.f32 %v2533, %v2534
    %v2536 = vand.u32 %v2535, 4294901760
    %2537 = vmatprep.subr.mxu0 %v2536
    %v2538 = vand.u32 %v2053, 4294901760
    %v2539 = vsub.f32 %v2053, %v2538
    %v2540 = vand.u32 %v2539, 4294901760
    %v2541 = vsub.f32 %v2539, %v2540
    %v2542 = vand.u32 %v2541, 4294901760
    %2543 = vmatpush1.msra.mxu0 %v2542
    %v2544 = vand.u32 %v2056, 4294901760
    %v2545 = vsub.f32 %v2056, %v2544
    %v2546 = vand.u32 %v2545, 4294901760
    %v2547 = vsub.f32 %v2545, %v2546
    %v2548 = vand.u32 %v2547, 4294901760
    %2549 = vmatprep.subr.mxu0 %v2548
    %v2550 = vand.u32 %v2055, 4294901760
    %v2551 = vsub.f32 %v2055, %v2550
    %v2552 = vand.u32 %v2551, 4294901760
    %v2553 = vsub.f32 %v2551, %v2552
    %v2554 = vand.u32 %v2553, 4294901760
    %2555 = vmatpush1.msra.mxu0 %v2554
    %v2556 = vand.u32 %v2058, 4294901760
    %v2557 = vsub.f32 %v2058, %v2556
    %v2558 = vand.u32 %v2557, 4294901760
    %v2559 = vsub.f32 %v2557, %v2558
    %v2560 = vand.u32 %v2559, 4294901760
    %2561 = vmatprep.subr.mxu0 %v2560
    %v2562 = vand.u32 %v2057, 4294901760
    %v2563 = vsub.f32 %v2057, %v2562
    %v2564 = vand.u32 %v2563, 4294901760
    %v2565 = vsub.f32 %v2563, %v2564
    %v2566 = vand.u32 %v2565, 4294901760
    %2567 = vmatpush1.msra.mxu0 %v2566
    %v2568 = vand.u32 %v2060, 4294901760
    %v2569 = vsub.f32 %v2060, %v2568
    %v2570 = vand.u32 %v2569, 4294901760
    %v2571 = vsub.f32 %v2569, %v2570
    %v2572 = vand.u32 %v2571, 4294901760
    %2573 = vmatprep.subr.mxu0 %v2572
    %v2574 = vand.u32 %v2059, 4294901760
    %v2575 = vsub.f32 %v2059, %v2574
    %v2576 = vand.u32 %v2575, 4294901760
    %v2577 = vsub.f32 %v2575, %v2576
    %v2578 = vand.u32 %v2577, 4294901760
    %2579 = vmatpush1.msra.mxu0 %v2578
    %v2580 = vand.u32 %v2062, 4294901760
    %v2581 = vsub.f32 %v2062, %v2580
    %v2582 = vand.u32 %v2581, 4294901760
    %v2583 = vsub.f32 %v2581, %v2582
    %v2584 = vand.u32 %v2583, 4294901760
    %2585 = vmatprep.subr.mxu0 %v2584
    %v2586 = vand.u32 %v2061, 4294901760
    %v2587 = vsub.f32 %v2061, %v2586
    %v2588 = vand.u32 %v2587, 4294901760
    %v2589 = vsub.f32 %v2587, %v2588
    %v2590 = vand.u32 %v2589, 4294901760
    %2591 = vmatpush1.msra.mxu0 %v2590
    %v2592 = vand.u32 %v2064, 4294901760
    %v2593 = vsub.f32 %v2064, %v2592
    %v2594 = vand.u32 %v2593, 4294901760
    %v2595 = vsub.f32 %v2593, %v2594
    %v2596 = vand.u32 %v2595, 4294901760
    %2597 = vmatprep.subr.mxu0 %v2596
    %v2598 = vand.u32 %v2063, 4294901760
    %v2599 = vsub.f32 %v2063, %v2598
    %v2600 = vand.u32 %v2599, 4294901760
    %v2601 = vsub.f32 %v2599, %v2600
    %v2602 = vand.u32 %v2601, 4294901760
    %2603 = vmatpush1.msra.mxu0 %v2602
    %v2604 = vand.u32 %v2066, 4294901760
    %v2605 = vsub.f32 %v2066, %v2604
    %v2606 = vand.u32 %v2605, 4294901760
    %v2607 = vsub.f32 %v2605, %v2606
    %v2608 = vand.u32 %v2607, 4294901760
    %2609 = vmatprep.subr.mxu0 %v2608
    %v2610 = vand.u32 %v2065, 4294901760
    %v2611 = vsub.f32 %v2065, %v2610
    %v2612 = vand.u32 %v2611, 4294901760
    %v2613 = vsub.f32 %v2611, %v2612
    %v2614 = vand.u32 %v2613, 4294901760
    %2615 = vmatpush1.msra.mxu0 %v2614
    %v2616 = vand.u32 %v2068, 4294901760
    %v2617 = vsub.f32 %v2068, %v2616
    %v2618 = vand.u32 %v2617, 4294901760
    %v2619 = vsub.f32 %v2617, %v2618
    %v2620 = vand.u32 %v2619, 4294901760
    %2621 = vmatprep.subr.mxu0 %v2620
    %v2622 = vand.u32 %v2067, 4294901760
    %v2623 = vsub.f32 %v2067, %v2622
    %v2624 = vand.u32 %v2623, 4294901760
    %v2625 = vsub.f32 %v2623, %v2624
    %v2626 = vand.u32 %v2625, 4294901760
    %2627 = vmatpush1.msra.mxu0 %v2626
    %v2628 = vand.u32 %v2070, 4294901760
    %v2629 = vsub.f32 %v2070, %v2628
    %v2630 = vand.u32 %v2629, 4294901760
    %v2631 = vsub.f32 %v2629, %v2630
    %v2632 = vand.u32 %v2631, 4294901760
    %2633 = vmatprep.subr.mxu0 %v2632
    %v2634 = vand.u32 %v2069, 4294901760
    %v2635 = vsub.f32 %v2069, %v2634
    %v2636 = vand.u32 %v2635, 4294901760
    %v2637 = vsub.f32 %v2635, %v2636
    %v2638 = vand.u32 %v2637, 4294901760
    %2639 = vmatpush1.msra.mxu0 %v2638
    %v2640 = vand.u32 %v2072, 4294901760
    %v2641 = vsub.f32 %v2072, %v2640
    %v2642 = vand.u32 %v2641, 4294901760
    %v2643 = vsub.f32 %v2641, %v2642
    %v2644 = vand.u32 %v2643, 4294901760
    %2645 = vmatprep.subr.mxu0 %v2644
    %v2646 = vand.u32 %v2071, 4294901760
    %v2647 = vsub.f32 %v2071, %v2646
    %v2648 = vand.u32 %v2647, 4294901760
    %v2649 = vsub.f32 %v2647, %v2648
    %v2650 = vand.u32 %v2649, 4294901760
    %2651 = vmatpush1.msra.mxu0 %v2650
    %v2652 = vand.u32 %v2074, 4294901760
    %v2653 = vsub.f32 %v2074, %v2652
    %v2654 = vand.u32 %v2653, 4294901760
    %v2655 = vsub.f32 %v2653, %v2654
    %v2656 = vand.u32 %v2655, 4294901760
    %2657 = vmatprep.subr.mxu0 %v2656
    %v2658 = vand.u32 %v2073, 4294901760
    %v2659 = vsub.f32 %v2073, %v2658
    %v2660 = vand.u32 %v2659, 4294901760
    %v2661 = vsub.f32 %v2659, %v2660
    %v2662 = vand.u32 %v2661, 4294901760
    %2663 = vmatpush1.msra.mxu0 %v2662
    %v2664 = vand.u32 %v2076, 4294901760
    %v2665 = vsub.f32 %v2076, %v2664
    %v2666 = vand.u32 %v2665, 4294901760
    %v2667 = vsub.f32 %v2665, %v2666
    %v2668 = vand.u32 %v2667, 4294901760
    %2669 = vmatprep.subr.mxu0 %v2668
    %v2670 = vand.u32 %v2075, 4294901760
    %v2671 = vsub.f32 %v2075, %v2670
    %v2672 = vand.u32 %v2671, 4294901760
    %v2673 = vsub.f32 %v2671, %v2672
    %v2674 = vand.u32 %v2673, 4294901760
    %2675 = vmatpush1.msra.mxu0 %v2674
    %v2676 = vand.u32 %v2078, 4294901760
    %v2677 = vsub.f32 %v2078, %v2676
    %v2678 = vand.u32 %v2677, 4294901760
    %v2679 = vsub.f32 %v2677, %v2678
    %v2680 = vand.u32 %v2679, 4294901760
    %2681 = vmatprep.subr.mxu0 %v2680
    %v2682 = vand.u32 %v2077, 4294901760
    %v2683 = vsub.f32 %v2077, %v2682
    %v2684 = vand.u32 %v2683, 4294901760
    %v2685 = vsub.f32 %v2683, %v2684
    %v2686 = vand.u32 %v2685, 4294901760
    %2687 = vmatpush1.msra.mxu0 %v2686
    %v2688 = vand.u32 %v2080, 4294901760
    %v2689 = vsub.f32 %v2080, %v2688
    %v2690 = vand.u32 %v2689, 4294901760
    %v2691 = vsub.f32 %v2689, %v2690
    %v2692 = vand.u32 %v2691, 4294901760
    %2693 = vmatprep.subr.mxu0 %v2692
    %v2694 = vand.u32 %v2079, 4294901760
    %v2695 = vsub.f32 %v2079, %v2694
    %v2696 = vand.u32 %v2695, 4294901760
    %v2697 = vsub.f32 %v2695, %v2696
    %v2698 = vand.u32 %v2697, 4294901760
    %2699 = vmatpush1.msra.mxu0 %v2698
    %v2700 = vand.u32 %v2082, 4294901760
    %v2701 = vsub.f32 %v2082, %v2700
    %v2702 = vand.u32 %v2701, 4294901760
    %v2703 = vsub.f32 %v2701, %v2702
    %v2704 = vand.u32 %v2703, 4294901760
    %2705 = vmatprep.subr.mxu0 %v2704
    %v2706 = vand.u32 %v2081, 4294901760
    %v2707 = vsub.f32 %v2081, %v2706
    %v2708 = vand.u32 %v2707, 4294901760
    %v2709 = vsub.f32 %v2707, %v2708
    %v2710 = vand.u32 %v2709, 4294901760
    %2711 = vmatpush1.msra.mxu0 %v2710
    %v2712 = vand.u32 %v2084, 4294901760
    %v2713 = vsub.f32 %v2084, %v2712
    %v2714 = vand.u32 %v2713, 4294901760
    %v2715 = vsub.f32 %v2713, %v2714
    %v2716 = vand.u32 %v2715, 4294901760
    %2717 = vmatprep.subr.mxu0 %v2716
    %v2718 = vand.u32 %v2083, 4294901760
    %v2719 = vsub.f32 %v2083, %v2718
    %v2720 = vand.u32 %v2719, 4294901760
    %v2721 = vsub.f32 %v2719, %v2720
    %v2722 = vand.u32 %v2721, 4294901760
    %2723 = vmatpush1.msra.mxu0 %v2722
    %v2724 = vand.u32 %v2086, 4294901760
    %v2725 = vsub.f32 %v2086, %v2724
    %v2726 = vand.u32 %v2725, 4294901760
    %v2727 = vsub.f32 %v2725, %v2726
    %v2728 = vand.u32 %v2727, 4294901760
    %2729 = vmatprep.subr.mxu0 %v2728
    %v2730 = vand.u32 %v2085, 4294901760
    %v2731 = vsub.f32 %v2085, %v2730
    %v2732 = vand.u32 %v2731, 4294901760
    %v2733 = vsub.f32 %v2731, %v2732
    %v2734 = vand.u32 %v2733, 4294901760
    %2735 = vmatpush1.msra.mxu0 %v2734
    %v2736 = vand.u32 %v2088, 4294901760
    %v2737 = vsub.f32 %v2088, %v2736
    %v2738 = vand.u32 %v2737, 4294901760
    %v2739 = vsub.f32 %v2737, %v2738
    %v2740 = vand.u32 %v2739, 4294901760
    %2741 = vmatprep.subr.mxu0 %v2740
    %v2742 = vand.u32 %v2087, 4294901760
    %v2743 = vsub.f32 %v2087, %v2742
    %v2744 = vand.u32 %v2743, 4294901760
    %v2745 = vsub.f32 %v2743, %v2744
    %v2746 = vand.u32 %v2745, 4294901760
    %2747 = vmatpush1.msra.mxu0 %v2746
    %v2748 = vand.u32 %v2090, 4294901760
    %v2749 = vsub.f32 %v2090, %v2748
    %v2750 = vand.u32 %v2749, 4294901760
    %v2751 = vsub.f32 %v2749, %v2750
    %v2752 = vand.u32 %v2751, 4294901760
    %2753 = vmatprep.subr.mxu0 %v2752
    %v2754 = vand.u32 %v2089, 4294901760
    %v2755 = vsub.f32 %v2089, %v2754
    %v2756 = vand.u32 %v2755, 4294901760
    %v2757 = vsub.f32 %v2755, %v2756
    %v2758 = vand.u32 %v2757, 4294901760
    %2759 = vmatpush1.msra.mxu0 %v2758
    %v2760 = vand.u32 %v2092, 4294901760
    %v2761 = vsub.f32 %v2092, %v2760
    %v2762 = vand.u32 %v2761, 4294901760
    %v2763 = vsub.f32 %v2761, %v2762
    %v2764 = vand.u32 %v2763, 4294901760
    %2765 = vmatprep.subr.mxu0 %v2764
    %v2766 = vand.u32 %v2091, 4294901760
    %v2767 = vsub.f32 %v2091, %v2766
    %v2768 = vand.u32 %v2767, 4294901760
    %v2769 = vsub.f32 %v2767, %v2768
    %v2770 = vand.u32 %v2769, 4294901760
    %2771 = vmatpush1.msra.mxu0 %v2770
    %v2772 = vand.u32 %v2094, 4294901760
    %v2773 = vsub.f32 %v2094, %v2772
    %v2774 = vand.u32 %v2773, 4294901760
    %v2775 = vsub.f32 %v2773, %v2774
    %v2776 = vand.u32 %v2775, 4294901760
    %2777 = vmatprep.subr.mxu0 %v2776
    %v2778 = vand.u32 %v2093, 4294901760
    %v2779 = vsub.f32 %v2093, %v2778
    %v2780 = vand.u32 %v2779, 4294901760
    %v2781 = vsub.f32 %v2779, %v2780
    %v2782 = vand.u32 %v2781, 4294901760
    %2783 = vmatpush1.msra.mxu0 %v2782
    %v2784 = vand.u32 %v2096, 4294901760
    %v2785 = vsub.f32 %v2096, %v2784
    %v2786 = vand.u32 %v2785, 4294901760
    %v2787 = vsub.f32 %v2785, %v2786
    %v2788 = vand.u32 %v2787, 4294901760
    %2789 = vmatprep.subr.mxu0 %v2788
    %v2790 = vand.u32 %v2095, 4294901760
    %v2791 = vsub.f32 %v2095, %v2790
    %v2792 = vand.u32 %v2791, 4294901760
    %v2793 = vsub.f32 %v2791, %v2792
    %v2794 = vand.u32 %v2793, 4294901760
    %2795 = vmatpush1.msra.mxu0 %v2794
    %v2796 = vand.u32 %v2098, 4294901760
    %v2797 = vsub.f32 %v2098, %v2796
    %v2798 = vand.u32 %v2797, 4294901760
    %v2799 = vsub.f32 %v2797, %v2798
    %v2800 = vand.u32 %v2799, 4294901760
    %2801 = vmatprep.subr.mxu0 %v2800
    %v2802 = vand.u32 %v2097, 4294901760
    %v2803 = vsub.f32 %v2097, %v2802
    %v2804 = vand.u32 %v2803, 4294901760
    %v2805 = vsub.f32 %v2803, %v2804
    %v2806 = vand.u32 %v2805, 4294901760
    %2807 = vmatpush1.msra.mxu0 %v2806
    %v2808 = vand.u32 %v2100, 4294901760
    %v2809 = vsub.f32 %v2100, %v2808
    %v2810 = vand.u32 %v2809, 4294901760
    %v2811 = vsub.f32 %v2809, %v2810
    %v2812 = vand.u32 %v2811, 4294901760
    %2813 = vmatprep.subr.mxu0 %v2812
    %v2814 = vand.u32 %v2099, 4294901760
    %v2815 = vsub.f32 %v2099, %v2814
    %v2816 = vand.u32 %v2815, 4294901760
    %v2817 = vsub.f32 %v2815, %v2816
    %v2818 = vand.u32 %v2817, 4294901760
    %2819 = vmatpush1.msra.mxu0 %v2818
    %v2820 = vand.u32 %v2102, 4294901760
    %v2821 = vsub.f32 %v2102, %v2820
    %v2822 = vand.u32 %v2821, 4294901760
    %v2823 = vsub.f32 %v2821, %v2822
    %v2824 = vand.u32 %v2823, 4294901760
    %2825 = vmatprep.subr.mxu0 %v2824
    %v2826 = vand.u32 %v2101, 4294901760
    %v2827 = vsub.f32 %v2101, %v2826
    %v2828 = vand.u32 %v2827, 4294901760
    %v2829 = vsub.f32 %v2827, %v2828
    %v2830 = vand.u32 %v2829, 4294901760
    %2831 = vmatpush1.msra.mxu0 %v2830
    %v2832 = vand.u32 %v2104, 4294901760
    %v2833 = vsub.f32 %v2104, %v2832
    %v2834 = vand.u32 %v2833, 4294901760
    %v2835 = vsub.f32 %v2833, %v2834
    %v2836 = vand.u32 %v2835, 4294901760
    %2837 = vmatprep.subr.mxu0 %v2836
    %v2838 = vand.u32 %v2103, 4294901760
    %v2839 = vsub.f32 %v2103, %v2838
    %v2840 = vand.u32 %v2839, 4294901760
    %v2841 = vsub.f32 %v2839, %v2840
    %v2842 = vand.u32 %v2841, 4294901760
    %2843 = vmatpush1.msra.mxu0 %v2842
    %v2844 = vand.u32 %v2106, 4294901760
    %v2845 = vsub.f32 %v2106, %v2844
    %v2846 = vand.u32 %v2845, 4294901760
    %v2847 = vsub.f32 %v2845, %v2846
    %v2848 = vand.u32 %v2847, 4294901760
    %2849 = vmatprep.subr.mxu0 %v2848
    %v2850 = vand.u32 %v2105, 4294901760
    %v2851 = vsub.f32 %v2105, %v2850
    %v2852 = vand.u32 %v2851, 4294901760
    %v2853 = vsub.f32 %v2851, %v2852
    %v2854 = vand.u32 %v2853, 4294901760
    %2855 = vmatpush1.msra.mxu0 %v2854
    %v2856 = vand.u32 %v2108, 4294901760
    %v2857 = vsub.f32 %v2108, %v2856
    %v2858 = vand.u32 %v2857, 4294901760
    %v2859 = vsub.f32 %v2857, %v2858
    %v2860 = vand.u32 %v2859, 4294901760
    %2861 = vmatprep.subr.mxu0 %v2860
    %v2862 = vand.u32 %v2107, 4294901760
    %v2863 = vsub.f32 %v2107, %v2862
    %v2864 = vand.u32 %v2863, 4294901760
    %v2865 = vsub.f32 %v2863, %v2864
    %v2866 = vand.u32 %v2865, 4294901760
    %2867 = vmatpush1.msra.mxu0 %v2866
    %v2868 = vand.u32 %v2110, 4294901760
    %v2869 = vsub.f32 %v2110, %v2868
    %v2870 = vand.u32 %v2869, 4294901760
    %v2871 = vsub.f32 %v2869, %v2870
    %v2872 = vand.u32 %v2871, 4294901760
    %2873 = vmatprep.subr.mxu0 %v2872
    %v2874 = vand.u32 %v2109, 4294901760
    %v2875 = vsub.f32 %v2109, %v2874
    %v2876 = vand.u32 %v2875, 4294901760
    %v2877 = vsub.f32 %v2875, %v2876
    %v2878 = vand.u32 %v2877, 4294901760
    %2879 = vmatpush1.msra.mxu0 %v2878
    %v2880 = vand.u32 %v2016, 4294901760
    %2881 = vmatprep.mubr.f32.mxu0 %v2880
    %v2882 = vand.u32 %v2015, 4294901760
    %2883 = vmatmul.mubr.f32.gmra.mrb[0].mxu0 %v2882
    %v2884 = vpop.f32.mrb[0].mxu0
    %v2885 = vadd.f32 %v2252, %v2884
    %v2886 = vpop.f32.mrb[0].mxu0
    %v2887 = vadd.f32 %v2254, %v2886
    %v2888 = vand.u32 %v2018, 4294901760
    %2889 = vmatprep.mubr.f32.mxu0 %v2888
    %v2890 = vand.u32 %v2017, 4294901760
    %2891 = vmatmul.mubr.f32.gmra.mrb[0].mxu0 %v2890
    %v2892 = vpop.f32.mrb[0].mxu0
    %v2893 = vadd.f32 %v2268, %v2892
    %v2894 = vpop.f32.mrb[0].mxu0
    %v2895 = vadd.f32 %v2270, %v2894
    %v2896 = vand.u32 %v2020, 4294901760
    %2897 = vmatprep.mubr.f32.mxu0 %v2896
    %v2898 = vand.u32 %v2019, 4294901760
    %2899 = vmatmul.mubr.f32.gmra.mrb[0].mxu0 %v2898
    %v2900 = vpop.f32.mrb[0].mxu0
    %v2901 = vadd.f32 %v2284, %v2900
    %v2902 = vpop.f32.mrb[0].mxu0
    %v2903 = vadd.f32 %v2286, %v2902
    %v2904 = vand.u32 %v2022, 4294901760
    %2905 = vmatprep.mubr.f32.mxu0 %v2904
    %v2906 = vand.u32 %v2021, 4294901760
    %2907 = vmatmul.mubr.f32.gmra.mrb[0].mxu0 %v2906
    %v2908 = vpop.f32.mrb[0].mxu0
    %v2909 = vadd.f32 %v2300, %v2908
    %v2910 = vpop.f32.mrb[0].mxu0
    %v2911 = vadd.f32 %v2302, %v2910
    %v2912 = vand.u32 %v2024, 4294901760
    %2913 = vmatprep.mubr.f32.mxu0 %v2912
    %v2914 = vand.u32 %v2023, 4294901760
    %2915 = vmatmul.mubr.f32.gmra.mrb[0].mxu0 %v2914
    %v2916 = vpop.f32.mrb[0].mxu0
    %v2917 = vadd.f32 %v2316, %v2916
    %v2918 = vpop.f32.mrb[0].mxu0
    %v2919 = vadd.f32 %v2318, %v2918
    %v2920 = vand.u32 %v2026, 4294901760
    %2921 = vmatprep.mubr.f32.mxu0 %v2920
    %v2922 = vand.u32 %v2025, 4294901760
    %2923 = vmatmul.mubr.f32.gmra.mrb[0].mxu0 %v2922
    %v2924 = vpop.f32.mrb[0].mxu0
    %v2925 = vadd.f32 %v2332, %v2924
    %v2926 = vpop.f32.mrb[0].mxu0
    %v2927 = vadd.f32 %v2334, %v2926
    %v2928 = vand.u32 %v2028, 4294901760
    %2929 = vmatprep.mubr.f32.mxu0 %v2928
    %v2930 = vand.u32 %v2027, 4294901760
    %2931 = vmatmul.mubr.f32.gmra.mrb[0].mxu0 %v2930
    %v2932 = vpop.f32.mrb[0].mxu0
    %v2933 = vadd.f32 %v2348, %v2932
    %v2934 = vpop.f32.mrb[0].mxu0
    %v2935 = vadd.f32 %v2350, %v2934
    %v2936 = vand.u32 %v2030, 4294901760
    %2937 = vmatprep.mubr.f32.mxu0 %v2936
    %v2938 = vand.u32 %v2029, 4294901760
    %2939 = vmatmul.mubr.f32.gmra.mrb[0].mxu0 %v2938
    %v2940 = vpop.f32.mrb[0].mxu0
    %v2941 = vadd.f32 %v2364, %v2940
    %v2942 = vpop.f32.mrb[0].mxu0
    %v2943 = vadd.f32 %v2366, %v2942
    %v2944 = vand.u32 %v2032, 4294901760
    %2945 = vmatprep.mubr.f32.mxu0 %v2944
    %v2946 = vand.u32 %v2031, 4294901760
    %2947 = vmatmul.mubr.f32.gmra.mrb[0].mxu0 %v2946
    %v2948 = vpop.f32.mrb[0].mxu0
    %v2949 = vadd.f32 %v2380, %v2948
    %v2950 = vpop.f32.mrb[0].mxu0
    %v2951 = vadd.f32 %v2382, %v2950
    %v2952 = vand.u32 %v2034, 4294901760
    %2953 = vmatprep.mubr.f32.mxu0 %v2952
    %v2954 = vand.u32 %v2033, 4294901760
    %2955 = vmatmul.mubr.f32.gmra.mrb[0].mxu0 %v2954
    %v2956 = vpop.f32.mrb[0].mxu0
    %v2957 = vadd.f32 %v2396, %v2956
    %v2958 = vpop.f32.mrb[0].mxu0
    %v2959 = vadd.f32 %v2398, %v2958
    %v2960 = vand.u32 %v2036, 4294901760
    %2961 = vmatprep.mubr.f32.mxu0 %v2960
    %v2962 = vand.u32 %v2035, 4294901760
    %2963 = vmatmul.mubr.f32.gmra.mrb[0].mxu0 %v2962
    %v2964 = vpop.f32.mrb[0].mxu0
    %v2965 = vadd.f32 %v2412, %v2964
    %v2966 = vpop.f32.mrb[0].mxu0
    %v2967 = vadd.f32 %v2414, %v2966
    %v2968 = vand.u32 %v2038, 4294901760
    %2969 = vmatprep.mubr.f32.mxu0 %v2968
    %v2970 = vand.u32 %v2037, 4294901760
    %2971 = vmatmul.mubr.f32.gmra.mrb[0].mxu0 %v2970
    %v2972 = vpop.f32.mrb[0].mxu0
    %v2973 = vadd.f32 %v2428, %v2972
    %v2974 = vpop.f32.mrb[0].mxu0
    %v2975 = vadd.f32 %v2430, %v2974
    %v2976 = vand.u32 %v2040, 4294901760
    %2977 = vmatprep.mubr.f32.mxu0 %v2976
    %v2978 = vand.u32 %v2039, 4294901760
    %2979 = vmatmul.mubr.f32.gmra.mrb[0].mxu0 %v2978
    %v2980 = vpop.f32.mrb[0].mxu0
    %v2981 = vadd.f32 %v2444, %v2980
    %v2982 = vpop.f32.mrb[0].mxu0
    %v2983 = vadd.f32 %v2446, %v2982
    %v2984 = vand.u32 %v2042, 4294901760
    %2985 = vmatprep.mubr.f32.mxu0 %v2984
    %v2986 = vand.u32 %v2041, 4294901760
    %2987 = vmatmul.mubr.f32.gmra.mrb[0].mxu0 %v2986
    %v2988 = vpop.f32.mrb[0].mxu0
    %v2989 = vadd.f32 %v2460, %v2988
    %v2990 = vpop.f32.mrb[0].mxu0
    %v2991 = vadd.f32 %v2462, %v2990
    %v2992 = vand.u32 %v2044, 4294901760
    %2993 = vmatprep.mubr.f32.mxu0 %v2992
    %v2994 = vand.u32 %v2043, 4294901760
    %2995 = vmatmul.mubr.f32.gmra.mrb[0].mxu0 %v2994
    %v2996 = vpop.f32.mrb[0].mxu0
    %v2997 = vadd.f32 %v2476, %v2996
    %v2998 = vpop.f32.mrb[0].mxu0
    %v2999 = vadd.f32 %v2478, %v2998
    %v3000 = vand.u32 %v2046, 4294901760
    %3001 = vmatprep.mubr.f32.mxu0 %v3000
    %v3002 = vand.u32 %v2045, 4294901760
    %3003 = vmatmul.mubr.f32.gmra.mrb[0].mxu0 %v3002
    %v3004 = vpop.f32.mrb[0].mxu0
    %v3005 = vadd.f32 %v2492, %v3004
    %v3006 = vpop.f32.mrb[0].mxu0
    %v3007 = vadd.f32 %v2494, %v3006
    %3008 = vdwg.mxu0
    %v3009 = vand.u32 %v2048, 4294901760
    %v3010 = vsub.f32 %v2048, %v3009
    %3011 = vmatprep.subr.mxu0 %v3010
    %v3012 = vand.u32 %v2047, 4294901760
    %v3013 = vsub.f32 %v2047, %v3012
    %3014 = vmatpush1.msra.mxu0 %v3013
    %v3015 = vand.u32 %v2050, 4294901760
    %v3016 = vsub.f32 %v2050, %v3015
    %3017 = vmatprep.subr.mxu0 %v3016
    %v3018 = vand.u32 %v2049, 4294901760
    %v3019 = vsub.f32 %v2049, %v3018
    %3020 = vmatpush1.msra.mxu0 %v3019
    %v3021 = vand.u32 %v2052, 4294901760
    %v3022 = vsub.f32 %v2052, %v3021
    %3023 = vmatprep.subr.mxu0 %v3022
    %v3024 = vand.u32 %v2051, 4294901760
    %v3025 = vsub.f32 %v2051, %v3024
    %3026 = vmatpush1.msra.mxu0 %v3025
    %v3027 = vand.u32 %v2054, 4294901760
    %v3028 = vsub.f32 %v2054, %v3027
    %3029 = vmatprep.subr.mxu0 %v3028
    %v3030 = vand.u32 %v2053, 4294901760
    %v3031 = vsub.f32 %v2053, %v3030
    %3032 = vmatpush1.msra.mxu0 %v3031
    %v3033 = vand.u32 %v2056, 4294901760
    %v3034 = vsub.f32 %v2056, %v3033
    %3035 = vmatprep.subr.mxu0 %v3034
    %v3036 = vand.u32 %v2055, 4294901760
    %v3037 = vsub.f32 %v2055, %v3036
    %3038 = vmatpush1.msra.mxu0 %v3037
    %v3039 = vand.u32 %v2058, 4294901760
    %v3040 = vsub.f32 %v2058, %v3039
    %3041 = vmatprep.subr.mxu0 %v3040
    %v3042 = vand.u32 %v2057, 4294901760
    %v3043 = vsub.f32 %v2057, %v3042
    %3044 = vmatpush1.msra.mxu0 %v3043
    %v3045 = vand.u32 %v2060, 4294901760
    %v3046 = vsub.f32 %v2060, %v3045
    %3047 = vmatprep.subr.mxu0 %v3046
    %v3048 = vand.u32 %v2059, 4294901760
    %v3049 = vsub.f32 %v2059, %v3048
    %3050 = vmatpush1.msra.mxu0 %v3049
    %v3051 = vand.u32 %v2062, 4294901760
    %v3052 = vsub.f32 %v2062, %v3051
    %3053 = vmatprep.subr.mxu0 %v3052
    %v3054 = vand.u32 %v2061, 4294901760
    %v3055 = vsub.f32 %v2061, %v3054
    %3056 = vmatpush1.msra.mxu0 %v3055
    %v3057 = vand.u32 %v2064, 4294901760
    %v3058 = vsub.f32 %v2064, %v3057
    %3059 = vmatprep.subr.mxu0 %v3058
    %v3060 = vand.u32 %v2063, 4294901760
    %v3061 = vsub.f32 %v2063, %v3060
    %3062 = vmatpush1.msra.mxu0 %v3061
    %v3063 = vand.u32 %v2066, 4294901760
    %v3064 = vsub.f32 %v2066, %v3063
    %3065 = vmatprep.subr.mxu0 %v3064
    %v3066 = vand.u32 %v2065, 4294901760
    %v3067 = vsub.f32 %v2065, %v3066
    %3068 = vmatpush1.msra.mxu0 %v3067
    %v3069 = vand.u32 %v2068, 4294901760
    %v3070 = vsub.f32 %v2068, %v3069
    %3071 = vmatprep.subr.mxu0 %v3070
    %v3072 = vand.u32 %v2067, 4294901760
    %v3073 = vsub.f32 %v2067, %v3072
    %3074 = vmatpush1.msra.mxu0 %v3073
    %v3075 = vand.u32 %v2070, 4294901760
    %v3076 = vsub.f32 %v2070, %v3075
    %3077 = vmatprep.subr.mxu0 %v3076
    %v3078 = vand.u32 %v2069, 4294901760
    %v3079 = vsub.f32 %v2069, %v3078
    %3080 = vmatpush1.msra.mxu0 %v3079
    %v3081 = vand.u32 %v2072, 4294901760
    %v3082 = vsub.f32 %v2072, %v3081
    %3083 = vmatprep.subr.mxu0 %v3082
    %v3084 = vand.u32 %v2071, 4294901760
    %v3085 = vsub.f32 %v2071, %v3084
    %3086 = vmatpush1.msra.mxu0 %v3085
    %v3087 = vand.u32 %v2074, 4294901760
    %v3088 = vsub.f32 %v2074, %v3087
    %3089 = vmatprep.subr.mxu0 %v3088
    %v3090 = vand.u32 %v2073, 4294901760
    %v3091 = vsub.f32 %v2073, %v3090
    %3092 = vmatpush1.msra.mxu0 %v3091
    %v3093 = vand.u32 %v2076, 4294901760
    %v3094 = vsub.f32 %v2076, %v3093
    %3095 = vmatprep.subr.mxu0 %v3094
    %v3096 = vand.u32 %v2075, 4294901760
    %v3097 = vsub.f32 %v2075, %v3096
    %3098 = vmatpush1.msra.mxu0 %v3097
    %v3099 = vand.u32 %v2078, 4294901760
    %v3100 = vsub.f32 %v2078, %v3099
    %3101 = vmatprep.subr.mxu0 %v3100
    %v3102 = vand.u32 %v2077, 4294901760
    %v3103 = vsub.f32 %v2077, %v3102
    %3104 = vmatpush1.msra.mxu0 %v3103
    %v3105 = vand.u32 %v2080, 4294901760
    %v3106 = vsub.f32 %v2080, %v3105
    %3107 = vmatprep.subr.mxu0 %v3106
    %v3108 = vand.u32 %v2079, 4294901760
    %v3109 = vsub.f32 %v2079, %v3108
    %3110 = vmatpush1.msra.mxu0 %v3109
    %v3111 = vand.u32 %v2082, 4294901760
    %v3112 = vsub.f32 %v2082, %v3111
    %3113 = vmatprep.subr.mxu0 %v3112
    %v3114 = vand.u32 %v2081, 4294901760
    %v3115 = vsub.f32 %v2081, %v3114
    %3116 = vmatpush1.msra.mxu0 %v3115
    %v3117 = vand.u32 %v2084, 4294901760
    %v3118 = vsub.f32 %v2084, %v3117
    %3119 = vmatprep.subr.mxu0 %v3118
    %v3120 = vand.u32 %v2083, 4294901760
    %v3121 = vsub.f32 %v2083, %v3120
    %3122 = vmatpush1.msra.mxu0 %v3121
    %v3123 = vand.u32 %v2086, 4294901760
    %v3124 = vsub.f32 %v2086, %v3123
    %3125 = vmatprep.subr.mxu0 %v3124
    %v3126 = vand.u32 %v2085, 4294901760
    %v3127 = vsub.f32 %v2085, %v3126
    %3128 = vmatpush1.msra.mxu0 %v3127
    %v3129 = vand.u32 %v2088, 4294901760
    %v3130 = vsub.f32 %v2088, %v3129
    %3131 = vmatprep.subr.mxu0 %v3130
    %v3132 = vand.u32 %v2087, 4294901760
    %v3133 = vsub.f32 %v2087, %v3132
    %3134 = vmatpush1.msra.mxu0 %v3133
    %v3135 = vand.u32 %v2090, 4294901760
    %v3136 = vsub.f32 %v2090, %v3135
    %3137 = vmatprep.subr.mxu0 %v3136
    %v3138 = vand.u32 %v2089, 4294901760
    %v3139 = vsub.f32 %v2089, %v3138
    %3140 = vmatpush1.msra.mxu0 %v3139
    %v3141 = vand.u32 %v2092, 4294901760
    %v3142 = vsub.f32 %v2092, %v3141
    %3143 = vmatprep.subr.mxu0 %v3142
    %v3144 = vand.u32 %v2091, 4294901760
    %v3145 = vsub.f32 %v2091, %v3144
    %3146 = vmatpush1.msra.mxu0 %v3145
    %v3147 = vand.u32 %v2094, 4294901760
    %v3148 = vsub.f32 %v2094, %v3147
    %3149 = vmatprep.subr.mxu0 %v3148
    %v3150 = vand.u32 %v2093, 4294901760
    %v3151 = vsub.f32 %v2093, %v3150
    %3152 = vmatpush1.msra.mxu0 %v3151
    %v3153 = vand.u32 %v2096, 4294901760
    %v3154 = vsub.f32 %v2096, %v3153
    %3155 = vmatprep.subr.mxu0 %v3154
    %v3156 = vand.u32 %v2095, 4294901760
    %v3157 = vsub.f32 %v2095, %v3156
    %3158 = vmatpush1.msra.mxu0 %v3157
    %v3159 = vand.u32 %v2098, 4294901760
    %v3160 = vsub.f32 %v2098, %v3159
    %3161 = vmatprep.subr.mxu0 %v3160
    %v3162 = vand.u32 %v2097, 4294901760
    %v3163 = vsub.f32 %v2097, %v3162
    %3164 = vmatpush1.msra.mxu0 %v3163
    %v3165 = vand.u32 %v2100, 4294901760
    %v3166 = vsub.f32 %v2100, %v3165
    %3167 = vmatprep.subr.mxu0 %v3166
    %v3168 = vand.u32 %v2099, 4294901760
    %v3169 = vsub.f32 %v2099, %v3168
    %3170 = vmatpush1.msra.mxu0 %v3169
    %v3171 = vand.u32 %v2102, 4294901760
    %v3172 = vsub.f32 %v2102, %v3171
    %3173 = vmatprep.subr.mxu0 %v3172
    %v3174 = vand.u32 %v2101, 4294901760
    %v3175 = vsub.f32 %v2101, %v3174
    %3176 = vmatpush1.msra.mxu0 %v3175
    %v3177 = vand.u32 %v2104, 4294901760
    %v3178 = vsub.f32 %v2104, %v3177
    %3179 = vmatprep.subr.mxu0 %v3178
    %v3180 = vand.u32 %v2103, 4294901760
    %v3181 = vsub.f32 %v2103, %v3180
    %3182 = vmatpush1.msra.mxu0 %v3181
    %v3183 = vand.u32 %v2106, 4294901760
    %v3184 = vsub.f32 %v2106, %v3183
    %3185 = vmatprep.subr.mxu0 %v3184
    %v3186 = vand.u32 %v2105, 4294901760
    %v3187 = vsub.f32 %v2105, %v3186
    %3188 = vmatpush1.msra.mxu0 %v3187
    %v3189 = vand.u32 %v2108, 4294901760
    %v3190 = vsub.f32 %v2108, %v3189
    %3191 = vmatprep.subr.mxu0 %v3190
    %v3192 = vand.u32 %v2107, 4294901760
    %v3193 = vsub.f32 %v2107, %v3192
    %3194 = vmatpush1.msra.mxu0 %v3193
    %v3195 = vand.u32 %v2110, 4294901760
    %v3196 = vsub.f32 %v2110, %v3195
    %3197 = vmatprep.subr.mxu0 %v3196
    %v3198 = vand.u32 %v2109, 4294901760
    %v3199 = vsub.f32 %v2109, %v3198
    %3200 = vmatpush1.msra.mxu0 %v3199
    %v3201 = vand.u32 %v2016, 4294901760
    %v3202 = vsub.f32 %v2016, %v3201
    %3203 = vmatprep.mubr.f32.mxu0 %v3202
    %v3204 = vand.u32 %v2015, 4294901760
    %v3205 = vsub.f32 %v2015, %v3204
    %3206 = vmatmul.mubr.f32.gmra.mrb[0].mxu0 %v3205
    %v3207 = vpop.f32.mrb[0].mxu0
    %v3208 = vadd.f32 %v2885, %v3207
    %v3209 = vpop.f32.mrb[0].mxu0
    %v3210 = vadd.f32 %v2887, %v3209
    %v3211 = vand.u32 %v2018, 4294901760
    %v3212 = vsub.f32 %v2018, %v3211
    %3213 = vmatprep.mubr.f32.mxu0 %v3212
    %v3214 = vand.u32 %v2017, 4294901760
    %v3215 = vsub.f32 %v2017, %v3214
    %3216 = vmatmul.mubr.f32.gmra.mrb[0].mxu0 %v3215
    %v3217 = vpop.f32.mrb[0].mxu0
    %v3218 = vadd.f32 %v2893, %v3217
    %v3219 = vpop.f32.mrb[0].mxu0
    %v3220 = vadd.f32 %v2895, %v3219
    %v3221 = vand.u32 %v2020, 4294901760
    %v3222 = vsub.f32 %v2020, %v3221
    %3223 = vmatprep.mubr.f32.mxu0 %v3222
    %v3224 = vand.u32 %v2019, 4294901760
    %v3225 = vsub.f32 %v2019, %v3224
    %3226 = vmatmul.mubr.f32.gmra.mrb[0].mxu0 %v3225
    %v3227 = vpop.f32.mrb[0].mxu0
    %v3228 = vadd.f32 %v2901, %v3227
    %v3229 = vpop.f32.mrb[0].mxu0
    %v3230 = vadd.f32 %v2903, %v3229
    %v3231 = vand.u32 %v2022, 4294901760
    %v3232 = vsub.f32 %v2022, %v3231
    %3233 = vmatprep.mubr.f32.mxu0 %v3232
    %v3234 = vand.u32 %v2021, 4294901760
    %v3235 = vsub.f32 %v2021, %v3234
    %3236 = vmatmul.mubr.f32.gmra.mrb[0].mxu0 %v3235
    %v3237 = vpop.f32.mrb[0].mxu0
    %v3238 = vadd.f32 %v2909, %v3237
    %v3239 = vpop.f32.mrb[0].mxu0
    %v3240 = vadd.f32 %v2911, %v3239
    %v3241 = vand.u32 %v2024, 4294901760
    %v3242 = vsub.f32 %v2024, %v3241
    %3243 = vmatprep.mubr.f32.mxu0 %v3242
    %v3244 = vand.u32 %v2023, 4294901760
    %v3245 = vsub.f32 %v2023, %v3244
    %3246 = vmatmul.mubr.f32.gmra.mrb[0].mxu0 %v3245
    %v3247 = vpop.f32.mrb[0].mxu0
    %v3248 = vadd.f32 %v2917, %v3247
    %v3249 = vpop.f32.mrb[0].mxu0
    %v3250 = vadd.f32 %v2919, %v3249
    %v3251 = vand.u32 %v2026, 4294901760
    %v3252 = vsub.f32 %v2026, %v3251
    %3253 = vmatprep.mubr.f32.mxu0 %v3252
    %v3254 = vand.u32 %v2025, 4294901760
    %v3255 = vsub.f32 %v2025, %v3254
    %3256 = vmatmul.mubr.f32.gmra.mrb[0].mxu0 %v3255
    %v3257 = vpop.f32.mrb[0].mxu0
    %v3258 = vadd.f32 %v2925, %v3257
    %v3259 = vpop.f32.mrb[0].mxu0
    %v3260 = vadd.f32 %v2927, %v3259
    %v3261 = vand.u32 %v2028, 4294901760
    %v3262 = vsub.f32 %v2028, %v3261
    %3263 = vmatprep.mubr.f32.mxu0 %v3262
    %v3264 = vand.u32 %v2027, 4294901760
    %v3265 = vsub.f32 %v2027, %v3264
    %3266 = vmatmul.mubr.f32.gmra.mrb[0].mxu0 %v3265
    %v3267 = vpop.f32.mrb[0].mxu0
    %v3268 = vadd.f32 %v2933, %v3267
    %v3269 = vpop.f32.mrb[0].mxu0
    %v3270 = vadd.f32 %v2935, %v3269
    %v3271 = vand.u32 %v2030, 4294901760
    %v3272 = vsub.f32 %v2030, %v3271
    %3273 = vmatprep.mubr.f32.mxu0 %v3272
    %v3274 = vand.u32 %v2029, 4294901760
    %v3275 = vsub.f32 %v2029, %v3274
    %3276 = vmatmul.mubr.f32.gmra.mrb[0].mxu0 %v3275
    %v3277 = vpop.f32.mrb[0].mxu0
    %v3278 = vadd.f32 %v2941, %v3277
    %v3279 = vpop.f32.mrb[0].mxu0
    %v3280 = vadd.f32 %v2943, %v3279
    %v3281 = vand.u32 %v2032, 4294901760
    %v3282 = vsub.f32 %v2032, %v3281
    %3283 = vmatprep.mubr.f32.mxu0 %v3282
    %v3284 = vand.u32 %v2031, 4294901760
    %v3285 = vsub.f32 %v2031, %v3284
    %3286 = vmatmul.mubr.f32.gmra.mrb[0].mxu0 %v3285
    %v3287 = vpop.f32.mrb[0].mxu0
    %v3288 = vadd.f32 %v2949, %v3287
    %v3289 = vpop.f32.mrb[0].mxu0
    %v3290 = vadd.f32 %v2951, %v3289
    %v3291 = vand.u32 %v2034, 4294901760
    %v3292 = vsub.f32 %v2034, %v3291
    %3293 = vmatprep.mubr.f32.mxu0 %v3292
    %v3294 = vand.u32 %v2033, 4294901760
    %v3295 = vsub.f32 %v2033, %v3294
    %3296 = vmatmul.mubr.f32.gmra.mrb[0].mxu0 %v3295
    %v3297 = vpop.f32.mrb[0].mxu0
    %v3298 = vadd.f32 %v2957, %v3297
    %v3299 = vpop.f32.mrb[0].mxu0
    %v3300 = vadd.f32 %v2959, %v3299
    %v3301 = vand.u32 %v2036, 4294901760
    %v3302 = vsub.f32 %v2036, %v3301
    %3303 = vmatprep.mubr.f32.mxu0 %v3302
    %v3304 = vand.u32 %v2035, 4294901760
    %v3305 = vsub.f32 %v2035, %v3304
    %3306 = vmatmul.mubr.f32.gmra.mrb[0].mxu0 %v3305
    %v3307 = vpop.f32.mrb[0].mxu0
    %v3308 = vadd.f32 %v2965, %v3307
    %v3309 = vpop.f32.mrb[0].mxu0
    %v3310 = vadd.f32 %v2967, %v3309
    %v3311 = vand.u32 %v2038, 4294901760
    %v3312 = vsub.f32 %v2038, %v3311
    %3313 = vmatprep.mubr.f32.mxu0 %v3312
    %v3314 = vand.u32 %v2037, 4294901760
    %v3315 = vsub.f32 %v2037, %v3314
    %3316 = vmatmul.mubr.f32.gmra.mrb[0].mxu0 %v3315
    %v3317 = vpop.f32.mrb[0].mxu0
    %v3318 = vadd.f32 %v2973, %v3317
    %v3319 = vpop.f32.mrb[0].mxu0
    %v3320 = vadd.f32 %v2975, %v3319
    %v3321 = vand.u32 %v2040, 4294901760
    %v3322 = vsub.f32 %v2040, %v3321
    %3323 = vmatprep.mubr.f32.mxu0 %v3322
    %v3324 = vand.u32 %v2039, 4294901760
    %v3325 = vsub.f32 %v2039, %v3324
    %3326 = vmatmul.mubr.f32.gmra.mrb[0].mxu0 %v3325
    %v3327 = vpop.f32.mrb[0].mxu0
    %v3328 = vadd.f32 %v2981, %v3327
    %v3329 = vpop.f32.mrb[0].mxu0
    %v3330 = vadd.f32 %v2983, %v3329
    %v3331 = vand.u32 %v2042, 4294901760
    %v3332 = vsub.f32 %v2042, %v3331
    %3333 = vmatprep.mubr.f32.mxu0 %v3332
    %v3334 = vand.u32 %v2041, 4294901760
    %v3335 = vsub.f32 %v2041, %v3334
    %3336 = vmatmul.mubr.f32.gmra.mrb[0].mxu0 %v3335
    %v3337 = vpop.f32.mrb[0].mxu0
    %v3338 = vadd.f32 %v2989, %v3337
    %v3339 = vpop.f32.mrb[0].mxu0
    %v3340 = vadd.f32 %v2991, %v3339
    %v3341 = vand.u32 %v2044, 4294901760
    %v3342 = vsub.f32 %v2044, %v3341
    %3343 = vmatprep.mubr.f32.mxu0 %v3342
    %v3344 = vand.u32 %v2043, 4294901760
    %v3345 = vsub.f32 %v2043, %v3344
    %3346 = vmatmul.mubr.f32.gmra.mrb[0].mxu0 %v3345
    %v3347 = vpop.f32.mrb[0].mxu0
    %v3348 = vadd.f32 %v2997, %v3347
    %v3349 = vpop.f32.mrb[0].mxu0
    %v3350 = vadd.f32 %v2999, %v3349
    %v3351 = vand.u32 %v2046, 4294901760
    %v3352 = vsub.f32 %v2046, %v3351
    %3353 = vmatprep.mubr.f32.mxu0 %v3352
    %v3354 = vand.u32 %v2045, 4294901760
    %v3355 = vsub.f32 %v2045, %v3354
    %3356 = vmatmul.mubr.f32.gmra.mrb[0].mxu0 %v3355
    %v3357 = vpop.f32.mrb[0].mxu0
    %v3358 = vadd.f32 %v3005, %v3357
    %v3359 = vpop.f32.mrb[0].mxu0
    %v3360 = vadd.f32 %v3007, %v3359
    %3361 = vdwg.mxu0
    %v3362 = vand.u32 %v2048, 4294901760
    %3363 = vmatprep.subr.mxu0 %v3362
    %v3364 = vand.u32 %v2047, 4294901760
    %3365 = vmatpush1.msra.mxu0 %v3364
    %v3366 = vand.u32 %v2050, 4294901760
    %3367 = vmatprep.subr.mxu0 %v3366
    %v3368 = vand.u32 %v2049, 4294901760
    %3369 = vmatpush1.msra.mxu0 %v3368
    %v3370 = vand.u32 %v2052, 4294901760
    %3371 = vmatprep.subr.mxu0 %v3370
    %v3372 = vand.u32 %v2051, 4294901760
    %3373 = vmatpush1.msra.mxu0 %v3372
    %v3374 = vand.u32 %v2054, 4294901760
    %3375 = vmatprep.subr.mxu0 %v3374
    %v3376 = vand.u32 %v2053, 4294901760
    %3377 = vmatpush1.msra.mxu0 %v3376
    %v3378 = vand.u32 %v2056, 4294901760
    %3379 = vmatprep.subr.mxu0 %v3378
    %v3380 = vand.u32 %v2055, 4294901760
    %3381 = vmatpush1.msra.mxu0 %v3380
    %v3382 = vand.u32 %v2058, 4294901760
    %3383 = vmatprep.subr.mxu0 %v3382
    %v3384 = vand.u32 %v2057, 4294901760
    %3385 = vmatpush1.msra.mxu0 %v3384
    %v3386 = vand.u32 %v2060, 4294901760
    %3387 = vmatprep.subr.mxu0 %v3386
    %v3388 = vand.u32 %v2059, 4294901760
    %3389 = vmatpush1.msra.mxu0 %v3388
    %v3390 = vand.u32 %v2062, 4294901760
    %3391 = vmatprep.subr.mxu0 %v3390
    %v3392 = vand.u32 %v2061, 4294901760
    %3393 = vmatpush1.msra.mxu0 %v3392
    %v3394 = vand.u32 %v2064, 4294901760
    %3395 = vmatprep.subr.mxu0 %v3394
    %v3396 = vand.u32 %v2063, 4294901760
    %3397 = vmatpush1.msra.mxu0 %v3396
    %v3398 = vand.u32 %v2066, 4294901760
    %3399 = vmatprep.subr.mxu0 %v3398
    %v3400 = vand.u32 %v2065, 4294901760
    %3401 = vmatpush1.msra.mxu0 %v3400
    %v3402 = vand.u32 %v2068, 4294901760
    %3403 = vmatprep.subr.mxu0 %v3402
    %v3404 = vand.u32 %v2067, 4294901760
    %3405 = vmatpush1.msra.mxu0 %v3404
    %v3406 = vand.u32 %v2070, 4294901760
    %3407 = vmatprep.subr.mxu0 %v3406
    %v3408 = vand.u32 %v2069, 4294901760
    %3409 = vmatpush1.msra.mxu0 %v3408
    %v3410 = vand.u32 %v2072, 4294901760
    %3411 = vmatprep.subr.mxu0 %v3410
    %v3412 = vand.u32 %v2071, 4294901760
    %3413 = vmatpush1.msra.mxu0 %v3412
    %v3414 = vand.u32 %v2074, 4294901760
    %3415 = vmatprep.subr.mxu0 %v3414
    %v3416 = vand.u32 %v2073, 4294901760
    %3417 = vmatpush1.msra.mxu0 %v3416
    %v3418 = vand.u32 %v2076, 4294901760
    %3419 = vmatprep.subr.mxu0 %v3418
    %v3420 = vand.u32 %v2075, 4294901760
    %3421 = vmatpush1.msra.mxu0 %v3420
    %v3422 = vand.u32 %v2078, 4294901760
    %3423 = vmatprep.subr.mxu0 %v3422
    %v3424 = vand.u32 %v2077, 4294901760
    %3425 = vmatpush1.msra.mxu0 %v3424
    %v3426 = vand.u32 %v2080, 4294901760
    %3427 = vmatprep.subr.mxu0 %v3426
    %v3428 = vand.u32 %v2079, 4294901760
    %3429 = vmatpush1.msra.mxu0 %v3428
    %v3430 = vand.u32 %v2082, 4294901760
    %3431 = vmatprep.subr.mxu0 %v3430
    %v3432 = vand.u32 %v2081, 4294901760
    %3433 = vmatpush1.msra.mxu0 %v3432
    %v3434 = vand.u32 %v2084, 4294901760
    %3435 = vmatprep.subr.mxu0 %v3434
    %v3436 = vand.u32 %v2083, 4294901760
    %3437 = vmatpush1.msra.mxu0 %v3436
    %v3438 = vand.u32 %v2086, 4294901760
    %3439 = vmatprep.subr.mxu0 %v3438
    %v3440 = vand.u32 %v2085, 4294901760
    %3441 = vmatpush1.msra.mxu0 %v3440
    %v3442 = vand.u32 %v2088, 4294901760
    %3443 = vmatprep.subr.mxu0 %v3442
    %v3444 = vand.u32 %v2087, 4294901760
    %3445 = vmatpush1.msra.mxu0 %v3444
    %v3446 = vand.u32 %v2090, 4294901760
    %3447 = vmatprep.subr.mxu0 %v3446
    %v3448 = vand.u32 %v2089, 4294901760
    %3449 = vmatpush1.msra.mxu0 %v3448
    %v3450 = vand.u32 %v2092, 4294901760
    %3451 = vmatprep.subr.mxu0 %v3450
    %v3452 = vand.u32 %v2091, 4294901760
    %3453 = vmatpush1.msra.mxu0 %v3452
    %v3454 = vand.u32 %v2094, 4294901760
    %3455 = vmatprep.subr.mxu0 %v3454
    %v3456 = vand.u32 %v2093, 4294901760
    %3457 = vmatpush1.msra.mxu0 %v3456
    %v3458 = vand.u32 %v2096, 4294901760
    %3459 = vmatprep.subr.mxu0 %v3458
    %v3460 = vand.u32 %v2095, 4294901760
    %3461 = vmatpush1.msra.mxu0 %v3460
    %v3462 = vand.u32 %v2098, 4294901760
    %3463 = vmatprep.subr.mxu0 %v3462
    %v3464 = vand.u32 %v2097, 4294901760
    %3465 = vmatpush1.msra.mxu0 %v3464
    %v3466 = vand.u32 %v2100, 4294901760
    %3467 = vmatprep.subr.mxu0 %v3466
    %v3468 = vand.u32 %v2099, 4294901760
    %3469 = vmatpush1.msra.mxu0 %v3468
    %v3470 = vand.u32 %v2102, 4294901760
    %3471 = vmatprep.subr.mxu0 %v3470
    %v3472 = vand.u32 %v2101, 4294901760
    %3473 = vmatpush1.msra.mxu0 %v3472
    %v3474 = vand.u32 %v2104, 4294901760
    %3475 = vmatprep.subr.mxu0 %v3474
    %v3476 = vand.u32 %v2103, 4294901760
    %3477 = vmatpush1.msra.mxu0 %v3476
    %v3478 = vand.u32 %v2106, 4294901760
    %3479 = vmatprep.subr.mxu0 %v3478
    %v3480 = vand.u32 %v2105, 4294901760
    %3481 = vmatpush1.msra.mxu0 %v3480
    %v3482 = vand.u32 %v2108, 4294901760
    %3483 = vmatprep.subr.mxu0 %v3482
    %v3484 = vand.u32 %v2107, 4294901760
    %3485 = vmatpush1.msra.mxu0 %v3484
    %v3486 = vand.u32 %v2110, 4294901760
    %3487 = vmatprep.subr.mxu0 %v3486
    %v3488 = vand.u32 %v2109, 4294901760
    %3489 = vmatpush1.msra.mxu0 %v3488
    %v3490 = vand.u32 %v2016, 4294901760
    %v3491 = vsub.f32 %v2016, %v3490
    %v3492 = vand.u32 %v3491, 4294901760
    %3493 = vmatprep.mubr.f32.mxu0 %v3492
    %v3494 = vand.u32 %v2015, 4294901760
    %v3495 = vsub.f32 %v2015, %v3494
    %v3496 = vand.u32 %v3495, 4294901760
    %3497 = vmatmul.mubr.f32.gmra.mrb[0].mxu0 %v3496
    %v3498 = vpop.f32.mrb[0].mxu0
    %v3499 = vadd.f32 %v3208, %v3498
    %v3500 = vpop.f32.mrb[0].mxu0
    %v3501 = vadd.f32 %v3210, %v3500
    %v3502 = vand.u32 %v2018, 4294901760
    %v3503 = vsub.f32 %v2018, %v3502
    %v3504 = vand.u32 %v3503, 4294901760
    %3505 = vmatprep.mubr.f32.mxu0 %v3504
    %v3506 = vand.u32 %v2017, 4294901760
    %v3507 = vsub.f32 %v2017, %v3506
    %v3508 = vand.u32 %v3507, 4294901760
    %3509 = vmatmul.mubr.f32.gmra.mrb[0].mxu0 %v3508
    %v3510 = vpop.f32.mrb[0].mxu0
    %v3511 = vadd.f32 %v3218, %v3510
    %v3512 = vpop.f32.mrb[0].mxu0
    %v3513 = vadd.f32 %v3220, %v3512
    %v3514 = vand.u32 %v2020, 4294901760
    %v3515 = vsub.f32 %v2020, %v3514
    %v3516 = vand.u32 %v3515, 4294901760
    %3517 = vmatprep.mubr.f32.mxu0 %v3516
    %v3518 = vand.u32 %v2019, 4294901760
    %v3519 = vsub.f32 %v2019, %v3518
    %v3520 = vand.u32 %v3519, 4294901760
    %3521 = vmatmul.mubr.f32.gmra.mrb[0].mxu0 %v3520
    %v3522 = vpop.f32.mrb[0].mxu0
    %v3523 = vadd.f32 %v3228, %v3522
    %v3524 = vpop.f32.mrb[0].mxu0
    %v3525 = vadd.f32 %v3230, %v3524
    %v3526 = vand.u32 %v2022, 4294901760
    %v3527 = vsub.f32 %v2022, %v3526
    %v3528 = vand.u32 %v3527, 4294901760
    %3529 = vmatprep.mubr.f32.mxu0 %v3528
    %v3530 = vand.u32 %v2021, 4294901760
    %v3531 = vsub.f32 %v2021, %v3530
    %v3532 = vand.u32 %v3531, 4294901760
    %3533 = vmatmul.mubr.f32.gmra.mrb[0].mxu0 %v3532
    %v3534 = vpop.f32.mrb[0].mxu0
    %v3535 = vadd.f32 %v3238, %v3534
    %v3536 = vpop.f32.mrb[0].mxu0
    %v3537 = vadd.f32 %v3240, %v3536
    %v3538 = vand.u32 %v2024, 4294901760
    %v3539 = vsub.f32 %v2024, %v3538
    %v3540 = vand.u32 %v3539, 4294901760
    %3541 = vmatprep.mubr.f32.mxu0 %v3540
    %v3542 = vand.u32 %v2023, 4294901760
    %v3543 = vsub.f32 %v2023, %v3542
    %v3544 = vand.u32 %v3543, 4294901760
    %3545 = vmatmul.mubr.f32.gmra.mrb[0].mxu0 %v3544
    %v3546 = vpop.f32.mrb[0].mxu0
    %v3547 = vadd.f32 %v3248, %v3546
    %v3548 = vpop.f32.mrb[0].mxu0
    %v3549 = vadd.f32 %v3250, %v3548
    %v3550 = vand.u32 %v2026, 4294901760
    %v3551 = vsub.f32 %v2026, %v3550
    %v3552 = vand.u32 %v3551, 4294901760
    %3553 = vmatprep.mubr.f32.mxu0 %v3552
    %v3554 = vand.u32 %v2025, 4294901760
    %v3555 = vsub.f32 %v2025, %v3554
    %v3556 = vand.u32 %v3555, 4294901760
    %3557 = vmatmul.mubr.f32.gmra.mrb[0].mxu0 %v3556
    %v3558 = vpop.f32.mrb[0].mxu0
    %v3559 = vadd.f32 %v3258, %v3558
    %v3560 = vpop.f32.mrb[0].mxu0
    %v3561 = vadd.f32 %v3260, %v3560
    %v3562 = vand.u32 %v2028, 4294901760
    %v3563 = vsub.f32 %v2028, %v3562
    %v3564 = vand.u32 %v3563, 4294901760
    %3565 = vmatprep.mubr.f32.mxu0 %v3564
    %v3566 = vand.u32 %v2027, 4294901760
    %v3567 = vsub.f32 %v2027, %v3566
    %v3568 = vand.u32 %v3567, 4294901760
    %3569 = vmatmul.mubr.f32.gmra.mrb[0].mxu0 %v3568
    %v3570 = vpop.f32.mrb[0].mxu0
    %v3571 = vadd.f32 %v3268, %v3570
    %v3572 = vpop.f32.mrb[0].mxu0
    %v3573 = vadd.f32 %v3270, %v3572
    %v3574 = vand.u32 %v2030, 4294901760
    %v3575 = vsub.f32 %v2030, %v3574
    %v3576 = vand.u32 %v3575, 4294901760
    %3577 = vmatprep.mubr.f32.mxu0 %v3576
    %v3578 = vand.u32 %v2029, 4294901760
    %v3579 = vsub.f32 %v2029, %v3578
    %v3580 = vand.u32 %v3579, 4294901760
    %3581 = vmatmul.mubr.f32.gmra.mrb[0].mxu0 %v3580
    %v3582 = vpop.f32.mrb[0].mxu0
    %v3583 = vadd.f32 %v3278, %v3582
    %v3584 = vpop.f32.mrb[0].mxu0
    %v3585 = vadd.f32 %v3280, %v3584
    %v3586 = vand.u32 %v2032, 4294901760
    %v3587 = vsub.f32 %v2032, %v3586
    %v3588 = vand.u32 %v3587, 4294901760
    %3589 = vmatprep.mubr.f32.mxu0 %v3588
    %v3590 = vand.u32 %v2031, 4294901760
    %v3591 = vsub.f32 %v2031, %v3590
    %v3592 = vand.u32 %v3591, 4294901760
    %3593 = vmatmul.mubr.f32.gmra.mrb[0].mxu0 %v3592
    %v3594 = vpop.f32.mrb[0].mxu0
    %v3595 = vadd.f32 %v3288, %v3594
    %v3596 = vpop.f32.mrb[0].mxu0
    %v3597 = vadd.f32 %v3290, %v3596
    %v3598 = vand.u32 %v2034, 4294901760
    %v3599 = vsub.f32 %v2034, %v3598
    %v3600 = vand.u32 %v3599, 4294901760
    %3601 = vmatprep.mubr.f32.mxu0 %v3600
    %v3602 = vand.u32 %v2033, 4294901760
    %v3603 = vsub.f32 %v2033, %v3602
    %v3604 = vand.u32 %v3603, 4294901760
    %3605 = vmatmul.mubr.f32.gmra.mrb[0].mxu0 %v3604
    %v3606 = vpop.f32.mrb[0].mxu0
    %v3607 = vadd.f32 %v3298, %v3606
    %v3608 = vpop.f32.mrb[0].mxu0
    %v3609 = vadd.f32 %v3300, %v3608
    %v3610 = vand.u32 %v2036, 4294901760
    %v3611 = vsub.f32 %v2036, %v3610
    %v3612 = vand.u32 %v3611, 4294901760
    %3613 = vmatprep.mubr.f32.mxu0 %v3612
    %v3614 = vand.u32 %v2035, 4294901760
    %v3615 = vsub.f32 %v2035, %v3614
    %v3616 = vand.u32 %v3615, 4294901760
    %3617 = vmatmul.mubr.f32.gmra.mrb[0].mxu0 %v3616
    %v3618 = vpop.f32.mrb[0].mxu0
    %v3619 = vadd.f32 %v3308, %v3618
    %v3620 = vpop.f32.mrb[0].mxu0
    %v3621 = vadd.f32 %v3310, %v3620
    %v3622 = vand.u32 %v2038, 4294901760
    %v3623 = vsub.f32 %v2038, %v3622
    %v3624 = vand.u32 %v3623, 4294901760
    %3625 = vmatprep.mubr.f32.mxu0 %v3624
    %v3626 = vand.u32 %v2037, 4294901760
    %v3627 = vsub.f32 %v2037, %v3626
    %v3628 = vand.u32 %v3627, 4294901760
    %3629 = vmatmul.mubr.f32.gmra.mrb[0].mxu0 %v3628
    %v3630 = vpop.f32.mrb[0].mxu0
    %v3631 = vadd.f32 %v3318, %v3630
    %v3632 = vpop.f32.mrb[0].mxu0
    %v3633 = vadd.f32 %v3320, %v3632
    %v3634 = vand.u32 %v2040, 4294901760
    %v3635 = vsub.f32 %v2040, %v3634
    %v3636 = vand.u32 %v3635, 4294901760
    %3637 = vmatprep.mubr.f32.mxu0 %v3636
    %v3638 = vand.u32 %v2039, 4294901760
    %v3639 = vsub.f32 %v2039, %v3638
    %v3640 = vand.u32 %v3639, 4294901760
    %3641 = vmatmul.mubr.f32.gmra.mrb[0].mxu0 %v3640
    %v3642 = vpop.f32.mrb[0].mxu0
    %v3643 = vadd.f32 %v3328, %v3642
    %v3644 = vpop.f32.mrb[0].mxu0
    %v3645 = vadd.f32 %v3330, %v3644
    %v3646 = vand.u32 %v2042, 4294901760
    %v3647 = vsub.f32 %v2042, %v3646
    %v3648 = vand.u32 %v3647, 4294901760
    %3649 = vmatprep.mubr.f32.mxu0 %v3648
    %v3650 = vand.u32 %v2041, 4294901760
    %v3651 = vsub.f32 %v2041, %v3650
    %v3652 = vand.u32 %v3651, 4294901760
    %3653 = vmatmul.mubr.f32.gmra.mrb[0].mxu0 %v3652
    %v3654 = vpop.f32.mrb[0].mxu0
    %v3655 = vadd.f32 %v3338, %v3654
    %v3656 = vpop.f32.mrb[0].mxu0
    %v3657 = vadd.f32 %v3340, %v3656
    %v3658 = vand.u32 %v2044, 4294901760
    %v3659 = vsub.f32 %v2044, %v3658
    %v3660 = vand.u32 %v3659, 4294901760
    %3661 = vmatprep.mubr.f32.mxu0 %v3660
    %v3662 = vand.u32 %v2043, 4294901760
    %v3663 = vsub.f32 %v2043, %v3662
    %v3664 = vand.u32 %v3663, 4294901760
    %3665 = vmatmul.mubr.f32.gmra.mrb[0].mxu0 %v3664
    %v3666 = vpop.f32.mrb[0].mxu0
    %v3667 = vadd.f32 %v3348, %v3666
    %v3668 = vpop.f32.mrb[0].mxu0
    %v3669 = vadd.f32 %v3350, %v3668
    %v3670 = vand.u32 %v2046, 4294901760
    %v3671 = vsub.f32 %v2046, %v3670
    %v3672 = vand.u32 %v3671, 4294901760
    %3673 = vmatprep.mubr.f32.mxu0 %v3672
    %v3674 = vand.u32 %v2045, 4294901760
    %v3675 = vsub.f32 %v2045, %v3674
    %v3676 = vand.u32 %v3675, 4294901760
    %3677 = vmatmul.mubr.f32.gmra.mrb[0].mxu0 %v3676
    %v3678 = vpop.f32.mrb[0].mxu0
    %v3679 = vadd.f32 %v3358, %v3678
    %v3680 = vpop.f32.mrb[0].mxu0
    %v3681 = vadd.f32 %v3360, %v3680
    %3682 = vdwg.mxu0
    %v3683 = vand.u32 %v2048, 4294901760
    %v3684 = vsub.f32 %v2048, %v3683
    %v3685 = vand.u32 %v3684, 4294901760
    %3686 = vmatprep.subr.mxu0 %v3685
    %v3687 = vand.u32 %v2047, 4294901760
    %v3688 = vsub.f32 %v2047, %v3687
    %v3689 = vand.u32 %v3688, 4294901760
    %3690 = vmatpush1.msra.mxu0 %v3689
    %v3691 = vand.u32 %v2050, 4294901760
    %v3692 = vsub.f32 %v2050, %v3691
    %v3693 = vand.u32 %v3692, 4294901760
    %3694 = vmatprep.subr.mxu0 %v3693
    %v3695 = vand.u32 %v2049, 4294901760
    %v3696 = vsub.f32 %v2049, %v3695
    %v3697 = vand.u32 %v3696, 4294901760
    %3698 = vmatpush1.msra.mxu0 %v3697
    %v3699 = vand.u32 %v2052, 4294901760
    %v3700 = vsub.f32 %v2052, %v3699
    %v3701 = vand.u32 %v3700, 4294901760
    %3702 = vmatprep.subr.mxu0 %v3701
    %v3703 = vand.u32 %v2051, 4294901760
    %v3704 = vsub.f32 %v2051, %v3703
    %v3705 = vand.u32 %v3704, 4294901760
    %3706 = vmatpush1.msra.mxu0 %v3705
    %v3707 = vand.u32 %v2054, 4294901760
    %v3708 = vsub.f32 %v2054, %v3707
    %v3709 = vand.u32 %v3708, 4294901760
    %3710 = vmatprep.subr.mxu0 %v3709
    %v3711 = vand.u32 %v2053, 4294901760
    %v3712 = vsub.f32 %v2053, %v3711
    %v3713 = vand.u32 %v3712, 4294901760
    %3714 = vmatpush1.msra.mxu0 %v3713
    %v3715 = vand.u32 %v2056, 4294901760
    %v3716 = vsub.f32 %v2056, %v3715
    %v3717 = vand.u32 %v3716, 4294901760
    %3718 = vmatprep.subr.mxu0 %v3717
    %v3719 = vand.u32 %v2055, 4294901760
    %v3720 = vsub.f32 %v2055, %v3719
    %v3721 = vand.u32 %v3720, 4294901760
    %3722 = vmatpush1.msra.mxu0 %v3721
    %v3723 = vand.u32 %v2058, 4294901760
    %v3724 = vsub.f32 %v2058, %v3723
    %v3725 = vand.u32 %v3724, 4294901760
    %3726 = vmatprep.subr.mxu0 %v3725
    %v3727 = vand.u32 %v2057, 4294901760
    %v3728 = vsub.f32 %v2057, %v3727
    %v3729 = vand.u32 %v3728, 4294901760
    %3730 = vmatpush1.msra.mxu0 %v3729
    %v3731 = vand.u32 %v2060, 4294901760
    %v3732 = vsub.f32 %v2060, %v3731
    %v3733 = vand.u32 %v3732, 4294901760
    %3734 = vmatprep.subr.mxu0 %v3733
    %v3735 = vand.u32 %v2059, 4294901760
    %v3736 = vsub.f32 %v2059, %v3735
    %v3737 = vand.u32 %v3736, 4294901760
    %3738 = vmatpush1.msra.mxu0 %v3737
    %v3739 = vand.u32 %v2062, 4294901760
    %v3740 = vsub.f32 %v2062, %v3739
    %v3741 = vand.u32 %v3740, 4294901760
    %3742 = vmatprep.subr.mxu0 %v3741
    %v3743 = vand.u32 %v2061, 4294901760
    %v3744 = vsub.f32 %v2061, %v3743
    %v3745 = vand.u32 %v3744, 4294901760
    %3746 = vmatpush1.msra.mxu0 %v3745
    %v3747 = vand.u32 %v2064, 4294901760
    %v3748 = vsub.f32 %v2064, %v3747
    %v3749 = vand.u32 %v3748, 4294901760
    %3750 = vmatprep.subr.mxu0 %v3749
    %v3751 = vand.u32 %v2063, 4294901760
    %v3752 = vsub.f32 %v2063, %v3751
    %v3753 = vand.u32 %v3752, 4294901760
    %3754 = vmatpush1.msra.mxu0 %v3753
    %v3755 = vand.u32 %v2066, 4294901760
    %v3756 = vsub.f32 %v2066, %v3755
    %v3757 = vand.u32 %v3756, 4294901760
    %3758 = vmatprep.subr.mxu0 %v3757
    %v3759 = vand.u32 %v2065, 4294901760
    %v3760 = vsub.f32 %v2065, %v3759
    %v3761 = vand.u32 %v3760, 4294901760
    %3762 = vmatpush1.msra.mxu0 %v3761
    %v3763 = vand.u32 %v2068, 4294901760
    %v3764 = vsub.f32 %v2068, %v3763
    %v3765 = vand.u32 %v3764, 4294901760
    %3766 = vmatprep.subr.mxu0 %v3765
    %v3767 = vand.u32 %v2067, 4294901760
    %v3768 = vsub.f32 %v2067, %v3767
    %v3769 = vand.u32 %v3768, 4294901760
    %3770 = vmatpush1.msra.mxu0 %v3769
    %v3771 = vand.u32 %v2070, 4294901760
    %v3772 = vsub.f32 %v2070, %v3771
    %v3773 = vand.u32 %v3772, 4294901760
    %3774 = vmatprep.subr.mxu0 %v3773
    %v3775 = vand.u32 %v2069, 4294901760
    %v3776 = vsub.f32 %v2069, %v3775
    %v3777 = vand.u32 %v3776, 4294901760
    %3778 = vmatpush1.msra.mxu0 %v3777
    %v3779 = vand.u32 %v2072, 4294901760
    %v3780 = vsub.f32 %v2072, %v3779
    %v3781 = vand.u32 %v3780, 4294901760
    %3782 = vmatprep.subr.mxu0 %v3781
    %v3783 = vand.u32 %v2071, 4294901760
    %v3784 = vsub.f32 %v2071, %v3783
    %v3785 = vand.u32 %v3784, 4294901760
    %3786 = vmatpush1.msra.mxu0 %v3785
    %v3787 = vand.u32 %v2074, 4294901760
    %v3788 = vsub.f32 %v2074, %v3787
    %v3789 = vand.u32 %v3788, 4294901760
    %3790 = vmatprep.subr.mxu0 %v3789
    %v3791 = vand.u32 %v2073, 4294901760
    %v3792 = vsub.f32 %v2073, %v3791
    %v3793 = vand.u32 %v3792, 4294901760
    %3794 = vmatpush1.msra.mxu0 %v3793
    %v3795 = vand.u32 %v2076, 4294901760
    %v3796 = vsub.f32 %v2076, %v3795
    %v3797 = vand.u32 %v3796, 4294901760
    %3798 = vmatprep.subr.mxu0 %v3797
    %v3799 = vand.u32 %v2075, 4294901760
    %v3800 = vsub.f32 %v2075, %v3799
    %v3801 = vand.u32 %v3800, 4294901760
    %3802 = vmatpush1.msra.mxu0 %v3801
    %v3803 = vand.u32 %v2078, 4294901760
    %v3804 = vsub.f32 %v2078, %v3803
    %v3805 = vand.u32 %v3804, 4294901760
    %3806 = vmatprep.subr.mxu0 %v3805
    %v3807 = vand.u32 %v2077, 4294901760
    %v3808 = vsub.f32 %v2077, %v3807
    %v3809 = vand.u32 %v3808, 4294901760
    %3810 = vmatpush1.msra.mxu0 %v3809
    %v3811 = vand.u32 %v2080, 4294901760
    %v3812 = vsub.f32 %v2080, %v3811
    %v3813 = vand.u32 %v3812, 4294901760
    %3814 = vmatprep.subr.mxu0 %v3813
    %v3815 = vand.u32 %v2079, 4294901760
    %v3816 = vsub.f32 %v2079, %v3815
    %v3817 = vand.u32 %v3816, 4294901760
    %3818 = vmatpush1.msra.mxu0 %v3817
    %v3819 = vand.u32 %v2082, 4294901760
    %v3820 = vsub.f32 %v2082, %v3819
    %v3821 = vand.u32 %v3820, 4294901760
    %3822 = vmatprep.subr.mxu0 %v3821
    %v3823 = vand.u32 %v2081, 4294901760
    %v3824 = vsub.f32 %v2081, %v3823
    %v3825 = vand.u32 %v3824, 4294901760
    %3826 = vmatpush1.msra.mxu0 %v3825
    %v3827 = vand.u32 %v2084, 4294901760
    %v3828 = vsub.f32 %v2084, %v3827
    %v3829 = vand.u32 %v3828, 4294901760
    %3830 = vmatprep.subr.mxu0 %v3829
    %v3831 = vand.u32 %v2083, 4294901760
    %v3832 = vsub.f32 %v2083, %v3831
    %v3833 = vand.u32 %v3832, 4294901760
    %3834 = vmatpush1.msra.mxu0 %v3833
    %v3835 = vand.u32 %v2086, 4294901760
    %v3836 = vsub.f32 %v2086, %v3835
    %v3837 = vand.u32 %v3836, 4294901760
    %3838 = vmatprep.subr.mxu0 %v3837
    %v3839 = vand.u32 %v2085, 4294901760
    %v3840 = vsub.f32 %v2085, %v3839
    %v3841 = vand.u32 %v3840, 4294901760
    %3842 = vmatpush1.msra.mxu0 %v3841
    %v3843 = vand.u32 %v2088, 4294901760
    %v3844 = vsub.f32 %v2088, %v3843
    %v3845 = vand.u32 %v3844, 4294901760
    %3846 = vmatprep.subr.mxu0 %v3845
    %v3847 = vand.u32 %v2087, 4294901760
    %v3848 = vsub.f32 %v2087, %v3847
    %v3849 = vand.u32 %v3848, 4294901760
    %3850 = vmatpush1.msra.mxu0 %v3849
    %v3851 = vand.u32 %v2090, 4294901760
    %v3852 = vsub.f32 %v2090, %v3851
    %v3853 = vand.u32 %v3852, 4294901760
    %3854 = vmatprep.subr.mxu0 %v3853
    %v3855 = vand.u32 %v2089, 4294901760
    %v3856 = vsub.f32 %v2089, %v3855
    %v3857 = vand.u32 %v3856, 4294901760
    %3858 = vmatpush1.msra.mxu0 %v3857
    %v3859 = vand.u32 %v2092, 4294901760
    %v3860 = vsub.f32 %v2092, %v3859
    %v3861 = vand.u32 %v3860, 4294901760
    %3862 = vmatprep.subr.mxu0 %v3861
    %v3863 = vand.u32 %v2091, 4294901760
    %v3864 = vsub.f32 %v2091, %v3863
    %v3865 = vand.u32 %v3864, 4294901760
    %3866 = vmatpush1.msra.mxu0 %v3865
    %v3867 = vand.u32 %v2094, 4294901760
    %v3868 = vsub.f32 %v2094, %v3867
    %v3869 = vand.u32 %v3868, 4294901760
    %3870 = vmatprep.subr.mxu0 %v3869
    %v3871 = vand.u32 %v2093, 4294901760
    %v3872 = vsub.f32 %v2093, %v3871
    %v3873 = vand.u32 %v3872, 4294901760
    %3874 = vmatpush1.msra.mxu0 %v3873
    %v3875 = vand.u32 %v2096, 4294901760
    %v3876 = vsub.f32 %v2096, %v3875
    %v3877 = vand.u32 %v3876, 4294901760
    %3878 = vmatprep.subr.mxu0 %v3877
    %v3879 = vand.u32 %v2095, 4294901760
    %v3880 = vsub.f32 %v2095, %v3879
    %v3881 = vand.u32 %v3880, 4294901760
    %3882 = vmatpush1.msra.mxu0 %v3881
    %v3883 = vand.u32 %v2098, 4294901760
    %v3884 = vsub.f32 %v2098, %v3883
    %v3885 = vand.u32 %v3884, 4294901760
    %3886 = vmatprep.subr.mxu0 %v3885
    %v3887 = vand.u32 %v2097, 4294901760
    %v3888 = vsub.f32 %v2097, %v3887
    %v3889 = vand.u32 %v3888, 4294901760
    %3890 = vmatpush1.msra.mxu0 %v3889
    %v3891 = vand.u32 %v2100, 4294901760
    %v3892 = vsub.f32 %v2100, %v3891
    %v3893 = vand.u32 %v3892, 4294901760
    %3894 = vmatprep.subr.mxu0 %v3893
    %v3895 = vand.u32 %v2099, 4294901760
    %v3896 = vsub.f32 %v2099, %v3895
    %v3897 = vand.u32 %v3896, 4294901760
    %3898 = vmatpush1.msra.mxu0 %v3897
    %v3899 = vand.u32 %v2102, 4294901760
    %v3900 = vsub.f32 %v2102, %v3899
    %v3901 = vand.u32 %v3900, 4294901760
    %3902 = vmatprep.subr.mxu0 %v3901
    %v3903 = vand.u32 %v2101, 4294901760
    %v3904 = vsub.f32 %v2101, %v3903
    %v3905 = vand.u32 %v3904, 4294901760
    %3906 = vmatpush1.msra.mxu0 %v3905
    %v3907 = vand.u32 %v2104, 4294901760
    %v3908 = vsub.f32 %v2104, %v3907
    %v3909 = vand.u32 %v3908, 4294901760
    %3910 = vmatprep.subr.mxu0 %v3909
    %v3911 = vand.u32 %v2103, 4294901760
    %v3912 = vsub.f32 %v2103, %v3911
    %v3913 = vand.u32 %v3912, 4294901760
    %3914 = vmatpush1.msra.mxu0 %v3913
    %v3915 = vand.u32 %v2106, 4294901760
    %v3916 = vsub.f32 %v2106, %v3915
    %v3917 = vand.u32 %v3916, 4294901760
    %3918 = vmatprep.subr.mxu0 %v3917
    %v3919 = vand.u32 %v2105, 4294901760
    %v3920 = vsub.f32 %v2105, %v3919
    %v3921 = vand.u32 %v3920, 4294901760
    %3922 = vmatpush1.msra.mxu0 %v3921
    %v3923 = vand.u32 %v2108, 4294901760
    %v3924 = vsub.f32 %v2108, %v3923
    %v3925 = vand.u32 %v3924, 4294901760
    %3926 = vmatprep.subr.mxu0 %v3925
    %v3927 = vand.u32 %v2107, 4294901760
    %v3928 = vsub.f32 %v2107, %v3927
    %v3929 = vand.u32 %v3928, 4294901760
    %3930 = vmatpush1.msra.mxu0 %v3929
    %v3931 = vand.u32 %v2110, 4294901760
    %v3932 = vsub.f32 %v2110, %v3931
    %v3933 = vand.u32 %v3932, 4294901760
    %3934 = vmatprep.subr.mxu0 %v3933
    %v3935 = vand.u32 %v2109, 4294901760
    %v3936 = vsub.f32 %v2109, %v3935
    %v3937 = vand.u32 %v3936, 4294901760
    %3938 = vmatpush1.msra.mxu0 %v3937
    %v3939 = vand.u32 %v2016, 4294901760
    %3940 = vmatprep.mubr.f32.mxu0 %v3939
    %v3941 = vand.u32 %v2015, 4294901760
    %3942 = vmatmul.mubr.f32.gmra.mrb[0].mxu0 %v3941
    %v3943 = vpop.f32.mrb[0].mxu0
    %v3944 = vadd.f32 %v3499, %v3943
    %v3945 = vpop.f32.mrb[0].mxu0
    %v3946 = vadd.f32 %v3501, %v3945
    %v3947 = vand.u32 %v2018, 4294901760
    %3948 = vmatprep.mubr.f32.mxu0 %v3947
    %v3949 = vand.u32 %v2017, 4294901760
    %3950 = vmatmul.mubr.f32.gmra.mrb[0].mxu0 %v3949
    %v3951 = vpop.f32.mrb[0].mxu0
    %v3952 = vadd.f32 %v3511, %v3951
    %v3953 = vpop.f32.mrb[0].mxu0
    %v3954 = vadd.f32 %v3513, %v3953
    %v3955 = vand.u32 %v2020, 4294901760
    %3956 = vmatprep.mubr.f32.mxu0 %v3955
    %v3957 = vand.u32 %v2019, 4294901760
    %3958 = vmatmul.mubr.f32.gmra.mrb[0].mxu0 %v3957
    %v3959 = vpop.f32.mrb[0].mxu0
    %v3960 = vadd.f32 %v3523, %v3959
    %v3961 = vpop.f32.mrb[0].mxu0
    %v3962 = vadd.f32 %v3525, %v3961
    %v3963 = vand.u32 %v2022, 4294901760
    %3964 = vmatprep.mubr.f32.mxu0 %v3963
    %v3965 = vand.u32 %v2021, 4294901760
    %3966 = vmatmul.mubr.f32.gmra.mrb[0].mxu0 %v3965
    %v3967 = vpop.f32.mrb[0].mxu0
    %v3968 = vadd.f32 %v3535, %v3967
    %v3969 = vpop.f32.mrb[0].mxu0
    %v3970 = vadd.f32 %v3537, %v3969
    %v3971 = vand.u32 %v2024, 4294901760
    %3972 = vmatprep.mubr.f32.mxu0 %v3971
    %v3973 = vand.u32 %v2023, 4294901760
    %3974 = vmatmul.mubr.f32.gmra.mrb[0].mxu0 %v3973
    %v3975 = vpop.f32.mrb[0].mxu0
    %v3976 = vadd.f32 %v3547, %v3975
    %v3977 = vpop.f32.mrb[0].mxu0
    %v3978 = vadd.f32 %v3549, %v3977
    %v3979 = vand.u32 %v2026, 4294901760
    %3980 = vmatprep.mubr.f32.mxu0 %v3979
    %v3981 = vand.u32 %v2025, 4294901760
    %3982 = vmatmul.mubr.f32.gmra.mrb[0].mxu0 %v3981
    %v3983 = vpop.f32.mrb[0].mxu0
    %v3984 = vadd.f32 %v3559, %v3983
    %v3985 = vpop.f32.mrb[0].mxu0
    %v3986 = vadd.f32 %v3561, %v3985
    %v3987 = vand.u32 %v2028, 4294901760
    %3988 = vmatprep.mubr.f32.mxu0 %v3987
    %v3989 = vand.u32 %v2027, 4294901760
    %3990 = vmatmul.mubr.f32.gmra.mrb[0].mxu0 %v3989
    %v3991 = vpop.f32.mrb[0].mxu0
    %v3992 = vadd.f32 %v3571, %v3991
    %v3993 = vpop.f32.mrb[0].mxu0
    %v3994 = vadd.f32 %v3573, %v3993
    %v3995 = vand.u32 %v2030, 4294901760
    %3996 = vmatprep.mubr.f32.mxu0 %v3995
    %v3997 = vand.u32 %v2029, 4294901760
    %3998 = vmatmul.mubr.f32.gmra.mrb[0].mxu0 %v3997
    %v3999 = vpop.f32.mrb[0].mxu0
    %v4000 = vadd.f32 %v3583, %v3999
    %v4001 = vpop.f32.mrb[0].mxu0
    %v4002 = vadd.f32 %v3585, %v4001
    %v4003 = vand.u32 %v2032, 4294901760
    %4004 = vmatprep.mubr.f32.mxu0 %v4003
    %v4005 = vand.u32 %v2031, 4294901760
    %4006 = vmatmul.mubr.f32.gmra.mrb[0].mxu0 %v4005
    %v4007 = vpop.f32.mrb[0].mxu0
    %v4008 = vadd.f32 %v3595, %v4007
    %v4009 = vpop.f32.mrb[0].mxu0
    %v4010 = vadd.f32 %v3597, %v4009
    %v4011 = vand.u32 %v2034, 4294901760
    %4012 = vmatprep.mubr.f32.mxu0 %v4011
    %v4013 = vand.u32 %v2033, 4294901760
    %4014 = vmatmul.mubr.f32.gmra.mrb[0].mxu0 %v4013
    %v4015 = vpop.f32.mrb[0].mxu0
    %v4016 = vadd.f32 %v3607, %v4015
    %v4017 = vpop.f32.mrb[0].mxu0
    %v4018 = vadd.f32 %v3609, %v4017
    %v4019 = vand.u32 %v2036, 4294901760
    %4020 = vmatprep.mubr.f32.mxu0 %v4019
    %v4021 = vand.u32 %v2035, 4294901760
    %4022 = vmatmul.mubr.f32.gmra.mrb[0].mxu0 %v4021
    %v4023 = vpop.f32.mrb[0].mxu0
    %v4024 = vadd.f32 %v3619, %v4023
    %v4025 = vpop.f32.mrb[0].mxu0
    %v4026 = vadd.f32 %v3621, %v4025
    %v4027 = vand.u32 %v2038, 4294901760
    %4028 = vmatprep.mubr.f32.mxu0 %v4027
    %v4029 = vand.u32 %v2037, 4294901760
    %4030 = vmatmul.mubr.f32.gmra.mrb[0].mxu0 %v4029
    %v4031 = vpop.f32.mrb[0].mxu0
    %v4032 = vadd.f32 %v3631, %v4031
    %v4033 = vpop.f32.mrb[0].mxu0
    %v4034 = vadd.f32 %v3633, %v4033
    %v4035 = vand.u32 %v2040, 4294901760
    %4036 = vmatprep.mubr.f32.mxu0 %v4035
    %v4037 = vand.u32 %v2039, 4294901760
    %4038 = vmatmul.mubr.f32.gmra.mrb[0].mxu0 %v4037
    %v4039 = vpop.f32.mrb[0].mxu0
    %v4040 = vadd.f32 %v3643, %v4039
    %v4041 = vpop.f32.mrb[0].mxu0
    %v4042 = vadd.f32 %v3645, %v4041
    %v4043 = vand.u32 %v2042, 4294901760
    %4044 = vmatprep.mubr.f32.mxu0 %v4043
    %v4045 = vand.u32 %v2041, 4294901760
    %4046 = vmatmul.mubr.f32.gmra.mrb[0].mxu0 %v4045
    %v4047 = vpop.f32.mrb[0].mxu0
    %v4048 = vadd.f32 %v3655, %v4047
    %v4049 = vpop.f32.mrb[0].mxu0
    %v4050 = vadd.f32 %v3657, %v4049
    %v4051 = vand.u32 %v2044, 4294901760
    %4052 = vmatprep.mubr.f32.mxu0 %v4051
    %v4053 = vand.u32 %v2043, 4294901760
    %4054 = vmatmul.mubr.f32.gmra.mrb[0].mxu0 %v4053
    %v4055 = vpop.f32.mrb[0].mxu0
    %v4056 = vadd.f32 %v3667, %v4055
    %v4057 = vpop.f32.mrb[0].mxu0
    %v4058 = vadd.f32 %v3669, %v4057
    %v4059 = vand.u32 %v2046, 4294901760
    %4060 = vmatprep.mubr.f32.mxu0 %v4059
    %v4061 = vand.u32 %v2045, 4294901760
    %4062 = vmatmul.mubr.f32.gmra.mrb[0].mxu0 %v4061
    %v4063 = vpop.f32.mrb[0].mxu0
    %v4064 = vadd.f32 %v3679, %v4063
    %v4065 = vpop.f32.mrb[0].mxu0
    %v4066 = vadd.f32 %v3681, %v4065
    %4067 = vdwg.mxu0
    %v4068 = vand.u32 %v2048, 4294901760
    %4069 = vmatprep.subr.mxu0 %v4068
    %v4070 = vand.u32 %v2047, 4294901760
    %4071 = vmatpush1.msra.mxu0 %v4070
    %v4072 = vand.u32 %v2050, 4294901760
    %4073 = vmatprep.subr.mxu0 %v4072
    %v4074 = vand.u32 %v2049, 4294901760
    %4075 = vmatpush1.msra.mxu0 %v4074
    %v4076 = vand.u32 %v2052, 4294901760
    %4077 = vmatprep.subr.mxu0 %v4076
    %v4078 = vand.u32 %v2051, 4294901760
    %4079 = vmatpush1.msra.mxu0 %v4078
    %v4080 = vand.u32 %v2054, 4294901760
    %4081 = vmatprep.subr.mxu0 %v4080
    %v4082 = vand.u32 %v2053, 4294901760
    %4083 = vmatpush1.msra.mxu0 %v4082
    %v4084 = vand.u32 %v2056, 4294901760
    %4085 = vmatprep.subr.mxu0 %v4084
    %v4086 = vand.u32 %v2055, 4294901760
    %4087 = vmatpush1.msra.mxu0 %v4086
    %v4088 = vand.u32 %v2058, 4294901760
    %4089 = vmatprep.subr.mxu0 %v4088
    %v4090 = vand.u32 %v2057, 4294901760
    %4091 = vmatpush1.msra.mxu0 %v4090
    %v4092 = vand.u32 %v2060, 4294901760
    %4093 = vmatprep.subr.mxu0 %v4092
    %v4094 = vand.u32 %v2059, 4294901760
    %4095 = vmatpush1.msra.mxu0 %v4094
    %v4096 = vand.u32 %v2062, 4294901760
    %4097 = vmatprep.subr.mxu0 %v4096
    %v4098 = vand.u32 %v2061, 4294901760
    %4099 = vmatpush1.msra.mxu0 %v4098
    %v4100 = vand.u32 %v2064, 4294901760
    %4101 = vmatprep.subr.mxu0 %v4100
    %v4102 = vand.u32 %v2063, 4294901760
    %4103 = vmatpush1.msra.mxu0 %v4102
    %v4104 = vand.u32 %v2066, 4294901760
    %4105 = vmatprep.subr.mxu0 %v4104
    %v4106 = vand.u32 %v2065, 4294901760
    %4107 = vmatpush1.msra.mxu0 %v4106
    %v4108 = vand.u32 %v2068, 4294901760
    %4109 = vmatprep.subr.mxu0 %v4108
    %v4110 = vand.u32 %v2067, 4294901760
    %4111 = vmatpush1.msra.mxu0 %v4110
    %v4112 = vand.u32 %v2070, 4294901760
    %4113 = vmatprep.subr.mxu0 %v4112
    %v4114 = vand.u32 %v2069, 4294901760
    %4115 = vmatpush1.msra.mxu0 %v4114
    %v4116 = vand.u32 %v2072, 4294901760
    %4117 = vmatprep.subr.mxu0 %v4116
    %v4118 = vand.u32 %v2071, 4294901760
    %4119 = vmatpush1.msra.mxu0 %v4118
    %v4120 = vand.u32 %v2074, 4294901760
    %4121 = vmatprep.subr.mxu0 %v4120
    %v4122 = vand.u32 %v2073, 4294901760
    %4123 = vmatpush1.msra.mxu0 %v4122
    %v4124 = vand.u32 %v2076, 4294901760
    %4125 = vmatprep.subr.mxu0 %v4124
    %v4126 = vand.u32 %v2075, 4294901760
    %4127 = vmatpush1.msra.mxu0 %v4126
    %v4128 = vand.u32 %v2078, 4294901760
    %4129 = vmatprep.subr.mxu0 %v4128
    %v4130 = vand.u32 %v2077, 4294901760
    %4131 = vmatpush1.msra.mxu0 %v4130
    %v4132 = vand.u32 %v2080, 4294901760
    %4133 = vmatprep.subr.mxu0 %v4132
    %v4134 = vand.u32 %v2079, 4294901760
    %4135 = vmatpush1.msra.mxu0 %v4134
    %v4136 = vand.u32 %v2082, 4294901760
    %4137 = vmatprep.subr.mxu0 %v4136
    %v4138 = vand.u32 %v2081, 4294901760
    %4139 = vmatpush1.msra.mxu0 %v4138
    %v4140 = vand.u32 %v2084, 4294901760
    %4141 = vmatprep.subr.mxu0 %v4140
    %v4142 = vand.u32 %v2083, 4294901760
    %4143 = vmatpush1.msra.mxu0 %v4142
    %v4144 = vand.u32 %v2086, 4294901760
    %4145 = vmatprep.subr.mxu0 %v4144
    %v4146 = vand.u32 %v2085, 4294901760
    %4147 = vmatpush1.msra.mxu0 %v4146
    %v4148 = vand.u32 %v2088, 4294901760
    %4149 = vmatprep.subr.mxu0 %v4148
    %v4150 = vand.u32 %v2087, 4294901760
    %4151 = vmatpush1.msra.mxu0 %v4150
    %v4152 = vand.u32 %v2090, 4294901760
    %4153 = vmatprep.subr.mxu0 %v4152
    %v4154 = vand.u32 %v2089, 4294901760
    %4155 = vmatpush1.msra.mxu0 %v4154
    %v4156 = vand.u32 %v2092, 4294901760
    %4157 = vmatprep.subr.mxu0 %v4156
    %v4158 = vand.u32 %v2091, 4294901760
    %4159 = vmatpush1.msra.mxu0 %v4158
    %v4160 = vand.u32 %v2094, 4294901760
    %4161 = vmatprep.subr.mxu0 %v4160
    %v4162 = vand.u32 %v2093, 4294901760
    %4163 = vmatpush1.msra.mxu0 %v4162
    %v4164 = vand.u32 %v2096, 4294901760
    %4165 = vmatprep.subr.mxu0 %v4164
    %v4166 = vand.u32 %v2095, 4294901760
    %4167 = vmatpush1.msra.mxu0 %v4166
    %v4168 = vand.u32 %v2098, 4294901760
    %4169 = vmatprep.subr.mxu0 %v4168
    %v4170 = vand.u32 %v2097, 4294901760
    %4171 = vmatpush1.msra.mxu0 %v4170
    %v4172 = vand.u32 %v2100, 4294901760
    %4173 = vmatprep.subr.mxu0 %v4172
    %v4174 = vand.u32 %v2099, 4294901760
    %4175 = vmatpush1.msra.mxu0 %v4174
    %v4176 = vand.u32 %v2102, 4294901760
    %4177 = vmatprep.subr.mxu0 %v4176
    %v4178 = vand.u32 %v2101, 4294901760
    %4179 = vmatpush1.msra.mxu0 %v4178
    %v4180 = vand.u32 %v2104, 4294901760
    %4181 = vmatprep.subr.mxu0 %v4180
    %v4182 = vand.u32 %v2103, 4294901760
    %4183 = vmatpush1.msra.mxu0 %v4182
    %v4184 = vand.u32 %v2106, 4294901760
    %4185 = vmatprep.subr.mxu0 %v4184
    %v4186 = vand.u32 %v2105, 4294901760
    %4187 = vmatpush1.msra.mxu0 %v4186
    %v4188 = vand.u32 %v2108, 4294901760
    %4189 = vmatprep.subr.mxu0 %v4188
    %v4190 = vand.u32 %v2107, 4294901760
    %4191 = vmatpush1.msra.mxu0 %v4190
    %v4192 = vand.u32 %v2110, 4294901760
    %4193 = vmatprep.subr.mxu0 %v4192
    %v4194 = vand.u32 %v2109, 4294901760
    %4195 = vmatpush1.msra.mxu0 %v4194
    %v4196 = vand.u32 %v2016, 4294901760
    %4197 = vmatprep.mubr.f32.mxu0 %v4196
    %v4198 = vand.u32 %v2015, 4294901760
    %4199 = vmatmul.mubr.f32.gmra.mrb[0].mxu0 %v4198
    %v4200 = vpop.f32.mrb[0].mxu0
    %v4201 = vadd.f32 %v3944, %v4200
    %v4202 = vpop.f32.mrb[0].mxu0
    %v4203 = vadd.f32 %v3946, %v4202
    %v4204 = vand.u32 %v2018, 4294901760
    %4205 = vmatprep.mubr.f32.mxu0 %v4204
    %v4206 = vand.u32 %v2017, 4294901760
    %4207 = vmatmul.mubr.f32.gmra.mrb[0].mxu0 %v4206
    %v4208 = vpop.f32.mrb[0].mxu0
    %v4209 = vadd.f32 %v3952, %v4208
    %v4210 = vpop.f32.mrb[0].mxu0
    %v4211 = vadd.f32 %v3954, %v4210
    %v4212 = vand.u32 %v2020, 4294901760
    %4213 = vmatprep.mubr.f32.mxu0 %v4212
    %v4214 = vand.u32 %v2019, 4294901760
    %4215 = vmatmul.mubr.f32.gmra.mrb[0].mxu0 %v4214
    %v4216 = vpop.f32.mrb[0].mxu0
    %v4217 = vadd.f32 %v3960, %v4216
    %v4218 = vpop.f32.mrb[0].mxu0
    %v4219 = vadd.f32 %v3962, %v4218
    %v4220 = vand.u32 %v2022, 4294901760
    %4221 = vmatprep.mubr.f32.mxu0 %v4220
    %v4222 = vand.u32 %v2021, 4294901760
    %4223 = vmatmul.mubr.f32.gmra.mrb[0].mxu0 %v4222
    %v4224 = vpop.f32.mrb[0].mxu0
    %v4225 = vadd.f32 %v3968, %v4224
    %v4226 = vpop.f32.mrb[0].mxu0
    %v4227 = vadd.f32 %v3970, %v4226
    %v4228 = vand.u32 %v2024, 4294901760
    %4229 = vmatprep.mubr.f32.mxu0 %v4228
    %v4230 = vand.u32 %v2023, 4294901760
    %4231 = vmatmul.mubr.f32.gmra.mrb[0].mxu0 %v4230
    %v4232 = vpop.f32.mrb[0].mxu0
    %v4233 = vadd.f32 %v3976, %v4232
    %v4234 = vpop.f32.mrb[0].mxu0
    %v4235 = vadd.f32 %v3978, %v4234
    %v4236 = vand.u32 %v2026, 4294901760
    %4237 = vmatprep.mubr.f32.mxu0 %v4236
    %v4238 = vand.u32 %v2025, 4294901760
    %4239 = vmatmul.mubr.f32.gmra.mrb[0].mxu0 %v4238
    %v4240 = vpop.f32.mrb[0].mxu0
    %v4241 = vadd.f32 %v3984, %v4240
    %v4242 = vpop.f32.mrb[0].mxu0
    %v4243 = vadd.f32 %v3986, %v4242
    %v4244 = vand.u32 %v2028, 4294901760
    %4245 = vmatprep.mubr.f32.mxu0 %v4244
    %v4246 = vand.u32 %v2027, 4294901760
    %4247 = vmatmul.mubr.f32.gmra.mrb[0].mxu0 %v4246
    %v4248 = vpop.f32.mrb[0].mxu0
    %v4249 = vadd.f32 %v3992, %v4248
    %v4250 = vpop.f32.mrb[0].mxu0
    %v4251 = vadd.f32 %v3994, %v4250
    %v4252 = vand.u32 %v2030, 4294901760
    %4253 = vmatprep.mubr.f32.mxu0 %v4252
    %v4254 = vand.u32 %v2029, 4294901760
    %4255 = vmatmul.mubr.f32.gmra.mrb[0].mxu0 %v4254
    %v4256 = vpop.f32.mrb[0].mxu0
    %v4257 = vadd.f32 %v4000, %v4256
    %v4258 = vpop.f32.mrb[0].mxu0
    %v4259 = vadd.f32 %v4002, %v4258
    %v4260 = vand.u32 %v2032, 4294901760
    %4261 = vmatprep.mubr.f32.mxu0 %v4260
    %v4262 = vand.u32 %v2031, 4294901760
    %4263 = vmatmul.mubr.f32.gmra.mrb[0].mxu0 %v4262
    %v4264 = vpop.f32.mrb[0].mxu0
    %v4265 = vadd.f32 %v4008, %v4264
    %v4266 = vpop.f32.mrb[0].mxu0
    %v4267 = vadd.f32 %v4010, %v4266
    %v4268 = vand.u32 %v2034, 4294901760
    %4269 = vmatprep.mubr.f32.mxu0 %v4268
    %v4270 = vand.u32 %v2033, 4294901760
    %4271 = vmatmul.mubr.f32.gmra.mrb[0].mxu0 %v4270
    %v4272 = vpop.f32.mrb[0].mxu0
    %v4273 = vadd.f32 %v4016, %v4272
    %v4274 = vpop.f32.mrb[0].mxu0
    %v4275 = vadd.f32 %v4018, %v4274
    %v4276 = vand.u32 %v2036, 4294901760
    %4277 = vmatprep.mubr.f32.mxu0 %v4276
    %v4278 = vand.u32 %v2035, 4294901760
    %4279 = vmatmul.mubr.f32.gmra.mrb[0].mxu0 %v4278
    %v4280 = vpop.f32.mrb[0].mxu0
    %v4281 = vadd.f32 %v4024, %v4280
    %v4282 = vpop.f32.mrb[0].mxu0
    %v4283 = vadd.f32 %v4026, %v4282
    %v4284 = vand.u32 %v2038, 4294901760
    %4285 = vmatprep.mubr.f32.mxu0 %v4284
    %v4286 = vand.u32 %v2037, 4294901760
    %4287 = vmatmul.mubr.f32.gmra.mrb[0].mxu0 %v4286
    %v4288 = vpop.f32.mrb[0].mxu0
    %v4289 = vadd.f32 %v4032, %v4288
    %v4290 = vpop.f32.mrb[0].mxu0
    %v4291 = vadd.f32 %v4034, %v4290
    %v4292 = vand.u32 %v2040, 4294901760
    %4293 = vmatprep.mubr.f32.mxu0 %v4292
    %v4294 = vand.u32 %v2039, 4294901760
    %4295 = vmatmul.mubr.f32.gmra.mrb[0].mxu0 %v4294
    %v4296 = vpop.f32.mrb[0].mxu0
    %v4297 = vadd.f32 %v4040, %v4296
    %v4298 = vpop.f32.mrb[0].mxu0
    %v4299 = vadd.f32 %v4042, %v4298
    %v4300 = vand.u32 %v2042, 4294901760
    %4301 = vmatprep.mubr.f32.mxu0 %v4300
    %v4302 = vand.u32 %v2041, 4294901760
    %4303 = vmatmul.mubr.f32.gmra.mrb[0].mxu0 %v4302
    %v4304 = vpop.f32.mrb[0].mxu0
    %v4305 = vadd.f32 %v4048, %v4304
    %v4306 = vpop.f32.mrb[0].mxu0
    %v4307 = vadd.f32 %v4050, %v4306
    %v4308 = vand.u32 %v2044, 4294901760
    %4309 = vmatprep.mubr.f32.mxu0 %v4308
    %v4310 = vand.u32 %v2043, 4294901760
    %4311 = vmatmul.mubr.f32.gmra.mrb[0].mxu0 %v4310
    %v4312 = vpop.f32.mrb[0].mxu0
    %v4313 = vadd.f32 %v4056, %v4312
    %v4314 = vpop.f32.mrb[0].mxu0
    %v4315 = vadd.f32 %v4058, %v4314
    %v4316 = vand.u32 %v2046, 4294901760
    %4317 = vmatprep.mubr.f32.mxu0 %v4316
    %v4318 = vand.u32 %v2045, 4294901760
    %4319 = vmatmul.mubr.f32.gmra.mrb[0].mxu0 %v4318
    %v4320 = vpop.f32.mrb[0].mxu0
    %v4321 = vadd.f32 %v4064, %v4320
    %v4322 = vpop.f32.mrb[0].mxu0
    %v4323 = vadd.f32 %v4066, %v4322
    %4324 = vdwg.mxu0
    %4325 = vst [vmem:[#allocation4] sm:$0xff] %v4201
    %4326 = vst [vmem:[#allocation4 + $0x8] sm:$0xff] %v4203
    %4327 = vst [vmem:[#allocation4 + $0x10] sm:$0xff] %v4209
    %4328 = vst [vmem:[#allocation4 + $0x18] sm:$0xff] %v4211
    %4329 = vst [vmem:[#allocation4 + $0x20] sm:$0xff] %v4217
    %4330 = vst [vmem:[#allocation4 + $0x28] sm:$0xff] %v4219
    %4331 = vst [vmem:[#allocation4 + $0x30] sm:$0xff] %v4225
    %4332 = vst [vmem:[#allocation4 + $0x38] sm:$0xff] %v4227
    %4333 = vst [vmem:[#allocation4 + $0x40] sm:$0xff] %v4233
    %4334 = vst [vmem:[#allocation4 + $0x48] sm:$0xff] %v4235
    %4335 = vst [vmem:[#allocation4 + $0x50] sm:$0xff] %v4241
    %4336 = vst [vmem:[#allocation4 + $0x58] sm:$0xff] %v4243
    %4337 = vst [vmem:[#allocation4 + $0x60] sm:$0xff] %v4249
    %4338 = vst [vmem:[#allocation4 + $0x68] sm:$0xff] %v4251
    %4339 = vst [vmem:[#allocation4 + $0x70] sm:$0xff] %v4257
    %4340 = vst [vmem:[#allocation4 + $0x78] sm:$0xff] %v4259
    %4341 = vst [vmem:[#allocation4 + $0x80] sm:$0xff] %v4265
    %4342 = vst [vmem:[#allocation4 + $0x88] sm:$0xff] %v4267
    %4343 = vst [vmem:[#allocation4 + $0x90] sm:$0xff] %v4273
    %4344 = vst [vmem:[#allocation4 + $0x98] sm:$0xff] %v4275
    %4345 = vst [vmem:[#allocation4 + $0xa0] sm:$0xff] %v4281
    %4346 = vst [vmem:[#allocation4 + $0xa8] sm:$0xff] %v4283
    %4347 = vst [vmem:[#allocation4 + $0xb0] sm:$0xff] %v4289
    %4348 = vst [vmem:[#allocation4 + $0xb8] sm:$0xff] %v4291
    %4349 = vst [vmem:[#allocation4 + $0xc0] sm:$0xff] %v4297
    %4350 = vst [vmem:[#allocation4 + $0xc8] sm:$0xff] %v4299
    %4351 = vst [vmem:[#allocation4 + $0xd0] sm:$0xff] %v4305
    %4352 = vst [vmem:[#allocation4 + $0xd8] sm:$0xff] %v4307
    %4353 = vst [vmem:[#allocation4 + $0xe0] sm:$0xff] %v4313
    %4354 = vst [vmem:[#allocation4 + $0xe8] sm:$0xff] %v4315
    %4355 = vst [vmem:[#allocation4 + $0xf0] sm:$0xff] %v4321
    %4356 = vst [vmem:[#allocation4 + $0xf8] sm:$0xff] %v4323
    %v4357 = vld [vmem:[#allocation4] sm:$0xff]
    %v4358 = vld [vmem:[#allocation4 + $0x8] sm:$0xff]
    %v4359 = vld [vmem:[#allocation4 + $0x10] sm:$0xff]
    %v4360 = vld [vmem:[#allocation4 + $0x18] sm:$0xff]
    %v4361 = vld [vmem:[#allocation4 + $0x20] sm:$0xff]
    %v4362 = vld [vmem:[#allocation4 + $0x28] sm:$0xff]
    %v4363 = vld [vmem:[#allocation4 + $0x30] sm:$0xff]
    %v4364 = vld [vmem:[#allocation4 + $0x38] sm:$0xff]
    %v4365 = vld [vmem:[#allocation4 + $0x40] sm:$0xff]
    %v4366 = vld [vmem:[#allocation4 + $0x48] sm:$0xff]
    %v4367 = vld [vmem:[#allocation4 + $0x50] sm:$0xff]
    %v4368 = vld [vmem:[#allocation4 + $0x58] sm:$0xff]
    %v4369 = vld [vmem:[#allocation4 + $0x60] sm:$0xff]
    %v4370 = vld [vmem:[#allocation4 + $0x68] sm:$0xff]
    %v4371 = vld [vmem:[#allocation4 + $0x70] sm:$0xff]
    %v4372 = vld [vmem:[#allocation4 + $0x78] sm:$0xff]
    %v4373 = vld [vmem:[#allocation4 + $0x80] sm:$0xff]
    %v4374 = vld [vmem:[#allocation4 + $0x88] sm:$0xff]
    %v4375 = vld [vmem:[#allocation4 + $0x90] sm:$0xff]
    %v4376 = vld [vmem:[#allocation4 + $0x98] sm:$0xff]
    %v4377 = vld [vmem:[#allocation4 + $0xa0] sm:$0xff]
    %v4378 = vld [vmem:[#allocation4 + $0xa8] sm:$0xff]
    %v4379 = vld [vmem:[#allocation4 + $0xb0] sm:$0xff]
    %v4380 = vld [vmem:[#allocation4 + $0xb8] sm:$0xff]
    %v4381 = vld [vmem:[#allocation4 + $0xc0] sm:$0xff]
    %v4382 = vld [vmem:[#allocation4 + $0xc8] sm:$0xff]
    %v4383 = vld [vmem:[#allocation4 + $0xd0] sm:$0xff]
    %v4384 = vld [vmem:[#allocation4 + $0xd8] sm:$0xff]
    %v4385 = vld [vmem:[#allocation4 + $0xe0] sm:$0xff]
    %v4386 = vld [vmem:[#allocation4 + $0xe8] sm:$0xff]
    %v4387 = vld [vmem:[#allocation4 + $0xf0] sm:$0xff]
    %v4388 = vld [vmem:[#allocation4 + $0xf8] sm:$0xff]
    %v4389 = vld [vmem:[#allocation2] sm:$0xff]
    %v4390 = vld [vmem:[#allocation2 + $0x8] sm:$0xff]
    %v4391 = vld [vmem:[#allocation2 + $0x10] sm:$0xff]
    %v4392 = vld [vmem:[#allocation2 + $0x18] sm:$0xff]
    %v4393 = vld [vmem:[#allocation2 + $0x20] sm:$0xff]
    %v4394 = vld [vmem:[#allocation2 + $0x28] sm:$0xff]
    %v4395 = vld [vmem:[#allocation2 + $0x30] sm:$0xff]
    %v4396 = vld [vmem:[#allocation2 + $0x38] sm:$0xff]
    %v4397 = vld [vmem:[#allocation2 + $0x40] sm:$0xff]
    %v4398 = vld [vmem:[#allocation2 + $0x48] sm:$0xff]
    %v4399 = vld [vmem:[#allocation2 + $0x50] sm:$0xff]
    %v4400 = vld [vmem:[#allocation2 + $0x58] sm:$0xff]
    %v4401 = vld [vmem:[#allocation2 + $0x60] sm:$0xff]
    %v4402 = vld [vmem:[#allocation2 + $0x68] sm:$0xff]
    %v4403 = vld [vmem:[#allocation2 + $0x70] sm:$0xff]
    %v4404 = vld [vmem:[#allocation2 + $0x78] sm:$0xff]
    %v4405 = vld [vmem:[#allocation2 + $0x80] sm:$0xff]
    %v4406 = vld [vmem:[#allocation2 + $0x88] sm:$0xff]
    %v4407 = vld [vmem:[#allocation2 + $0x90] sm:$0xff]
    %v4408 = vld [vmem:[#allocation2 + $0x98] sm:$0xff]
    %v4409 = vld [vmem:[#allocation2 + $0xa0] sm:$0xff]
    %v4410 = vld [vmem:[#allocation2 + $0xa8] sm:$0xff]
    %v4411 = vld [vmem:[#allocation2 + $0xb0] sm:$0xff]
    %v4412 = vld [vmem:[#allocation2 + $0xb8] sm:$0xff]
    %v4413 = vld [vmem:[#allocation2 + $0xc0] sm:$0xff]
    %v4414 = vld [vmem:[#allocation2 + $0xc8] sm:$0xff]
    %v4415 = vld [vmem:[#allocation2 + $0xd0] sm:$0xff]
    %v4416 = vld [vmem:[#allocation2 + $0xd8] sm:$0xff]
    %v4417 = vld [vmem:[#allocation2 + $0xe0] sm:$0xff]
    %v4418 = vld [vmem:[#allocation2 + $0xe8] sm:$0xff]
    %v4419 = vld [vmem:[#allocation2 + $0xf0] sm:$0xff]
    %v4420 = vld [vmem:[#allocation2 + $0xf8] sm:$0xff]
    %v4421 = vand.u32 %v4390, 4294901760
    %4422 = vmatprep.subr.mxu0 %v4421
    %v4423 = vand.u32 %v4389, 4294901760
    %4424 = vmatpush1.xpose.msra.mxu0 %v4423
    %v4425 = vand.u32 %v4392, 4294901760
    %4426 = vmatprep.subr.mxu0 %v4425
    %v4427 = vand.u32 %v4391, 4294901760
    %4428 = vmatpush1.xpose.msra.mxu0 %v4427
    %v4429 = vand.u32 %v4394, 4294901760
    %4430 = vmatprep.subr.mxu0 %v4429
    %v4431 = vand.u32 %v4393, 4294901760
    %4432 = vmatpush1.xpose.msra.mxu0 %v4431
    %v4433 = vand.u32 %v4396, 4294901760
    %4434 = vmatprep.subr.mxu0 %v4433
    %v4435 = vand.u32 %v4395, 4294901760
    %4436 = vmatpush1.xpose.msra.mxu0 %v4435
    %v4437 = vand.u32 %v4398, 4294901760
    %4438 = vmatprep.subr.mxu0 %v4437
    %v4439 = vand.u32 %v4397, 4294901760
    %4440 = vmatpush1.xpose.msra.mxu0 %v4439
    %v4441 = vand.u32 %v4400, 4294901760
    %4442 = vmatprep.subr.mxu0 %v4441
    %v4443 = vand.u32 %v4399, 4294901760
    %4444 = vmatpush1.xpose.msra.mxu0 %v4443
    %v4445 = vand.u32 %v4402, 4294901760
    %4446 = vmatprep.subr.mxu0 %v4445
    %v4447 = vand.u32 %v4401, 4294901760
    %4448 = vmatpush1.xpose.msra.mxu0 %v4447
    %v4449 = vand.u32 %v4404, 4294901760
    %4450 = vmatprep.subr.mxu0 %v4449
    %v4451 = vand.u32 %v4403, 4294901760
    %4452 = vmatpush1.xpose.msra.mxu0 %v4451
    %v4453 = vand.u32 %v4406, 4294901760
    %4454 = vmatprep.subr.mxu0 %v4453
    %v4455 = vand.u32 %v4405, 4294901760
    %4456 = vmatpush1.xpose.msra.mxu0 %v4455
    %v4457 = vand.u32 %v4408, 4294901760
    %4458 = vmatprep.subr.mxu0 %v4457
    %v4459 = vand.u32 %v4407, 4294901760
    %4460 = vmatpush1.xpose.msra.mxu0 %v4459
    %v4461 = vand.u32 %v4410, 4294901760
    %4462 = vmatprep.subr.mxu0 %v4461
    %v4463 = vand.u32 %v4409, 4294901760
    %4464 = vmatpush1.xpose.msra.mxu0 %v4463
    %v4465 = vand.u32 %v4412, 4294901760
    %4466 = vmatprep.subr.mxu0 %v4465
    %v4467 = vand.u32 %v4411, 4294901760
    %4468 = vmatpush1.xpose.msra.mxu0 %v4467
    %v4469 = vand.u32 %v4414, 4294901760
    %4470 = vmatprep.subr.mxu0 %v4469
    %v4471 = vand.u32 %v4413, 4294901760
    %4472 = vmatpush1.xpose.msra.mxu0 %v4471
    %v4473 = vand.u32 %v4416, 4294901760
    %4474 = vmatprep.subr.mxu0 %v4473
    %v4475 = vand.u32 %v4415, 4294901760
    %4476 = vmatpush1.xpose.msra.mxu0 %v4475
    %v4477 = vand.u32 %v4418, 4294901760
    %4478 = vmatprep.subr.mxu0 %v4477
    %v4479 = vand.u32 %v4417, 4294901760
    %4480 = vmatpush1.xpose.msra.mxu0 %v4479
    %v4481 = vand.u32 %v4420, 4294901760
    %4482 = vmatprep.subr.mxu0 %v4481
    %v4483 = vand.u32 %v4419, 4294901760
    %4484 = vmatpush1.xpose.msra.mxu0 %v4483
    %4485 = vmatprep.subr.mxu0 0.0
    %4486 = vmatpush1.xpose.msra.mxu0 0.0
    %4487 = vmatprep.subr.mxu0 0.0
    %4488 = vmatpush1.xpose.msra.mxu0 0.0
    %4489 = vmatprep.subr.mxu0 0.0
    %4490 = vmatpush1.xpose.msra.mxu0 0.0
    %4491 = vmatprep.subr.mxu0 0.0
    %4492 = vmatpush1.xpose.msra.mxu0 0.0
    %4493 = vmatprep.subr.mxu0 0.0
    %4494 = vmatpush1.xpose.msra.mxu0 0.0
    %4495 = vmatprep.subr.mxu0 0.0
    %4496 = vmatpush1.xpose.msra.mxu0 0.0
    %4497 = vmatprep.subr.mxu0 0.0
    %4498 = vmatpush1.xpose.msra.mxu0 0.0
    %4499 = vmatprep.subr.mxu0 0.0
    %4500 = vmatpush1.xpose.msra.mxu0 0.0
    %4501 = vmatprep.subr.mxu0 0.0
    %4502 = vmatpush1.xpose.msra.mxu0 0.0
    %4503 = vmatprep.subr.mxu0 0.0
    %4504 = vmatpush1.xpose.msra.mxu0 0.0
    %4505 = vmatprep.subr.mxu0 0.0
    %4506 = vmatpush1.xpose.msra.mxu0 0.0
    %4507 = vmatprep.subr.mxu0 0.0
    %4508 = vmatpush1.xpose.msra.mxu0 0.0
    %4509 = vmatprep.subr.mxu0 0.0
    %4510 = vmatpush1.xpose.msra.mxu0 0.0
    %4511 = vmatprep.subr.mxu0 0.0
    %4512 = vmatpush1.xpose.msra.mxu0 0.0
    %4513 = vmatprep.subr.mxu0 0.0
    %4514 = vmatpush1.xpose.msra.mxu0 0.0
    %4515 = vmatprep.subr.mxu0 0.0
    %4516 = vmatpush1.xpose.msra.mxu0 0.0
    %v4517 = vand.u32 %v4358, 4294901760
    %v4518 = vsub.f32 %v4358, %v4517
    %v4519 = vand.u32 %v4518, 4294901760
    %v4520 = vsub.f32 %v4518, %v4519
    %v4521 = vand.u32 %v4520, 4294901760
    %4522 = vmatprep.mubr.f32.mxu0 %v4521
    %v4523 = vand.u32 %v4357, 4294901760
    %v4524 = vsub.f32 %v4357, %v4523
    %v4525 = vand.u32 %v4524, 4294901760
    %v4526 = vsub.f32 %v4524, %v4525
    %v4527 = vand.u32 %v4526, 4294901760
    %4528 = vmatmul.mubr.f32.gmra.mrb[0].mxu0 %v4527
    %v4529 = vpop.f32.mrb[0].mxu0
    %v4530 = vadd.f32 0.0, %v4529
    %v4531 = vpop.f32.mrb[0].mxu0
    %v4532 = vand.u32 %v4360, 4294901760
    %v4533 = vsub.f32 %v4360, %v4532
    %v4534 = vand.u32 %v4533, 4294901760
    %v4535 = vsub.f32 %v4533, %v4534
    %v4536 = vand.u32 %v4535, 4294901760
    %4537 = vmatprep.mubr.f32.mxu0 %v4536
    %v4538 = vand.u32 %v4359, 4294901760
    %v4539 = vsub.f32 %v4359, %v4538
    %v4540 = vand.u32 %v4539, 4294901760
    %v4541 = vsub.f32 %v4539, %v4540
    %v4542 = vand.u32 %v4541, 4294901760
    %4543 = vmatmul.mubr.f32.gmra.mrb[0].mxu0 %v4542
    %v4544 = vpop.f32.mrb[0].mxu0
    %v4545 = vadd.f32 0.0, %v4544
    %v4546 = vpop.f32.mrb[0].mxu0
    %v4547 = vand.u32 %v4362, 4294901760
    %v4548 = vsub.f32 %v4362, %v4547
    %v4549 = vand.u32 %v4548, 4294901760
    %v4550 = vsub.f32 %v4548, %v4549
    %v4551 = vand.u32 %v4550, 4294901760
    %4552 = vmatprep.mubr.f32.mxu0 %v4551
    %v4553 = vand.u32 %v4361, 4294901760
    %v4554 = vsub.f32 %v4361, %v4553
    %v4555 = vand.u32 %v4554, 4294901760
    %v4556 = vsub.f32 %v4554, %v4555
    %v4557 = vand.u32 %v4556, 4294901760
    %4558 = vmatmul.mubr.f32.gmra.mrb[0].mxu0 %v4557
    %v4559 = vpop.f32.mrb[0].mxu0
    %v4560 = vadd.f32 0.0, %v4559
    %v4561 = vpop.f32.mrb[0].mxu0
    %v4562 = vand.u32 %v4364, 4294901760
    %v4563 = vsub.f32 %v4364, %v4562
    %v4564 = vand.u32 %v4563, 4294901760
    %v4565 = vsub.f32 %v4563, %v4564
    %v4566 = vand.u32 %v4565, 4294901760
    %4567 = vmatprep.mubr.f32.mxu0 %v4566
    %v4568 = vand.u32 %v4363, 4294901760
    %v4569 = vsub.f32 %v4363, %v4568
    %v4570 = vand.u32 %v4569, 4294901760
    %v4571 = vsub.f32 %v4569, %v4570
    %v4572 = vand.u32 %v4571, 4294901760
    %4573 = vmatmul.mubr.f32.gmra.mrb[0].mxu0 %v4572
    %v4574 = vpop.f32.mrb[0].mxu0
    %v4575 = vadd.f32 0.0, %v4574
    %v4576 = vpop.f32.mrb[0].mxu0
    %v4577 = vand.u32 %v4366, 4294901760
    %v4578 = vsub.f32 %v4366, %v4577
    %v4579 = vand.u32 %v4578, 4294901760
    %v4580 = vsub.f32 %v4578, %v4579
    %v4581 = vand.u32 %v4580, 4294901760
    %4582 = vmatprep.mubr.f32.mxu0 %v4581
    %v4583 = vand.u32 %v4365, 4294901760
    %v4584 = vsub.f32 %v4365, %v4583
    %v4585 = vand.u32 %v4584, 4294901760
    %v4586 = vsub.f32 %v4584, %v4585
    %v4587 = vand.u32 %v4586, 4294901760
    %4588 = vmatmul.mubr.f32.gmra.mrb[0].mxu0 %v4587
    %v4589 = vpop.f32.mrb[0].mxu0
    %v4590 = vadd.f32 0.0, %v4589
    %v4591 = vpop.f32.mrb[0].mxu0
    %v4592 = vand.u32 %v4368, 4294901760
    %v4593 = vsub.f32 %v4368, %v4592
    %v4594 = vand.u32 %v4593, 4294901760
    %v4595 = vsub.f32 %v4593, %v4594
    %v4596 = vand.u32 %v4595, 4294901760
    %4597 = vmatprep.mubr.f32.mxu0 %v4596
    %v4598 = vand.u32 %v4367, 4294901760
    %v4599 = vsub.f32 %v4367, %v4598
    %v4600 = vand.u32 %v4599, 4294901760
    %v4601 = vsub.f32 %v4599, %v4600
    %v4602 = vand.u32 %v4601, 4294901760
    %4603 = vmatmul.mubr.f32.gmra.mrb[0].mxu0 %v4602
    %v4604 = vpop.f32.mrb[0].mxu0
    %v4605 = vadd.f32 0.0, %v4604
    %v4606 = vpop.f32.mrb[0].mxu0
    %v4607 = vand.u32 %v4370, 4294901760
    %v4608 = vsub.f32 %v4370, %v4607
    %v4609 = vand.u32 %v4608, 4294901760
    %v4610 = vsub.f32 %v4608, %v4609
    %v4611 = vand.u32 %v4610, 4294901760
    %4612 = vmatprep.mubr.f32.mxu0 %v4611
    %v4613 = vand.u32 %v4369, 4294901760
    %v4614 = vsub.f32 %v4369, %v4613
    %v4615 = vand.u32 %v4614, 4294901760
    %v4616 = vsub.f32 %v4614, %v4615
    %v4617 = vand.u32 %v4616, 4294901760
    %4618 = vmatmul.mubr.f32.gmra.mrb[0].mxu0 %v4617
    %v4619 = vpop.f32.mrb[0].mxu0
    %v4620 = vadd.f32 0.0, %v4619
    %v4621 = vpop.f32.mrb[0].mxu0
    %v4622 = vand.u32 %v4372, 4294901760
    %v4623 = vsub.f32 %v4372, %v4622
    %v4624 = vand.u32 %v4623, 4294901760
    %v4625 = vsub.f32 %v4623, %v4624
    %v4626 = vand.u32 %v4625, 4294901760
    %4627 = vmatprep.mubr.f32.mxu0 %v4626
    %v4628 = vand.u32 %v4371, 4294901760
    %v4629 = vsub.f32 %v4371, %v4628
    %v4630 = vand.u32 %v4629, 4294901760
    %v4631 = vsub.f32 %v4629, %v4630
    %v4632 = vand.u32 %v4631, 4294901760
    %4633 = vmatmul.mubr.f32.gmra.mrb[0].mxu0 %v4632
    %v4634 = vpop.f32.mrb[0].mxu0
    %v4635 = vadd.f32 0.0, %v4634
    %v4636 = vpop.f32.mrb[0].mxu0
    %v4637 = vand.u32 %v4374, 4294901760
    %v4638 = vsub.f32 %v4374, %v4637
    %v4639 = vand.u32 %v4638, 4294901760
    %v4640 = vsub.f32 %v4638, %v4639
    %v4641 = vand.u32 %v4640, 4294901760
    %4642 = vmatprep.mubr.f32.mxu0 %v4641
    %v4643 = vand.u32 %v4373, 4294901760
    %v4644 = vsub.f32 %v4373, %v4643
    %v4645 = vand.u32 %v4644, 4294901760
    %v4646 = vsub.f32 %v4644, %v4645
    %v4647 = vand.u32 %v4646, 4294901760
    %4648 = vmatmul.mubr.f32.gmra.mrb[0].mxu0 %v4647
    %v4649 = vpop.f32.mrb[0].mxu0
    %v4650 = vadd.f32 0.0, %v4649
    %v4651 = vpop.f32.mrb[0].mxu0
    %v4652 = vand.u32 %v4376, 4294901760
    %v4653 = vsub.f32 %v4376, %v4652
    %v4654 = vand.u32 %v4653, 4294901760
    %v4655 = vsub.f32 %v4653, %v4654
    %v4656 = vand.u32 %v4655, 4294901760
    %4657 = vmatprep.mubr.f32.mxu0 %v4656
    %v4658 = vand.u32 %v4375, 4294901760
    %v4659 = vsub.f32 %v4375, %v4658
    %v4660 = vand.u32 %v4659, 4294901760
    %v4661 = vsub.f32 %v4659, %v4660
    %v4662 = vand.u32 %v4661, 4294901760
    %4663 = vmatmul.mubr.f32.gmra.mrb[0].mxu0 %v4662
    %v4664 = vpop.f32.mrb[0].mxu0
    %v4665 = vadd.f32 0.0, %v4664
    %v4666 = vpop.f32.mrb[0].mxu0
    %v4667 = vand.u32 %v4378, 4294901760
    %v4668 = vsub.f32 %v4378, %v4667
    %v4669 = vand.u32 %v4668, 4294901760
    %v4670 = vsub.f32 %v4668, %v4669
    %v4671 = vand.u32 %v4670, 4294901760
    %4672 = vmatprep.mubr.f32.mxu0 %v4671
    %v4673 = vand.u32 %v4377, 4294901760
    %v4674 = vsub.f32 %v4377, %v4673
    %v4675 = vand.u32 %v4674, 4294901760
    %v4676 = vsub.f32 %v4674, %v4675
    %v4677 = vand.u32 %v4676, 4294901760
    %4678 = vmatmul.mubr.f32.gmra.mrb[0].mxu0 %v4677
    %v4679 = vpop.f32.mrb[0].mxu0
    %v4680 = vadd.f32 0.0, %v4679
    %v4681 = vpop.f32.mrb[0].mxu0
    %v4682 = vand.u32 %v4380, 4294901760
    %v4683 = vsub.f32 %v4380, %v4682
    %v4684 = vand.u32 %v4683, 4294901760
    %v4685 = vsub.f32 %v4683, %v4684
    %v4686 = vand.u32 %v4685, 4294901760
    %4687 = vmatprep.mubr.f32.mxu0 %v4686
    %v4688 = vand.u32 %v4379, 4294901760
    %v4689 = vsub.f32 %v4379, %v4688
    %v4690 = vand.u32 %v4689, 4294901760
    %v4691 = vsub.f32 %v4689, %v4690
    %v4692 = vand.u32 %v4691, 4294901760
    %4693 = vmatmul.mubr.f32.gmra.mrb[0].mxu0 %v4692
    %v4694 = vpop.f32.mrb[0].mxu0
    %v4695 = vadd.f32 0.0, %v4694
    %v4696 = vpop.f32.mrb[0].mxu0
    %v4697 = vand.u32 %v4382, 4294901760
    %v4698 = vsub.f32 %v4382, %v4697
    %v4699 = vand.u32 %v4698, 4294901760
    %v4700 = vsub.f32 %v4698, %v4699
    %v4701 = vand.u32 %v4700, 4294901760
    %4702 = vmatprep.mubr.f32.mxu0 %v4701
    %v4703 = vand.u32 %v4381, 4294901760
    %v4704 = vsub.f32 %v4381, %v4703
    %v4705 = vand.u32 %v4704, 4294901760
    %v4706 = vsub.f32 %v4704, %v4705
    %v4707 = vand.u32 %v4706, 4294901760
    %4708 = vmatmul.mubr.f32.gmra.mrb[0].mxu0 %v4707
    %v4709 = vpop.f32.mrb[0].mxu0
    %v4710 = vadd.f32 0.0, %v4709
    %v4711 = vpop.f32.mrb[0].mxu0
    %v4712 = vand.u32 %v4384, 4294901760
    %v4713 = vsub.f32 %v4384, %v4712
    %v4714 = vand.u32 %v4713, 4294901760
    %v4715 = vsub.f32 %v4713, %v4714
    %v4716 = vand.u32 %v4715, 4294901760
    %4717 = vmatprep.mubr.f32.mxu0 %v4716
    %v4718 = vand.u32 %v4383, 4294901760
    %v4719 = vsub.f32 %v4383, %v4718
    %v4720 = vand.u32 %v4719, 4294901760
    %v4721 = vsub.f32 %v4719, %v4720
    %v4722 = vand.u32 %v4721, 4294901760
    %4723 = vmatmul.mubr.f32.gmra.mrb[0].mxu0 %v4722
    %v4724 = vpop.f32.mrb[0].mxu0
    %v4725 = vadd.f32 0.0, %v4724
    %v4726 = vpop.f32.mrb[0].mxu0
    %v4727 = vand.u32 %v4386, 4294901760
    %v4728 = vsub.f32 %v4386, %v4727
    %v4729 = vand.u32 %v4728, 4294901760
    %v4730 = vsub.f32 %v4728, %v4729
    %v4731 = vand.u32 %v4730, 4294901760
    %4732 = vmatprep.mubr.f32.mxu0 %v4731
    %v4733 = vand.u32 %v4385, 4294901760
    %v4734 = vsub.f32 %v4385, %v4733
    %v4735 = vand.u32 %v4734, 4294901760
    %v4736 = vsub.f32 %v4734, %v4735
    %v4737 = vand.u32 %v4736, 4294901760
    %4738 = vmatmul.mubr.f32.gmra.mrb[0].mxu0 %v4737
    %v4739 = vpop.f32.mrb[0].mxu0
    %v4740 = vadd.f32 0.0, %v4739
    %v4741 = vpop.f32.mrb[0].mxu0
    %v4742 = vand.u32 %v4388, 4294901760
    %v4743 = vsub.f32 %v4388, %v4742
    %v4744 = vand.u32 %v4743, 4294901760
    %v4745 = vsub.f32 %v4743, %v4744
    %v4746 = vand.u32 %v4745, 4294901760
    %4747 = vmatprep.mubr.f32.mxu0 %v4746
    %v4748 = vand.u32 %v4387, 4294901760
    %v4749 = vsub.f32 %v4387, %v4748
    %v4750 = vand.u32 %v4749, 4294901760
    %v4751 = vsub.f32 %v4749, %v4750
    %v4752 = vand.u32 %v4751, 4294901760
    %4753 = vmatmul.mubr.f32.gmra.mrb[0].mxu0 %v4752
    %v4754 = vpop.f32.mrb[0].mxu0
    %v4755 = vadd.f32 0.0, %v4754
    %v4756 = vpop.f32.mrb[0].mxu0
    %4757 = vdwg.mxu0
    %v4758 = vand.u32 %v4390, 4294901760
    %v4759 = vsub.f32 %v4390, %v4758
    %v4760 = vand.u32 %v4759, 4294901760
    %v4761 = vsub.f32 %v4759, %v4760
    %v4762 = vand.u32 %v4761, 4294901760
    %4763 = vmatprep.subr.mxu0 %v4762
    %v4764 = vand.u32 %v4389, 4294901760
    %v4765 = vsub.f32 %v4389, %v4764
    %v4766 = vand.u32 %v4765, 4294901760
    %v4767 = vsub.f32 %v4765, %v4766
    %v4768 = vand.u32 %v4767, 4294901760
    %4769 = vmatpush1.xpose.msra.mxu0 %v4768
    %v4770 = vand.u32 %v4392, 4294901760
    %v4771 = vsub.f32 %v4392, %v4770
    %v4772 = vand.u32 %v4771, 4294901760
    %v4773 = vsub.f32 %v4771, %v4772
    %v4774 = vand.u32 %v4773, 4294901760
    %4775 = vmatprep.subr.mxu0 %v4774
    %v4776 = vand.u32 %v4391, 4294901760
    %v4777 = vsub.f32 %v4391, %v4776
    %v4778 = vand.u32 %v4777, 4294901760
    %v4779 = vsub.f32 %v4777, %v4778
    %v4780 = vand.u32 %v4779, 4294901760
    %4781 = vmatpush1.xpose.msra.mxu0 %v4780
    %v4782 = vand.u32 %v4394, 4294901760
    %v4783 = vsub.f32 %v4394, %v4782
    %v4784 = vand.u32 %v4783, 4294901760
    %v4785 = vsub.f32 %v4783, %v4784
    %v4786 = vand.u32 %v4785, 4294901760
    %4787 = vmatprep.subr.mxu0 %v4786
    %v4788 = vand.u32 %v4393, 4294901760
    %v4789 = vsub.f32 %v4393, %v4788
    %v4790 = vand.u32 %v4789, 4294901760
    %v4791 = vsub.f32 %v4789, %v4790
    %v4792 = vand.u32 %v4791, 4294901760
    %4793 = vmatpush1.xpose.msra.mxu0 %v4792
    %v4794 = vand.u32 %v4396, 4294901760
    %v4795 = vsub.f32 %v4396, %v4794
    %v4796 = vand.u32 %v4795, 4294901760
    %v4797 = vsub.f32 %v4795, %v4796
    %v4798 = vand.u32 %v4797, 4294901760
    %4799 = vmatprep.subr.mxu0 %v4798
    %v4800 = vand.u32 %v4395, 4294901760
    %v4801 = vsub.f32 %v4395, %v4800
    %v4802 = vand.u32 %v4801, 4294901760
    %v4803 = vsub.f32 %v4801, %v4802
    %v4804 = vand.u32 %v4803, 4294901760
    %4805 = vmatpush1.xpose.msra.mxu0 %v4804
    %v4806 = vand.u32 %v4398, 4294901760
    %v4807 = vsub.f32 %v4398, %v4806
    %v4808 = vand.u32 %v4807, 4294901760
    %v4809 = vsub.f32 %v4807, %v4808
    %v4810 = vand.u32 %v4809, 4294901760
    %4811 = vmatprep.subr.mxu0 %v4810
    %v4812 = vand.u32 %v4397, 4294901760
    %v4813 = vsub.f32 %v4397, %v4812
    %v4814 = vand.u32 %v4813, 4294901760
    %v4815 = vsub.f32 %v4813, %v4814
    %v4816 = vand.u32 %v4815, 4294901760
    %4817 = vmatpush1.xpose.msra.mxu0 %v4816
    %v4818 = vand.u32 %v4400, 4294901760
    %v4819 = vsub.f32 %v4400, %v4818
    %v4820 = vand.u32 %v4819, 4294901760
    %v4821 = vsub.f32 %v4819, %v4820
    %v4822 = vand.u32 %v4821, 4294901760
    %4823 = vmatprep.subr.mxu0 %v4822
    %v4824 = vand.u32 %v4399, 4294901760
    %v4825 = vsub.f32 %v4399, %v4824
    %v4826 = vand.u32 %v4825, 4294901760
    %v4827 = vsub.f32 %v4825, %v4826
    %v4828 = vand.u32 %v4827, 4294901760
    %4829 = vmatpush1.xpose.msra.mxu0 %v4828
    %v4830 = vand.u32 %v4402, 4294901760
    %v4831 = vsub.f32 %v4402, %v4830
    %v4832 = vand.u32 %v4831, 4294901760
    %v4833 = vsub.f32 %v4831, %v4832
    %v4834 = vand.u32 %v4833, 4294901760
    %4835 = vmatprep.subr.mxu0 %v4834
    %v4836 = vand.u32 %v4401, 4294901760
    %v4837 = vsub.f32 %v4401, %v4836
    %v4838 = vand.u32 %v4837, 4294901760
    %v4839 = vsub.f32 %v4837, %v4838
    %v4840 = vand.u32 %v4839, 4294901760
    %4841 = vmatpush1.xpose.msra.mxu0 %v4840
    %v4842 = vand.u32 %v4404, 4294901760
    %v4843 = vsub.f32 %v4404, %v4842
    %v4844 = vand.u32 %v4843, 4294901760
    %v4845 = vsub.f32 %v4843, %v4844
    %v4846 = vand.u32 %v4845, 4294901760
    %4847 = vmatprep.subr.mxu0 %v4846
    %v4848 = vand.u32 %v4403, 4294901760
    %v4849 = vsub.f32 %v4403, %v4848
    %v4850 = vand.u32 %v4849, 4294901760
    %v4851 = vsub.f32 %v4849, %v4850
    %v4852 = vand.u32 %v4851, 4294901760
    %4853 = vmatpush1.xpose.msra.mxu0 %v4852
    %v4854 = vand.u32 %v4406, 4294901760
    %v4855 = vsub.f32 %v4406, %v4854
    %v4856 = vand.u32 %v4855, 4294901760
    %v4857 = vsub.f32 %v4855, %v4856
    %v4858 = vand.u32 %v4857, 4294901760
    %4859 = vmatprep.subr.mxu0 %v4858
    %v4860 = vand.u32 %v4405, 4294901760
    %v4861 = vsub.f32 %v4405, %v4860
    %v4862 = vand.u32 %v4861, 4294901760
    %v4863 = vsub.f32 %v4861, %v4862
    %v4864 = vand.u32 %v4863, 4294901760
    %4865 = vmatpush1.xpose.msra.mxu0 %v4864
    %v4866 = vand.u32 %v4408, 4294901760
    %v4867 = vsub.f32 %v4408, %v4866
    %v4868 = vand.u32 %v4867, 4294901760
    %v4869 = vsub.f32 %v4867, %v4868
    %v4870 = vand.u32 %v4869, 4294901760
    %4871 = vmatprep.subr.mxu0 %v4870
    %v4872 = vand.u32 %v4407, 4294901760
    %v4873 = vsub.f32 %v4407, %v4872
    %v4874 = vand.u32 %v4873, 4294901760
    %v4875 = vsub.f32 %v4873, %v4874
    %v4876 = vand.u32 %v4875, 4294901760
    %4877 = vmatpush1.xpose.msra.mxu0 %v4876
    %v4878 = vand.u32 %v4410, 4294901760
    %v4879 = vsub.f32 %v4410, %v4878
    %v4880 = vand.u32 %v4879, 4294901760
    %v4881 = vsub.f32 %v4879, %v4880
    %v4882 = vand.u32 %v4881, 4294901760
    %4883 = vmatprep.subr.mxu0 %v4882
    %v4884 = vand.u32 %v4409, 4294901760
    %v4885 = vsub.f32 %v4409, %v4884
    %v4886 = vand.u32 %v4885, 4294901760
    %v4887 = vsub.f32 %v4885, %v4886
    %v4888 = vand.u32 %v4887, 4294901760
    %4889 = vmatpush1.xpose.msra.mxu0 %v4888
    %v4890 = vand.u32 %v4412, 4294901760
    %v4891 = vsub.f32 %v4412, %v4890
    %v4892 = vand.u32 %v4891, 4294901760
    %v4893 = vsub.f32 %v4891, %v4892
    %v4894 = vand.u32 %v4893, 4294901760
    %4895 = vmatprep.subr.mxu0 %v4894
    %v4896 = vand.u32 %v4411, 4294901760
    %v4897 = vsub.f32 %v4411, %v4896
    %v4898 = vand.u32 %v4897, 4294901760
    %v4899 = vsub.f32 %v4897, %v4898
    %v4900 = vand.u32 %v4899, 4294901760
    %4901 = vmatpush1.xpose.msra.mxu0 %v4900
    %v4902 = vand.u32 %v4414, 4294901760
    %v4903 = vsub.f32 %v4414, %v4902
    %v4904 = vand.u32 %v4903, 4294901760
    %v4905 = vsub.f32 %v4903, %v4904
    %v4906 = vand.u32 %v4905, 4294901760
    %4907 = vmatprep.subr.mxu0 %v4906
    %v4908 = vand.u32 %v4413, 4294901760
    %v4909 = vsub.f32 %v4413, %v4908
    %v4910 = vand.u32 %v4909, 4294901760
    %v4911 = vsub.f32 %v4909, %v4910
    %v4912 = vand.u32 %v4911, 4294901760
    %4913 = vmatpush1.xpose.msra.mxu0 %v4912
    %v4914 = vand.u32 %v4416, 4294901760
    %v4915 = vsub.f32 %v4416, %v4914
    %v4916 = vand.u32 %v4915, 4294901760
    %v4917 = vsub.f32 %v4915, %v4916
    %v4918 = vand.u32 %v4917, 4294901760
    %4919 = vmatprep.subr.mxu0 %v4918
    %v4920 = vand.u32 %v4415, 4294901760
    %v4921 = vsub.f32 %v4415, %v4920
    %v4922 = vand.u32 %v4921, 4294901760
    %v4923 = vsub.f32 %v4921, %v4922
    %v4924 = vand.u32 %v4923, 4294901760
    %4925 = vmatpush1.xpose.msra.mxu0 %v4924
    %v4926 = vand.u32 %v4418, 4294901760
    %v4927 = vsub.f32 %v4418, %v4926
    %v4928 = vand.u32 %v4927, 4294901760
    %v4929 = vsub.f32 %v4927, %v4928
    %v4930 = vand.u32 %v4929, 4294901760
    %4931 = vmatprep.subr.mxu0 %v4930
    %v4932 = vand.u32 %v4417, 4294901760
    %v4933 = vsub.f32 %v4417, %v4932
    %v4934 = vand.u32 %v4933, 4294901760
    %v4935 = vsub.f32 %v4933, %v4934
    %v4936 = vand.u32 %v4935, 4294901760
    %4937 = vmatpush1.xpose.msra.mxu0 %v4936
    %v4938 = vand.u32 %v4420, 4294901760
    %v4939 = vsub.f32 %v4420, %v4938
    %v4940 = vand.u32 %v4939, 4294901760
    %v4941 = vsub.f32 %v4939, %v4940
    %v4942 = vand.u32 %v4941, 4294901760
    %4943 = vmatprep.subr.mxu0 %v4942
    %v4944 = vand.u32 %v4419, 4294901760
    %v4945 = vsub.f32 %v4419, %v4944
    %v4946 = vand.u32 %v4945, 4294901760
    %v4947 = vsub.f32 %v4945, %v4946
    %v4948 = vand.u32 %v4947, 4294901760
    %4949 = vmatpush1.xpose.msra.mxu0 %v4948
    %4950 = vmatprep.subr.mxu0 0.0
    %4951 = vmatpush1.xpose.msra.mxu0 0.0
    %4952 = vmatprep.subr.mxu0 0.0
    %4953 = vmatpush1.xpose.msra.mxu0 0.0
    %4954 = vmatprep.subr.mxu0 0.0
    %4955 = vmatpush1.xpose.msra.mxu0 0.0
    %4956 = vmatprep.subr.mxu0 0.0
    %4957 = vmatpush1.xpose.msra.mxu0 0.0
    %4958 = vmatprep.subr.mxu0 0.0
    %4959 = vmatpush1.xpose.msra.mxu0 0.0
    %4960 = vmatprep.subr.mxu0 0.0
    %4961 = vmatpush1.xpose.msra.mxu0 0.0
    %4962 = vmatprep.subr.mxu0 0.0
    %4963 = vmatpush1.xpose.msra.mxu0 0.0
    %4964 = vmatprep.subr.mxu0 0.0
    %4965 = vmatpush1.xpose.msra.mxu0 0.0
    %4966 = vmatprep.subr.mxu0 0.0
    %4967 = vmatpush1.xpose.msra.mxu0 0.0
    %4968 = vmatprep.subr.mxu0 0.0
    %4969 = vmatpush1.xpose.msra.mxu0 0.0
    %4970 = vmatprep.subr.mxu0 0.0
    %4971 = vmatpush1.xpose.msra.mxu0 0.0
    %4972 = vmatprep.subr.mxu0 0.0
    %4973 = vmatpush1.xpose.msra.mxu0 0.0
    %4974 = vmatprep.subr.mxu0 0.0
    %4975 = vmatpush1.xpose.msra.mxu0 0.0
    %4976 = vmatprep.subr.mxu0 0.0
    %4977 = vmatpush1.xpose.msra.mxu0 0.0
    %4978 = vmatprep.subr.mxu0 0.0
    %4979 = vmatpush1.xpose.msra.mxu0 0.0
    %4980 = vmatprep.subr.mxu0 0.0
    %4981 = vmatpush1.xpose.msra.mxu0 0.0
    %v4982 = vand.u32 %v4358, 4294901760
    %4983 = vmatprep.mubr.f32.mxu0 %v4982
    %v4984 = vand.u32 %v4357, 4294901760
    %4985 = vmatmul.mubr.f32.gmra.mrb[0].mxu0 %v4984
    %v4986 = vpop.f32.mrb[0].mxu0
    %v4987 = vadd.f32 %v4530, %v4986
    %v4988 = vpop.f32.mrb[0].mxu0
    %v4989 = vand.u32 %v4360, 4294901760
    %4990 = vmatprep.mubr.f32.mxu0 %v4989
    %v4991 = vand.u32 %v4359, 4294901760
    %4992 = vmatmul.mubr.f32.gmra.mrb[0].mxu0 %v4991
    %v4993 = vpop.f32.mrb[0].mxu0
    %v4994 = vadd.f32 %v4545, %v4993
    %v4995 = vpop.f32.mrb[0].mxu0
    %v4996 = vand.u32 %v4362, 4294901760
    %4997 = vmatprep.mubr.f32.mxu0 %v4996
    %v4998 = vand.u32 %v4361, 4294901760
    %4999 = vmatmul.mubr.f32.gmra.mrb[0].mxu0 %v4998
    %v5000 = vpop.f32.mrb[0].mxu0
    %v5001 = vadd.f32 %v4560, %v5000
    %v5002 = vpop.f32.mrb[0].mxu0
    %v5003 = vand.u32 %v4364, 4294901760
    %5004 = vmatprep.mubr.f32.mxu0 %v5003
    %v5005 = vand.u32 %v4363, 4294901760
    %5006 = vmatmul.mubr.f32.gmra.mrb[0].mxu0 %v5005
    %v5007 = vpop.f32.mrb[0].mxu0
    %v5008 = vadd.f32 %v4575, %v5007
    %v5009 = vpop.f32.mrb[0].mxu0
    %v5010 = vand.u32 %v4366, 4294901760
    %5011 = vmatprep.mubr.f32.mxu0 %v5010
    %v5012 = vand.u32 %v4365, 4294901760
    %5013 = vmatmul.mubr.f32.gmra.mrb[0].mxu0 %v5012
    %v5014 = vpop.f32.mrb[0].mxu0
    %v5015 = vadd.f32 %v4590, %v5014
    %v5016 = vpop.f32.mrb[0].mxu0
    %v5017 = vand.u32 %v4368, 4294901760
    %5018 = vmatprep.mubr.f32.mxu0 %v5017
    %v5019 = vand.u32 %v4367, 4294901760
    %5020 = vmatmul.mubr.f32.gmra.mrb[0].mxu0 %v5019
    %v5021 = vpop.f32.mrb[0].mxu0
    %v5022 = vadd.f32 %v4605, %v5021
    %v5023 = vpop.f32.mrb[0].mxu0
    %v5024 = vand.u32 %v4370, 4294901760
    %5025 = vmatprep.mubr.f32.mxu0 %v5024
    %v5026 = vand.u32 %v4369, 4294901760
    %5027 = vmatmul.mubr.f32.gmra.mrb[0].mxu0 %v5026
    %v5028 = vpop.f32.mrb[0].mxu0
    %v5029 = vadd.f32 %v4620, %v5028
    %v5030 = vpop.f32.mrb[0].mxu0
    %v5031 = vand.u32 %v4372, 4294901760
    %5032 = vmatprep.mubr.f32.mxu0 %v5031
    %v5033 = vand.u32 %v4371, 4294901760
    %5034 = vmatmul.mubr.f32.gmra.mrb[0].mxu0 %v5033
    %v5035 = vpop.f32.mrb[0].mxu0
    %v5036 = vadd.f32 %v4635, %v5035
    %v5037 = vpop.f32.mrb[0].mxu0
    %v5038 = vand.u32 %v4374, 4294901760
    %5039 = vmatprep.mubr.f32.mxu0 %v5038
    %v5040 = vand.u32 %v4373, 4294901760
    %5041 = vmatmul.mubr.f32.gmra.mrb[0].mxu0 %v5040
    %v5042 = vpop.f32.mrb[0].mxu0
    %v5043 = vadd.f32 %v4650, %v5042
    %v5044 = vpop.f32.mrb[0].mxu0
    %v5045 = vand.u32 %v4376, 4294901760
    %5046 = vmatprep.mubr.f32.mxu0 %v5045
    %v5047 = vand.u32 %v4375, 4294901760
    %5048 = vmatmul.mubr.f32.gmra.mrb[0].mxu0 %v5047
    %v5049 = vpop.f32.mrb[0].mxu0
    %v5050 = vadd.f32 %v4665, %v5049
    %v5051 = vpop.f32.mrb[0].mxu0
    %v5052 = vand.u32 %v4378, 4294901760
    %5053 = vmatprep.mubr.f32.mxu0 %v5052
    %v5054 = vand.u32 %v4377, 4294901760
    %5055 = vmatmul.mubr.f32.gmra.mrb[0].mxu0 %v5054
    %v5056 = vpop.f32.mrb[0].mxu0
    %v5057 = vadd.f32 %v4680, %v5056
    %v5058 = vpop.f32.mrb[0].mxu0
    %v5059 = vand.u32 %v4380, 4294901760
    %5060 = vmatprep.mubr.f32.mxu0 %v5059
    %v5061 = vand.u32 %v4379, 4294901760
    %5062 = vmatmul.mubr.f32.gmra.mrb[0].mxu0 %v5061
    %v5063 = vpop.f32.mrb[0].mxu0
    %v5064 = vadd.f32 %v4695, %v5063
    %v5065 = vpop.f32.mrb[0].mxu0
    %v5066 = vand.u32 %v4382, 4294901760
    %5067 = vmatprep.mubr.f32.mxu0 %v5066
    %v5068 = vand.u32 %v4381, 4294901760
    %5069 = vmatmul.mubr.f32.gmra.mrb[0].mxu0 %v5068
    %v5070 = vpop.f32.mrb[0].mxu0
    %v5071 = vadd.f32 %v4710, %v5070
    %v5072 = vpop.f32.mrb[0].mxu0
    %v5073 = vand.u32 %v4384, 4294901760
    %5074 = vmatprep.mubr.f32.mxu0 %v5073
    %v5075 = vand.u32 %v4383, 4294901760
    %5076 = vmatmul.mubr.f32.gmra.mrb[0].mxu0 %v5075
    %v5077 = vpop.f32.mrb[0].mxu0
    %v5078 = vadd.f32 %v4725, %v5077
    %v5079 = vpop.f32.mrb[0].mxu0
    %v5080 = vand.u32 %v4386, 4294901760
    %5081 = vmatprep.mubr.f32.mxu0 %v5080
    %v5082 = vand.u32 %v4385, 4294901760
    %5083 = vmatmul.mubr.f32.gmra.mrb[0].mxu0 %v5082
    %v5084 = vpop.f32.mrb[0].mxu0
    %v5085 = vadd.f32 %v4740, %v5084
    %v5086 = vpop.f32.mrb[0].mxu0
    %v5087 = vand.u32 %v4388, 4294901760
    %5088 = vmatprep.mubr.f32.mxu0 %v5087
    %v5089 = vand.u32 %v4387, 4294901760
    %5090 = vmatmul.mubr.f32.gmra.mrb[0].mxu0 %v5089
    %v5091 = vpop.f32.mrb[0].mxu0
    %v5092 = vadd.f32 %v4755, %v5091
    %v5093 = vpop.f32.mrb[0].mxu0
    %5094 = vdwg.mxu0
    %v5095 = vand.u32 %v4390, 4294901760
    %v5096 = vsub.f32 %v4390, %v5095
    %5097 = vmatprep.subr.mxu0 %v5096
    %v5098 = vand.u32 %v4389, 4294901760
    %v5099 = vsub.f32 %v4389, %v5098
    %5100 = vmatpush1.xpose.msra.mxu0 %v5099
    %v5101 = vand.u32 %v4392, 4294901760
    %v5102 = vsub.f32 %v4392, %v5101
    %5103 = vmatprep.subr.mxu0 %v5102
    %v5104 = vand.u32 %v4391, 4294901760
    %v5105 = vsub.f32 %v4391, %v5104
    %5106 = vmatpush1.xpose.msra.mxu0 %v5105
    %v5107 = vand.u32 %v4394, 4294901760
    %v5108 = vsub.f32 %v4394, %v5107
    %5109 = vmatprep.subr.mxu0 %v5108
    %v5110 = vand.u32 %v4393, 4294901760
    %v5111 = vsub.f32 %v4393, %v5110
    %5112 = vmatpush1.xpose.msra.mxu0 %v5111
    %v5113 = vand.u32 %v4396, 4294901760
    %v5114 = vsub.f32 %v4396, %v5113
    %5115 = vmatprep.subr.mxu0 %v5114
    %v5116 = vand.u32 %v4395, 4294901760
    %v5117 = vsub.f32 %v4395, %v5116
    %5118 = vmatpush1.xpose.msra.mxu0 %v5117
    %v5119 = vand.u32 %v4398, 4294901760
    %v5120 = vsub.f32 %v4398, %v5119
    %5121 = vmatprep.subr.mxu0 %v5120
    %v5122 = vand.u32 %v4397, 4294901760
    %v5123 = vsub.f32 %v4397, %v5122
    %5124 = vmatpush1.xpose.msra.mxu0 %v5123
    %v5125 = vand.u32 %v4400, 4294901760
    %v5126 = vsub.f32 %v4400, %v5125
    %5127 = vmatprep.subr.mxu0 %v5126
    %v5128 = vand.u32 %v4399, 4294901760
    %v5129 = vsub.f32 %v4399, %v5128
    %5130 = vmatpush1.xpose.msra.mxu0 %v5129
    %v5131 = vand.u32 %v4402, 4294901760
    %v5132 = vsub.f32 %v4402, %v5131
    %5133 = vmatprep.subr.mxu0 %v5132
    %v5134 = vand.u32 %v4401, 4294901760
    %v5135 = vsub.f32 %v4401, %v5134
    %5136 = vmatpush1.xpose.msra.mxu0 %v5135
    %v5137 = vand.u32 %v4404, 4294901760
    %v5138 = vsub.f32 %v4404, %v5137
    %5139 = vmatprep.subr.mxu0 %v5138
    %v5140 = vand.u32 %v4403, 4294901760
    %v5141 = vsub.f32 %v4403, %v5140
    %5142 = vmatpush1.xpose.msra.mxu0 %v5141
    %v5143 = vand.u32 %v4406, 4294901760
    %v5144 = vsub.f32 %v4406, %v5143
    %5145 = vmatprep.subr.mxu0 %v5144
    %v5146 = vand.u32 %v4405, 4294901760
    %v5147 = vsub.f32 %v4405, %v5146
    %5148 = vmatpush1.xpose.msra.mxu0 %v5147
    %v5149 = vand.u32 %v4408, 4294901760
    %v5150 = vsub.f32 %v4408, %v5149
    %5151 = vmatprep.subr.mxu0 %v5150
    %v5152 = vand.u32 %v4407, 4294901760
    %v5153 = vsub.f32 %v4407, %v5152
    %5154 = vmatpush1.xpose.msra.mxu0 %v5153
    %v5155 = vand.u32 %v4410, 4294901760
    %v5156 = vsub.f32 %v4410, %v5155
    %5157 = vmatprep.subr.mxu0 %v5156
    %v5158 = vand.u32 %v4409, 4294901760
    %v5159 = vsub.f32 %v4409, %v5158
    %5160 = vmatpush1.xpose.msra.mxu0 %v5159
    %v5161 = vand.u32 %v4412, 4294901760
    %v5162 = vsub.f32 %v4412, %v5161
    %5163 = vmatprep.subr.mxu0 %v5162
    %v5164 = vand.u32 %v4411, 4294901760
    %v5165 = vsub.f32 %v4411, %v5164
    %5166 = vmatpush1.xpose.msra.mxu0 %v5165
    %v5167 = vand.u32 %v4414, 4294901760
    %v5168 = vsub.f32 %v4414, %v5167
    %5169 = vmatprep.subr.mxu0 %v5168
    %v5170 = vand.u32 %v4413, 4294901760
    %v5171 = vsub.f32 %v4413, %v5170
    %5172 = vmatpush1.xpose.msra.mxu0 %v5171
    %v5173 = vand.u32 %v4416, 4294901760
    %v5174 = vsub.f32 %v4416, %v5173
    %5175 = vmatprep.subr.mxu0 %v5174
    %v5176 = vand.u32 %v4415, 4294901760
    %v5177 = vsub.f32 %v4415, %v5176
    %5178 = vmatpush1.xpose.msra.mxu0 %v5177
    %v5179 = vand.u32 %v4418, 4294901760
    %v5180 = vsub.f32 %v4418, %v5179
    %5181 = vmatprep.subr.mxu0 %v5180
    %v5182 = vand.u32 %v4417, 4294901760
    %v5183 = vsub.f32 %v4417, %v5182
    %5184 = vmatpush1.xpose.msra.mxu0 %v5183
    %v5185 = vand.u32 %v4420, 4294901760
    %v5186 = vsub.f32 %v4420, %v5185
    %5187 = vmatprep.subr.mxu0 %v5186
    %v5188 = vand.u32 %v4419, 4294901760
    %v5189 = vsub.f32 %v4419, %v5188
    %5190 = vmatpush1.xpose.msra.mxu0 %v5189
    %5191 = vmatprep.subr.mxu0 0.0
    %5192 = vmatpush1.xpose.msra.mxu0 0.0
    %5193 = vmatprep.subr.mxu0 0.0
    %5194 = vmatpush1.xpose.msra.mxu0 0.0
    %5195 = vmatprep.subr.mxu0 0.0
    %5196 = vmatpush1.xpose.msra.mxu0 0.0
    %5197 = vmatprep.subr.mxu0 0.0
    %5198 = vmatpush1.xpose.msra.mxu0 0.0
    %5199 = vmatprep.subr.mxu0 0.0
    %5200 = vmatpush1.xpose.msra.mxu0 0.0
    %5201 = vmatprep.subr.mxu0 0.0
    %5202 = vmatpush1.xpose.msra.mxu0 0.0
    %5203 = vmatprep.subr.mxu0 0.0
    %5204 = vmatpush1.xpose.msra.mxu0 0.0
    %5205 = vmatprep.subr.mxu0 0.0
    %5206 = vmatpush1.xpose.msra.mxu0 0.0
    %5207 = vmatprep.subr.mxu0 0.0
    %5208 = vmatpush1.xpose.msra.mxu0 0.0
    %5209 = vmatprep.subr.mxu0 0.0
    %5210 = vmatpush1.xpose.msra.mxu0 0.0
    %5211 = vmatprep.subr.mxu0 0.0
    %5212 = vmatpush1.xpose.msra.mxu0 0.0
    %5213 = vmatprep.subr.mxu0 0.0
    %5214 = vmatpush1.xpose.msra.mxu0 0.0
    %5215 = vmatprep.subr.mxu0 0.0
    %5216 = vmatpush1.xpose.msra.mxu0 0.0
    %5217 = vmatprep.subr.mxu0 0.0
    %5218 = vmatpush1.xpose.msra.mxu0 0.0
    %5219 = vmatprep.subr.mxu0 0.0
    %5220 = vmatpush1.xpose.msra.mxu0 0.0
    %5221 = vmatprep.subr.mxu0 0.0
    %5222 = vmatpush1.xpose.msra.mxu0 0.0
    %v5223 = vand.u32 %v4358, 4294901760
    %v5224 = vsub.f32 %v4358, %v5223
    %5225 = vmatprep.mubr.f32.mxu0 %v5224
    %v5226 = vand.u32 %v4357, 4294901760
    %v5227 = vsub.f32 %v4357, %v5226
    %5228 = vmatmul.mubr.f32.gmra.mrb[0].mxu0 %v5227
    %v5229 = vpop.f32.mrb[0].mxu0
    %v5230 = vadd.f32 %v4987, %v5229
    %v5231 = vpop.f32.mrb[0].mxu0
    %v5232 = vand.u32 %v4360, 4294901760
    %v5233 = vsub.f32 %v4360, %v5232
    %5234 = vmatprep.mubr.f32.mxu0 %v5233
    %v5235 = vand.u32 %v4359, 4294901760
    %v5236 = vsub.f32 %v4359, %v5235
    %5237 = vmatmul.mubr.f32.gmra.mrb[0].mxu0 %v5236
    %v5238 = vpop.f32.mrb[0].mxu0
    %v5239 = vadd.f32 %v4994, %v5238
    %v5240 = vpop.f32.mrb[0].mxu0
    %v5241 = vand.u32 %v4362, 4294901760
    %v5242 = vsub.f32 %v4362, %v5241
    %5243 = vmatprep.mubr.f32.mxu0 %v5242
    %v5244 = vand.u32 %v4361, 4294901760
    %v5245 = vsub.f32 %v4361, %v5244
    %5246 = vmatmul.mubr.f32.gmra.mrb[0].mxu0 %v5245
    %v5247 = vpop.f32.mrb[0].mxu0
    %v5248 = vadd.f32 %v5001, %v5247
    %v5249 = vpop.f32.mrb[0].mxu0
    %v5250 = vand.u32 %v4364, 4294901760
    %v5251 = vsub.f32 %v4364, %v5250
    %5252 = vmatprep.mubr.f32.mxu0 %v5251
    %v5253 = vand.u32 %v4363, 4294901760
    %v5254 = vsub.f32 %v4363, %v5253
    %5255 = vmatmul.mubr.f32.gmra.mrb[0].mxu0 %v5254
    %v5256 = vpop.f32.mrb[0].mxu0
    %v5257 = vadd.f32 %v5008, %v5256
    %v5258 = vpop.f32.mrb[0].mxu0
    %v5259 = vand.u32 %v4366, 4294901760
    %v5260 = vsub.f32 %v4366, %v5259
    %5261 = vmatprep.mubr.f32.mxu0 %v5260
    %v5262 = vand.u32 %v4365, 4294901760
    %v5263 = vsub.f32 %v4365, %v5262
    %5264 = vmatmul.mubr.f32.gmra.mrb[0].mxu0 %v5263
    %v5265 = vpop.f32.mrb[0].mxu0
    %v5266 = vadd.f32 %v5015, %v5265
    %v5267 = vpop.f32.mrb[0].mxu0
    %v5268 = vand.u32 %v4368, 4294901760
    %v5269 = vsub.f32 %v4368, %v5268
    %5270 = vmatprep.mubr.f32.mxu0 %v5269
    %v5271 = vand.u32 %v4367, 4294901760
    %v5272 = vsub.f32 %v4367, %v5271
    %5273 = vmatmul.mubr.f32.gmra.mrb[0].mxu0 %v5272
    %v5274 = vpop.f32.mrb[0].mxu0
    %v5275 = vadd.f32 %v5022, %v5274
    %v5276 = vpop.f32.mrb[0].mxu0
    %v5277 = vand.u32 %v4370, 4294901760
    %v5278 = vsub.f32 %v4370, %v5277
    %5279 = vmatprep.mubr.f32.mxu0 %v5278
    %v5280 = vand.u32 %v4369, 4294901760
    %v5281 = vsub.f32 %v4369, %v5280
    %5282 = vmatmul.mubr.f32.gmra.mrb[0].mxu0 %v5281
    %v5283 = vpop.f32.mrb[0].mxu0
    %v5284 = vadd.f32 %v5029, %v5283
    %v5285 = vpop.f32.mrb[0].mxu0
    %v5286 = vand.u32 %v4372, 4294901760
    %v5287 = vsub.f32 %v4372, %v5286
    %5288 = vmatprep.mubr.f32.mxu0 %v5287
    %v5289 = vand.u32 %v4371, 4294901760
    %v5290 = vsub.f32 %v4371, %v5289
    %5291 = vmatmul.mubr.f32.gmra.mrb[0].mxu0 %v5290
    %v5292 = vpop.f32.mrb[0].mxu0
    %v5293 = vadd.f32 %v5036, %v5292
    %v5294 = vpop.f32.mrb[0].mxu0
    %v5295 = vand.u32 %v4374, 4294901760
    %v5296 = vsub.f32 %v4374, %v5295
    %5297 = vmatprep.mubr.f32.mxu0 %v5296
    %v5298 = vand.u32 %v4373, 4294901760
    %v5299 = vsub.f32 %v4373, %v5298
    %5300 = vmatmul.mubr.f32.gmra.mrb[0].mxu0 %v5299
    %v5301 = vpop.f32.mrb[0].mxu0
    %v5302 = vadd.f32 %v5043, %v5301
    %v5303 = vpop.f32.mrb[0].mxu0
    %v5304 = vand.u32 %v4376, 4294901760
    %v5305 = vsub.f32 %v4376, %v5304
    %5306 = vmatprep.mubr.f32.mxu0 %v5305
    %v5307 = vand.u32 %v4375, 4294901760
    %v5308 = vsub.f32 %v4375, %v5307
    %5309 = vmatmul.mubr.f32.gmra.mrb[0].mxu0 %v5308
    %v5310 = vpop.f32.mrb[0].mxu0
    %v5311 = vadd.f32 %v5050, %v5310
    %v5312 = vpop.f32.mrb[0].mxu0
    %v5313 = vand.u32 %v4378, 4294901760
    %v5314 = vsub.f32 %v4378, %v5313
    %5315 = vmatprep.mubr.f32.mxu0 %v5314
    %v5316 = vand.u32 %v4377, 4294901760
    %v5317 = vsub.f32 %v4377, %v5316
    %5318 = vmatmul.mubr.f32.gmra.mrb[0].mxu0 %v5317
    %v5319 = vpop.f32.mrb[0].mxu0
    %v5320 = vadd.f32 %v5057, %v5319
    %v5321 = vpop.f32.mrb[0].mxu0
    %v5322 = vand.u32 %v4380, 4294901760
    %v5323 = vsub.f32 %v4380, %v5322
    %5324 = vmatprep.mubr.f32.mxu0 %v5323
    %v5325 = vand.u32 %v4379, 4294901760
    %v5326 = vsub.f32 %v4379, %v5325
    %5327 = vmatmul.mubr.f32.gmra.mrb[0].mxu0 %v5326
    %v5328 = vpop.f32.mrb[0].mxu0
    %v5329 = vadd.f32 %v5064, %v5328
    %v5330 = vpop.f32.mrb[0].mxu0
    %v5331 = vand.u32 %v4382, 4294901760
    %v5332 = vsub.f32 %v4382, %v5331
    %5333 = vmatprep.mubr.f32.mxu0 %v5332
    %v5334 = vand.u32 %v4381, 4294901760
    %v5335 = vsub.f32 %v4381, %v5334
    %5336 = vmatmul.mubr.f32.gmra.mrb[0].mxu0 %v5335
    %v5337 = vpop.f32.mrb[0].mxu0
    %v5338 = vadd.f32 %v5071, %v5337
    %v5339 = vpop.f32.mrb[0].mxu0
    %v5340 = vand.u32 %v4384, 4294901760
    %v5341 = vsub.f32 %v4384, %v5340
    %5342 = vmatprep.mubr.f32.mxu0 %v5341
    %v5343 = vand.u32 %v4383, 4294901760
    %v5344 = vsub.f32 %v4383, %v5343
    %5345 = vmatmul.mubr.f32.gmra.mrb[0].mxu0 %v5344
    %v5346 = vpop.f32.mrb[0].mxu0
    %v5347 = vadd.f32 %v5078, %v5346
    %v5348 = vpop.f32.mrb[0].mxu0
    %v5349 = vand.u32 %v4386, 4294901760
    %v5350 = vsub.f32 %v4386, %v5349
    %5351 = vmatprep.mubr.f32.mxu0 %v5350
    %v5352 = vand.u32 %v4385, 4294901760
    %v5353 = vsub.f32 %v4385, %v5352
    %5354 = vmatmul.mubr.f32.gmra.mrb[0].mxu0 %v5353
    %v5355 = vpop.f32.mrb[0].mxu0
    %v5356 = vadd.f32 %v5085, %v5355
    %v5357 = vpop.f32.mrb[0].mxu0
    %v5358 = vand.u32 %v4388, 4294901760
    %v5359 = vsub.f32 %v4388, %v5358
    %5360 = vmatprep.mubr.f32.mxu0 %v5359
    %v5361 = vand.u32 %v4387, 4294901760
    %v5362 = vsub.f32 %v4387, %v5361
    %5363 = vmatmul.mubr.f32.gmra.mrb[0].mxu0 %v5362
    %v5364 = vpop.f32.mrb[0].mxu0
    %v5365 = vadd.f32 %v5092, %v5364
    %v5366 = vpop.f32.mrb[0].mxu0
    %5367 = vdwg.mxu0
    %v5368 = vand.u32 %v4390, 4294901760
    %5369 = vmatprep.subr.mxu0 %v5368
    %v5370 = vand.u32 %v4389, 4294901760
    %5371 = vmatpush1.xpose.msra.mxu0 %v5370
    %v5372 = vand.u32 %v4392, 4294901760
    %5373 = vmatprep.subr.mxu0 %v5372
    %v5374 = vand.u32 %v4391, 4294901760
    %5375 = vmatpush1.xpose.msra.mxu0 %v5374
    %v5376 = vand.u32 %v4394, 4294901760
    %5377 = vmatprep.subr.mxu0 %v5376
    %v5378 = vand.u32 %v4393, 4294901760
    %5379 = vmatpush1.xpose.msra.mxu0 %v5378
    %v5380 = vand.u32 %v4396, 4294901760
    %5381 = vmatprep.subr.mxu0 %v5380
    %v5382 = vand.u32 %v4395, 4294901760
    %5383 = vmatpush1.xpose.msra.mxu0 %v5382
    %v5384 = vand.u32 %v4398, 4294901760
    %5385 = vmatprep.subr.mxu0 %v5384
    %v5386 = vand.u32 %v4397, 4294901760
    %5387 = vmatpush1.xpose.msra.mxu0 %v5386
    %v5388 = vand.u32 %v4400, 4294901760
    %5389 = vmatprep.subr.mxu0 %v5388
    %v5390 = vand.u32 %v4399, 4294901760
    %5391 = vmatpush1.xpose.msra.mxu0 %v5390
    %v5392 = vand.u32 %v4402, 4294901760
    %5393 = vmatprep.subr.mxu0 %v5392
    %v5394 = vand.u32 %v4401, 4294901760
    %5395 = vmatpush1.xpose.msra.mxu0 %v5394
    %v5396 = vand.u32 %v4404, 4294901760
    %5397 = vmatprep.subr.mxu0 %v5396
    %v5398 = vand.u32 %v4403, 4294901760
    %5399 = vmatpush1.xpose.msra.mxu0 %v5398
    %v5400 = vand.u32 %v4406, 4294901760
    %5401 = vmatprep.subr.mxu0 %v5400
    %v5402 = vand.u32 %v4405, 4294901760
    %5403 = vmatpush1.xpose.msra.mxu0 %v5402
    %v5404 = vand.u32 %v4408, 4294901760
    %5405 = vmatprep.subr.mxu0 %v5404
    %v5406 = vand.u32 %v4407, 4294901760
    %5407 = vmatpush1.xpose.msra.mxu0 %v5406
    %v5408 = vand.u32 %v4410, 4294901760
    %5409 = vmatprep.subr.mxu0 %v5408
    %v5410 = vand.u32 %v4409, 4294901760
    %5411 = vmatpush1.xpose.msra.mxu0 %v5410
    %v5412 = vand.u32 %v4412, 4294901760
    %5413 = vmatprep.subr.mxu0 %v5412
    %v5414 = vand.u32 %v4411, 4294901760
    %5415 = vmatpush1.xpose.msra.mxu0 %v5414
    %v5416 = vand.u32 %v4414, 4294901760
    %5417 = vmatprep.subr.mxu0 %v5416
    %v5418 = vand.u32 %v4413, 4294901760
    %5419 = vmatpush1.xpose.msra.mxu0 %v5418
    %v5420 = vand.u32 %v4416, 4294901760
    %5421 = vmatprep.subr.mxu0 %v5420
    %v5422 = vand.u32 %v4415, 4294901760
    %5423 = vmatpush1.xpose.msra.mxu0 %v5422
    %v5424 = vand.u32 %v4418, 4294901760
    %5425 = vmatprep.subr.mxu0 %v5424
    %v5426 = vand.u32 %v4417, 4294901760
    %5427 = vmatpush1.xpose.msra.mxu0 %v5426
    %v5428 = vand.u32 %v4420, 4294901760
    %5429 = vmatprep.subr.mxu0 %v5428
    %v5430 = vand.u32 %v4419, 4294901760
    %5431 = vmatpush1.xpose.msra.mxu0 %v5430
    %5432 = vmatprep.subr.mxu0 0.0
    %5433 = vmatpush1.xpose.msra.mxu0 0.0
    %5434 = vmatprep.subr.mxu0 0.0
    %5435 = vmatpush1.xpose.msra.mxu0 0.0
    %5436 = vmatprep.subr.mxu0 0.0
    %5437 = vmatpush1.xpose.msra.mxu0 0.0
    %5438 = vmatprep.subr.mxu0 0.0
    %5439 = vmatpush1.xpose.msra.mxu0 0.0
    %5440 = vmatprep.subr.mxu0 0.0
    %5441 = vmatpush1.xpose.msra.mxu0 0.0
    %5442 = vmatprep.subr.mxu0 0.0
    %5443 = vmatpush1.xpose.msra.mxu0 0.0
    %5444 = vmatprep.subr.mxu0 0.0
    %5445 = vmatpush1.xpose.msra.mxu0 0.0
    %5446 = vmatprep.subr.mxu0 0.0
    %5447 = vmatpush1.xpose.msra.mxu0 0.0
    %5448 = vmatprep.subr.mxu0 0.0
    %5449 = vmatpush1.xpose.msra.mxu0 0.0
    %5450 = vmatprep.subr.mxu0 0.0
    %5451 = vmatpush1.xpose.msra.mxu0 0.0
    %5452 = vmatprep.subr.mxu0 0.0
    %5453 = vmatpush1.xpose.msra.mxu0 0.0
    %5454 = vmatprep.subr.mxu0 0.0
    %5455 = vmatpush1.xpose.msra.mxu0 0.0
    %5456 = vmatprep.subr.mxu0 0.0
    %5457 = vmatpush1.xpose.msra.mxu0 0.0
    %5458 = vmatprep.subr.mxu0 0.0
    %5459 = vmatpush1.xpose.msra.mxu0 0.0
    %5460 = vmatprep.subr.mxu0 0.0
    %5461 = vmatpush1.xpose.msra.mxu0 0.0
    %5462 = vmatprep.subr.mxu0 0.0
    %5463 = vmatpush1.xpose.msra.mxu0 0.0
    %v5464 = vand.u32 %v4358, 4294901760
    %v5465 = vsub.f32 %v4358, %v5464
    %v5466 = vand.u32 %v5465, 4294901760
    %5467 = vmatprep.mubr.f32.mxu0 %v5466
    %v5468 = vand.u32 %v4357, 4294901760
    %v5469 = vsub.f32 %v4357, %v5468
    %v5470 = vand.u32 %v5469, 4294901760
    %5471 = vmatmul.mubr.f32.gmra.mrb[0].mxu0 %v5470
    %v5472 = vpop.f32.mrb[0].mxu0
    %v5473 = vadd.f32 %v5230, %v5472
    %v5474 = vpop.f32.mrb[0].mxu0
    %v5475 = vand.u32 %v4360, 4294901760
    %v5476 = vsub.f32 %v4360, %v5475
    %v5477 = vand.u32 %v5476, 4294901760
    %5478 = vmatprep.mubr.f32.mxu0 %v5477
    %v5479 = vand.u32 %v4359, 4294901760
    %v5480 = vsub.f32 %v4359, %v5479
    %v5481 = vand.u32 %v5480, 4294901760
    %5482 = vmatmul.mubr.f32.gmra.mrb[0].mxu0 %v5481
    %v5483 = vpop.f32.mrb[0].mxu0
    %v5484 = vadd.f32 %v5239, %v5483
    %v5485 = vpop.f32.mrb[0].mxu0
    %v5486 = vand.u32 %v4362, 4294901760
    %v5487 = vsub.f32 %v4362, %v5486
    %v5488 = vand.u32 %v5487, 4294901760
    %5489 = vmatprep.mubr.f32.mxu0 %v5488
    %v5490 = vand.u32 %v4361, 4294901760
    %v5491 = vsub.f32 %v4361, %v5490
    %v5492 = vand.u32 %v5491, 4294901760
    %5493 = vmatmul.mubr.f32.gmra.mrb[0].mxu0 %v5492
    %v5494 = vpop.f32.mrb[0].mxu0
    %v5495 = vadd.f32 %v5248, %v5494
    %v5496 = vpop.f32.mrb[0].mxu0
    %v5497 = vand.u32 %v4364, 4294901760
    %v5498 = vsub.f32 %v4364, %v5497
    %v5499 = vand.u32 %v5498, 4294901760
    %5500 = vmatprep.mubr.f32.mxu0 %v5499
    %v5501 = vand.u32 %v4363, 4294901760
    %v5502 = vsub.f32 %v4363, %v5501
    %v5503 = vand.u32 %v5502, 4294901760
    %5504 = vmatmul.mubr.f32.gmra.mrb[0].mxu0 %v5503
    %v5505 = vpop.f32.mrb[0].mxu0
    %v5506 = vadd.f32 %v5257, %v5505
    %v5507 = vpop.f32.mrb[0].mxu0
    %v5508 = vand.u32 %v4366, 4294901760
    %v5509 = vsub.f32 %v4366, %v5508
    %v5510 = vand.u32 %v5509, 4294901760
    %5511 = vmatprep.mubr.f32.mxu0 %v5510
    %v5512 = vand.u32 %v4365, 4294901760
    %v5513 = vsub.f32 %v4365, %v5512
    %v5514 = vand.u32 %v5513, 4294901760
    %5515 = vmatmul.mubr.f32.gmra.mrb[0].mxu0 %v5514
    %v5516 = vpop.f32.mrb[0].mxu0
    %v5517 = vadd.f32 %v5266, %v5516
    %v5518 = vpop.f32.mrb[0].mxu0
    %v5519 = vand.u32 %v4368, 4294901760
    %v5520 = vsub.f32 %v4368, %v5519
    %v5521 = vand.u32 %v5520, 4294901760
    %5522 = vmatprep.mubr.f32.mxu0 %v5521
    %v5523 = vand.u32 %v4367, 4294901760
    %v5524 = vsub.f32 %v4367, %v5523
    %v5525 = vand.u32 %v5524, 4294901760
    %5526 = vmatmul.mubr.f32.gmra.mrb[0].mxu0 %v5525
    %v5527 = vpop.f32.mrb[0].mxu0
    %v5528 = vadd.f32 %v5275, %v5527
    %v5529 = vpop.f32.mrb[0].mxu0
    %v5530 = vand.u32 %v4370, 4294901760
    %v5531 = vsub.f32 %v4370, %v5530
    %v5532 = vand.u32 %v5531, 4294901760
    %5533 = vmatprep.mubr.f32.mxu0 %v5532
    %v5534 = vand.u32 %v4369, 4294901760
    %v5535 = vsub.f32 %v4369, %v5534
    %v5536 = vand.u32 %v5535, 4294901760
    %5537 = vmatmul.mubr.f32.gmra.mrb[0].mxu0 %v5536
    %v5538 = vpop.f32.mrb[0].mxu0
    %v5539 = vadd.f32 %v5284, %v5538
    %v5540 = vpop.f32.mrb[0].mxu0
    %v5541 = vand.u32 %v4372, 4294901760
    %v5542 = vsub.f32 %v4372, %v5541
    %v5543 = vand.u32 %v5542, 4294901760
    %5544 = vmatprep.mubr.f32.mxu0 %v5543
    %v5545 = vand.u32 %v4371, 4294901760
    %v5546 = vsub.f32 %v4371, %v5545
    %v5547 = vand.u32 %v5546, 4294901760
    %5548 = vmatmul.mubr.f32.gmra.mrb[0].mxu0 %v5547
    %v5549 = vpop.f32.mrb[0].mxu0
    %v5550 = vadd.f32 %v5293, %v5549
    %v5551 = vpop.f32.mrb[0].mxu0
    %v5552 = vand.u32 %v4374, 4294901760
    %v5553 = vsub.f32 %v4374, %v5552
    %v5554 = vand.u32 %v5553, 4294901760
    %5555 = vmatprep.mubr.f32.mxu0 %v5554
    %v5556 = vand.u32 %v4373, 4294901760
    %v5557 = vsub.f32 %v4373, %v5556
    %v5558 = vand.u32 %v5557, 4294901760
    %5559 = vmatmul.mubr.f32.gmra.mrb[0].mxu0 %v5558
    %v5560 = vpop.f32.mrb[0].mxu0
    %v5561 = vadd.f32 %v5302, %v5560
    %v5562 = vpop.f32.mrb[0].mxu0
    %v5563 = vand.u32 %v4376, 4294901760
    %v5564 = vsub.f32 %v4376, %v5563
    %v5565 = vand.u32 %v5564, 4294901760
    %5566 = vmatprep.mubr.f32.mxu0 %v5565
    %v5567 = vand.u32 %v4375, 4294901760
    %v5568 = vsub.f32 %v4375, %v5567
    %v5569 = vand.u32 %v5568, 4294901760
    %5570 = vmatmul.mubr.f32.gmra.mrb[0].mxu0 %v5569
    %v5571 = vpop.f32.mrb[0].mxu0
    %v5572 = vadd.f32 %v5311, %v5571
    %v5573 = vpop.f32.mrb[0].mxu0
    %v5574 = vand.u32 %v4378, 4294901760
    %v5575 = vsub.f32 %v4378, %v5574
    %v5576 = vand.u32 %v5575, 4294901760
    %5577 = vmatprep.mubr.f32.mxu0 %v5576
    %v5578 = vand.u32 %v4377, 4294901760
    %v5579 = vsub.f32 %v4377, %v5578
    %v5580 = vand.u32 %v5579, 4294901760
    %5581 = vmatmul.mubr.f32.gmra.mrb[0].mxu0 %v5580
    %v5582 = vpop.f32.mrb[0].mxu0
    %v5583 = vadd.f32 %v5320, %v5582
    %v5584 = vpop.f32.mrb[0].mxu0
    %v5585 = vand.u32 %v4380, 4294901760
    %v5586 = vsub.f32 %v4380, %v5585
    %v5587 = vand.u32 %v5586, 4294901760
    %5588 = vmatprep.mubr.f32.mxu0 %v5587
    %v5589 = vand.u32 %v4379, 4294901760
    %v5590 = vsub.f32 %v4379, %v5589
    %v5591 = vand.u32 %v5590, 4294901760
    %5592 = vmatmul.mubr.f32.gmra.mrb[0].mxu0 %v5591
    %v5593 = vpop.f32.mrb[0].mxu0
    %v5594 = vadd.f32 %v5329, %v5593
    %v5595 = vpop.f32.mrb[0].mxu0
    %v5596 = vand.u32 %v4382, 4294901760
    %v5597 = vsub.f32 %v4382, %v5596
    %v5598 = vand.u32 %v5597, 4294901760
    %5599 = vmatprep.mubr.f32.mxu0 %v5598
    %v5600 = vand.u32 %v4381, 4294901760
    %v5601 = vsub.f32 %v4381, %v5600
    %v5602 = vand.u32 %v5601, 4294901760
    %5603 = vmatmul.mubr.f32.gmra.mrb[0].mxu0 %v5602
    %v5604 = vpop.f32.mrb[0].mxu0
    %v5605 = vadd.f32 %v5338, %v5604
    %v5606 = vpop.f32.mrb[0].mxu0
    %v5607 = vand.u32 %v4384, 4294901760
    %v5608 = vsub.f32 %v4384, %v5607
    %v5609 = vand.u32 %v5608, 4294901760
    %5610 = vmatprep.mubr.f32.mxu0 %v5609
    %v5611 = vand.u32 %v4383, 4294901760
    %v5612 = vsub.f32 %v4383, %v5611
    %v5613 = vand.u32 %v5612, 4294901760
    %5614 = vmatmul.mubr.f32.gmra.mrb[0].mxu0 %v5613
    %v5615 = vpop.f32.mrb[0].mxu0
    %v5616 = vadd.f32 %v5347, %v5615
    %v5617 = vpop.f32.mrb[0].mxu0
    %v5618 = vand.u32 %v4386, 4294901760
    %v5619 = vsub.f32 %v4386, %v5618
    %v5620 = vand.u32 %v5619, 4294901760
    %5621 = vmatprep.mubr.f32.mxu0 %v5620
    %v5622 = vand.u32 %v4385, 4294901760
    %v5623 = vsub.f32 %v4385, %v5622
    %v5624 = vand.u32 %v5623, 4294901760
    %5625 = vmatmul.mubr.f32.gmra.mrb[0].mxu0 %v5624
    %v5626 = vpop.f32.mrb[0].mxu0
    %v5627 = vadd.f32 %v5356, %v5626
    %v5628 = vpop.f32.mrb[0].mxu0
    %v5629 = vand.u32 %v4388, 4294901760
    %v5630 = vsub.f32 %v4388, %v5629
    %v5631 = vand.u32 %v5630, 4294901760
    %5632 = vmatprep.mubr.f32.mxu0 %v5631
    %v5633 = vand.u32 %v4387, 4294901760
    %v5634 = vsub.f32 %v4387, %v5633
    %v5635 = vand.u32 %v5634, 4294901760
    %5636 = vmatmul.mubr.f32.gmra.mrb[0].mxu0 %v5635
    %v5637 = vpop.f32.mrb[0].mxu0
    %v5638 = vadd.f32 %v5365, %v5637
    %v5639 = vpop.f32.mrb[0].mxu0
    %5640 = vdwg.mxu0
    %v5641 = vand.u32 %v4390, 4294901760
    %v5642 = vsub.f32 %v4390, %v5641
    %v5643 = vand.u32 %v5642, 4294901760
    %5644 = vmatprep.subr.mxu0 %v5643
    %v5645 = vand.u32 %v4389, 4294901760
    %v5646 = vsub.f32 %v4389, %v5645
    %v5647 = vand.u32 %v5646, 4294901760
    %5648 = vmatpush1.xpose.msra.mxu0 %v5647
    %v5649 = vand.u32 %v4392, 4294901760
    %v5650 = vsub.f32 %v4392, %v5649
    %v5651 = vand.u32 %v5650, 4294901760
    %5652 = vmatprep.subr.mxu0 %v5651
    %v5653 = vand.u32 %v4391, 4294901760
    %v5654 = vsub.f32 %v4391, %v5653
    %v5655 = vand.u32 %v5654, 4294901760
    %5656 = vmatpush1.xpose.msra.mxu0 %v5655
    %v5657 = vand.u32 %v4394, 4294901760
    %v5658 = vsub.f32 %v4394, %v5657
    %v5659 = vand.u32 %v5658, 4294901760
    %5660 = vmatprep.subr.mxu0 %v5659
    %v5661 = vand.u32 %v4393, 4294901760
    %v5662 = vsub.f32 %v4393, %v5661
    %v5663 = vand.u32 %v5662, 4294901760
    %5664 = vmatpush1.xpose.msra.mxu0 %v5663
    %v5665 = vand.u32 %v4396, 4294901760
    %v5666 = vsub.f32 %v4396, %v5665
    %v5667 = vand.u32 %v5666, 4294901760
    %5668 = vmatprep.subr.mxu0 %v5667
    %v5669 = vand.u32 %v4395, 4294901760
    %v5670 = vsub.f32 %v4395, %v5669
    %v5671 = vand.u32 %v5670, 4294901760
    %5672 = vmatpush1.xpose.msra.mxu0 %v5671
    %v5673 = vand.u32 %v4398, 4294901760
    %v5674 = vsub.f32 %v4398, %v5673
    %v5675 = vand.u32 %v5674, 4294901760
    %5676 = vmatprep.subr.mxu0 %v5675
    %v5677 = vand.u32 %v4397, 4294901760
    %v5678 = vsub.f32 %v4397, %v5677
    %v5679 = vand.u32 %v5678, 4294901760
    %5680 = vmatpush1.xpose.msra.mxu0 %v5679
    %v5681 = vand.u32 %v4400, 4294901760
    %v5682 = vsub.f32 %v4400, %v5681
    %v5683 = vand.u32 %v5682, 4294901760
    %5684 = vmatprep.subr.mxu0 %v5683
    %v5685 = vand.u32 %v4399, 4294901760
    %v5686 = vsub.f32 %v4399, %v5685
    %v5687 = vand.u32 %v5686, 4294901760
    %5688 = vmatpush1.xpose.msra.mxu0 %v5687
    %v5689 = vand.u32 %v4402, 4294901760
    %v5690 = vsub.f32 %v4402, %v5689
    %v5691 = vand.u32 %v5690, 4294901760
    %5692 = vmatprep.subr.mxu0 %v5691
    %v5693 = vand.u32 %v4401, 4294901760
    %v5694 = vsub.f32 %v4401, %v5693
    %v5695 = vand.u32 %v5694, 4294901760
    %5696 = vmatpush1.xpose.msra.mxu0 %v5695
    %v5697 = vand.u32 %v4404, 4294901760
    %v5698 = vsub.f32 %v4404, %v5697
    %v5699 = vand.u32 %v5698, 4294901760
    %5700 = vmatprep.subr.mxu0 %v5699
    %v5701 = vand.u32 %v4403, 4294901760
    %v5702 = vsub.f32 %v4403, %v5701
    %v5703 = vand.u32 %v5702, 4294901760
    %5704 = vmatpush1.xpose.msra.mxu0 %v5703
    %v5705 = vand.u32 %v4406, 4294901760
    %v5706 = vsub.f32 %v4406, %v5705
    %v5707 = vand.u32 %v5706, 4294901760
    %5708 = vmatprep.subr.mxu0 %v5707
    %v5709 = vand.u32 %v4405, 4294901760
    %v5710 = vsub.f32 %v4405, %v5709
    %v5711 = vand.u32 %v5710, 4294901760
    %5712 = vmatpush1.xpose.msra.mxu0 %v5711
    %v5713 = vand.u32 %v4408, 4294901760
    %v5714 = vsub.f32 %v4408, %v5713
    %v5715 = vand.u32 %v5714, 4294901760
    %5716 = vmatprep.subr.mxu0 %v5715
    %v5717 = vand.u32 %v4407, 4294901760
    %v5718 = vsub.f32 %v4407, %v5717
    %v5719 = vand.u32 %v5718, 4294901760
    %5720 = vmatpush1.xpose.msra.mxu0 %v5719
    %v5721 = vand.u32 %v4410, 4294901760
    %v5722 = vsub.f32 %v4410, %v5721
    %v5723 = vand.u32 %v5722, 4294901760
    %5724 = vmatprep.subr.mxu0 %v5723
    %v5725 = vand.u32 %v4409, 4294901760
    %v5726 = vsub.f32 %v4409, %v5725
    %v5727 = vand.u32 %v5726, 4294901760
    %5728 = vmatpush1.xpose.msra.mxu0 %v5727
    %v5729 = vand.u32 %v4412, 4294901760
    %v5730 = vsub.f32 %v4412, %v5729
    %v5731 = vand.u32 %v5730, 4294901760
    %5732 = vmatprep.subr.mxu0 %v5731
    %v5733 = vand.u32 %v4411, 4294901760
    %v5734 = vsub.f32 %v4411, %v5733
    %v5735 = vand.u32 %v5734, 4294901760
    %5736 = vmatpush1.xpose.msra.mxu0 %v5735
    %v5737 = vand.u32 %v4414, 4294901760
    %v5738 = vsub.f32 %v4414, %v5737
    %v5739 = vand.u32 %v5738, 4294901760
    %5740 = vmatprep.subr.mxu0 %v5739
    %v5741 = vand.u32 %v4413, 4294901760
    %v5742 = vsub.f32 %v4413, %v5741
    %v5743 = vand.u32 %v5742, 4294901760
    %5744 = vmatpush1.xpose.msra.mxu0 %v5743
    %v5745 = vand.u32 %v4416, 4294901760
    %v5746 = vsub.f32 %v4416, %v5745
    %v5747 = vand.u32 %v5746, 4294901760
    %5748 = vmatprep.subr.mxu0 %v5747
    %v5749 = vand.u32 %v4415, 4294901760
    %v5750 = vsub.f32 %v4415, %v5749
    %v5751 = vand.u32 %v5750, 4294901760
    %5752 = vmatpush1.xpose.msra.mxu0 %v5751
    %v5753 = vand.u32 %v4418, 4294901760
    %v5754 = vsub.f32 %v4418, %v5753
    %v5755 = vand.u32 %v5754, 4294901760
    %5756 = vmatprep.subr.mxu0 %v5755
    %v5757 = vand.u32 %v4417, 4294901760
    %v5758 = vsub.f32 %v4417, %v5757
    %v5759 = vand.u32 %v5758, 4294901760
    %5760 = vmatpush1.xpose.msra.mxu0 %v5759
    %v5761 = vand.u32 %v4420, 4294901760
    %v5762 = vsub.f32 %v4420, %v5761
    %v5763 = vand.u32 %v5762, 4294901760
    %5764 = vmatprep.subr.mxu0 %v5763
    %v5765 = vand.u32 %v4419, 4294901760
    %v5766 = vsub.f32 %v4419, %v5765
    %v5767 = vand.u32 %v5766, 4294901760
    %5768 = vmatpush1.xpose.msra.mxu0 %v5767
    %5769 = vmatprep.subr.mxu0 0.0
    %5770 = vmatpush1.xpose.msra.mxu0 0.0
    %5771 = vmatprep.subr.mxu0 0.0
    %5772 = vmatpush1.xpose.msra.mxu0 0.0
    %5773 = vmatprep.subr.mxu0 0.0
    %5774 = vmatpush1.xpose.msra.mxu0 0.0
    %5775 = vmatprep.subr.mxu0 0.0
    %5776 = vmatpush1.xpose.msra.mxu0 0.0
    %5777 = vmatprep.subr.mxu0 0.0
    %5778 = vmatpush1.xpose.msra.mxu0 0.0
    %5779 = vmatprep.subr.mxu0 0.0
    %5780 = vmatpush1.xpose.msra.mxu0 0.0
    %5781 = vmatprep.subr.mxu0 0.0
    %5782 = vmatpush1.xpose.msra.mxu0 0.0
    %5783 = vmatprep.subr.mxu0 0.0
    %5784 = vmatpush1.xpose.msra.mxu0 0.0
    %5785 = vmatprep.subr.mxu0 0.0
    %5786 = vmatpush1.xpose.msra.mxu0 0.0
    %5787 = vmatprep.subr.mxu0 0.0
    %5788 = vmatpush1.xpose.msra.mxu0 0.0
    %5789 = vmatprep.subr.mxu0 0.0
    %5790 = vmatpush1.xpose.msra.mxu0 0.0
    %5791 = vmatprep.subr.mxu0 0.0
    %5792 = vmatpush1.xpose.msra.mxu0 0.0
    %5793 = vmatprep.subr.mxu0 0.0
    %5794 = vmatpush1.xpose.msra.mxu0 0.0
    %5795 = vmatprep.subr.mxu0 0.0
    %5796 = vmatpush1.xpose.msra.mxu0 0.0
    %5797 = vmatprep.subr.mxu0 0.0
    %5798 = vmatpush1.xpose.msra.mxu0 0.0
    %5799 = vmatprep.subr.mxu0 0.0
    %5800 = vmatpush1.xpose.msra.mxu0 0.0
    %v5801 = vand.u32 %v4358, 4294901760
    %5802 = vmatprep.mubr.f32.mxu0 %v5801
    %v5803 = vand.u32 %v4357, 4294901760
    %5804 = vmatmul.mubr.f32.gmra.mrb[0].mxu0 %v5803
    %v5805 = vpop.f32.mrb[0].mxu0
    %v5806 = vadd.f32 %v5473, %v5805
    %v5807 = vpop.f32.mrb[0].mxu0
    %v5808 = vand.u32 %v4360, 4294901760
    %5809 = vmatprep.mubr.f32.mxu0 %v5808
    %v5810 = vand.u32 %v4359, 4294901760
    %5811 = vmatmul.mubr.f32.gmra.mrb[0].mxu0 %v5810
    %v5812 = vpop.f32.mrb[0].mxu0
    %v5813 = vadd.f32 %v5484, %v5812
    %v5814 = vpop.f32.mrb[0].mxu0
    %v5815 = vand.u32 %v4362, 4294901760
    %5816 = vmatprep.mubr.f32.mxu0 %v5815
    %v5817 = vand.u32 %v4361, 4294901760
    %5818 = vmatmul.mubr.f32.gmra.mrb[0].mxu0 %v5817
    %v5819 = vpop.f32.mrb[0].mxu0
    %v5820 = vadd.f32 %v5495, %v5819
    %v5821 = vpop.f32.mrb[0].mxu0
    %v5822 = vand.u32 %v4364, 4294901760
    %5823 = vmatprep.mubr.f32.mxu0 %v5822
    %v5824 = vand.u32 %v4363, 4294901760
    %5825 = vmatmul.mubr.f32.gmra.mrb[0].mxu0 %v5824
    %v5826 = vpop.f32.mrb[0].mxu0
    %v5827 = vadd.f32 %v5506, %v5826
    %v5828 = vpop.f32.mrb[0].mxu0
    %v5829 = vand.u32 %v4366, 4294901760
    %5830 = vmatprep.mubr.f32.mxu0 %v5829
    %v5831 = vand.u32 %v4365, 4294901760
    %5832 = vmatmul.mubr.f32.gmra.mrb[0].mxu0 %v5831
    %v5833 = vpop.f32.mrb[0].mxu0
    %v5834 = vadd.f32 %v5517, %v5833
    %v5835 = vpop.f32.mrb[0].mxu0
    %v5836 = vand.u32 %v4368, 4294901760
    %5837 = vmatprep.mubr.f32.mxu0 %v5836
    %v5838 = vand.u32 %v4367, 4294901760
    %5839 = vmatmul.mubr.f32.gmra.mrb[0].mxu0 %v5838
    %v5840 = vpop.f32.mrb[0].mxu0
    %v5841 = vadd.f32 %v5528, %v5840
    %v5842 = vpop.f32.mrb[0].mxu0
    %v5843 = vand.u32 %v4370, 4294901760
    %5844 = vmatprep.mubr.f32.mxu0 %v5843
    %v5845 = vand.u32 %v4369, 4294901760
    %5846 = vmatmul.mubr.f32.gmra.mrb[0].mxu0 %v5845
    %v5847 = vpop.f32.mrb[0].mxu0
    %v5848 = vadd.f32 %v5539, %v5847
    %v5849 = vpop.f32.mrb[0].mxu0
    %v5850 = vand.u32 %v4372, 4294901760
    %5851 = vmatprep.mubr.f32.mxu0 %v5850
    %v5852 = vand.u32 %v4371, 4294901760
    %5853 = vmatmul.mubr.f32.gmra.mrb[0].mxu0 %v5852
    %v5854 = vpop.f32.mrb[0].mxu0
    %v5855 = vadd.f32 %v5550, %v5854
    %v5856 = vpop.f32.mrb[0].mxu0
    %v5857 = vand.u32 %v4374, 4294901760
    %5858 = vmatprep.mubr.f32.mxu0 %v5857
    %v5859 = vand.u32 %v4373, 4294901760
    %5860 = vmatmul.mubr.f32.gmra.mrb[0].mxu0 %v5859
    %v5861 = vpop.f32.mrb[0].mxu0
    %v5862 = vadd.f32 %v5561, %v5861
    %v5863 = vpop.f32.mrb[0].mxu0
    %v5864 = vand.u32 %v4376, 4294901760
    %5865 = vmatprep.mubr.f32.mxu0 %v5864
    %v5866 = vand.u32 %v4375, 4294901760
    %5867 = vmatmul.mubr.f32.gmra.mrb[0].mxu0 %v5866
    %v5868 = vpop.f32.mrb[0].mxu0
    %v5869 = vadd.f32 %v5572, %v5868
    %v5870 = vpop.f32.mrb[0].mxu0
    %v5871 = vand.u32 %v4378, 4294901760
    %5872 = vmatprep.mubr.f32.mxu0 %v5871
    %v5873 = vand.u32 %v4377, 4294901760
    %5874 = vmatmul.mubr.f32.gmra.mrb[0].mxu0 %v5873
    %v5875 = vpop.f32.mrb[0].mxu0
    %v5876 = vadd.f32 %v5583, %v5875
    %v5877 = vpop.f32.mrb[0].mxu0
    %v5878 = vand.u32 %v4380, 4294901760
    %5879 = vmatprep.mubr.f32.mxu0 %v5878
    %v5880 = vand.u32 %v4379, 4294901760
    %5881 = vmatmul.mubr.f32.gmra.mrb[0].mxu0 %v5880
    %v5882 = vpop.f32.mrb[0].mxu0
    %v5883 = vadd.f32 %v5594, %v5882
    %v5884 = vpop.f32.mrb[0].mxu0
    %v5885 = vand.u32 %v4382, 4294901760
    %5886 = vmatprep.mubr.f32.mxu0 %v5885
    %v5887 = vand.u32 %v4381, 4294901760
    %5888 = vmatmul.mubr.f32.gmra.mrb[0].mxu0 %v5887
    %v5889 = vpop.f32.mrb[0].mxu0
    %v5890 = vadd.f32 %v5605, %v5889
    %v5891 = vpop.f32.mrb[0].mxu0
    %v5892 = vand.u32 %v4384, 4294901760
    %5893 = vmatprep.mubr.f32.mxu0 %v5892
    %v5894 = vand.u32 %v4383, 4294901760
    %5895 = vmatmul.mubr.f32.gmra.mrb[0].mxu0 %v5894
    %v5896 = vpop.f32.mrb[0].mxu0
    %v5897 = vadd.f32 %v5616, %v5896
    %v5898 = vpop.f32.mrb[0].mxu0
    %v5899 = vand.u32 %v4386, 4294901760
    %5900 = vmatprep.mubr.f32.mxu0 %v5899
    %v5901 = vand.u32 %v4385, 4294901760
    %5902 = vmatmul.mubr.f32.gmra.mrb[0].mxu0 %v5901
    %v5903 = vpop.f32.mrb[0].mxu0
    %v5904 = vadd.f32 %v5627, %v5903
    %v5905 = vpop.f32.mrb[0].mxu0
    %v5906 = vand.u32 %v4388, 4294901760
    %5907 = vmatprep.mubr.f32.mxu0 %v5906
    %v5908 = vand.u32 %v4387, 4294901760
    %5909 = vmatmul.mubr.f32.gmra.mrb[0].mxu0 %v5908
    %v5910 = vpop.f32.mrb[0].mxu0
    %v5911 = vadd.f32 %v5638, %v5910
    %v5912 = vpop.f32.mrb[0].mxu0
    %5913 = vdwg.mxu0
    %v5914 = vand.u32 %v4390, 4294901760
    %5915 = vmatprep.subr.mxu0 %v5914
    %v5916 = vand.u32 %v4389, 4294901760
    %5917 = vmatpush1.xpose.msra.mxu0 %v5916
    %v5918 = vand.u32 %v4392, 4294901760
    %5919 = vmatprep.subr.mxu0 %v5918
    %v5920 = vand.u32 %v4391, 4294901760
    %5921 = vmatpush1.xpose.msra.mxu0 %v5920
    %v5922 = vand.u32 %v4394, 4294901760
    %5923 = vmatprep.subr.mxu0 %v5922
    %v5924 = vand.u32 %v4393, 4294901760
    %5925 = vmatpush1.xpose.msra.mxu0 %v5924
    %v5926 = vand.u32 %v4396, 4294901760
    %5927 = vmatprep.subr.mxu0 %v5926
    %v5928 = vand.u32 %v4395, 4294901760
    %5929 = vmatpush1.xpose.msra.mxu0 %v5928
    %v5930 = vand.u32 %v4398, 4294901760
    %5931 = vmatprep.subr.mxu0 %v5930
    %v5932 = vand.u32 %v4397, 4294901760
    %5933 = vmatpush1.xpose.msra.mxu0 %v5932
    %v5934 = vand.u32 %v4400, 4294901760
    %5935 = vmatprep.subr.mxu0 %v5934
    %v5936 = vand.u32 %v4399, 4294901760
    %5937 = vmatpush1.xpose.msra.mxu0 %v5936
    %v5938 = vand.u32 %v4402, 4294901760
    %5939 = vmatprep.subr.mxu0 %v5938
    %v5940 = vand.u32 %v4401, 4294901760
    %5941 = vmatpush1.xpose.msra.mxu0 %v5940
    %v5942 = vand.u32 %v4404, 4294901760
    %5943 = vmatprep.subr.mxu0 %v5942
    %v5944 = vand.u32 %v4403, 4294901760
    %5945 = vmatpush1.xpose.msra.mxu0 %v5944
    %v5946 = vand.u32 %v4406, 4294901760
    %5947 = vmatprep.subr.mxu0 %v5946
    %v5948 = vand.u32 %v4405, 4294901760
    %5949 = vmatpush1.xpose.msra.mxu0 %v5948
    %v5950 = vand.u32 %v4408, 4294901760
    %5951 = vmatprep.subr.mxu0 %v5950
    %v5952 = vand.u32 %v4407, 4294901760
    %5953 = vmatpush1.xpose.msra.mxu0 %v5952
    %v5954 = vand.u32 %v4410, 4294901760
    %5955 = vmatprep.subr.mxu0 %v5954
    %v5956 = vand.u32 %v4409, 4294901760
    %5957 = vmatpush1.xpose.msra.mxu0 %v5956
    %v5958 = vand.u32 %v4412, 4294901760
    %5959 = vmatprep.subr.mxu0 %v5958
    %v5960 = vand.u32 %v4411, 4294901760
    %5961 = vmatpush1.xpose.msra.mxu0 %v5960
    %v5962 = vand.u32 %v4414, 4294901760
    %5963 = vmatprep.subr.mxu0 %v5962
    %v5964 = vand.u32 %v4413, 4294901760
    %5965 = vmatpush1.xpose.msra.mxu0 %v5964
    %v5966 = vand.u32 %v4416, 4294901760
    %5967 = vmatprep.subr.mxu0 %v5966
    %v5968 = vand.u32 %v4415, 4294901760
    %5969 = vmatpush1.xpose.msra.mxu0 %v5968
    %v5970 = vand.u32 %v4418, 4294901760
    %5971 = vmatprep.subr.mxu0 %v5970
    %v5972 = vand.u32 %v4417, 4294901760
    %5973 = vmatpush1.xpose.msra.mxu0 %v5972
    %v5974 = vand.u32 %v4420, 4294901760
    %5975 = vmatprep.subr.mxu0 %v5974
    %v5976 = vand.u32 %v4419, 4294901760
    %5977 = vmatpush1.xpose.msra.mxu0 %v5976
    %5978 = vmatprep.subr.mxu0 0.0
    %5979 = vmatpush1.xpose.msra.mxu0 0.0
    %5980 = vmatprep.subr.mxu0 0.0
    %5981 = vmatpush1.xpose.msra.mxu0 0.0
    %5982 = vmatprep.subr.mxu0 0.0
    %5983 = vmatpush1.xpose.msra.mxu0 0.0
    %5984 = vmatprep.subr.mxu0 0.0
    %5985 = vmatpush1.xpose.msra.mxu0 0.0
    %5986 = vmatprep.subr.mxu0 0.0
    %5987 = vmatpush1.xpose.msra.mxu0 0.0
    %5988 = vmatprep.subr.mxu0 0.0
    %5989 = vmatpush1.xpose.msra.mxu0 0.0
    %5990 = vmatprep.subr.mxu0 0.0
    %5991 = vmatpush1.xpose.msra.mxu0 0.0
    %5992 = vmatprep.subr.mxu0 0.0
    %5993 = vmatpush1.xpose.msra.mxu0 0.0
    %5994 = vmatprep.subr.mxu0 0.0
    %5995 = vmatpush1.xpose.msra.mxu0 0.0
    %5996 = vmatprep.subr.mxu0 0.0
    %5997 = vmatpush1.xpose.msra.mxu0 0.0
    %5998 = vmatprep.subr.mxu0 0.0
    %5999 = vmatpush1.xpose.msra.mxu0 0.0
    %6000 = vmatprep.subr.mxu0 0.0
    %6001 = vmatpush1.xpose.msra.mxu0 0.0
    %6002 = vmatprep.subr.mxu0 0.0
    %6003 = vmatpush1.xpose.msra.mxu0 0.0
    %6004 = vmatprep.subr.mxu0 0.0
    %6005 = vmatpush1.xpose.msra.mxu0 0.0
    %6006 = vmatprep.subr.mxu0 0.0
    %6007 = vmatpush1.xpose.msra.mxu0 0.0
    %6008 = vmatprep.subr.mxu0 0.0
    %6009 = vmatpush1.xpose.msra.mxu0 0.0
    %v6010 = vand.u32 %v4358, 4294901760
    %6011 = vmatprep.mubr.f32.mxu0 %v6010
    %v6012 = vand.u32 %v4357, 4294901760
    %6013 = vmatmul.mubr.f32.gmra.mrb[0].mxu0 %v6012
    %v6014 = vpop.f32.mrb[0].mxu0
    %v6015 = vadd.f32 %v5806, %v6014
    %v6016 = vpop.f32.mrb[0].mxu0
    %v6017 = vand.u32 %v4360, 4294901760
    %6018 = vmatprep.mubr.f32.mxu0 %v6017
    %v6019 = vand.u32 %v4359, 4294901760
    %6020 = vmatmul.mubr.f32.gmra.mrb[0].mxu0 %v6019
    %v6021 = vpop.f32.mrb[0].mxu0
    %v6022 = vadd.f32 %v5813, %v6021
    %v6023 = vpop.f32.mrb[0].mxu0
    %v6024 = vand.u32 %v4362, 4294901760
    %6025 = vmatprep.mubr.f32.mxu0 %v6024
    %v6026 = vand.u32 %v4361, 4294901760
    %6027 = vmatmul.mubr.f32.gmra.mrb[0].mxu0 %v6026
    %v6028 = vpop.f32.mrb[0].mxu0
    %v6029 = vadd.f32 %v5820, %v6028
    %v6030 = vpop.f32.mrb[0].mxu0
    %v6031 = vand.u32 %v4364, 4294901760
    %6032 = vmatprep.mubr.f32.mxu0 %v6031
    %v6033 = vand.u32 %v4363, 4294901760
    %6034 = vmatmul.mubr.f32.gmra.mrb[0].mxu0 %v6033
    %v6035 = vpop.f32.mrb[0].mxu0
    %v6036 = vadd.f32 %v5827, %v6035
    %v6037 = vpop.f32.mrb[0].mxu0
    %v6038 = vand.u32 %v4366, 4294901760
    %6039 = vmatprep.mubr.f32.mxu0 %v6038
    %v6040 = vand.u32 %v4365, 4294901760
    %6041 = vmatmul.mubr.f32.gmra.mrb[0].mxu0 %v6040
    %v6042 = vpop.f32.mrb[0].mxu0
    %v6043 = vadd.f32 %v5834, %v6042
    %v6044 = vpop.f32.mrb[0].mxu0
    %v6045 = vand.u32 %v4368, 4294901760
    %6046 = vmatprep.mubr.f32.mxu0 %v6045
    %v6047 = vand.u32 %v4367, 4294901760
    %6048 = vmatmul.mubr.f32.gmra.mrb[0].mxu0 %v6047
    %v6049 = vpop.f32.mrb[0].mxu0
    %v6050 = vadd.f32 %v5841, %v6049
    %v6051 = vpop.f32.mrb[0].mxu0
    %v6052 = vand.u32 %v4370, 4294901760
    %6053 = vmatprep.mubr.f32.mxu0 %v6052
    %v6054 = vand.u32 %v4369, 4294901760
    %6055 = vmatmul.mubr.f32.gmra.mrb[0].mxu0 %v6054
    %v6056 = vpop.f32.mrb[0].mxu0
    %v6057 = vadd.f32 %v5848, %v6056
    %v6058 = vpop.f32.mrb[0].mxu0
    %v6059 = vand.u32 %v4372, 4294901760
    %6060 = vmatprep.mubr.f32.mxu0 %v6059
    %v6061 = vand.u32 %v4371, 4294901760
    %6062 = vmatmul.mubr.f32.gmra.mrb[0].mxu0 %v6061
    %v6063 = vpop.f32.mrb[0].mxu0
    %v6064 = vadd.f32 %v5855, %v6063
    %v6065 = vpop.f32.mrb[0].mxu0
    %v6066 = vand.u32 %v4374, 4294901760
    %6067 = vmatprep.mubr.f32.mxu0 %v6066
    %v6068 = vand.u32 %v4373, 4294901760
    %6069 = vmatmul.mubr.f32.gmra.mrb[0].mxu0 %v6068
    %v6070 = vpop.f32.mrb[0].mxu0
    %v6071 = vadd.f32 %v5862, %v6070
    %v6072 = vpop.f32.mrb[0].mxu0
    %v6073 = vand.u32 %v4376, 4294901760
    %6074 = vmatprep.mubr.f32.mxu0 %v6073
    %v6075 = vand.u32 %v4375, 4294901760
    %6076 = vmatmul.mubr.f32.gmra.mrb[0].mxu0 %v6075
    %v6077 = vpop.f32.mrb[0].mxu0
    %v6078 = vadd.f32 %v5869, %v6077
    %v6079 = vpop.f32.mrb[0].mxu0
    %v6080 = vand.u32 %v4378, 4294901760
    %6081 = vmatprep.mubr.f32.mxu0 %v6080
    %v6082 = vand.u32 %v4377, 4294901760
    %6083 = vmatmul.mubr.f32.gmra.mrb[0].mxu0 %v6082
    %v6084 = vpop.f32.mrb[0].mxu0
    %v6085 = vadd.f32 %v5876, %v6084
    %v6086 = vpop.f32.mrb[0].mxu0
    %v6087 = vand.u32 %v4380, 4294901760
    %6088 = vmatprep.mubr.f32.mxu0 %v6087
    %v6089 = vand.u32 %v4379, 4294901760
    %6090 = vmatmul.mubr.f32.gmra.mrb[0].mxu0 %v6089
    %v6091 = vpop.f32.mrb[0].mxu0
    %v6092 = vadd.f32 %v5883, %v6091
    %v6093 = vpop.f32.mrb[0].mxu0
    %v6094 = vand.u32 %v4382, 4294901760
    %6095 = vmatprep.mubr.f32.mxu0 %v6094
    %v6096 = vand.u32 %v4381, 4294901760
    %6097 = vmatmul.mubr.f32.gmra.mrb[0].mxu0 %v6096
    %v6098 = vpop.f32.mrb[0].mxu0
    %v6099 = vadd.f32 %v5890, %v6098
    %v6100 = vpop.f32.mrb[0].mxu0
    %v6101 = vand.u32 %v4384, 4294901760
    %6102 = vmatprep.mubr.f32.mxu0 %v6101
    %v6103 = vand.u32 %v4383, 4294901760
    %6104 = vmatmul.mubr.f32.gmra.mrb[0].mxu0 %v6103
    %v6105 = vpop.f32.mrb[0].mxu0
    %v6106 = vadd.f32 %v5897, %v6105
    %v6107 = vpop.f32.mrb[0].mxu0
    %v6108 = vand.u32 %v4386, 4294901760
    %6109 = vmatprep.mubr.f32.mxu0 %v6108
    %v6110 = vand.u32 %v4385, 4294901760
    %6111 = vmatmul.mubr.f32.gmra.mrb[0].mxu0 %v6110
    %v6112 = vpop.f32.mrb[0].mxu0
    %v6113 = vadd.f32 %v5904, %v6112
    %v6114 = vpop.f32.mrb[0].mxu0
    %v6115 = vand.u32 %v4388, 4294901760
    %6116 = vmatprep.mubr.f32.mxu0 %v6115
    %v6117 = vand.u32 %v4387, 4294901760
    %6118 = vmatmul.mubr.f32.gmra.mrb[0].mxu0 %v6117
    %v6119 = vpop.f32.mrb[0].mxu0
    %v6120 = vadd.f32 %v5911, %v6119
    %v6121 = vpop.f32.mrb[0].mxu0
    %6122 = vdwg.mxu0
    %6123 = vst [vmem:[#allocation10] sm:$0xff] %v6015
    %6124 = vst [vmem:[#allocation10 + $0x8] sm:$0xff] %v6022
    %6125 = vst [vmem:[#allocation10 + $0x10] sm:$0xff] %v6029
    %6126 = vst [vmem:[#allocation10 + $0x18] sm:$0xff] %v6036
    %6127 = vst [vmem:[#allocation10 + $0x20] sm:$0xff] %v6043
    %6128 = vst [vmem:[#allocation10 + $0x28] sm:$0xff] %v6050
    %6129 = vst [vmem:[#allocation10 + $0x30] sm:$0xff] %v6057
    %6130 = vst [vmem:[#allocation10 + $0x38] sm:$0xff] %v6064
    %6131 = vst [vmem:[#allocation10 + $0x40] sm:$0xff] %v6071
    %6132 = vst [vmem:[#allocation10 + $0x48] sm:$0xff] %v6078
    %6133 = vst [vmem:[#allocation10 + $0x50] sm:$0xff] %v6085
    %6134 = vst [vmem:[#allocation10 + $0x58] sm:$0xff] %v6092
    %6135 = vst [vmem:[#allocation10 + $0x60] sm:$0xff] %v6099
    %6136 = vst [vmem:[#allocation10 + $0x68] sm:$0xff] %v6106
    %6137 = vst [vmem:[#allocation10 + $0x70] sm:$0xff] %v6113
    %6138 = vst [vmem:[#allocation10 + $0x78] sm:$0xff] %v6120
    %v6139 = vld [vmem:[%s1] sm:$0x1]
    %v6141 = vlaneseq
    %v6142 = vshrl.u32 %v6141, 7
    %v6143 = vsub.s32 0, %v6142
    %v6144 = vrot.slane %v6139, %v6143
    %v6146 = vmul.f32 %v6015, %v6144
    %v6147 = vmul.f32 %v6022, %v6144
    %v6148 = vmul.f32 %v6029, %v6144
    %v6149 = vmul.f32 %v6036, %v6144
    %v6150 = vmul.f32 %v6043, %v6144
    %v6151 = vmul.f32 %v6050, %v6144
    %v6152 = vmul.f32 %v6057, %v6144
    %v6153 = vmul.f32 %v6064, %v6144
    %v6154 = vmul.f32 %v6071, %v6144
    %v6155 = vmul.f32 %v6078, %v6144
    %v6156 = vmul.f32 %v6085, %v6144
    %v6157 = vmul.f32 %v6092, %v6144
    %v6158 = vmul.f32 %v6099, %v6144
    %v6159 = vmul.f32 %v6106, %v6144
    %v6160 = vmul.f32 %v6113, %v6144
    %v6161 = vmul.f32 %v6120, %v6144
    %v6162 = vld [vmem:[#allocation3] sm:$0xff]
    %v6163 = vld [vmem:[#allocation3 + $0x8] sm:$0xff]
    %v6164 = vld [vmem:[#allocation3 + $0x10] sm:$0xff]
    %v6165 = vld [vmem:[#allocation3 + $0x18] sm:$0xff]
    %v6166 = vld [vmem:[#allocation3 + $0x20] sm:$0xff]
    %v6167 = vld [vmem:[#allocation3 + $0x28] sm:$0xff]
    %v6168 = vld [vmem:[#allocation3 + $0x30] sm:$0xff]
    %v6169 = vld [vmem:[#allocation3 + $0x38] sm:$0xff]
    %v6170 = vld [vmem:[#allocation3 + $0x40] sm:$0xff]
    %v6171 = vld [vmem:[#allocation3 + $0x48] sm:$0xff]
    %v6172 = vld [vmem:[#allocation3 + $0x50] sm:$0xff]
    %v6173 = vld [vmem:[#allocation3 + $0x58] sm:$0xff]
    %v6174 = vld [vmem:[#allocation3 + $0x60] sm:$0xff]
    %v6175 = vld [vmem:[#allocation3 + $0x68] sm:$0xff]
    %v6176 = vld [vmem:[#allocation3 + $0x70] sm:$0xff]
    %v6177 = vld [vmem:[#allocation3 + $0x78] sm:$0xff]
    %6178 = vmatprep.subr.mxu0 0.0
    %6179 = vmatpush1.msra.mxu0 %v6162
    %6180 = vmatprep.subr.mxu0 0.0
    %6181 = vmatpush1.msra.mxu0 %v6163
    %6182 = vmatprep.subr.mxu0 0.0
    %6183 = vmatpush1.msra.mxu0 %v6164
    %6184 = vmatprep.subr.mxu0 0.0
    %6185 = vmatpush1.msra.mxu0 %v6165
    %6186 = vmatprep.subr.mxu0 0.0
    %6187 = vmatpush1.msra.mxu0 %v6166
    %6188 = vmatprep.subr.mxu0 0.0
    %6189 = vmatpush1.msra.mxu0 %v6167
    %6190 = vmatprep.subr.mxu0 0.0
    %6191 = vmatpush1.msra.mxu0 %v6168
    %6192 = vmatprep.subr.mxu0 0.0
    %6193 = vmatpush1.msra.mxu0 %v6169
    %6194 = vmatprep.subr.mxu0 0.0
    %6195 = vmatpush1.msra.mxu0 %v6170
    %6196 = vmatprep.subr.mxu0 0.0
    %6197 = vmatpush1.msra.mxu0 %v6171
    %6198 = vmatprep.subr.mxu0 0.0
    %6199 = vmatpush1.msra.mxu0 %v6172
    %6200 = vmatprep.subr.mxu0 0.0
    %6201 = vmatpush1.msra.mxu0 %v6173
    %6202 = vmatprep.subr.mxu0 0.0
    %6203 = vmatpush1.msra.mxu0 %v6174
    %6204 = vmatprep.subr.mxu0 0.0
    %6205 = vmatpush1.msra.mxu0 %v6175
    %6206 = vmatprep.subr.mxu0 0.0
    %6207 = vmatpush1.msra.mxu0 %v6176
    %6208 = vmatprep.subr.mxu0 0.0
    %6209 = vmatpush1.msra.mxu0 %v6177
    %6210 = vmatprep.subr.mxu0 0.0
    %6211 = vmatpush1.msra.mxu0 0.0
    %6212 = vmatprep.subr.mxu0 0.0
    %6213 = vmatpush1.msra.mxu0 0.0
    %6214 = vmatprep.subr.mxu0 0.0
    %6215 = vmatpush1.msra.mxu0 0.0
    %6216 = vmatprep.subr.mxu0 0.0
    %6217 = vmatpush1.msra.mxu0 0.0
    %6218 = vmatprep.subr.mxu0 0.0
    %6219 = vmatpush1.msra.mxu0 0.0
    %6220 = vmatprep.subr.mxu0 0.0
    %6221 = vmatpush1.msra.mxu0 0.0
    %6222 = vmatprep.subr.mxu0 0.0
    %6223 = vmatpush1.msra.mxu0 0.0
    %6224 = vmatprep.subr.mxu0 0.0
    %6225 = vmatpush1.msra.mxu0 0.0
    %6226 = vmatprep.subr.mxu0 0.0
    %6227 = vmatpush1.msra.mxu0 0.0
    %6228 = vmatprep.subr.mxu0 0.0
    %6229 = vmatpush1.msra.mxu0 0.0
    %6230 = vmatprep.subr.mxu0 0.0
    %6231 = vmatpush1.msra.mxu0 0.0
    %6232 = vmatprep.subr.mxu0 0.0
    %6233 = vmatpush1.msra.mxu0 0.0
    %6234 = vmatprep.subr.mxu0 0.0
    %6235 = vmatpush1.msra.mxu0 0.0
    %6236 = vmatprep.subr.mxu0 0.0
    %6237 = vmatpush1.msra.mxu0 0.0
    %6238 = vmatprep.subr.mxu0 0.0
    %6239 = vmatpush1.msra.mxu0 0.0
    %6240 = vmatprep.subr.mxu0 0.0
    %6241 = vmatpush1.msra.mxu0 0.0
    %6242 = vmatprep.mubr.f32.mxu0 0.0
    %6243 = vmatmul.mubr.f32.gmra.mrb[0].mxu0 %v6146
    %v6244 = vpop.f32.mrb[0].mxu0
    %v6245 = vadd.f32 0.0, %v6244
    %v6246 = vpop.f32.mrb[0].mxu0
    %6247 = vmatprep.mubr.f32.mxu0 0.0
    %6248 = vmatmul.mubr.f32.gmra.mrb[0].mxu0 %v6147
    %v6249 = vpop.f32.mrb[0].mxu0
    %v6250 = vadd.f32 0.0, %v6249
    %v6251 = vpop.f32.mrb[0].mxu0
    %6252 = vmatprep.mubr.f32.mxu0 0.0
    %6253 = vmatmul.mubr.f32.gmra.mrb[0].mxu0 %v6148
    %v6254 = vpop.f32.mrb[0].mxu0
    %v6255 = vadd.f32 0.0, %v6254
    %v6256 = vpop.f32.mrb[0].mxu0
    %6257 = vmatprep.mubr.f32.mxu0 0.0
    %6258 = vmatmul.mubr.f32.gmra.mrb[0].mxu0 %v6149
    %v6259 = vpop.f32.mrb[0].mxu0
    %v6260 = vadd.f32 0.0, %v6259
    %v6261 = vpop.f32.mrb[0].mxu0
    %6262 = vmatprep.mubr.f32.mxu0 0.0
    %6263 = vmatmul.mubr.f32.gmra.mrb[0].mxu0 %v6150
    %v6264 = vpop.f32.mrb[0].mxu0
    %v6265 = vadd.f32 0.0, %v6264
    %v6266 = vpop.f32.mrb[0].mxu0
    %6267 = vmatprep.mubr.f32.mxu0 0.0
    %6268 = vmatmul.mubr.f32.gmra.mrb[0].mxu0 %v6151
    %v6269 = vpop.f32.mrb[0].mxu0
    %v6270 = vadd.f32 0.0, %v6269
    %v6271 = vpop.f32.mrb[0].mxu0
    %6272 = vmatprep.mubr.f32.mxu0 0.0
    %6273 = vmatmul.mubr.f32.gmra.mrb[0].mxu0 %v6152
    %v6274 = vpop.f32.mrb[0].mxu0
    %v6275 = vadd.f32 0.0, %v6274
    %v6276 = vpop.f32.mrb[0].mxu0
    %6277 = vmatprep.mubr.f32.mxu0 0.0
    %6278 = vmatmul.mubr.f32.gmra.mrb[0].mxu0 %v6153
    %v6279 = vpop.f32.mrb[0].mxu0
    %v6280 = vadd.f32 0.0, %v6279
    %v6281 = vpop.f32.mrb[0].mxu0
    %6282 = vmatprep.mubr.f32.mxu0 0.0
    %6283 = vmatmul.mubr.f32.gmra.mrb[0].mxu0 %v6154
    %v6284 = vpop.f32.mrb[0].mxu0
    %v6285 = vadd.f32 0.0, %v6284
    %v6286 = vpop.f32.mrb[0].mxu0
    %6287 = vmatprep.mubr.f32.mxu0 0.0
    %6288 = vmatmul.mubr.f32.gmra.mrb[0].mxu0 %v6155
    %v6289 = vpop.f32.mrb[0].mxu0
    %v6290 = vadd.f32 0.0, %v6289
    %v6291 = vpop.f32.mrb[0].mxu0
    %6292 = vmatprep.mubr.f32.mxu0 0.0
    %6293 = vmatmul.mubr.f32.gmra.mrb[0].mxu0 %v6156
    %v6294 = vpop.f32.mrb[0].mxu0
    %v6295 = vadd.f32 0.0, %v6294
    %v6296 = vpop.f32.mrb[0].mxu0
    %6297 = vmatprep.mubr.f32.mxu0 0.0
    %6298 = vmatmul.mubr.f32.gmra.mrb[0].mxu0 %v6157
    %v6299 = vpop.f32.mrb[0].mxu0
    %v6300 = vadd.f32 0.0, %v6299
    %v6301 = vpop.f32.mrb[0].mxu0
    %6302 = vmatprep.mubr.f32.mxu0 0.0
    %6303 = vmatmul.mubr.f32.gmra.mrb[0].mxu0 %v6158
    %v6304 = vpop.f32.mrb[0].mxu0
    %v6305 = vadd.f32 0.0, %v6304
    %v6306 = vpop.f32.mrb[0].mxu0
    %6307 = vmatprep.mubr.f32.mxu0 0.0
    %6308 = vmatmul.mubr.f32.gmra.mrb[0].mxu0 %v6159
    %v6309 = vpop.f32.mrb[0].mxu0
    %v6310 = vadd.f32 0.0, %v6309
    %v6311 = vpop.f32.mrb[0].mxu0
    %6312 = vmatprep.mubr.f32.mxu0 0.0
    %6313 = vmatmul.mubr.f32.gmra.mrb[0].mxu0 %v6160
    %v6314 = vpop.f32.mrb[0].mxu0
    %v6315 = vadd.f32 0.0, %v6314
    %v6316 = vpop.f32.mrb[0].mxu0
    %6317 = vmatprep.mubr.f32.mxu0 0.0
    %6318 = vmatmul.mubr.f32.gmra.mrb[0].mxu0 %v6161
    %v6319 = vpop.f32.mrb[0].mxu0
    %v6320 = vadd.f32 0.0, %v6319
    %v6321 = vpop.f32.mrb[0].mxu0
    %6322 = vdwg.mxu0
    %6323 = vst [vmem:[#allocation5] sm:$0xff] %v6245
    %6324 = vst [vmem:[#allocation5 + $0x8] sm:$0xff] %v6250
    %6325 = vst [vmem:[#allocation5 + $0x10] sm:$0xff] %v6255
    %6326 = vst [vmem:[#allocation5 + $0x18] sm:$0xff] %v6260
    %6327 = vst [vmem:[#allocation5 + $0x20] sm:$0xff] %v6265
    %6328 = vst [vmem:[#allocation5 + $0x28] sm:$0xff] %v6270
    %6329 = vst [vmem:[#allocation5 + $0x30] sm:$0xff] %v6275
    %6330 = vst [vmem:[#allocation5 + $0x38] sm:$0xff] %v6280
    %6331 = vst [vmem:[#allocation5 + $0x40] sm:$0xff] %v6285
    %6332 = vst [vmem:[#allocation5 + $0x48] sm:$0xff] %v6290
    %6333 = vst [vmem:[#allocation5 + $0x50] sm:$0xff] %v6295
    %6334 = vst [vmem:[#allocation5 + $0x58] sm:$0xff] %v6300
    %6335 = vst [vmem:[#allocation5 + $0x60] sm:$0xff] %v6305
    %6336 = vst [vmem:[#allocation5 + $0x68] sm:$0xff] %v6310
    %6337 = vst [vmem:[#allocation5 + $0x70] sm:$0xff] %v6315
    %6338 = vst [vmem:[#allocation5 + $0x78] sm:$0xff] %v6320
    %v6339 = vld [vmem:[#allocation5] sm:$0xff]
    %v6340 = vld [vmem:[#allocation5 + $0x8] sm:$0xff]
    %v6341 = vld [vmem:[#allocation5 + $0x10] sm:$0xff]
    %v6342 = vld [vmem:[#allocation5 + $0x18] sm:$0xff]
    %v6343 = vld [vmem:[#allocation5 + $0x20] sm:$0xff]
    %v6344 = vld [vmem:[#allocation5 + $0x28] sm:$0xff]
    %v6345 = vld [vmem:[#allocation5 + $0x30] sm:$0xff]
    %v6346 = vld [vmem:[#allocation5 + $0x38] sm:$0xff]
    %v6347 = vld [vmem:[#allocation5 + $0x40] sm:$0xff]
    %v6348 = vld [vmem:[#allocation5 + $0x48] sm:$0xff]
    %v6349 = vld [vmem:[#allocation5 + $0x50] sm:$0xff]
    %v6350 = vld [vmem:[#allocation5 + $0x58] sm:$0xff]
    %v6351 = vld [vmem:[#allocation5 + $0x60] sm:$0xff]
    %v6352 = vld [vmem:[#allocation5 + $0x68] sm:$0xff]
    %v6353 = vld [vmem:[#allocation5 + $0x70] sm:$0xff]
    %v6354 = vld [vmem:[#allocation5 + $0x78] sm:$0xff]
    %v6355 = vld [vmem:[%s4] sm:$0xff]
    %v6356 = vld [vmem:[%s4 + $0x8] sm:$0xff]
    %v6357 = vld [vmem:[%s4 + $0x10] sm:$0xff]
    %v6358 = vld [vmem:[%s4 + $0x18] sm:$0xff]
    %v6359 = vld [vmem:[%s4 + $0x20] sm:$0xff]
    %v6360 = vld [vmem:[%s4 + $0x28] sm:$0xff]
    %v6361 = vld [vmem:[%s4 + $0x30] sm:$0xff]
    %v6362 = vld [vmem:[%s4 + $0x38] sm:$0xff]
    %v6363 = vld [vmem:[%s4 + $0x40] sm:$0xff]
    %v6364 = vld [vmem:[%s4 + $0x48] sm:$0xff]
    %v6365 = vld [vmem:[%s4 + $0x50] sm:$0xff]
    %v6366 = vld [vmem:[%s4 + $0x58] sm:$0xff]
    %v6367 = vld [vmem:[%s4 + $0x60] sm:$0xff]
    %v6368 = vld [vmem:[%s4 + $0x68] sm:$0xff]
    %v6369 = vld [vmem:[%s4 + $0x70] sm:$0xff]
    %v6370 = vld [vmem:[%s4 + $0x78] sm:$0xff]
    %6371 = vmatprep.subr.mxu0 0.0
    %6372 = vmatpush1.msra.mxu0 %v6355
    %6373 = vmatprep.subr.mxu0 0.0
    %6374 = vmatpush1.msra.mxu0 %v6356
    %6375 = vmatprep.subr.mxu0 0.0
    %6376 = vmatpush1.msra.mxu0 %v6357
    %6377 = vmatprep.subr.mxu0 0.0
    %6378 = vmatpush1.msra.mxu0 %v6358
    %6379 = vmatprep.subr.mxu0 0.0
    %6380 = vmatpush1.msra.mxu0 %v6359
    %6381 = vmatprep.subr.mxu0 0.0
    %6382 = vmatpush1.msra.mxu0 %v6360
    %6383 = vmatprep.subr.mxu0 0.0
    %6384 = vmatpush1.msra.mxu0 %v6361
    %6385 = vmatprep.subr.mxu0 0.0
    %6386 = vmatpush1.msra.mxu0 %v6362
    %6387 = vmatprep.subr.mxu0 0.0
    %6388 = vmatpush1.msra.mxu0 %v6363
    %6389 = vmatprep.subr.mxu0 0.0
    %6390 = vmatpush1.msra.mxu0 %v6364
    %6391 = vmatprep.subr.mxu0 0.0
    %6392 = vmatpush1.msra.mxu0 %v6365
    %6393 = vmatprep.subr.mxu0 0.0
    %6394 = vmatpush1.msra.mxu0 %v6366
    %6395 = vmatprep.subr.mxu0 0.0
    %6396 = vmatpush1.msra.mxu0 %v6367
    %6397 = vmatprep.subr.mxu0 0.0
    %6398 = vmatpush1.msra.mxu0 %v6368
    %6399 = vmatprep.subr.mxu0 0.0
    %6400 = vmatpush1.msra.mxu0 %v6369
    %6401 = vmatprep.subr.mxu0 0.0
    %6402 = vmatpush1.msra.mxu0 %v6370
    %6403 = vmatprep.subr.mxu0 0.0
    %6404 = vmatpush1.msra.mxu0 0.0
    %6405 = vmatprep.subr.mxu0 0.0
    %6406 = vmatpush1.msra.mxu0 0.0
    %6407 = vmatprep.subr.mxu0 0.0
    %6408 = vmatpush1.msra.mxu0 0.0
    %6409 = vmatprep.subr.mxu0 0.0
    %6410 = vmatpush1.msra.mxu0 0.0
    %6411 = vmatprep.subr.mxu0 0.0
    %6412 = vmatpush1.msra.mxu0 0.0
    %6413 = vmatprep.subr.mxu0 0.0
    %6414 = vmatpush1.msra.mxu0 0.0
    %6415 = vmatprep.subr.mxu0 0.0
    %6416 = vmatpush1.msra.mxu0 0.0
    %6417 = vmatprep.subr.mxu0 0.0
    %6418 = vmatpush1.msra.mxu0 0.0
    %6419 = vmatprep.subr.mxu0 0.0
    %6420 = vmatpush1.msra.mxu0 0.0
    %6421 = vmatprep.subr.mxu0 0.0
    %6422 = vmatpush1.msra.mxu0 0.0
    %6423 = vmatprep.subr.mxu0 0.0
    %6424 = vmatpush1.msra.mxu0 0.0
    %6425 = vmatprep.subr.mxu0 0.0
    %6426 = vmatpush1.msra.mxu0 0.0
    %6427 = vmatprep.subr.mxu0 0.0
    %6428 = vmatpush1.msra.mxu0 0.0
    %6429 = vmatprep.subr.mxu0 0.0
    %6430 = vmatpush1.msra.mxu0 0.0
    %6431 = vmatprep.subr.mxu0 0.0
    %6432 = vmatpush1.msra.mxu0 0.0
    %6433 = vmatprep.subr.mxu0 0.0
    %6434 = vmatpush1.msra.mxu0 0.0
    %6435 = vmatprep.mubr.f32.mxu0 0.0
    %6436 = vmatmul.mubr.f32.gmra.mrb[0].mxu0 %v6339
    %v6437 = vpop.f32.mrb[0].mxu0
    %v6438 = vadd.f32 0.0, %v6437
    %v6439 = vpop.f32.mrb[0].mxu0
    %6440 = vmatprep.mubr.f32.mxu0 0.0
    %6441 = vmatmul.mubr.f32.gmra.mrb[0].mxu0 %v6340
    %v6442 = vpop.f32.mrb[0].mxu0
    %v6443 = vadd.f32 0.0, %v6442
    %v6444 = vpop.f32.mrb[0].mxu0
    %6445 = vmatprep.mubr.f32.mxu0 0.0
    %6446 = vmatmul.mubr.f32.gmra.mrb[0].mxu0 %v6341
    %v6447 = vpop.f32.mrb[0].mxu0
    %v6448 = vadd.f32 0.0, %v6447
    %v6449 = vpop.f32.mrb[0].mxu0
    %6450 = vmatprep.mubr.f32.mxu0 0.0
    %6451 = vmatmul.mubr.f32.gmra.mrb[0].mxu0 %v6342
    %v6452 = vpop.f32.mrb[0].mxu0
    %v6453 = vadd.f32 0.0, %v6452
    %v6454 = vpop.f32.mrb[0].mxu0
    %6455 = vmatprep.mubr.f32.mxu0 0.0
    %6456 = vmatmul.mubr.f32.gmra.mrb[0].mxu0 %v6343
    %v6457 = vpop.f32.mrb[0].mxu0
    %v6458 = vadd.f32 0.0, %v6457
    %v6459 = vpop.f32.mrb[0].mxu0
    %6460 = vmatprep.mubr.f32.mxu0 0.0
    %6461 = vmatmul.mubr.f32.gmra.mrb[0].mxu0 %v6344
    %v6462 = vpop.f32.mrb[0].mxu0
    %v6463 = vadd.f32 0.0, %v6462
    %v6464 = vpop.f32.mrb[0].mxu0
    %6465 = vmatprep.mubr.f32.mxu0 0.0
    %6466 = vmatmul.mubr.f32.gmra.mrb[0].mxu0 %v6345
    %v6467 = vpop.f32.mrb[0].mxu0
    %v6468 = vadd.f32 0.0, %v6467
    %v6469 = vpop.f32.mrb[0].mxu0
    %6470 = vmatprep.mubr.f32.mxu0 0.0
    %6471 = vmatmul.mubr.f32.gmra.mrb[0].mxu0 %v6346
    %v6472 = vpop.f32.mrb[0].mxu0
    %v6473 = vadd.f32 0.0, %v6472
    %v6474 = vpop.f32.mrb[0].mxu0
    %6475 = vmatprep.mubr.f32.mxu0 0.0
    %6476 = vmatmul.mubr.f32.gmra.mrb[0].mxu0 %v6347
    %v6477 = vpop.f32.mrb[0].mxu0
    %v6478 = vadd.f32 0.0, %v6477
    %v6479 = vpop.f32.mrb[0].mxu0
    %6480 = vmatprep.mubr.f32.mxu0 0.0
    %6481 = vmatmul.mubr.f32.gmra.mrb[0].mxu0 %v6348
    %v6482 = vpop.f32.mrb[0].mxu0
    %v6483 = vadd.f32 0.0, %v6482
    %v6484 = vpop.f32.mrb[0].mxu0
    %6485 = vmatprep.mubr.f32.mxu0 0.0
    %6486 = vmatmul.mubr.f32.gmra.mrb[0].mxu0 %v6349
    %v6487 = vpop.f32.mrb[0].mxu0
    %v6488 = vadd.f32 0.0, %v6487
    %v6489 = vpop.f32.mrb[0].mxu0
    %6490 = vmatprep.mubr.f32.mxu0 0.0
    %6491 = vmatmul.mubr.f32.gmra.mrb[0].mxu0 %v6350
    %v6492 = vpop.f32.mrb[0].mxu0
    %v6493 = vadd.f32 0.0, %v6492
    %v6494 = vpop.f32.mrb[0].mxu0
    %6495 = vmatprep.mubr.f32.mxu0 0.0
    %6496 = vmatmul.mubr.f32.gmra.mrb[0].mxu0 %v6351
    %v6497 = vpop.f32.mrb[0].mxu0
    %v6498 = vadd.f32 0.0, %v6497
    %v6499 = vpop.f32.mrb[0].mxu0
    %6500 = vmatprep.mubr.f32.mxu0 0.0
    %6501 = vmatmul.mubr.f32.gmra.mrb[0].mxu0 %v6352
    %v6502 = vpop.f32.mrb[0].mxu0
    %v6503 = vadd.f32 0.0, %v6502
    %v6504 = vpop.f32.mrb[0].mxu0
    %6505 = vmatprep.mubr.f32.mxu0 0.0
    %6506 = vmatmul.mubr.f32.gmra.mrb[0].mxu0 %v6353
    %v6507 = vpop.f32.mrb[0].mxu0
    %v6508 = vadd.f32 0.0, %v6507
    %v6509 = vpop.f32.mrb[0].mxu0
    %6510 = vmatprep.mubr.f32.mxu0 0.0
    %6511 = vmatmul.mubr.f32.gmra.mrb[0].mxu0 %v6354
    %v6512 = vpop.f32.mrb[0].mxu0
    %v6513 = vadd.f32 0.0, %v6512
    %v6514 = vpop.f32.mrb[0].mxu0
    %6515 = vdwg.mxu0
    %v6516 = vmax.f32 %v6438, 0.0
    %v6517 = vmax.f32 %v6443, 0.0
    %v6518 = vmax.f32 %v6448, 0.0
    %v6519 = vmax.f32 %v6453, 0.0
    %v6520 = vmax.f32 %v6458, 0.0
    %v6521 = vmax.f32 %v6463, 0.0
    %v6522 = vmax.f32 %v6468, 0.0
    %v6523 = vmax.f32 %v6473, 0.0
    %v6524 = vmax.f32 %v6478, 0.0
    %v6525 = vmax.f32 %v6483, 0.0
    %v6526 = vmax.f32 %v6488, 0.0
    %v6527 = vmax.f32 %v6493, 0.0
    %v6528 = vmax.f32 %v6498, 0.0
    %v6529 = vmax.f32 %v6503, 0.0
    %v6530 = vmax.f32 %v6508, 0.0
    %v6531 = vmax.f32 %v6513, 0.0
    %6532 = vst [vmem:[#allocation9] sm:$0xff] %v6516
    %6533 = vst [vmem:[#allocation9 + $0x8] sm:$0xff] %v6517
    %6534 = vst [vmem:[#allocation9 + $0x10] sm:$0xff] %v6518
    %6535 = vst [vmem:[#allocation9 + $0x18] sm:$0xff] %v6519
    %6536 = vst [vmem:[#allocation9 + $0x20] sm:$0xff] %v6520
    %6537 = vst [vmem:[#allocation9 + $0x28] sm:$0xff] %v6521
    %6538 = vst [vmem:[#allocation9 + $0x30] sm:$0xff] %v6522
    %6539 = vst [vmem:[#allocation9 + $0x38] sm:$0xff] %v6523
    %6540 = vst [vmem:[#allocation9 + $0x40] sm:$0xff] %v6524
    %6541 = vst [vmem:[#allocation9 + $0x48] sm:$0xff] %v6525
    %6542 = vst [vmem:[#allocation9 + $0x50] sm:$0xff] %v6526
    %6543 = vst [vmem:[#allocation9 + $0x58] sm:$0xff] %v6527
    %6544 = vst [vmem:[#allocation9 + $0x60] sm:$0xff] %v6528
    %6545 = vst [vmem:[#allocation9 + $0x68] sm:$0xff] %v6529
    %6546 = vst [vmem:[#allocation9 + $0x70] sm:$0xff] %v6530
    %6547 = vst [vmem:[#allocation9 + $0x78] sm:$0xff] %v6531
    // Predicated region
    $region26: #{gpool_block_forward.3} parent=1 // pred_check
      _
    $region27: #{gpool_block_forward.3} parent=1 // pred_check_branch
      %6549 = sbr.rel (0) target = $region29
    $region28: #{gpool_block_forward.3} parent=1 // pred_region
      %s6551 = ssub.s32 2048, 2048
      %6552 = vsyncadd [#allocation8], %s6551
      %s6553 = sshll.u32 [#allocation9], 4
      %s6554 = int_to_ptr.vmem [resolvable:$true] %s6553
      %6559 = dma.vmem_to_hbm [thread:$0]  %s6554, 2048, %s5, [#allocation8], 128, 128, 8
    $region29: #{gpool_block_forward.3} parent=1 // pred_fallthru
      _
    // Predicated region
    $region30: #{gpool_block_forward.3} parent=1 // pred_check
      _
    $region31: #{gpool_block_forward.3} parent=1 // pred_check_branch
      %6561 = sbr.rel (0) target = $region33
    $region32: #{gpool_block_forward.3} parent=1 // pred_region
      %s6563 = ssub.s32 2048, 2048
      %6564 = vsyncadd [#allocation11], %s6563
      %s6565 = sshll.u32 [#allocation10], 4
      %s6566 = int_to_ptr.vmem [resolvable:$true] %s6565
      %6571 = dma.vmem_to_hbm [thread:$0]  %s6566, 2048, %s6, [#allocation11], 128, 128, 8
    $region33: #{gpool_block_forward.3} parent=1 // pred_fallthru
      _
    // Predicated region
    $region34: #{gpool_block_forward.3} parent=1 // pred_check
      _
    $region35: #{gpool_block_forward.3} parent=1 // pred_check_branch
      %6573 = sbr.rel (0) target = $region37
    $region36: #{gpool_block_forward.3} parent=1 // pred_region
      %6574 = dma.done [#allocation8], 2048
    $region37: #{gpool_block_forward.3} parent=1 // pred_fallthru
      _
    // Predicated region
    $region38: #{gpool_block_forward.3} parent=1 // pred_check
      _
    $region39: #{gpool_block_forward.3} parent=1 // pred_check_branch
      %6576 = sbr.rel (0) target = $region41
    $region40: #{gpool_block_forward.3} parent=1 // pred_region
      %6577 = dma.done [#allocation11], 2048
    $region41: #{gpool_block_forward.3} parent=1 // pred_fallthru
      _
    %6578 = vsyncpa [#allocation7], 1
    %6579 = vsyncpa [#allocation8], 1
    %6580 = vsyncpa [#allocation11], 1

</llo_original>
